<compile_context>
chip_gen: v7x
topology: tpu7x:2x2x1
jax: 0.10.0
libtpu: 0.0.40
codegen_flags: <defaults>
</compile_context>

<pallas_src>
import functools

import jax
import jax.numpy as jnp
from jax.experimental import pallas as pl
from jax.experimental.pallas import tpu as pltpu


# ----------------------------------------------------------------------------
# Model hyper-parameters (small, deterministic, synthetic)
# ----------------------------------------------------------------------------
HIDDEN_SIZE = 32          # hidden_size
NUM_LAYERS = 2            # num_layers
FEAT_DIM = 32             # stand-in for `resnet_output`
CONV_K = 3                # 3x3 conv stem
FC_MID = 64
OUT_DIM = 7

# Lane / sublane padding constants.
KPAD = 128                # padded im2col contraction dim (C*9 <= 128)
FPAD = 128                # padded feature width (lane-dense)
GATE_W = 4 * HIDDEN_SIZE  # 128: gate vreg is already lane-dense
FC_PAD = 128              # padded FC hidden width
OUT_PAD = 128             # padded head output width
BATCH_PAD = 8             # pad batch to full sublane occupancy


# ----------------------------------------------------------------------------
# Kernel 1: per-frame CNN feature extractor (one lane-dense matmul + pooling matmul)
# ----------------------------------------------------------------------------
def _cnn_kernel(p_ref, w_ref, b_ref, pool_ref, o_ref):
    # p_ref: (M, KPAD) bf16  w_ref: (KPAD, FPAD) bf16  b_ref: (1, FPAD) f32
    # pool_ref: (N, M) f32   o_ref: (N, FPAD) f32
    acts = jnp.dot(p_ref[...], w_ref[...], preferred_element_type=jnp.float32)
    acts = jnp.maximum(acts + b_ref[...], 0.0)                       # conv + ReLU
    # Global average pool expressed as a second matmul against a block-diagonal mean
    # matrix: keeps everything 2-D / lane-dense, no cross-sublane reductions.
    o_ref[...] = jnp.dot(pool_ref[...], acts, preferred_element_type=jnp.float32)


def _full_spec(shape):
    nd = len(shape)
    return pl.BlockSpec(shape, lambda i, _n=nd: (0,) * _n)


def cnn_features(patches, conv_w, conv_b, pool_mat):
    """patches: (M, KPAD) bf16 -> per-frame features (N, FPAD) f32."""
    n = pool_mat.shape[0]
    return pl.pallas_call(
        _cnn_kernel,
        out_shape=jax.ShapeDtypeStruct((n, FPAD), jnp.float32),
        grid=(1,),
        in_specs=[_full_spec(patches.shape), _full_spec(conv_w.shape),
                  _full_spec(conv_b.shape), _full_spec(pool_mat.shape)],
        out_specs=_full_spec((n, FPAD)),
        compiler_params=pltpu.CompilerParams(dimension_semantics=("arbitrary",)),
    )(patches, conv_w, conv_b, pool_mat)


# ----------------------------------------------------------------------------
# Kernel 2: multi-layer LSTM (time-major, hoisted input projection) + MLP head
# ----------------------------------------------------------------------------
def _make_lstm_fc_kernel(num_layers, seq_len, b8, hidden):
    gw = 4 * hidden

    def kernel(*refs):
        feat_ref = refs[0]                                   # (S*B8, FPAD) bf16
        layer_refs = refs[1:1 + 3 * num_layers]              # per layer: w_ih, w_hh, b
        fc1_w, fc1_b, fc2_w, fc2_b = refs[1 + 3 * num_layers:5 + 3 * num_layers]
        out_ref = refs[5 + 3 * num_layers]                   # (B8, OUT_PAD) f32
        gx_ref = refs[6 + 3 * num_layers]                    # (S*B8, 4H) f32 scratch
        hs_ref = refs[7 + 3 * num_layers]                    # (S*B8, H)  f32 scratch

        # Lane mask selecting the cell-candidate gate (g) inside the 128-lane gate
        # vreg (PyTorch gate order i, f, g, o). Hoisted: built once, not per step.
        lane = jax.lax.broadcasted_iota(jnp.int32, (b8, gw), 1)
        g_mask = (lane >= 2 * hidden) & (lane < 3 * hidden)

        x_flat = feat_ref[...]                               # time-major (S*B8, in_dim)
        h_last = None
        for layer in range(num_layers):                      # static layer loop
            w_ih, w_hh, bias = layer_refs[3 * layer:3 * layer + 3]
            # Hoisted input projection: one matmul covering all S timesteps.
            gx_ref[...] = (jnp.dot(x_flat, w_ih[...],
                                   preferred_element_type=jnp.float32) + bias[...])
            w_hh_v = w_hh[...]                               # keep recurrent weights resident

            def step(t, carry, w_hh_v=w_hh_v):
                h, c = carry                                 # f32 (B8, H)
                row = pl.multiple_of(t * b8, b8)
                gates = gx_ref[pl.ds(row, b8), :] + jnp.dot(
                    h.astype(jnp.bfloat16), w_hh_v,
                    preferred_element_type=jnp.float32)      # (B8, 4H) f32
                # Full-width activations: one sigmoid + one tanh EUP pass over the
                # whole 128-lane gate vreg, select tanh lanes for gate g.
                act = jnp.where(g_mask, jnp.tanh(gates), jax.nn.sigmoid(gates))
                i_g = act[:, 0 * hidden:1 * hidden]
                f_g = act[:, 1 * hidden:2 * hidden]
                g_g = act[:, 2 * hidden:3 * hidden]
                o_g = act[:, 3 * hidden:4 * hidden]
                c = f_g * c + i_g * g_g
                h = o_g * jnp.tanh(c)
                hs_ref[pl.ds(row, b8), :] = h                # layer output -> scratch
                return h, c

            zeros = jnp.zeros((b8, hidden), jnp.float32)
            h_last, _ = jax.lax.fori_loop(0, seq_len, step, (zeros, zeros),
                                          unroll=True)
            if layer + 1 < num_layers:
                x_flat = hs_ref[...].astype(jnp.bfloat16)    # feed next layer

        # MLP head on the last timestep of the last layer (== lstm_out[:, -1, :]).
        y = jnp.dot(h_last.astype(jnp.bfloat16), fc1_w[...],
                    preferred_element_type=jnp.float32) + fc1_b[...]
        y = jnp.maximum(y, 0.0)                              # ReLU
        out_ref[...] = jnp.dot(y.astype(jnp.bfloat16), fc2_w[...],
                               preferred_element_type=jnp.float32) + fc2_b[...]

    return kernel


def lstm_fc(feats2d, prep, *, seq_len):
    """feats2d: (S*BATCH_PAD, FPAD) bf16 time-major -> (BATCH_PAD, OUT_PAD) f32."""
    args = [feats2d]
    for w_ih, w_hh, bias in prep["lstm"]:
        args += [w_ih, w_hh, bias]
    args += list(prep["fc"])
    kernel = _make_lstm_fc_kernel(NUM_LAYERS, seq_len, BATCH_PAD, HIDDEN_SIZE)
    return pl.pallas_call(
        kernel,
        out_shape=jax.ShapeDtypeStruct((BATCH_PAD, OUT_PAD), jnp.float32),
        grid=(1,),
        in_specs=[_full_spec(a.shape) for a in args],
        out_specs=_full_spec((BATCH_PAD, OUT_PAD)),
        scratch_shapes=[
            pltpu.VMEM((seq_len * BATCH_PAD, GATE_W), jnp.float32),       # hoisted gx
            pltpu.VMEM((seq_len * BATCH_PAD, HIDDEN_SIZE), jnp.float32),  # layer outputs
        ],
        compiler_params=pltpu.CompilerParams(dimension_semantics=("arbitrary",)),
    )(*args)


# ----------------------------------------------------------------------------
# Wrapper glue: im2col in the final lane-dense layout, pooling matrix, forward pass
# ----------------------------------------------------------------------------
def _im2col_3x3_padded(x):
    """x: (B, S, C, H, W) -> (B*S*H*W, KPAD) f32 'same' 3x3 patches, channel-major
    taps, contraction dim zero-padded to KPAD (produced directly in kernel layout)."""
    b, s, c, h, w = x.shape
    frames = x.reshape(b * s, c, h, w)
    xp = jnp.pad(frames, ((0, 0), (0, 0), (1, 1), (1, 1)))
    taps = [xp[:, :, dy:dy + h, dx:dx + w] for dy in range(3) for dx in range(3)]
    patches = jnp.stack(taps, axis=-1)                       # (N, C, H, W, 9)
    patches = patches.transpose(0, 2, 3, 1, 4)               # (N, H, W, C, 9)
    patches = patches.reshape(b * s * h * w, c * 9)
    return jnp.pad(patches, ((0, 0), (0, KPAD - c * 9)))


def _pool_matrix(n_frames, pix):
    """(n_frames, n_frames*pix) block-diagonal mean-pooling matrix."""
    return jnp.kron(jnp.eye(n_frames, dtype=jnp.float32),
                    jnp.full((1, pix), 1.0 / pix, jnp.float32))


def visual_odometry_forward(x, prep):
    b, s, c, h, w = x.shape
    assert b <= BATCH_PAD
    n, pix = b * s, h * w
    patches = _im2col_3x3_padded(x).astype(jnp.bfloat16)               # bf16 MXU operand
    feats = cnn_features(patches, prep["conv_w"], prep["conv_b"],
                         _pool_matrix(n, pix))                          # (N, FPAD) f32
    # batch-major (B,S,F) -> time-major, batch padded to full sublanes, flattened 2-D
    feats = feats.reshape(b, s, FPAD).transpose(1, 0, 2)
    feats = jnp.pad(feats, ((0, 0), (0, BATCH_PAD - b), (0, 0)))
    feats2d = feats.reshape(s * BATCH_PAD, FPAD).astype(jnp.bfloat16)
    out = lstm_fc(feats2d, prep, seq_len=s)                             # (B8, OUT_PAD)
    return out[:b, :OUT_DIM]


# ----------------------------------------------------------------------------
# Deterministic parameter init + lane-dense / bf16 preparation
# ----------------------------------------------------------------------------
def init_params(key, channels):
    keys = iter(jax.random.split(key, 32))
    scale = 0.1
    params = {
        "conv_w": scale * jax.random.normal(
            next(keys), (channels * CONV_K * CONV_K, FEAT_DIM), jnp.float32),
        "conv_b": scale * jax.random.normal(next(keys), (1, FEAT_DIM), jnp.float32),
    }
    lstm = []
    for layer in range(NUM_LAYERS):
        in_dim = FEAT_DIM if layer == 0 else HIDDEN_SIZE
        lstm.append((
            scale * jax.random.normal(next(keys), (in_dim, 4 * HIDDEN_SIZE), jnp.float32),
            scale * jax.random.normal(next(keys), (HIDDEN_SIZE, 4 * HIDDEN_SIZE), jnp.float32),
            scale * jax.random.normal(next(keys), (1, 4 * HIDDEN_SIZE), jnp.float32),
            scale * jax.random.normal(next(keys), (1, 4 * HIDDEN_SIZE), jnp.float32),
        ))
    params["lstm"] = lstm
    params["fc"] = (
        scale * jax.random.normal(next(keys), (HIDDEN_SIZE, FC_MID), jnp.float32),
        scale * jax.random.normal(next(keys), (1, FC_MID), jnp.float32),
        scale * jax.random.normal(next(keys), (FC_MID, OUT_DIM), jnp.float32),
        scale * jax.random.normal(next(keys), (1, OUT_DIM), jnp.float32),
    )
    return params


def prepare_params(params, channels):
    """Zero-pad weights to lane-dense shapes; cast matmul operands to bf16."""
    k = channels * CONV_K * CONV_K
    conv_w = jnp.zeros((KPAD, FPAD), jnp.float32).at[:k, :FEAT_DIM].set(params["conv_w"])
    conv_b = jnp.zeros((1, FPAD), jnp.float32).at[:, :FEAT_DIM].set(params["conv_b"])
    lstm = []
    for layer, (w_ih, w_hh, b_ih, b_hh) in enumerate(params["lstm"]):
        in_dim = w_ih.shape[0]
        in_pad = FPAD if layer == 0 else in_dim           # layer 0 input is padded feats
        w_ih_p = jnp.zeros((in_pad, GATE_W), jnp.float32).at[:in_dim, :].set(w_ih)
        lstm.append((w_ih_p.astype(jnp.bfloat16),
                     w_hh.astype(jnp.bfloat16),
                     b_ih + b_hh))                        # fold both biases, keep f32
    fc1_w, fc1_b, fc2_w, fc2_b = params["fc"]
    fc1_w_p = jnp.zeros((HIDDEN_SIZE, FC_PAD), jnp.float32).at[:, :FC_MID].set(fc1_w)
    fc1_b_p = jnp.zeros((1, FC_PAD), jnp.float32).at[:, :FC_MID].set(fc1_b)
    fc2_w_p = jnp.zeros((FC_PAD, OUT_PAD), jnp.float32).at[:FC_MID, :OUT_DIM].set(fc2_w)
    fc2_b_p = jnp.zeros((1, OUT_PAD), jnp.float32).at[:, :OUT_DIM].set(fc2_b)
    return {
        "conv_w": conv_w.astype(jnp.bfloat16),
        "conv_b": conv_b,
        "lstm": lstm,
        "fc": (fc1_w_p.astype(jnp.bfloat16), fc1_b_p,
               fc2_w_p.astype(jnp.bfloat16), fc2_b_p),
    }


# ----------------------------------------------------------------------------
# Pure-JAX reference (mirrors the kernels' padding / bf16 operand casts)
# ----------------------------------------------------------------------------
def reference_forward(x, prep):
    b, s, c, h, w = x.shape
    n, pix = b * s, h * w
    patches = _im2col_3x3_padded(x).astype(jnp.bfloat16)
    acts = jnp.dot(patches, prep["conv_w"], preferred_element_type=jnp.float32)
    acts = jnp.maximum(acts + prep["conv_b"], 0.0)
    feats = jnp.dot(_pool_matrix(n, pix), acts, preferred_element_type=jnp.float32)
    feats = feats.reshape(b, s, FPAD).transpose(1, 0, 2)
    feats = jnp.pad(feats, ((0, 0), (0, BATCH_PAD - b), (0, 0)))
    x_seq = feats.reshape(s * BATCH_PAD, FPAD).astype(jnp.bfloat16)
    hcur = jnp.zeros((BATCH_PAD, HIDDEN_SIZE), jnp.float32)
    for w_ih, w_hh, bias in prep["lstm"]:
        gx = jnp.dot(x_seq, w_ih, preferred_element_type=jnp.float32) + bias
        hcur = jnp.zeros((BATCH_PAD, HIDDEN_SIZE), jnp.float32)
        ccur = jnp.zeros((BATCH_PAD, HIDDEN_SIZE), jnp.float32)
        outs = []
        for t in range(s):
            g = gx[t * BATCH_PAD:(t + 1) * BATCH_PAD] + jnp.dot(
                hcur.astype(jnp.bfloat16), w_hh, preferred_element_type=jnp.float32)
            i_g = jax.nn.sigmoid(g[:, 0 * HIDDEN_SIZE:1 * HIDDEN_SIZE])
            f_g = jax.nn.sigmoid(g[:, 1 * HIDDEN_SIZE:2 * HIDDEN_SIZE])
            g_g = jnp.tanh(g[:, 2 * HIDDEN_SIZE:3 * HIDDEN_SIZE])
            o_g = jax.nn.sigmoid(g[:, 3 * HIDDEN_SIZE:4 * HIDDEN_SIZE])
            ccur = f_g * ccur + i_g * g_g
            hcur = o_g * jnp.tanh(ccur)
            outs.append(hcur)
        x_seq = jnp.concatenate(outs, axis=0).astype(jnp.bfloat16)
    fc1_w, fc1_b, fc2_w, fc2_b = prep["fc"]
    y = jnp.maximum(jnp.dot(hcur.astype(jnp.bfloat16), fc1_w,
                            preferred_element_type=jnp.float32) + fc1_b, 0.0)
    y = jnp.dot(y.astype(jnp.bfloat16), fc2_w,
                preferred_element_type=jnp.float32) + fc2_b
    return y[:b, :OUT_DIM]


if __name__ == "__main__":
    key = jax.random.PRNGKey(0)
    k_x, k_p = jax.random.split(key)

    B, S, C, H, W = 2, 8, 4, 16, 16
    x = jax.random.normal(k_x, (B, S, C, H, W), jnp.float32)
    params = init_params(k_p, C)
    prep = prepare_params(params, C)

    fwd = jax.jit(functools.partial(visual_odometry_forward, prep=prep))
    out = fwd(x)
    jax.block_until_ready(out)

    assert out.shape == (B, OUT_DIM), out.shape
    assert out.dtype == jnp.float32
    assert bool(jnp.all(jnp.isfinite(out)))

    ref = jax.jit(functools.partial(reference_forward, prep=prep))(x)
    assert bool(jnp.allclose(out, ref, atol=5e-3, rtol=5e-3)), (
        "max |out-ref| = %e" % float(jnp.max(jnp.abs(out - ref))))
    print("KERNEL_OK")
</pallas_src>

<mosaic_0001>
module attributes {stable_mosaic.version = 11 : i64} {
  func.func @_cnn_kernel(%arg0: i32, %arg1: memref<4096x128xbf16, #tpu.memory_space<vmem>>, %arg2: memref<128x128xbf16, #tpu.memory_space<vmem>>, %arg3: memref<1x128xf32, #tpu.memory_space<vmem>>, %arg4: memref<16x4096xf32, #tpu.memory_space<vmem>>, %arg5: memref<16x128xf32, #tpu.memory_space<vmem>>) attributes {dimension_semantics = [#tpu.dimension_semantics<arbitrary>], iteration_bounds = array<i64: 1>, scalar_prefetch = 0 : i64, scratch_operands = 0 : i64, tpu.core_type = #tpu.core_type<tc>, window_params = [{pipeline_mode = #tpu.pipeline_mode<synchronous>, transform_indices = @transform_0, window_bounds = array<i64: 4096, 128>}, {pipeline_mode = #tpu.pipeline_mode<synchronous>, transform_indices = @transform_1, window_bounds = array<i64: 128, 128>}, {pipeline_mode = #tpu.pipeline_mode<synchronous>, transform_indices = @transform_2, window_bounds = array<i64: 1, 128>}, {pipeline_mode = #tpu.pipeline_mode<synchronous>, transform_indices = @transform_3, window_bounds = array<i64: 16, 4096>}, {pipeline_mode = #tpu.pipeline_mode<synchronous>, transform_indices = @transform_4, window_bounds = array<i64: 16, 128>}]} {
    %c0 = arith.constant 0 : index
    %c0_0 = arith.constant 0 : index
    %0 = vector.load %arg1[%c0, %c0_0] : memref<4096x128xbf16, #tpu.memory_space<vmem>>, vector<4096x128xbf16>
    %c0_1 = arith.constant 0 : index
    %c0_2 = arith.constant 0 : index
    %1 = vector.load %arg2[%c0_1, %c0_2] : memref<128x128xbf16, #tpu.memory_space<vmem>>, vector<128x128xbf16>
    %cst = arith.constant dense<0.000000e+00> : vector<4096x128xf32>
    %2 = tpu.matmul %0, %1, %cst {dimension_numbers = #tpu.dot_dimension_numbers<[1], [0], [0], [1], [0, 0, 1, 1], [], []>} : vector<4096x128xbf16>, vector<128x128xbf16>, vector<4096x128xf32> -> vector<4096x128xf32>
    %c0_3 = arith.constant 0 : index
    %c0_4 = arith.constant 0 : index
    %3 = vector.load %arg3[%c0_3, %c0_4] : memref<1x128xf32, #tpu.memory_space<vmem>>, vector<1x128xf32>
    %4 = vector.broadcast %3 : vector<1x128xf32> to vector<4096x128xf32>
    %5 = arith.addf %2, %4 : vector<4096x128xf32>
    %cst_5 = arith.constant 0.000000e+00 : f32
    %6 = vector.broadcast %cst_5 : f32 to vector<4096x128xf32>
    %7 = arith.maximumf %5, %6 : vector<4096x128xf32>
    %c0_6 = arith.constant 0 : index
    %c0_7 = arith.constant 0 : index
    %8 = vector.load %arg4[%c0_6, %c0_7] : memref<16x4096xf32, #tpu.memory_space<vmem>>, vector<16x4096xf32>
    %cst_8 = arith.constant dense<0.000000e+00> : vector<16x128xf32>
    %9 = tpu.matmul %8, %7, %cst_8 {dimension_numbers = #tpu.dot_dimension_numbers<[1], [0], [0], [1], [0, 0, 1, 1], [], []>} : vector<16x4096xf32>, vector<4096x128xf32>, vector<16x128xf32> -> vector<16x128xf32>
    %c0_9 = arith.constant 0 : index
    %c0_10 = arith.constant 0 : index
    %10 = vector.load %arg5[%c0_9, %c0_10] : memref<16x128xf32, #tpu.memory_space<vmem>>, vector<16x128xf32>
    tpu.vector_store %arg5[%c0_9, %c0_10], %9 {strides = array<i32>} : memref<16x128xf32, #tpu.memory_space<vmem>>, vector<16x128xf32>,
    return
  }
  func.func @transform_0(%arg0: i32) -> (i32, i32) {
    %c0_i32 = arith.constant 0 : i32
    %c0_i32_0 = arith.constant 0 : i32
    %c0_i32_1 = arith.constant 0 : i32
    return %c0_i32, %c0_i32_0 : i32, i32
  }
  func.func @transform_1(%arg0: i32) -> (i32, i32) {
    %c0_i32 = arith.constant 0 : i32
    %c0_i32_0 = arith.constant 0 : i32
    %c0_i32_1 = arith.constant 0 : i32
    return %c0_i32, %c0_i32_0 : i32, i32
  }
  func.func @transform_2(%arg0: i32) -> (i32, i32) {
    %c0_i32 = arith.constant 0 : i32
    %c0_i32_0 = arith.constant 0 : i32
    %c0_i32_1 = arith.constant 0 : i32
    return %c0_i32, %c0_i32_0 : i32, i32
  }
  func.func @transform_3(%arg0: i32) -> (i32, i32) {
    %c0_i32 = arith.constant 0 : i32
    %c0_i32_0 = arith.constant 0 : i32
    %c0_i32_1 = arith.constant 0 : i32
    return %c0_i32, %c0_i32_0 : i32, i32
  }
  func.func @transform_4(%arg0: i32) -> (i32, i32) {
    %c0_i32 = arith.constant 0 : i32
    %c0_i32_0 = arith.constant 0 : i32
    %c0_i32_1 = arith.constant 0 : i32
    return %c0_i32, %c0_i32_0 : i32, i32
  }
}

module attributes {stable_mosaic.version = 11 : i64} {
  func.func @kernel(%arg0: i32, %arg1: memref<64x128xbf16, #tpu.memory_space<vmem>>, %arg2: memref<128x128xbf16, #tpu.memory_space<vmem>>, %arg3: memref<32x128xbf16, #tpu.memory_space<vmem>>, %arg4: memref<1x128xf32, #tpu.memory_space<vmem>>, %arg5: memref<32x128xbf16, #tpu.memory_space<vmem>>, %arg6: memref<32x128xbf16, #tpu.memory_space<vmem>>, %arg7: memref<1x128xf32, #tpu.memory_space<vmem>>, %arg8: memref<32x128xbf16, #tpu.memory_space<vmem>>, %arg9: memref<1x128xf32, #tpu.memory_space<vmem>>, %arg10: memref<128x128xbf16, #tpu.memory_space<vmem>>, %arg11: memref<1x128xf32, #tpu.memory_space<vmem>>, %arg12: memref<8x128xf32, #tpu.memory_space<vmem>>, %arg13: memref<64x128xf32, #tpu.memory_space<vmem>>, %arg14: memref<64x32xf32, #tpu.memory_space<vmem>>) attributes {dimension_semantics = [#tpu.dimension_semantics<arbitrary>], iteration_bounds = array<i64: 1>, scalar_prefetch = 0 : i64, scratch_operands = 2 : i64, tpu.core_type = #tpu.core_type<tc>, window_params = [{pipeline_mode = #tpu.pipeline_mode<synchronous>, transform_indices = @transform_0, window_bounds = array<i64: 64, 128>}, {pipeline_mode = #tpu.pipeline_mode<synchronous>, transform_indices = @transform_1, window_bounds = array<i64: 128, 128>}, {pipeline_mode = #tpu.pipeline_mode<synchronous>, transform_indices = @transform_2, window_bounds = array<i64: 32, 128>}, {pipeline_mode = #tpu.pipeline_mode<synchronous>, transform_indices = @transform_3, window_bounds = array<i64: 1, 128>}, {pipeline_mode = #tpu.pipeline_mode<synchronous>, transform_indices = @transform_4, window_bounds = array<i64: 32, 128>}, {pipeline_mode = #tpu.pipeline_mode<synchronous>, transform_indices = @transform_5, window_bounds = array<i64: 32, 128>}, {pipeline_mode = #tpu.pipeline_mode<synchronous>, transform_indices = @transform_6, window_bounds = array<i64: 1, 128>}, {pipeline_mode = #tpu.pipeline_mode<synchronous>, transform_indices = @transform_7, window_bounds = array<i64: 32, 128>}, {pipeline_mode = #tpu.pipeline_mode<synchronous>, transform_indices = @transform_8, window_bounds = array<i64: 1, 128>}, {pipeline_mode = #tpu.pipeline_mode<synchronous>, transform_indices = @transform_9, window_bounds = array<i64: 128, 128>}, {pipeline_mode = #tpu.pipeline_mode<synchronous>, transform_indices = @transform_10, window_bounds = array<i64: 1, 128>}, {pipeline_mode = #tpu.pipeline_mode<synchronous>, transform_indices = @transform_11, window_bounds = array<i64: 8, 128>}]} {
    %0 = tpu.iota {dimensions = array<i32: 1>} : vector<8x128xi32>
    %c64_i32 = arith.constant 64 : i32
    %1 = vector.broadcast %c64_i32 : i32 to vector<8x128xi32>
    %2 = arith.cmpi sge, %0, %1 : vector<8x128xi32>
    %c96_i32 = arith.constant 96 : i32
    %3 = vector.broadcast %c96_i32 : i32 to vector<8x128xi32>
    %4 = arith.cmpi slt, %0, %3 : vector<8x128xi32>
    %5 = arith.andi %2, %4 : vector<8x128xi1>
    %c0 = arith.constant 0 : index
    %c0_0 = arith.constant 0 : index
    %6 = vector.load %arg1[%c0, %c0_0] : memref<64x128xbf16, #tpu.memory_space<vmem>>, vector<64x128xbf16>
    %c0_1 = arith.constant 0 : index
    %c0_2 = arith.constant 0 : index
    %7 = vector.load %arg2[%c0_1, %c0_2] : memref<128x128xbf16, #tpu.memory_space<vmem>>, vector<128x128xbf16>
    %cst = arith.constant dense<0.000000e+00> : vector<64x128xf32>
    %8 = tpu.matmul %6, %7, %cst {dimension_numbers = #tpu.dot_dimension_numbers<[1], [0], [0], [1], [0, 0, 1, 1], [], []>} : vector<64x128xbf16>, vector<128x128xbf16>, vector<64x128xf32> -> vector<64x128xf32>
    %c0_3 = arith.constant 0 : index
    %c0_4 = arith.constant 0 : index
    %9 = vector.load %arg4[%c0_3, %c0_4] : memref<1x128xf32, #tpu.memory_space<vmem>>, vector<1x128xf32>
    %10 = vector.broadcast %9 : vector<1x128xf32> to vector<64x128xf32>
    %11 = arith.addf %8, %10 : vector<64x128xf32>
    %c0_5 = arith.constant 0 : index
    %c0_6 = arith.constant 0 : index
    %12 = vector.load %arg13[%c0_5, %c0_6] : memref<64x128xf32, #tpu.memory_space<vmem>>, vector<64x128xf32>
    tpu.vector_store %arg13[%c0_5, %c0_6], %11 {strides = array<i32>} : memref<64x128xf32, #tpu.memory_space<vmem>>, vector<64x128xf32>,
    %c0_7 = arith.constant 0 : index
    %c0_8 = arith.constant 0 : index
    %13 = vector.load %arg3[%c0_7, %c0_8] : memref<32x128xbf16, #tpu.memory_space<vmem>>, vector<32x128xbf16>
    %cst_9 = arith.constant 0.000000e+00 : f32
    %14 = vector.broadcast %cst_9 : f32 to vector<8x32xf32>
    %c0_i32 = arith.constant 0 : i32
    %c8_i32 = arith.constant 8 : i32
    %15 = arith.muli %c0_i32, %c8_i32 : i32
    %16 = tpu.assume_multiple %15, 8 : i32
    %17 = arith.index_cast %16 : i32 to index
    %c0_10 = arith.constant 0 : index
    %18 = vector.load %arg13[%17, %c0_10] : memref<64x128xf32, #tpu.memory_space<vmem>>, vector<8x128xf32>
    %19 = arith.truncf %14 : vector<8x32xf32> to vector<8x32xbf16>
    %cst_11 = arith.constant dense<0.000000e+00> : vector<8x128xf32>
    %20 = tpu.matmul %19, %13, %cst_11 {dimension_numbers = #tpu.dot_dimension_numbers<[1], [0], [0], [1], [0, 0, 1, 1], [], []>} : vector<8x32xbf16>, vector<32x128xbf16>, vector<8x128xf32> -> vector<8x128xf32>
    %21 = arith.addf %18, %20 : vector<8x128xf32>
    %22 = math.tanh %21 : vector<8x128xf32>
    %23 = arith.negf %21 : vector<8x128xf32>
    %24 = math.exp %23 : vector<8x128xf32>
    %cst_12 = arith.constant 1.000000e+00 : f32
    %25 = vector.broadcast %cst_12 : f32 to vector<8x128xf32>
    %26 = arith.addf %25, %24 : vector<8x128xf32>
    %27 = arith.divf %25, %26 : vector<8x128xf32>
    %28 = arith.select %5, %22, %27 : vector<8x128xi1>, vector<8x128xf32>
    %29 = vector.extract_strided_slice %28 {offsets = [0, 0], sizes = [8, 32], strides = [1, 1]} : vector<8x128xf32> to vector<8x32xf32>
    %30 = vector.extract_strided_slice %28 {offsets = [0, 32], sizes = [8, 32], strides = [1, 1]} : vector<8x128xf32> to vector<8x32xf32>
    %31 = vector.extract_strided_slice %28 {offsets = [0, 64], sizes = [8, 32], strides = [1, 1]} : vector<8x128xf32> to vector<8x32xf32>
    %32 = vector.extract_strided_slice %28 {offsets = [0, 96], sizes = [8, 32], strides = [1, 1]} : vector<8x128xf32> to vector<8x32xf32>
    %33 = arith.mulf %30, %14 : vector<8x32xf32>
    %34 = arith.mulf %29, %31 : vector<8x32xf32>
    %35 = arith.addf %33, %34 : vector<8x32xf32>
    %36 = math.tanh %35 : vector<8x32xf32>
    %37 = arith.mulf %32, %36 : vector<8x32xf32>
    %38 = arith.index_cast %16 : i32 to index
    %c0_13 = arith.constant 0 : index
    %39 = vector.load %arg14[%38, %c0_13] : memref<64x32xf32, #tpu.memory_space<vmem>>, vector<8x32xf32>
    tpu.vector_store %arg14[%38, %c0_13], %37 {strides = array<i32>} : memref<64x32xf32, #tpu.memory_space<vmem>>, vector<8x32xf32>,
    %c1_i32 = arith.constant 1 : i32
    %c8_i32_14 = arith.constant 8 : i32
    %40 = arith.muli %c1_i32, %c8_i32_14 : i32
    %41 = tpu.assume_multiple %40, 8 : i32
    %42 = arith.index_cast %41 : i32 to index
    %c0_15 = arith.constant 0 : index
    %43 = vector.load %arg13[%42, %c0_15] : memref<64x128xf32, #tpu.memory_space<vmem>>, vector<8x128xf32>
    %44 = arith.truncf %37 : vector<8x32xf32> to vector<8x32xbf16>
    %cst_16 = arith.constant dense<0.000000e+00> : vector<8x128xf32>
    %45 = tpu.matmul %44, %13, %cst_16 {dimension_numbers = #tpu.dot_dimension_numbers<[1], [0], [0], [1], [0, 0, 1, 1], [], []>} : vector<8x32xbf16>, vector<32x128xbf16>, vector<8x128xf32> -> vector<8x128xf32>
    %46 = arith.addf %43, %45 : vector<8x128xf32>
    %47 = math.tanh %46 : vector<8x128xf32>
    %48 = arith.negf %46 : vector<8x128xf32>
    %49 = math.exp %48 : vector<8x128xf32>
    %cst_17 = arith.constant 1.000000e+00 : f32
    %50 = vector.broadcast %cst_17 : f32 to vector<8x128xf32>
    %51 = arith.addf %50, %49 : vector<8x128xf32>
    %52 = arith.divf %50, %51 : vector<8x128xf32>
    %53 = arith.select %5, %47, %52 : vector<8x128xi1>, vector<8x128xf32>
    %54 = vector.extract_strided_slice %53 {offsets = [0, 0], sizes = [8, 32], strides = [1, 1]} : vector<8x128xf32> to vector<8x32xf32>
    %55 = vector.extract_strided_slice %53 {offsets = [0, 32], sizes = [8, 32], strides = [1, 1]} : vector<8x128xf32> to vector<8x32xf32>
    %56 = vector.extract_strided_slice %53 {offsets = [0, 64], sizes = [8, 32], strides = [1, 1]} : vector<8x128xf32> to vector<8x32xf32>
    %57 = vector.extract_strided_slice %53 {offsets = [0, 96], sizes = [8, 32], strides = [1, 1]} : vector<8x128xf32> to vector<8x32xf32>
    %58 = arith.mulf %55, %35 : vector<8x32xf32>
    %59 = arith.mulf %54, %56 : vector<8x32xf32>
    %60 = arith.addf %58, %59 : vector<8x32xf32>
    %61 = math.tanh %60 : vector<8x32xf32>
    %62 = arith.mulf %57, %61 : vector<8x32xf32>
    %63 = arith.index_cast %41 : i32 to index
    %c0_18 = arith.constant 0 : index
    %64 = vector.load %arg14[%63, %c0_18] : memref<64x32xf32, #tpu.memory_space<vmem>>, vector<8x32xf32>
    tpu.vector_store %arg14[%63, %c0_18], %62 {strides = array<i32>} : memref<64x32xf32, #tpu.memory_space<vmem>>, vector<8x32xf32>,
    %c2_i32 = arith.constant 2 : i32
    %c8_i32_19 = arith.constant 8 : i32
    %65 = arith.muli %c2_i32, %c8_i32_19 : i32
    %66 = tpu.assume_multiple %65, 8 : i32
    %67 = arith.index_cast %66 : i32 to index
    %c0_20 = arith.constant 0 : index
    %68 = vector.load %arg13[%67, %c0_20] : memref<64x128xf32, #tpu.memory_space<vmem>>, vector<8x128xf32>
    %69 = arith.truncf %62 : vector<8x32xf32> to vector<8x32xbf16>
    %cst_21 = arith.constant dense<0.000000e+00> : vector<8x128xf32>
    %70 = tpu.matmul %69, %13, %cst_21 {dimension_numbers = #tpu.dot_dimension_numbers<[1], [0], [0], [1], [0, 0, 1, 1], [], []>} : vector<8x32xbf16>, vector<32x128xbf16>, vector<8x128xf32> -> vector<8x128xf32>
    %71 = arith.addf %68, %70 : vector<8x128xf32>
    %72 = math.tanh %71 : vector<8x128xf32>
    %73 = arith.negf %71 : vector<8x128xf32>
    %74 = math.exp %73 : vector<8x128xf32>
    %cst_22 = arith.constant 1.000000e+00 : f32
    %75 = vector.broadcast %cst_22 : f32 to vector<8x128xf32>
    %76 = arith.addf %75, %74 : vector<8x128xf32>
    %77 = arith.divf %75, %76 : vector<8x128xf32>
    %78 = arith.select %5, %72, %77 : vector<8x128xi1>, vector<8x128xf32>
    %79 = vector.extract_strided_slice %78 {offsets = [0, 0], sizes = [8, 32], strides = [1, 1]} : vector<8x128xf32> to vector<8x32xf32>
    %80 = vector.extract_strided_slice %78 {offsets = [0, 32], sizes = [8, 32], strides = [1, 1]} : vector<8x128xf32> to vector<8x32xf32>
    %81 = vector.extract_strided_slice %78 {offsets = [0, 64], sizes = [8, 32], strides = [1, 1]} : vector<8x128xf32> to vector<8x32xf32>
    %82 = vector.extract_strided_slice %78 {offsets = [0, 96], sizes = [8, 32], strides = [1, 1]} : vector<8x128xf32> to vector<8x32xf32>
    %83 = arith.mulf %80, %60 : vector<8x32xf32>
    %84 = arith.mulf %79, %81 : vector<8x32xf32>
    %85 = arith.addf %83, %84 : vector<8x32xf32>
    %86 = math.tanh %85 : vector<8x32xf32>
    %87 = arith.mulf %82, %86 : vector<8x32xf32>
    %88 = arith.index_cast %66 : i32 to index
    %c0_23 = arith.constant 0 : index
    %89 = vector.load %arg14[%88, %c0_23] : memref<64x32xf32, #tpu.memory_space<vmem>>, vector<8x32xf32>
    tpu.vector_store %arg14[%88, %c0_23], %87 {strides = array<i32>} : memref<64x32xf32, #tpu.memory_space<vmem>>, vector<8x32xf32>,
    %c3_i32 = arith.constant 3 : i32
    %c8_i32_24 = arith.constant 8 : i32
    %90 = arith.muli %c3_i32, %c8_i32_24 : i32
    %91 = tpu.assume_multiple %90, 8 : i32
    %92 = arith.index_cast %91 : i32 to index
    %c0_25 = arith.constant 0 : index
    %93 = vector.load %arg13[%92, %c0_25] : memref<64x128xf32, #tpu.memory_space<vmem>>, vector<8x128xf32>
    %94 = arith.truncf %87 : vector<8x32xf32> to vector<8x32xbf16>
    %cst_26 = arith.constant dense<0.000000e+00> : vector<8x128xf32>
    %95 = tpu.matmul %94, %13, %cst_26 {dimension_numbers = #tpu.dot_dimension_numbers<[1], [0], [0], [1], [0, 0, 1, 1], [], []>} : vector<8x32xbf16>, vector<32x128xbf16>, vector<8x128xf32> -> vector<8x128xf32>
    %96 = arith.addf %93, %95 : vector<8x128xf32>
    %97 = math.tanh %96 : vector<8x128xf32>
    %98 = arith.negf %96 : vector<8x128xf32>
    %99 = math.exp %98 : vector<8x128xf32>
    %cst_27 = arith.constant 1.000000e+00 : f32
    %100 = vector.broadcast %cst_27 : f32 to vector<8x128xf32>
    %101 = arith.addf %100, %99 : vector<8x128xf32>
    %102 = arith.divf %100, %101 : vector<8x128xf32>
    %103 = arith.select %5, %97, %102 : vector<8x128xi1>, vector<8x128xf32>
    %104 = vector.extract_strided_slice %103 {offsets = [0, 0], sizes = [8, 32], strides = [1, 1]} : vector<8x128xf32> to vector<8x32xf32>
    %105 = vector.extract_strided_slice %103 {offsets = [0, 32], sizes = [8, 32], strides = [1, 1]} : vector<8x128xf32> to vector<8x32xf32>
    %106 = vector.extract_strided_slice %103 {offsets = [0, 64], sizes = [8, 32], strides = [1, 1]} : vector<8x128xf32> to vector<8x32xf32>
    %107 = vector.extract_strided_slice %103 {offsets = [0, 96], sizes = [8, 32], strides = [1, 1]} : vector<8x128xf32> to vector<8x32xf32>
    %108 = arith.mulf %105, %85 : vector<8x32xf32>
    %109 = arith.mulf %104, %106 : vector<8x32xf32>
    %110 = arith.addf %108, %109 : vector<8x32xf32>
    %111 = math.tanh %110 : vector<8x32xf32>
    %112 = arith.mulf %107, %111 : vector<8x32xf32>
    %113 = arith.index_cast %91 : i32 to index
    %c0_28 = arith.constant 0 : index
    %114 = vector.load %arg14[%113, %c0_28] : memref<64x32xf32, #tpu.memory_space<vmem>>, vector<8x32xf32>
    tpu.vector_store %arg14[%113, %c0_28], %112 {strides = array<i32>} : memref<64x32xf32, #tpu.memory_space<vmem>>, vector<8x32xf32>,
    %c4_i32 = arith.constant 4 : i32
    %c8_i32_29 = arith.constant 8 : i32
    %115 = arith.muli %c4_i32, %c8_i32_29 : i32
    %116 = tpu.assume_multiple %115, 8 : i32
    %117 = arith.index_cast %116 : i32 to index
    %c0_30 = arith.constant 0 : index
    %118 = vector.load %arg13[%117, %c0_30] : memref<64x128xf32, #tpu.memory_space<vmem>>, vector<8x128xf32>
    %119 = arith.truncf %112 : vector<8x32xf32> to vector<8x32xbf16>
    %cst_31 = arith.constant dense<0.000000e+00> : vector<8x128xf32>
    %120 = tpu.matmul %119, %13, %cst_31 {dimension_numbers = #tpu.dot_dimension_numbers<[1], [0], [0], [1], [0, 0, 1, 1], [], []>} : vector<8x32xbf16>, vector<32x128xbf16>, vector<8x128xf32> -> vector<8x128xf32>
    %121 = arith.addf %118, %120 : vector<8x128xf32>
    %122 = math.tanh %121 : vector<8x128xf32>
    %123 = arith.negf %121 : vector<8x128xf32>
    %124 = math.exp %123 : vector<8x128xf32>
    %cst_32 = arith.constant 1.000000e+00 : f32
    %125 = vector.broadcast %cst_32 : f32 to vector<8x128xf32>
    %126 = arith.addf %125, %124 : vector<8x128xf32>
    %127 = arith.divf %125, %126 : vector<8x128xf32>
    %128 = arith.select %5, %122, %127 : vector<8x128xi1>, vector<8x128xf32>
    %129 = vector.extract_strided_slice %128 {offsets = [0, 0], sizes = [8, 32], strides = [1, 1]} : vector<8x128xf32> to vector<8x32xf32>
    %130 = vector.extract_strided_slice %128 {offsets = [0, 32], sizes = [8, 32], strides = [1, 1]} : vector<8x128xf32> to vector<8x32xf32>
    %131 = vector.extract_strided_slice %128 {offsets = [0, 64], sizes = [8, 32], strides = [1, 1]} : vector<8x128xf32> to vector<8x32xf32>
    %132 = vector.extract_strided_slice %128 {offsets = [0, 96], sizes = [8, 32], strides = [1, 1]} : vector<8x128xf32> to vector<8x32xf32>
    %133 = arith.mulf %130, %110 : vector<8x32xf32>
    %134 = arith.mulf %129, %131 : vector<8x32xf32>
    %135 = arith.addf %133, %134 : vector<8x32xf32>
    %136 = math.tanh %135 : vector<8x32xf32>
    %137 = arith.mulf %132, %136 : vector<8x32xf32>
    %138 = arith.index_cast %116 : i32 to index
    %c0_33 = arith.constant 0 : index
    %139 = vector.load %arg14[%138, %c0_33] : memref<64x32xf32, #tpu.memory_space<vmem>>, vector<8x32xf32>
    tpu.vector_store %arg14[%138, %c0_33], %137 {strides = array<i32>} : memref<64x32xf32, #tpu.memory_space<vmem>>, vector<8x32xf32>,
    %c5_i32 = arith.constant 5 : i32
    %c8_i32_34 = arith.constant 8 : i32
    %140 = arith.muli %c5_i32, %c8_i32_34 : i32
    %141 = tpu.assume_multiple %140, 8 : i32
    %142 = arith.index_cast %141 : i32 to index
    %c0_35 = arith.constant 0 : index
    %143 = vector.load %arg13[%142, %c0_35] : memref<64x128xf32, #tpu.memory_space<vmem>>, vector<8x128xf32>
    %144 = arith.truncf %137 : vector<8x32xf32> to vector<8x32xbf16>
    %cst_36 = arith.constant dense<0.000000e+00> : vector<8x128xf32>
    %145 = tpu.matmul %144, %13, %cst_36 {dimension_numbers = #tpu.dot_dimension_numbers<[1], [0], [0], [1], [0, 0, 1, 1], [], []>} : vector<8x32xbf16>, vector<32x128xbf16>, vector<8x128xf32> -> vector<8x128xf32>
    %146 = arith.addf %143, %145 : vector<8x128xf32>
    %147 = math.tanh %146 : vector<8x128xf32>
    %148 = arith.negf %146 : vector<8x128xf32>
    %149 = math.exp %148 : vector<8x128xf32>
    %cst_37 = arith.constant 1.000000e+00 : f32
    %150 = vector.broadcast %cst_37 : f32 to vector<8x128xf32>
    %151 = arith.addf %150, %149 : vector<8x128xf32>
    %152 = arith.divf %150, %151 : vector<8x128xf32>
    %153 = arith.select %5, %147, %152 : vector<8x128xi1>, vector<8x128xf32>
    %154 = vector.extract_strided_slice %153 {offsets = [0, 0], sizes = [8, 32], strides = [1, 1]} : vector<8x128xf32> to vector<8x32xf32>
    %155 = vector.extract_strided_slice %153 {offsets = [0, 32], sizes = [8, 32], strides = [1, 1]} : vector<8x128xf32> to vector<8x32xf32>
    %156 = vector.extract_strided_slice %153 {offsets = [0, 64], sizes = [8, 32], strides = [1, 1]} : vector<8x128xf32> to vector<8x32xf32>
    %157 = vector.extract_strided_slice %153 {offsets = [0, 96], sizes = [8, 32], strides = [1, 1]} : vector<8x128xf32> to vector<8x32xf32>
    %158 = arith.mulf %155, %135 : vector<8x32xf32>
    %159 = arith.mulf %154, %156 : vector<8x32xf32>
    %160 = arith.addf %158, %159 : vector<8x32xf32>
    %161 = math.tanh %160 : vector<8x32xf32>
    %162 = arith.mulf %157, %161 : vector<8x32xf32>
    %163 = arith.index_cast %141 : i32 to index
    %c0_38 = arith.constant 0 : index
    %164 = vector.load %arg14[%163, %c0_38] : memref<64x32xf32, #tpu.memory_space<vmem>>, vector<8x32xf32>
    tpu.vector_store %arg14[%163, %c0_38], %162 {strides = array<i32>} : memref<64x32xf32, #tpu.memory_space<vmem>>, vector<8x32xf32>,
    %c6_i32 = arith.constant 6 : i32
    %c8_i32_39 = arith.constant 8 : i32
    %165 = arith.muli %c6_i32, %c8_i32_39 : i32
    %166 = tpu.assume_multiple %165, 8 : i32
    %167 = arith.index_cast %166 : i32 to index
    %c0_40 = arith.constant 0 : index
    %168 = vector.load %arg13[%167, %c0_40] : memref<64x128xf32, #tpu.memory_space<vmem>>, vector<8x128xf32>
    %169 = arith.truncf %162 : vector<8x32xf32> to vector<8x32xbf16>
    %cst_41 = arith.constant dense<0.000000e+00> : vector<8x128xf32>
    %170 = tpu.matmul %169, %13, %cst_41 {dimension_numbers = #tpu.dot_dimension_numbers<[1], [0], [0], [1], [0, 0, 1, 1], [], []>} : vector<8x32xbf16>, vector<32x128xbf16>, vector<8x128xf32> -> vector<8x128xf32>
    %171 = arith.addf %168, %170 : vector<8x128xf32>
    %172 = math.tanh %171 : vector<8x128xf32>
    %173 = arith.negf %171 : vector<8x128xf32>
    %174 = math.exp %173 : vector<8x128xf32>
    %cst_42 = arith.constant 1.000000e+00 : f32
    %175 = vector.broadcast %cst_42 : f32 to vector<8x128xf32>
    %176 = arith.addf %175, %174 : vector<8x128xf32>
    %177 = arith.divf %175, %176 : vector<8x128xf32>
    %178 = arith.select %5, %172, %177 : vector<8x128xi1>, vector<8x128xf32>
    %179 = vector.extract_strided_slice %178 {offsets = [0, 0], sizes = [8, 32], strides = [1, 1]} : vector<8x128xf32> to vector<8x32xf32>
    %180 = vector.extract_strided_slice %178 {offsets = [0, 32], sizes = [8, 32], strides = [1, 1]} : vector<8x128xf32> to vector<8x32xf32>
    %181 = vector.extract_strided_slice %178 {offsets = [0, 64], sizes = [8, 32], strides = [1, 1]} : vector<8x128xf32> to vector<8x32xf32>
    %182 = vector.extract_strided_slice %178 {offsets = [0, 96], sizes = [8, 32], strides = [1, 1]} : vector<8x128xf32> to vector<8x32xf32>
    %183 = arith.mulf %180, %160 : vector<8x32xf32>
    %184 = arith.mulf %179, %181 : vector<8x32xf32>
    %185 = arith.addf %183, %184 : vector<8x32xf32>
    %186 = math.tanh %185 : vector<8x32xf32>
    %187 = arith.mulf %182, %186 : vector<8x32xf32>
    %188 = arith.index_cast %166 : i32 to index
    %c0_43 = arith.constant 0 : index
    %189 = vector.load %arg14[%188, %c0_43] : memref<64x32xf32, #tpu.memory_space<vmem>>, vector<8x32xf32>
    tpu.vector_store %arg14[%188, %c0_43], %187 {strides = array<i32>} : memref<64x32xf32, #tpu.memory_space<vmem>>, vector<8x32xf32>,
    %c7_i32 = arith.constant 7 : i32
    %c8_i32_44 = arith.constant 8 : i32
    %190 = arith.muli %c7_i32, %c8_i32_44 : i32
    %191 = tpu.assume_multiple %190, 8 : i32
    %192 = arith.index_cast %191 : i32 to index
    %c0_45 = arith.constant 0 : index
    %193 = vector.load %arg13[%192, %c0_45] : memref<64x128xf32, #tpu.memory_space<vmem>>, vector<8x128xf32>
    %194 = arith.truncf %187 : vector<8x32xf32> to vector<8x32xbf16>
    %cst_46 = arith.constant dense<0.000000e+00> : vector<8x128xf32>
    %195 = tpu.matmul %194, %13, %cst_46 {dimension_numbers = #tpu.dot_dimension_numbers<[1], [0], [0], [1], [0, 0, 1, 1], [], []>} : vector<8x32xbf16>, vector<32x128xbf16>, vector<8x128xf32> -> vector<8x128xf32>
    %196 = arith.addf %193, %195 : vector<8x128xf32>
    %197 = math.tanh %196 : vector<8x128xf32>
    %198 = arith.negf %196 : vector<8x128xf32>
    %199 = math.exp %198 : vector<8x128xf32>
    %cst_47 = arith.constant 1.000000e+00 : f32
    %200 = vector.broadcast %cst_47 : f32 to vector<8x128xf32>
    %201 = arith.addf %200, %199 : vector<8x128xf32>
    %202 = arith.divf %200, %201 : vector<8x128xf32>
    %203 = arith.select %5, %197, %202 : vector<8x128xi1>, vector<8x128xf32>
    %204 = vector.extract_strided_slice %203 {offsets = [0, 0], sizes = [8, 32], strides = [1, 1]} : vector<8x128xf32> to vector<8x32xf32>
    %205 = vector.extract_strided_slice %203 {offsets = [0, 32], sizes = [8, 32], strides = [1, 1]} : vector<8x128xf32> to vector<8x32xf32>
    %206 = vector.extract_strided_slice %203 {offsets = [0, 64], sizes = [8, 32], strides = [1, 1]} : vector<8x128xf32> to vector<8x32xf32>
    %207 = vector.extract_strided_slice %203 {offsets = [0, 96], sizes = [8, 32], strides = [1, 1]} : vector<8x128xf32> to vector<8x32xf32>
    %208 = arith.mulf %205, %185 : vector<8x32xf32>
    %209 = arith.mulf %204, %206 : vector<8x32xf32>
    %210 = arith.addf %208, %209 : vector<8x32xf32>
    %211 = math.tanh %210 : vector<8x32xf32>
    %212 = arith.mulf %207, %211 : vector<8x32xf32>
    %213 = arith.index_cast %191 : i32 to index
    %c0_48 = arith.constant 0 : index
    %214 = vector.load %arg14[%213, %c0_48] : memref<64x32xf32, #tpu.memory_space<vmem>>, vector<8x32xf32>
    tpu.vector_store %arg14[%213, %c0_48], %212 {strides = array<i32>} : memref<64x32xf32, #tpu.memory_space<vmem>>, vector<8x32xf32>,
    %c8_i32_49 = arith.constant 8 : i32
    %c0_50 = arith.constant 0 : index
    %c0_51 = arith.constant 0 : index
    %215 = vector.load %arg14[%c0_50, %c0_51] : memref<64x32xf32, #tpu.memory_space<vmem>>, vector<64x32xf32>
    %216 = arith.truncf %215 : vector<64x32xf32> to vector<64x32xbf16>
    %c0_52 = arith.constant 0 : index
    %c0_53 = arith.constant 0 : index
    %217 = vector.load %arg5[%c0_52, %c0_53] : memref<32x128xbf16, #tpu.memory_space<vmem>>, vector<32x128xbf16>
    %cst_54 = arith.constant dense<0.000000e+00> : vector<64x128xf32>
    %218 = tpu.matmul %216, %217, %cst_54 {dimension_numbers = #tpu.dot_dimension_numbers<[1], [0], [0], [1], [0, 0, 1, 1], [], []>} : vector<64x32xbf16>, vector<32x128xbf16>, vector<64x128xf32> -> vector<64x128xf32>
    %c0_55 = arith.constant 0 : index
    %c0_56 = arith.constant 0 : index
    %219 = vector.load %arg7[%c0_55, %c0_56] : memref<1x128xf32, #tpu.memory_space<vmem>>, vector<1x128xf32>
    %220 = vector.broadcast %219 : vector<1x128xf32> to vector<64x128xf32>
    %221 = arith.addf %218, %220 : vector<64x128xf32>
    %c0_57 = arith.constant 0 : index
    %c0_58 = arith.constant 0 : index
    %222 = vector.load %arg13[%c0_57, %c0_58] : memref<64x128xf32, #tpu.memory_space<vmem>>, vector<64x128xf32>
    tpu.vector_store %arg13[%c0_57, %c0_58], %221 {strides = array<i32>} : memref<64x128xf32, #tpu.memory_space<vmem>>, vector<64x128xf32>,
    %c0_59 = arith.constant 0 : index
    %c0_60 = arith.constant 0 : index
    %223 = vector.load %arg6[%c0_59, %c0_60] : memref<32x128xbf16, #tpu.memory_space<vmem>>, vector<32x128xbf16>
    %cst_61 = arith.constant 0.000000e+00 : f32
    %224 = vector.broadcast %cst_61 : f32 to vector<8x32xf32>
    %c0_i32_62 = arith.constant 0 : i32
    %c8_i32_63 = arith.constant 8 : i32
    %225 = arith.muli %c0_i32_62, %c8_i32_63 : i32
    %226 = tpu.assume_multiple %225, 8 : i32
    %227 = arith.index_cast %226 : i32 to index
    %c0_64 = arith.constant 0 : index
    %228 = vector.load %arg13[%227, %c0_64] : memref<64x128xf32, #tpu.memory_space<vmem>>, vector<8x128xf32>
    %229 = arith.truncf %224 : vector<8x32xf32> to vector<8x32xbf16>
    %cst_65 = arith.constant dense<0.000000e+00> : vector<8x128xf32>
    %230 = tpu.matmul %229, %223, %cst_65 {dimension_numbers = #tpu.dot_dimension_numbers<[1], [0], [0], [1], [0, 0, 1, 1], [], []>} : vector<8x32xbf16>, vector<32x128xbf16>, vector<8x128xf32> -> vector<8x128xf32>
    %231 = arith.addf %228, %230 : vector<8x128xf32>
    %232 = math.tanh %231 : vector<8x128xf32>
    %233 = arith.negf %231 : vector<8x128xf32>
    %234 = math.exp %233 : vector<8x128xf32>
    %cst_66 = arith.constant 1.000000e+00 : f32
    %235 = vector.broadcast %cst_66 : f32 to vector<8x128xf32>
    %236 = arith.addf %235, %234 : vector<8x128xf32>
    %237 = arith.divf %235, %236 : vector<8x128xf32>
    %238 = arith.select %5, %232, %237 : vector<8x128xi1>, vector<8x128xf32>
    %239 = vector.extract_strided_slice %238 {offsets = [0, 0], sizes = [8, 32], strides = [1, 1]} : vector<8x128xf32> to vector<8x32xf32>
    %240 = vector.extract_strided_slice %238 {offsets = [0, 32], sizes = [8, 32], strides = [1, 1]} : vector<8x128xf32> to vector<8x32xf32>
    %241 = vector.extract_strided_slice %238 {offsets = [0, 64], sizes = [8, 32], strides = [1, 1]} : vector<8x128xf32> to vector<8x32xf32>
    %242 = vector.extract_strided_slice %238 {offsets = [0, 96], sizes = [8, 32], strides = [1, 1]} : vector<8x128xf32> to vector<8x32xf32>
    %243 = arith.mulf %240, %224 : vector<8x32xf32>
    %244 = arith.mulf %239, %241 : vector<8x32xf32>
    %245 = arith.addf %243, %244 : vector<8x32xf32>
    %246 = math.tanh %245 : vector<8x32xf32>
    %247 = arith.mulf %242, %246 : vector<8x32xf32>
    %248 = arith.index_cast %226 : i32 to index
    %c0_67 = arith.constant 0 : index
    %249 = vector.load %arg14[%248, %c0_67] : memref<64x32xf32, #tpu.memory_space<vmem>>, vector<8x32xf32>
    tpu.vector_store %arg14[%248, %c0_67], %247 {strides = array<i32>} : memref<64x32xf32, #tpu.memory_space<vmem>>, vector<8x32xf32>,
    %c1_i32_68 = arith.constant 1 : i32
    %c8_i32_69 = arith.constant 8 : i32
    %250 = arith.muli %c1_i32_68, %c8_i32_69 : i32
    %251 = tpu.assume_multiple %250, 8 : i32
    %252 = arith.index_cast %251 : i32 to index
    %c0_70 = arith.constant 0 : index
    %253 = vector.load %arg13[%252, %c0_70] : memref<64x128xf32, #tpu.memory_space<vmem>>, vector<8x128xf32>
    %254 = arith.truncf %247 : vector<8x32xf32> to vector<8x32xbf16>
    %cst_71 = arith.constant dense<0.000000e+00> : vector<8x128xf32>
    %255 = tpu.matmul %254, %223, %cst_71 {dimension_numbers = #tpu.dot_dimension_numbers<[1], [0], [0], [1], [0, 0, 1, 1], [], []>} : vector<8x32xbf16>, vector<32x128xbf16>, vector<8x128xf32> -> vector<8x128xf32>
    %256 = arith.addf %253, %255 : vector<8x128xf32>
    %257 = math.tanh %256 : vector<8x128xf32>
    %258 = arith.negf %256 : vector<8x128xf32>
    %259 = math.exp %258 : vector<8x128xf32>
    %cst_72 = arith.constant 1.000000e+00 : f32
    %260 = vector.broadcast %cst_72 : f32 to vector<8x128xf32>
    %261 = arith.addf %260, %259 : vector<8x128xf32>
    %262 = arith.divf %260, %261 : vector<8x128xf32>
    %263 = arith.select %5, %257, %262 : vector<8x128xi1>, vector<8x128xf32>
    %264 = vector.extract_strided_slice %263 {offsets = [0, 0], sizes = [8, 32], strides = [1, 1]} : vector<8x128xf32> to vector<8x32xf32>
    %265 = vector.extract_strided_slice %263 {offsets = [0, 32], sizes = [8, 32], strides = [1, 1]} : vector<8x128xf32> to vector<8x32xf32>
    %266 = vector.extract_strided_slice %263 {offsets = [0, 64], sizes = [8, 32], strides = [1, 1]} : vector<8x128xf32> to vector<8x32xf32>
    %267 = vector.extract_strided_slice %263 {offsets = [0, 96], sizes = [8, 32], strides = [1, 1]} : vector<8x128xf32> to vector<8x32xf32>
    %268 = arith.mulf %265, %245 : vector<8x32xf32>
    %269 = arith.mulf %264, %266 : vector<8x32xf32>
    %270 = arith.addf %268, %269 : vector<8x32xf32>
    %271 = math.tanh %270 : vector<8x32xf32>
    %272 = arith.mulf %267, %271 : vector<8x32xf32>
    %273 = arith.index_cast %251 : i32 to index
    %c0_73 = arith.constant 0 : index
    %274 = vector.load %arg14[%273, %c0_73] : memref<64x32xf32, #tpu.memory_space<vmem>>, vector<8x32xf32>
    tpu.vector_store %arg14[%273, %c0_73], %272 {strides = array<i32>} : memref<64x32xf32, #tpu.memory_space<vmem>>, vector<8x32xf32>,
    %c2_i32_74 = arith.constant 2 : i32
    %c8_i32_75 = arith.constant 8 : i32
    %275 = arith.muli %c2_i32_74, %c8_i32_75 : i32
    %276 = tpu.assume_multiple %275, 8 : i32
    %277 = arith.index_cast %276 : i32 to index
    %c0_76 = arith.constant 0 : index
    %278 = vector.load %arg13[%277, %c0_76] : memref<64x128xf32, #tpu.memory_space<vmem>>, vector<8x128xf32>
    %279 = arith.truncf %272 : vector<8x32xf32> to vector<8x32xbf16>
    %cst_77 = arith.constant dense<0.000000e+00> : vector<8x128xf32>
    %280 = tpu.matmul %279, %223, %cst_77 {dimension_numbers = #tpu.dot_dimension_numbers<[1], [0], [0], [1], [0, 0, 1, 1], [], []>} : vector<8x32xbf16>, vector<32x128xbf16>, vector<8x128xf32> -> vector<8x128xf32>
    %281 = arith.addf %278, %280 : vector<8x128xf32>
    %282 = math.tanh %281 : vector<8x128xf32>
    %283 = arith.negf %281 : vector<8x128xf32>
    %284 = math.exp %283 : vector<8x128xf32>
    %cst_78 = arith.constant 1.000000e+00 : f32
    %285 = vector.broadcast %cst_78 : f32 to vector<8x128xf32>
    %286 = arith.addf %285, %284 : vector<8x128xf32>
    %287 = arith.divf %285, %286 : vector<8x128xf32>
    %288 = arith.select %5, %282, %287 : vector<8x128xi1>, vector<8x128xf32>
    %289 = vector.extract_strided_slice %288 {offsets = [0, 0], sizes = [8, 32], strides = [1, 1]} : vector<8x128xf32> to vector<8x32xf32>
    %290 = vector.extract_strided_slice %288 {offsets = [0, 32], sizes = [8, 32], strides = [1, 1]} : vector<8x128xf32> to vector<8x32xf32>
    %291 = vector.extract_strided_slice %288 {offsets = [0, 64], sizes = [8, 32], strides = [1, 1]} : vector<8x128xf32> to vector<8x32xf32>
    %292 = vector.extract_strided_slice %288 {offsets = [0, 96], sizes = [8, 32], strides = [1, 1]} : vector<8x128xf32> to vector<8x32xf32>
    %293 = arith.mulf %290, %270 : vector<8x32xf32>
    %294 = arith.mulf %289, %291 : vector<8x32xf32>
    %295 = arith.addf %293, %294 : vector<8x32xf32>
    %296 = math.tanh %295 : vector<8x32xf32>
    %297 = arith.mulf %292, %296 : vector<8x32xf32>
    %298 = arith.index_cast %276 : i32 to index
    %c0_79 = arith.constant 0 : index
    %299 = vector.load %arg14[%298, %c0_79] : memref<64x32xf32, #tpu.memory_space<vmem>>, vector<8x32xf32>
    tpu.vector_store %arg14[%298, %c0_79], %297 {strides = array<i32>} : memref<64x32xf32, #tpu.memory_space<vmem>>, vector<8x32xf32>,
    %c3_i32_80 = arith.constant 3 : i32
    %c8_i32_81 = arith.constant 8 : i32
    %300 = arith.muli %c3_i32_80, %c8_i32_81 : i32
    %301 = tpu.assume_multiple %300, 8 : i32
    %302 = arith.index_cast %301 : i32 to index
    %c0_82 = arith.constant 0 : index
    %303 = vector.load %arg13[%302, %c0_82] : memref<64x128xf32, #tpu.memory_space<vmem>>, vector<8x128xf32>
    %304 = arith.truncf %297 : vector<8x32xf32> to vector<8x32xbf16>
    %cst_83 = arith.constant dense<0.000000e+00> : vector<8x128xf32>
    %305 = tpu.matmul %304, %223, %cst_83 {dimension_numbers = #tpu.dot_dimension_numbers<[1], [0], [0], [1], [0, 0, 1, 1], [], []>} : vector<8x32xbf16>, vector<32x128xbf16>, vector<8x128xf32> -> vector<8x128xf32>
    %306 = arith.addf %303, %305 : vector<8x128xf32>
    %307 = math.tanh %306 : vector<8x128xf32>
    %308 = arith.negf %306 : vector<8x128xf32>
    %309 = math.exp %308 : vector<8x128xf32>
    %cst_84 = arith.constant 1.000000e+00 : f32
    %310 = vector.broadcast %cst_84 : f32 to vector<8x128xf32>
    %311 = arith.addf %310, %309 : vector<8x128xf32>
    %312 = arith.divf %310, %311 : vector<8x128xf32>
    %313 = arith.select %5, %307, %312 : vector<8x128xi1>, vector<8x128xf32>
    %314 = vector.extract_strided_slice %313 {offsets = [0, 0], sizes = [8, 32], strides = [1, 1]} : vector<8x128xf32> to vector<8x32xf32>
    %315 = vector.extract_strided_slice %313 {offsets = [0, 32], sizes = [8, 32], strides = [1, 1]} : vector<8x128xf32> to vector<8x32xf32>
    %316 = vector.extract_strided_slice %313 {offsets = [0, 64], sizes = [8, 32], strides = [1, 1]} : vector<8x128xf32> to vector<8x32xf32>
    %317 = vector.extract_strided_slice %313 {offsets = [0, 96], sizes = [8, 32], strides = [1, 1]} : vector<8x128xf32> to vector<8x32xf32>
    %318 = arith.mulf %315, %295 : vector<8x32xf32>
    %319 = arith.mulf %314, %316 : vector<8x32xf32>
    %320 = arith.addf %318, %319 : vector<8x32xf32>
    %321 = math.tanh %320 : vector<8x32xf32>
    %322 = arith.mulf %317, %321 : vector<8x32xf32>
    %323 = arith.index_cast %301 : i32 to index
    %c0_85 = arith.constant 0 : index
    %324 = vector.load %arg14[%323, %c0_85] : memref<64x32xf32, #tpu.memory_space<vmem>>, vector<8x32xf32>
    tpu.vector_store %arg14[%323, %c0_85], %322 {strides = array<i32>} : memref<64x32xf32, #tpu.memory_space<vmem>>, vector<8x32xf32>,
    %c4_i32_86 = arith.constant 4 : i32
    %c8_i32_87 = arith.constant 8 : i32
    %325 = arith.muli %c4_i32_86, %c8_i32_87 : i32
    %326 = tpu.assume_multiple %325, 8 : i32
    %327 = arith.index_cast %326 : i32 to index
    %c0_88 = arith.constant 0 : index
    %328 = vector.load %arg13[%327, %c0_88] : memref<64x128xf32, #tpu.memory_space<vmem>>, vector<8x128xf32>
    %329 = arith.truncf %322 : vector<8x32xf32> to vector<8x32xbf16>
    %cst_89 = arith.constant dense<0.000000e+00> : vector<8x128xf32>
    %330 = tpu.matmul %329, %223, %cst_89 {dimension_numbers = #tpu.dot_dimension_numbers<[1], [0], [0], [1], [0, 0, 1, 1], [], []>} : vector<8x32xbf16>, vector<32x128xbf16>, vector<8x128xf32> -> vector<8x128xf32>
    %331 = arith.addf %328, %330 : vector<8x128xf32>
    %332 = math.tanh %331 : vector<8x128xf32>
    %333 = arith.negf %331 : vector<8x128xf32>
    %334 = math.exp %333 : vector<8x128xf32>
    %cst_90 = arith.constant 1.000000e+00 : f32
    %335 = vector.broadcast %cst_90 : f32 to vector<8x128xf32>
    %336 = arith.addf %335, %334 : vector<8x128xf32>
    %337 = arith.divf %335, %336 : vector<8x128xf32>
    %338 = arith.select %5, %332, %337 : vector<8x128xi1>, vector<8x128xf32>
    %339 = vector.extract_strided_slice %338 {offsets = [0, 0], sizes = [8, 32], strides = [1, 1]} : vector<8x128xf32> to vector<8x32xf32>
    %340 = vector.extract_strided_slice %338 {offsets = [0, 32], sizes = [8, 32], strides = [1, 1]} : vector<8x128xf32> to vector<8x32xf32>
    %341 = vector.extract_strided_slice %338 {offsets = [0, 64], sizes = [8, 32], strides = [1, 1]} : vector<8x128xf32> to vector<8x32xf32>
    %342 = vector.extract_strided_slice %338 {offsets = [0, 96], sizes = [8, 32], strides = [1, 1]} : vector<8x128xf32> to vector<8x32xf32>
    %343 = arith.mulf %340, %320 : vector<8x32xf32>
    %344 = arith.mulf %339, %341 : vector<8x32xf32>
    %345 = arith.addf %343, %344 : vector<8x32xf32>
    %346 = math.tanh %345 : vector<8x32xf32>
    %347 = arith.mulf %342, %346 : vector<8x32xf32>
    %348 = arith.index_cast %326 : i32 to index
    %c0_91 = arith.constant 0 : index
    %349 = vector.load %arg14[%348, %c0_91] : memref<64x32xf32, #tpu.memory_space<vmem>>, vector<8x32xf32>
    tpu.vector_store %arg14[%348, %c0_91], %347 {strides = array<i32>} : memref<64x32xf32, #tpu.memory_space<vmem>>, vector<8x32xf32>,
    %c5_i32_92 = arith.constant 5 : i32
    %c8_i32_93 = arith.constant 8 : i32
    %350 = arith.muli %c5_i32_92, %c8_i32_93 : i32
    %351 = tpu.assume_multiple %350, 8 : i32
    %352 = arith.index_cast %351 : i32 to index
    %c0_94 = arith.constant 0 : index
    %353 = vector.load %arg13[%352, %c0_94] : memref<64x128xf32, #tpu.memory_space<vmem>>, vector<8x128xf32>
    %354 = arith.truncf %347 : vector<8x32xf32> to vector<8x32xbf16>
    %cst_95 = arith.constant dense<0.000000e+00> : vector<8x128xf32>
    %355 = tpu.matmul %354, %223, %cst_95 {dimension_numbers = #tpu.dot_dimension_numbers<[1], [0], [0], [1], [0, 0, 1, 1], [], []>} : vector<8x32xbf16>, vector<32x128xbf16>, vector<8x128xf32> -> vector<8x128xf32>
    %356 = arith.addf %353, %355 : vector<8x128xf32>
    %357 = math.tanh %356 : vector<8x128xf32>
    %358 = arith.negf %356 : vector<8x128xf32>
    %359 = math.exp %358 : vector<8x128xf32>
    %cst_96 = arith.constant 1.000000e+00 : f32
    %360 = vector.broadcast %cst_96 : f32 to vector<8x128xf32>
    %361 = arith.addf %360, %359 : vector<8x128xf32>
    %362 = arith.divf %360, %361 : vector<8x128xf32>
    %363 = arith.select %5, %357, %362 : vector<8x128xi1>, vector<8x128xf32>
    %364 = vector.extract_strided_slice %363 {offsets = [0, 0], sizes = [8, 32], strides = [1, 1]} : vector<8x128xf32> to vector<8x32xf32>
    %365 = vector.extract_strided_slice %363 {offsets = [0, 32], sizes = [8, 32], strides = [1, 1]} : vector<8x128xf32> to vector<8x32xf32>
    %366 = vector.extract_strided_slice %363 {offsets = [0, 64], sizes = [8, 32], strides = [1, 1]} : vector<8x128xf32> to vector<8x32xf32>
    %367 = vector.extract_strided_slice %363 {offsets = [0, 96], sizes = [8, 32], strides = [1, 1]} : vector<8x128xf32> to vector<8x32xf32>
    %368 = arith.mulf %365, %345 : vector<8x32xf32>
    %369 = arith.mulf %364, %366 : vector<8x32xf32>
    %370 = arith.addf %368, %369 : vector<8x32xf32>
    %371 = math.tanh %370 : vector<8x32xf32>
    %372 = arith.mulf %367, %371 : vector<8x32xf32>
    %373 = arith.index_cast %351 : i32 to index
    %c0_97 = arith.constant 0 : index
    %374 = vector.load %arg14[%373, %c0_97] : memref<64x32xf32, #tpu.memory_space<vmem>>, vector<8x32xf32>
    tpu.vector_store %arg14[%373, %c0_97], %372 {strides = array<i32>} : memref<64x32xf32, #tpu.memory_space<vmem>>, vector<8x32xf32>,
    %c6_i32_98 = arith.constant 6 : i32
    %c8_i32_99 = arith.constant 8 : i32
    %375 = arith.muli %c6_i32_98, %c8_i32_99 : i32
    %376 = tpu.assume_multiple %375, 8 : i32
    %377 = arith.index_cast %376 : i32 to index
    %c0_100 = arith.constant 0 : index
    %378 = vector.load %arg13[%377, %c0_100] : memref<64x128xf32, #tpu.memory_space<vmem>>, vector<8x128xf32>
    %379 = arith.truncf %372 : vector<8x32xf32> to vector<8x32xbf16>
    %cst_101 = arith.constant dense<0.000000e+00> : vector<8x128xf32>
    %380 = tpu.matmul %379, %223, %cst_101 {dimension_numbers = #tpu.dot_dimension_numbers<[1], [0], [0], [1], [0, 0, 1, 1], [], []>} : vector<8x32xbf16>, vector<32x128xbf16>, vector<8x128xf32> -> vector<8x128xf32>
    %381 = arith.addf %378, %380 : vector<8x128xf32>
    %382 = math.tanh %381 : vector<8x128xf32>
    %383 = arith.negf %381 : vector<8x128xf32>
    %384 = math.exp %383 : vector<8x128xf32>
    %cst_102 = arith.constant 1.000000e+00 : f32
    %385 = vector.broadcast %cst_102 : f32 to vector<8x128xf32>
    %386 = arith.addf %385, %384 : vector<8x128xf32>
    %387 = arith.divf %385, %386 : vector<8x128xf32>
    %388 = arith.select %5, %382, %387 : vector<8x128xi1>, vector<8x128xf32>
    %389 = vector.extract_strided_slice %388 {offsets = [0, 0], sizes = [8, 32], strides = [1, 1]} : vector<8x128xf32> to vector<8x32xf32>
    %390 = vector.extract_strided_slice %388 {offsets = [0, 32], sizes = [8, 32], strides = [1, 1]} : vector<8x128xf32> to vector<8x32xf32>
    %391 = vector.extract_strided_slice %388 {offsets = [0, 64], sizes = [8, 32], strides = [1, 1]} : vector<8x128xf32> to vector<8x32xf32>
    %392 = vector.extract_strided_slice %388 {offsets = [0, 96], sizes = [8, 32], strides = [1, 1]} : vector<8x128xf32> to vector<8x32xf32>
    %393 = arith.mulf %390, %370 : vector<8x32xf32>
    %394 = arith.mulf %389, %391 : vector<8x32xf32>
    %395 = arith.addf %393, %394 : vector<8x32xf32>
    %396 = math.tanh %395 : vector<8x32xf32>
    %397 = arith.mulf %392, %396 : vector<8x32xf32>
    %398 = arith.index_cast %376 : i32 to index
    %c0_103 = arith.constant 0 : index
    %399 = vector.load %arg14[%398, %c0_103] : memref<64x32xf32, #tpu.memory_space<vmem>>, vector<8x32xf32>
    tpu.vector_store %arg14[%398, %c0_103], %397 {strides = array<i32>} : memref<64x32xf32, #tpu.memory_space<vmem>>, vector<8x32xf32>,
    %c7_i32_104 = arith.constant 7 : i32
    %c8_i32_105 = arith.constant 8 : i32
    %400 = arith.muli %c7_i32_104, %c8_i32_105 : i32
    %401 = tpu.assume_multiple %400, 8 : i32
    %402 = arith.index_cast %401 : i32 to index
    %c0_106 = arith.constant 0 : index
    %403 = vector.load %arg13[%402, %c0_106] : memref<64x128xf32, #tpu.memory_space<vmem>>, vector<8x128xf32>
    %404 = arith.truncf %397 : vector<8x32xf32> to vector<8x32xbf16>
    %cst_107 = arith.constant dense<0.000000e+00> : vector<8x128xf32>
    %405 = tpu.matmul %404, %223, %cst_107 {dimension_numbers = #tpu.dot_dimension_numbers<[1], [0], [0], [1], [0, 0, 1, 1], [], []>} : vector<8x32xbf16>, vector<32x128xbf16>, vector<8x128xf32> -> vector<8x128xf32>
    %406 = arith.addf %403, %405 : vector<8x128xf32>
    %407 = math.tanh %406 : vector<8x128xf32>
    %408 = arith.negf %406 : vector<8x128xf32>
    %409 = math.exp %408 : vector<8x128xf32>
    %cst_108 = arith.constant 1.000000e+00 : f32
    %410 = vector.broadcast %cst_108 : f32 to vector<8x128xf32>
    %411 = arith.addf %410, %409 : vector<8x128xf32>
    %412 = arith.divf %410, %411 : vector<8x128xf32>
    %413 = arith.select %5, %407, %412 : vector<8x128xi1>, vector<8x128xf32>
    %414 = vector.extract_strided_slice %413 {offsets = [0, 0], sizes = [8, 32], strides = [1, 1]} : vector<8x128xf32> to vector<8x32xf32>
    %415 = vector.extract_strided_slice %413 {offsets = [0, 32], sizes = [8, 32], strides = [1, 1]} : vector<8x128xf32> to vector<8x32xf32>
    %416 = vector.extract_strided_slice %413 {offsets = [0, 64], sizes = [8, 32], strides = [1, 1]} : vector<8x128xf32> to vector<8x32xf32>
    %417 = vector.extract_strided_slice %413 {offsets = [0, 96], sizes = [8, 32], strides = [1, 1]} : vector<8x128xf32> to vector<8x32xf32>
    %418 = arith.mulf %415, %395 : vector<8x32xf32>
    %419 = arith.mulf %414, %416 : vector<8x32xf32>
    %420 = arith.addf %418, %419 : vector<8x32xf32>
    %421 = math.tanh %420 : vector<8x32xf32>
    %422 = arith.mulf %417, %421 : vector<8x32xf32>
    %423 = arith.index_cast %401 : i32 to index
    %c0_109 = arith.constant 0 : index
    %424 = vector.load %arg14[%423, %c0_109] : memref<64x32xf32, #tpu.memory_space<vmem>>, vector<8x32xf32>
    tpu.vector_store %arg14[%423, %c0_109], %422 {strides = array<i32>} : memref<64x32xf32, #tpu.memory_space<vmem>>, vector<8x32xf32>,
    %c8_i32_110 = arith.constant 8 : i32
    %425 = arith.truncf %422 : vector<8x32xf32> to vector<8x32xbf16>
    %c0_111 = arith.constant 0 : index
    %c0_112 = arith.constant 0 : index
    %426 = vector.load %arg8[%c0_111, %c0_112] : memref<32x128xbf16, #tpu.memory_space<vmem>>, vector<32x128xbf16>
    %cst_113 = arith.constant dense<0.000000e+00> : vector<8x128xf32>
    %427 = tpu.matmul %425, %426, %cst_113 {dimension_numbers = #tpu.dot_dimension_numbers<[1], [0], [0], [1], [0, 0, 1, 1], [], []>} : vector<8x32xbf16>, vector<32x128xbf16>, vector<8x128xf32> -> vector<8x128xf32>
    %c0_114 = arith.constant 0 : index
    %c0_115 = arith.constant 0 : index
    %428 = vector.load %arg9[%c0_114, %c0_115] : memref<1x128xf32, #tpu.memory_space<vmem>>, vector<1x128xf32>
    %429 = vector.broadcast %428 : vector<1x128xf32> to vector<8x128xf32>
    %430 = arith.addf %427, %429 : vector<8x128xf32>
    %cst_116 = arith.constant 0.000000e+00 : f32
    %431 = vector.broadcast %cst_116 : f32 to vector<8x128xf32>
    %432 = arith.maximumf %430, %431 : vector<8x128xf32>
    %433 = arith.truncf %432 : vector<8x128xf32> to vector<8x128xbf16>
    %c0_117 = arith.constant 0 : index
    %c0_118 = arith.constant 0 : index
    %434 = vector.load %arg10[%c0_117, %c0_118] : memref<128x128xbf16, #tpu.memory_space<vmem>>, vector<128x128xbf16>
    %cst_119 = arith.constant dense<0.000000e+00> : vector<8x128xf32>
    %435 = tpu.matmul %433, %434, %cst_119 {dimension_numbers = #tpu.dot_dimension_numbers<[1], [0], [0], [1], [0, 0, 1, 1], [], []>} : vector<8x128xbf16>, vector<128x128xbf16>, vector<8x128xf32> -> vector<8x128xf32>
    %c0_120 = arith.constant 0 : index
    %c0_121 = arith.constant 0 : index
    %436 = vector.load %arg11[%c0_120, %c0_121] : memref<1x128xf32, #tpu.memory_space<vmem>>, vector<1x128xf32>
    %437 = vector.broadcast %436 : vector<1x128xf32> to vector<8x128xf32>
    %438 = arith.addf %435, %437 : vector<8x128xf32>
    %c0_122 = arith.constant 0 : index
    %c0_123 = arith.constant 0 : index
    %439 = vector.load %arg12[%c0_122, %c0_123] : memref<8x128xf32, #tpu.memory_space<vmem>>, vector<8x128xf32>
    tpu.vector_store %arg12[%c0_122, %c0_123], %438 {strides = array<i32>} : memref<8x128xf32, #tpu.memory_space<vmem>>, vector<8x128xf32>,
    return
  }
  func.func @transform_0(%arg0: i32) -> (i32, i32) {
    %c0_i32 = arith.constant 0 : i32
    %c0_i32_0 = arith.constant 0 : i32
    %c0_i32_1 = arith.constant 0 : i32
    return %c0_i32, %c0_i32_0 : i32, i32
  }
  func.func @transform_1(%arg0: i32) -> (i32, i32) {
    %c0_i32 = arith.constant 0 : i32
    %c0_i32_0 = arith.constant 0 : i32
    %c0_i32_1 = arith.constant 0 : i32
    return %c0_i32, %c0_i32_0 : i32, i32
  }
  func.func @transform_2(%arg0: i32) -> (i32, i32) {
    %c0_i32 = arith.constant 0 : i32
    %c0_i32_0 = arith.constant 0 : i32
    %c0_i32_1 = arith.constant 0 : i32
    return %c0_i32, %c0_i32_0 : i32, i32
  }
  func.func @transform_3(%arg0: i32) -> (i32, i32) {
    %c0_i32 = arith.constant 0 : i32
    %c0_i32_0 = arith.constant 0 : i32
    %c0_i32_1 = arith.constant 0 : i32
    return %c0_i32, %c0_i32_0 : i32, i32
  }
  func.func @transform_4(%arg0: i32) -> (i32, i32) {
    %c0_i32 = arith.constant 0 : i32
    %c0_i32_0 = arith.constant 0 : i32
    %c0_i32_1 = arith.constant 0 : i32
    return %c0_i32, %c0_i32_0 : i32, i32
  }
  func.func @transform_5(%arg0: i32) -> (i32, i32) {
    %c0_i32 = arith.constant 0 : i32
    %c0_i32_0 = arith.constant 0 : i32
    %c0_i32_1 = arith.constant 0 : i32
    return %c0_i32, %c0_i32_0 : i32, i32
  }
  func.func @transform_6(%arg0: i32) -> (i32, i32) {
    %c0_i32 = arith.constant 0 : i32
    %c0_i32_0 = arith.constant 0 : i32
    %c0_i32_1 = arith.constant 0 : i32
    return %c0_i32, %c0_i32_0 : i32, i32
  }
  func.func @transform_7(%arg0: i32) -> (i32, i32) {
    %c0_i32 = arith.constant 0 : i32
    %c0_i32_0 = arith.constant 0 : i32
    %c0_i32_1 = arith.constant 0 : i32
    return %c0_i32, %c0_i32_0 : i32, i32
  }
  func.func @transform_8(%arg0: i32) -> (i32, i32) {
    %c0_i32 = arith.constant 0 : i32
    %c0_i32_0 = arith.constant 0 : i32
    %c0_i32_1 = arith.constant 0 : i32
    return %c0_i32, %c0_i32_0 : i32, i32
  }
  func.func @transform_9(%arg0: i32) -> (i32, i32) {
    %c0_i32 = arith.constant 0 : i32
    %c0_i32_0 = arith.constant 0 : i32
    %c0_i32_1 = arith.constant 0 : i32
    return %c0_i32, %c0_i32_0 : i32, i32
  }
  func.func @transform_10(%arg0: i32) -> (i32, i32) {
    %c0_i32 = arith.constant 0 : i32
    %c0_i32_0 = arith.constant 0 : i32
    %c0_i32_1 = arith.constant 0 : i32
    return %c0_i32, %c0_i32_0 : i32, i32
  }
  func.func @transform_11(%arg0: i32) -> (i32, i32) {
    %c0_i32 = arith.constant 0 : i32
    %c0_i32_0 = arith.constant 0 : i32
    %c0_i32_1 = arith.constant 0 : i32
    return %c0_i32, %c0_i32_0 : i32, i32
  }
}

</mosaic_0001>

<llo_original>
// kernel: visual_odometry_forward.3
$region0: #{visual_odometry_forward.3}
  #allocation0 [shape = 'u32[]', space=smem, size = 0x4, offset = 0x4, fixed_abs, tag = 'smem constant byte address 0x4 - core index']
  #allocation1 [shape = 'u32[144,128]{1,0:T(1,128)}', space=vmem, size = 0x12000, scoped, tag = 'internal scratch']
  #allocation2 [shape = 'f32[64,128]{1,0:T(8,128)}', space=vmem, size = 0x8000, scoped, tag = 'scratch operand']
  #allocation3 [shape = 'f32[64,32]{1,0:T(8,128)}', space=vmem, size = 0x8000, scoped, tag = 'scratch operand']
  %s0 = inlined_call_operand.vmem [shape: bf16[64,128], index: 0, kind: input, shape index: {}]
  %s1 = inlined_call_operand.vmem [shape: bf16[128,128], index: 1, kind: input, shape index: {}]
  %s2 = inlined_call_operand.vmem [shape: bf16[32,128], index: 2, kind: input, shape index: {}]
  %s3 = inlined_call_operand.vmem [shape: f32[1,128], index: 3, kind: input, shape index: {}]
  %s4 = inlined_call_operand.vmem [shape: bf16[32,128], index: 4, kind: input, shape index: {}]
  %s5 = inlined_call_operand.vmem [shape: bf16[32,128], index: 5, kind: input, shape index: {}]
  %s6 = inlined_call_operand.vmem [shape: f32[1,128], index: 6, kind: input, shape index: {}]
  %s7 = inlined_call_operand.vmem [shape: bf16[32,128], index: 7, kind: input, shape index: {}]
  %s8 = inlined_call_operand.vmem [shape: f32[1,128], index: 8, kind: input, shape index: {}]
  %s9 = inlined_call_operand.vmem [shape: bf16[128,128], index: 9, kind: input, shape index: {}]
  %s10 = inlined_call_operand.vmem [shape: f32[1,128], index: 10, kind: input, shape index: {}]
  %s11 = inlined_call_operand.vmem [shape: f32[8,128], index: 11, kind: output, shape index: {}]
  %s12 = sld [smem:[#allocation0]]
  $region54: #{visual_odometry_forward.3} parent=0
    _
  %s14 = ssub.s32 1, %s12
  %s15 = scalar_select 0, %s14, %s12
  // Predicated region
  $region2: #{visual_odometry_forward.3} parent=0 // pred_check
    _
  $region3: #{visual_odometry_forward.3} parent=0 // pred_check_branch
    %17 = sbr.rel (0) target = $region5
  $region4: #{visual_odometry_forward.3} parent=0 // pred_region
    _
  $region5: #{visual_odometry_forward.3} parent=0 // pred_fallthru
    _
  // Predicated region
  $region6: #{visual_odometry_forward.3} parent=0 // pred_check
    _
  $region7: #{visual_odometry_forward.3} parent=0 // pred_check_branch
    %19 = sbr.rel (0) target = $region9
  $region8: #{visual_odometry_forward.3} parent=0 // pred_region
    _
  $region9: #{visual_odometry_forward.3} parent=0 // pred_fallthru
    _
  // Predicated region
  $region10: #{visual_odometry_forward.3} parent=0 // pred_check
    _
  $region11: #{visual_odometry_forward.3} parent=0 // pred_check_branch
    %21 = sbr.rel (0) target = $region13
  $region12: #{visual_odometry_forward.3} parent=0 // pred_region
    _
  $region13: #{visual_odometry_forward.3} parent=0 // pred_fallthru
    _
  // Predicated region
  $region14: #{visual_odometry_forward.3} parent=0 // pred_check
    _
  $region15: #{visual_odometry_forward.3} parent=0 // pred_check_branch
    %23 = sbr.rel (0) target = $region17
  $region16: #{visual_odometry_forward.3} parent=0 // pred_region
    _
  $region17: #{visual_odometry_forward.3} parent=0 // pred_fallthru
    _
  // Predicated region
  $region18: #{visual_odometry_forward.3} parent=0 // pred_check
    _
  $region19: #{visual_odometry_forward.3} parent=0 // pred_check_branch
    %25 = sbr.rel (0) target = $region21
  $region20: #{visual_odometry_forward.3} parent=0 // pred_region
    _
  $region21: #{visual_odometry_forward.3} parent=0 // pred_fallthru
    _
  // Predicated region
  $region22: #{visual_odometry_forward.3} parent=0 // pred_check
    _
  $region23: #{visual_odometry_forward.3} parent=0 // pred_check_branch
    %27 = sbr.rel (0) target = $region25
  $region24: #{visual_odometry_forward.3} parent=0 // pred_region
    _
  $region25: #{visual_odometry_forward.3} parent=0 // pred_fallthru
    _
  // Predicated region
  $region26: #{visual_odometry_forward.3} parent=0 // pred_check
    _
  $region27: #{visual_odometry_forward.3} parent=0 // pred_check_branch
    %29 = sbr.rel (0) target = $region29
  $region28: #{visual_odometry_forward.3} parent=0 // pred_region
    _
  $region29: #{visual_odometry_forward.3} parent=0 // pred_fallthru
    _
  // Predicated region
  $region30: #{visual_odometry_forward.3} parent=0 // pred_check
    _
  $region31: #{visual_odometry_forward.3} parent=0 // pred_check_branch
    %31 = sbr.rel (0) target = $region33
  $region32: #{visual_odometry_forward.3} parent=0 // pred_region
    _
  $region33: #{visual_odometry_forward.3} parent=0 // pred_fallthru
    _
  // Predicated region
  $region34: #{visual_odometry_forward.3} parent=0 // pred_check
    _
  $region35: #{visual_odometry_forward.3} parent=0 // pred_check_branch
    %33 = sbr.rel (0) target = $region37
  $region36: #{visual_odometry_forward.3} parent=0 // pred_region
    _
  $region37: #{visual_odometry_forward.3} parent=0 // pred_fallthru
    _
  // Predicated region
  $region38: #{visual_odometry_forward.3} parent=0 // pred_check
    _
  $region39: #{visual_odometry_forward.3} parent=0 // pred_check_branch
    %35 = sbr.rel (0) target = $region41
  $region40: #{visual_odometry_forward.3} parent=0 // pred_region
    _
  $region41: #{visual_odometry_forward.3} parent=0 // pred_fallthru
    _
  // Predicated region
  $region42: #{visual_odometry_forward.3} parent=0 // pred_check
    _
  $region43: #{visual_odometry_forward.3} parent=0 // pred_check_branch
    %37 = sbr.rel (0) target = $region45
  $region44: #{visual_odometry_forward.3} parent=0 // pred_region
    _
  $region45: #{visual_odometry_forward.3} parent=0 // pred_fallthru
    _
  %v39 = vlaneseq
  %v40 = vand.u32 %v39, 127
  %vm41 = vcmp.ge.s32.totalorder %v40, 64
  %vm42 = vcmp.lt.s32.totalorder %v40, 96
  %vm43 = vmand %vm41, %vm42
  %v44 = vld [vmem:[%s0] sm:$0xf]
  %v45 = vld [vmem:[%s0 + $0x4] sm:$0xf]
  %v46 = vld [vmem:[%s0 + $0x8] sm:$0xf]
  %v47 = vld [vmem:[%s0 + $0xc] sm:$0xf]
  %v48 = vld [vmem:[%s0 + $0x10] sm:$0xf]
  %v49 = vld [vmem:[%s0 + $0x14] sm:$0xf]
  %v50 = vld [vmem:[%s0 + $0x18] sm:$0xf]
  %v51 = vld [vmem:[%s0 + $0x1c] sm:$0xf]
  %v52 = vld [vmem:[%s1] sm:$0xf]
  %v53 = vld [vmem:[%s1 + $0x4] sm:$0xf]
  %v54 = vld [vmem:[%s1 + $0x8] sm:$0xf]
  %v55 = vld [vmem:[%s1 + $0xc] sm:$0xf]
  %v56 = vld [vmem:[%s1 + $0x10] sm:$0xf]
  %v57 = vld [vmem:[%s1 + $0x14] sm:$0xf]
  %v58 = vld [vmem:[%s1 + $0x18] sm:$0xf]
  %v59 = vld [vmem:[%s1 + $0x1c] sm:$0xf]
  %v60 = vld [vmem:[%s1 + $0x20] sm:$0xf]
  %v61 = vld [vmem:[%s1 + $0x24] sm:$0xf]
  %v62 = vld [vmem:[%s1 + $0x28] sm:$0xf]
  %v63 = vld [vmem:[%s1 + $0x2c] sm:$0xf]
  %v64 = vld [vmem:[%s1 + $0x30] sm:$0xf]
  %v65 = vld [vmem:[%s1 + $0x34] sm:$0xf]
  %v66 = vld [vmem:[%s1 + $0x38] sm:$0xf]
  %v67 = vld [vmem:[%s1 + $0x3c] sm:$0xf]
  %v68 = vld [vmem:[%s3] sm:$0x1]
  %v70 = vlaneseq
  %v71 = vshrl.u32 %v70, 7
  %v72 = vsub.s32 0, %v71
  %v73 = vrot.slane %v68, %v72
  %v83 = vunpack.c.l.b16 %v44
  %v84 = vunpack.c.l.b16 %v45
  %v85 = vunpack.c.l.b16 %v46
  %v86 = vunpack.c.l.b16 %v47
  %v87 = vunpack.c.l.b16 %v48
  %v88 = vunpack.c.l.b16 %v49
  %v89 = vunpack.c.l.b16 %v50
  %v90 = vunpack.c.l.b16 %v51
  %v91 = vpack.c.b16 %v84, %v83
  %v92 = vpack.c.b16 %v86, %v85
  %v93 = vpack.c.b16 %v88, %v87
  %v94 = vpack.c.b16 %v90, %v89
  %v115 = vunpack.c.l.b16 %v52
  %v116 = vunpack.c.l.b16 %v53
  %v117 = vunpack.c.l.b16 %v54
  %v118 = vunpack.c.l.b16 %v55
  %v119 = vunpack.c.l.b16 %v56
  %v120 = vunpack.c.l.b16 %v57
  %v121 = vunpack.c.l.b16 %v58
  %v122 = vunpack.c.l.b16 %v59
  %v123 = vunpack.c.l.b16 %v60
  %v124 = vunpack.c.l.b16 %v61
  %v125 = vunpack.c.l.b16 %v62
  %v126 = vunpack.c.l.b16 %v63
  %v127 = vunpack.c.l.b16 %v64
  %v128 = vunpack.c.l.b16 %v65
  %v129 = vunpack.c.l.b16 %v66
  %v130 = vunpack.c.l.b16 %v67
  %v131 = vpack.c.b16 %v116, %v115
  %v132 = vpack.c.b16 %v118, %v117
  %v133 = vpack.c.b16 %v120, %v119
  %v134 = vpack.c.b16 %v122, %v121
  %v135 = vpack.c.b16 %v124, %v123
  %v136 = vpack.c.b16 %v126, %v125
  %v137 = vpack.c.b16 %v128, %v127
  %v138 = vpack.c.b16 %v130, %v129
  %147 = vmatprep.subr.bf16.mxu0 0
  %148 = vmatpush1.bf16.msra.mxu0 %v131
  %149 = vmatprep.subr.bf16.mxu0 0
  %150 = vmatpush1.bf16.msra.mxu0 %v132
  %151 = vmatprep.subr.bf16.mxu0 0
  %152 = vmatpush1.bf16.msra.mxu0 %v133
  %153 = vmatprep.subr.bf16.mxu0 0
  %154 = vmatpush1.bf16.msra.mxu0 %v134
  %155 = vmatprep.subr.bf16.mxu0 0
  %156 = vmatpush1.bf16.msra.mxu0 %v135
  %157 = vmatprep.subr.bf16.mxu0 0
  %158 = vmatpush1.bf16.msra.mxu0 %v136
  %159 = vmatprep.subr.bf16.mxu0 0
  %160 = vmatpush1.bf16.msra.mxu0 %v137
  %161 = vmatprep.subr.bf16.mxu0 0
  %162 = vmatpush1.bf16.msra.mxu0 %v138
  %163 = vmatprep.subr.bf16.mxu0 0
  %164 = vmatpush1.bf16.msra.mxu0 0
  %165 = vmatprep.subr.bf16.mxu0 0
  %166 = vmatpush1.bf16.msra.mxu0 0
  %167 = vmatprep.subr.bf16.mxu0 0
  %168 = vmatpush1.bf16.msra.mxu0 0
  %169 = vmatprep.subr.bf16.mxu0 0
  %170 = vmatpush1.bf16.msra.mxu0 0
  %171 = vmatprep.subr.bf16.mxu0 0
  %172 = vmatpush1.bf16.msra.mxu0 0
  %173 = vmatprep.subr.bf16.mxu0 0
  %174 = vmatpush1.bf16.msra.mxu0 0
  %175 = vmatprep.subr.bf16.mxu0 0
  %176 = vmatpush1.bf16.msra.mxu0 0
  %177 = vmatprep.subr.bf16.mxu0 0
  %178 = vmatpush1.bf16.msra.mxu0 0
  %179 = vmatprep.mubr.bf16.mxu0 0
  %180 = vmatmul.mubr.bf16.gmra.mrb[0].mxu0 %v91
  %v181 = vpop.f32.mrb[0].mxu0
  %v182 = vadd.f32 %v73, %v181
  %v183 = vpop.f32.mrb[0].mxu0
  %v184 = vpop.f32.mrb[0].mxu0
  %v185 = vadd.f32 %v73, %v184
  %v186 = vpop.f32.mrb[0].mxu0
  %187 = vmatprep.mubr.bf16.mxu0 0
  %188 = vmatmul.mubr.bf16.gmra.mrb[0].mxu0 %v92
  %v189 = vpop.f32.mrb[0].mxu0
  %v190 = vadd.f32 %v73, %v189
  %v191 = vpop.f32.mrb[0].mxu0
  %v192 = vpop.f32.mrb[0].mxu0
  %v193 = vadd.f32 %v73, %v192
  %v194 = vpop.f32.mrb[0].mxu0
  %195 = vmatprep.mubr.bf16.mxu0 0
  %196 = vmatmul.mubr.bf16.gmra.mrb[0].mxu0 %v93
  %v197 = vpop.f32.mrb[0].mxu0
  %v198 = vadd.f32 %v73, %v197
  %v199 = vpop.f32.mrb[0].mxu0
  %v200 = vpop.f32.mrb[0].mxu0
  %v201 = vadd.f32 %v73, %v200
  %v202 = vpop.f32.mrb[0].mxu0
  %203 = vmatprep.mubr.bf16.mxu0 0
  %204 = vmatmul.mubr.bf16.gmra.mrb[0].mxu0 %v94
  %v205 = vpop.f32.mrb[0].mxu0
  %v206 = vadd.f32 %v73, %v205
  %v207 = vpop.f32.mrb[0].mxu0
  %v208 = vpop.f32.mrb[0].mxu0
  %v209 = vadd.f32 %v73, %v208
  %v210 = vpop.f32.mrb[0].mxu0
  %211 = vdwg.mxu0
  %212 = vst [vmem:[#allocation2] sm:$0xff] %v182
  %213 = vst [vmem:[#allocation2 + $0x8] sm:$0xff] %v185
  %214 = vst [vmem:[#allocation2 + $0x10] sm:$0xff] %v190
  %215 = vst [vmem:[#allocation2 + $0x18] sm:$0xff] %v193
  %216 = vst [vmem:[#allocation2 + $0x20] sm:$0xff] %v198
  %217 = vst [vmem:[#allocation2 + $0x28] sm:$0xff] %v201
  %218 = vst [vmem:[#allocation2 + $0x30] sm:$0xff] %v206
  %219 = vst [vmem:[#allocation2 + $0x38] sm:$0xff] %v209
  %v220 = vld [vmem:[%s2] sm:$0xf]
  %v221 = vld [vmem:[%s2 + $0x4] sm:$0xf]
  %v222 = vld [vmem:[%s2 + $0x8] sm:$0xf]
  %v223 = vld [vmem:[%s2 + $0xc] sm:$0xf]
  %v224 = vld [vmem:[#allocation2] sm:$0xff]
  %v229 = vunpack.c.l.b16 %v220
  %v230 = vunpack.c.l.b16 %v221
  %v231 = vunpack.c.l.b16 %v222
  %v232 = vunpack.c.l.b16 %v223
  %v233 = vpack.c.b16 %v230, %v229
  %v234 = vpack.c.b16 %v232, %v231
  %vm237 = vcmask 261120
  %v239 = vsel %vm237, 0, 0
  %241 = vmatprep.subr.bf16.mxu0 0
  %242 = vmatpush1.bf16.msra.mxu0 %v233
  %243 = vmatprep.subr.bf16.mxu0 0
  %244 = vmatpush1.bf16.msra.mxu0 %v234
  %245 = vmatprep.subr.bf16.mxu0 0
  %246 = vmatpush1.bf16.msra.mxu0 0
  %247 = vmatprep.subr.bf16.mxu0 0
  %248 = vmatpush1.bf16.msra.mxu0 0
  %249 = vmatprep.subr.bf16.mxu0 0
  %250 = vmatpush1.bf16.msra.mxu0 0
  %251 = vmatprep.subr.bf16.mxu0 0
  %252 = vmatpush1.bf16.msra.mxu0 0
  %253 = vmatprep.subr.bf16.mxu0 0
  %254 = vmatpush1.bf16.msra.mxu0 0
  %255 = vmatprep.subr.bf16.mxu0 0
  %256 = vmatpush1.bf16.msra.mxu0 0
  %257 = vmatprep.subr.bf16.mxu0 0
  %258 = vmatpush1.bf16.msra.mxu0 0
  %259 = vmatprep.subr.bf16.mxu0 0
  %260 = vmatpush1.bf16.msra.mxu0 0
  %261 = vmatprep.subr.bf16.mxu0 0
  %262 = vmatpush1.bf16.msra.mxu0 0
  %263 = vmatprep.subr.bf16.mxu0 0
  %264 = vmatpush1.bf16.msra.mxu0 0
  %265 = vmatprep.subr.bf16.mxu0 0
  %266 = vmatpush1.bf16.msra.mxu0 0
  %267 = vmatprep.subr.bf16.mxu0 0
  %268 = vmatpush1.bf16.msra.mxu0 0
  %269 = vmatprep.subr.bf16.mxu0 0
  %270 = vmatpush1.bf16.msra.mxu0 0
  %271 = vmatprep.subr.bf16.mxu0 0
  %272 = vmatpush1.bf16.msra.mxu0 0
  %273 = vmatprep.mubr.bf16.mxu0 0
  %274 = vmatmul.mubr.bf16.gmra.mrb[0].mxu0 %v239
  %v275 = vpop.f32.mrb[0].mxu0
  %v276 = vadd.f32 0.0, %v275
  %v277 = vpop.f32.mrb[0].mxu0
  %v278 = vpop.f32.mrb[0].mxu0
  %v279 = vpop.f32.mrb[0].mxu0
  %280 = vdwg.mxu0
  %v281 = vadd.f32 %v224, %v276
  %v282 = vtanh.pop %v281
  %v283 = vxor.u32 %v281, 2147483648
  %v284 = vmul.f32 %v283, 1.442695
  %v285 = vpow.pop %v284
  %v286 = vadd.f32 %v285, 1.0
  %v287 = vrcp.pop %v286
  %v288 = vmul.f32 1.0, %v287
  %v289 = vsel %vm43, %v282, %v288
  %v290 = vmul.f32 %v289, 0.0
  %292 = vrot.lane.b32.xlu0 %v289, 64
  %v293 = vpop.permute.xlu0 %292
  %v295 = vmul.f32 %v289, %v293
  %297 = vrot.lane.b32.xlu0 %v295, 32
  %v298 = vpop.permute.xlu0 %297
  %v300 = vadd.f32 %v290, %v298
  %v301 = vtanh.pop %v300
  %303 = vrot.lane.b32.xlu0 %v301, 64
  %v304 = vpop.permute.xlu0 %303
  %v306 = vmul.f32 %v289, %v304
  %308 = vrot.lane.b32.xlu0 %v306, 32
  %v309 = vpop.permute.xlu0 %308
  %311 = vst.msk [vmem:[#allocation3] sm:$0xff] %vm237, %v309
  %s312 = scalar_lea.vmem [#allocation2], 8
  %v313 = vld [vmem:[%s312] sm:$0xff]
  %v314 = vpack.c.bf16 %v306, %v306
  %316 = vrot.lane.b32.xlu0 %v314, 32
  %v317 = vpop.permute.xlu0 %316
  %v319 = vsel %vm237, %v317, 0
  %321 = vmatprep.subr.bf16.mxu0 0
  %322 = vmatpush1.bf16.msra.mxu0 %v233
  %323 = vmatprep.subr.bf16.mxu0 0
  %324 = vmatpush1.bf16.msra.mxu0 %v234
  %325 = vmatprep.subr.bf16.mxu0 0
  %326 = vmatpush1.bf16.msra.mxu0 0
  %327 = vmatprep.subr.bf16.mxu0 0
  %328 = vmatpush1.bf16.msra.mxu0 0
  %329 = vmatprep.subr.bf16.mxu0 0
  %330 = vmatpush1.bf16.msra.mxu0 0
  %331 = vmatprep.subr.bf16.mxu0 0
  %332 = vmatpush1.bf16.msra.mxu0 0
  %333 = vmatprep.subr.bf16.mxu0 0
  %334 = vmatpush1.bf16.msra.mxu0 0
  %335 = vmatprep.subr.bf16.mxu0 0
  %336 = vmatpush1.bf16.msra.mxu0 0
  %337 = vmatprep.subr.bf16.mxu0 0
  %338 = vmatpush1.bf16.msra.mxu0 0
  %339 = vmatprep.subr.bf16.mxu0 0
  %340 = vmatpush1.bf16.msra.mxu0 0
  %341 = vmatprep.subr.bf16.mxu0 0
  %342 = vmatpush1.bf16.msra.mxu0 0
  %343 = vmatprep.subr.bf16.mxu0 0
  %344 = vmatpush1.bf16.msra.mxu0 0
  %345 = vmatprep.subr.bf16.mxu0 0
  %346 = vmatpush1.bf16.msra.mxu0 0
  %347 = vmatprep.subr.bf16.mxu0 0
  %348 = vmatpush1.bf16.msra.mxu0 0
  %349 = vmatprep.subr.bf16.mxu0 0
  %350 = vmatpush1.bf16.msra.mxu0 0
  %351 = vmatprep.subr.bf16.mxu0 0
  %352 = vmatpush1.bf16.msra.mxu0 0
  %353 = vmatprep.mubr.bf16.mxu0 0
  %354 = vmatmul.mubr.bf16.gmra.mrb[0].mxu0 %v319
  %v355 = vpop.f32.mrb[0].mxu0
  %v356 = vadd.f32 0.0, %v355
  %v357 = vpop.f32.mrb[0].mxu0
  %v358 = vpop.f32.mrb[0].mxu0
  %v359 = vpop.f32.mrb[0].mxu0
  %360 = vdwg.mxu0
  %v361 = vadd.f32 %v313, %v356
  %v362 = vtanh.pop %v361
  %v363 = vxor.u32 %v361, 2147483648
  %v364 = vmul.f32 %v363, 1.442695
  %v365 = vpow.pop %v364
  %v366 = vadd.f32 %v365, 1.0
  %v367 = vrcp.pop %v366
  %v368 = vmul.f32 1.0, %v367
  %v369 = vsel %vm43, %v362, %v368
  %v370 = vmul.f32 %v369, %v300
  %372 = vrot.lane.b32.xlu0 %v369, 64
  %v373 = vpop.permute.xlu0 %372
  %v375 = vmul.f32 %v369, %v373
  %377 = vrot.lane.b32.xlu0 %v375, 32
  %v378 = vpop.permute.xlu0 %377
  %v380 = vadd.f32 %v370, %v378
  %v381 = vtanh.pop %v380
  %383 = vrot.lane.b32.xlu0 %v381, 64
  %v384 = vpop.permute.xlu0 %383
  %v386 = vmul.f32 %v369, %v384
  %388 = vrot.lane.b32.xlu0 %v386, 32
  %v389 = vpop.permute.xlu0 %388
  %s391 = scalar_lea.vmem [#allocation3], 8
  %392 = vst.msk [vmem:[%s391] sm:$0xff] %vm237, %v389
  %s393 = scalar_lea.vmem [#allocation2], 16
  %v394 = vld [vmem:[%s393] sm:$0xff]
  %v395 = vpack.c.bf16 %v386, %v386
  %397 = vrot.lane.b32.xlu0 %v395, 32
  %v398 = vpop.permute.xlu0 %397
  %v400 = vsel %vm237, %v398, 0
  %402 = vmatprep.subr.bf16.mxu0 0
  %403 = vmatpush1.bf16.msra.mxu0 %v233
  %404 = vmatprep.subr.bf16.mxu0 0
  %405 = vmatpush1.bf16.msra.mxu0 %v234
  %406 = vmatprep.subr.bf16.mxu0 0
  %407 = vmatpush1.bf16.msra.mxu0 0
  %408 = vmatprep.subr.bf16.mxu0 0
  %409 = vmatpush1.bf16.msra.mxu0 0
  %410 = vmatprep.subr.bf16.mxu0 0
  %411 = vmatpush1.bf16.msra.mxu0 0
  %412 = vmatprep.subr.bf16.mxu0 0
  %413 = vmatpush1.bf16.msra.mxu0 0
  %414 = vmatprep.subr.bf16.mxu0 0
  %415 = vmatpush1.bf16.msra.mxu0 0
  %416 = vmatprep.subr.bf16.mxu0 0
  %417 = vmatpush1.bf16.msra.mxu0 0
  %418 = vmatprep.subr.bf16.mxu0 0
  %419 = vmatpush1.bf16.msra.mxu0 0
  %420 = vmatprep.subr.bf16.mxu0 0
  %421 = vmatpush1.bf16.msra.mxu0 0
  %422 = vmatprep.subr.bf16.mxu0 0
  %423 = vmatpush1.bf16.msra.mxu0 0
  %424 = vmatprep.subr.bf16.mxu0 0
  %425 = vmatpush1.bf16.msra.mxu0 0
  %426 = vmatprep.subr.bf16.mxu0 0
  %427 = vmatpush1.bf16.msra.mxu0 0
  %428 = vmatprep.subr.bf16.mxu0 0
  %429 = vmatpush1.bf16.msra.mxu0 0
  %430 = vmatprep.subr.bf16.mxu0 0
  %431 = vmatpush1.bf16.msra.mxu0 0
  %432 = vmatprep.subr.bf16.mxu0 0
  %433 = vmatpush1.bf16.msra.mxu0 0
  %434 = vmatprep.mubr.bf16.mxu0 0
  %435 = vmatmul.mubr.bf16.gmra.mrb[0].mxu0 %v400
  %v436 = vpop.f32.mrb[0].mxu0
  %v437 = vadd.f32 0.0, %v436
  %v438 = vpop.f32.mrb[0].mxu0
  %v439 = vpop.f32.mrb[0].mxu0
  %v440 = vpop.f32.mrb[0].mxu0
  %441 = vdwg.mxu0
  %v442 = vadd.f32 %v394, %v437
  %v443 = vtanh.pop %v442
  %v444 = vxor.u32 %v442, 2147483648
  %v445 = vmul.f32 %v444, 1.442695
  %v446 = vpow.pop %v445
  %v447 = vadd.f32 %v446, 1.0
  %v448 = vrcp.pop %v447
  %v449 = vmul.f32 1.0, %v448
  %v450 = vsel %vm43, %v443, %v449
  %v451 = vmul.f32 %v450, %v380
  %453 = vrot.lane.b32.xlu0 %v450, 64
  %v454 = vpop.permute.xlu0 %453
  %v456 = vmul.f32 %v450, %v454
  %458 = vrot.lane.b32.xlu0 %v456, 32
  %v459 = vpop.permute.xlu0 %458
  %v461 = vadd.f32 %v451, %v459
  %v462 = vtanh.pop %v461
  %464 = vrot.lane.b32.xlu0 %v462, 64
  %v465 = vpop.permute.xlu0 %464
  %v467 = vmul.f32 %v450, %v465
  %469 = vrot.lane.b32.xlu0 %v467, 32
  %v470 = vpop.permute.xlu0 %469
  %s472 = scalar_lea.vmem [#allocation3], 16
  %473 = vst.msk [vmem:[%s472] sm:$0xff] %vm237, %v470
  %s474 = scalar_lea.vmem [#allocation2], 24
  %v475 = vld [vmem:[%s474] sm:$0xff]
  %v476 = vpack.c.bf16 %v467, %v467
  %478 = vrot.lane.b32.xlu0 %v476, 32
  %v479 = vpop.permute.xlu0 %478
  %v481 = vsel %vm237, %v479, 0
  %483 = vmatprep.subr.bf16.mxu0 0
  %484 = vmatpush1.bf16.msra.mxu0 %v233
  %485 = vmatprep.subr.bf16.mxu0 0
  %486 = vmatpush1.bf16.msra.mxu0 %v234
  %487 = vmatprep.subr.bf16.mxu0 0
  %488 = vmatpush1.bf16.msra.mxu0 0
  %489 = vmatprep.subr.bf16.mxu0 0
  %490 = vmatpush1.bf16.msra.mxu0 0
  %491 = vmatprep.subr.bf16.mxu0 0
  %492 = vmatpush1.bf16.msra.mxu0 0
  %493 = vmatprep.subr.bf16.mxu0 0
  %494 = vmatpush1.bf16.msra.mxu0 0
  %495 = vmatprep.subr.bf16.mxu0 0
  %496 = vmatpush1.bf16.msra.mxu0 0
  %497 = vmatprep.subr.bf16.mxu0 0
  %498 = vmatpush1.bf16.msra.mxu0 0
  %499 = vmatprep.subr.bf16.mxu0 0
  %500 = vmatpush1.bf16.msra.mxu0 0
  %501 = vmatprep.subr.bf16.mxu0 0
  %502 = vmatpush1.bf16.msra.mxu0 0
  %503 = vmatprep.subr.bf16.mxu0 0
  %504 = vmatpush1.bf16.msra.mxu0 0
  %505 = vmatprep.subr.bf16.mxu0 0
  %506 = vmatpush1.bf16.msra.mxu0 0
  %507 = vmatprep.subr.bf16.mxu0 0
  %508 = vmatpush1.bf16.msra.mxu0 0
  %509 = vmatprep.subr.bf16.mxu0 0
  %510 = vmatpush1.bf16.msra.mxu0 0
  %511 = vmatprep.subr.bf16.mxu0 0
  %512 = vmatpush1.bf16.msra.mxu0 0
  %513 = vmatprep.subr.bf16.mxu0 0
  %514 = vmatpush1.bf16.msra.mxu0 0
  %515 = vmatprep.mubr.bf16.mxu0 0
  %516 = vmatmul.mubr.bf16.gmra.mrb[0].mxu0 %v481
  %v517 = vpop.f32.mrb[0].mxu0
  %v518 = vadd.f32 0.0, %v517
  %v519 = vpop.f32.mrb[0].mxu0
  %v520 = vpop.f32.mrb[0].mxu0
  %v521 = vpop.f32.mrb[0].mxu0
  %522 = vdwg.mxu0
  %v523 = vadd.f32 %v475, %v518
  %v524 = vtanh.pop %v523
  %v525 = vxor.u32 %v523, 2147483648
  %v526 = vmul.f32 %v525, 1.442695
  %v527 = vpow.pop %v526
  %v528 = vadd.f32 %v527, 1.0
  %v529 = vrcp.pop %v528
  %v530 = vmul.f32 1.0, %v529
  %v531 = vsel %vm43, %v524, %v530
  %v532 = vmul.f32 %v531, %v461
  %534 = vrot.lane.b32.xlu0 %v531, 64
  %v535 = vpop.permute.xlu0 %534
  %v537 = vmul.f32 %v531, %v535
  %539 = vrot.lane.b32.xlu0 %v537, 32
  %v540 = vpop.permute.xlu0 %539
  %v542 = vadd.f32 %v532, %v540
  %v543 = vtanh.pop %v542
  %545 = vrot.lane.b32.xlu0 %v543, 64
  %v546 = vpop.permute.xlu0 %545
  %v548 = vmul.f32 %v531, %v546
  %550 = vrot.lane.b32.xlu0 %v548, 32
  %v551 = vpop.permute.xlu0 %550
  %s553 = scalar_lea.vmem [#allocation3], 24
  %554 = vst.msk [vmem:[%s553] sm:$0xff] %vm237, %v551
  %s555 = scalar_lea.vmem [#allocation2], 32
  %v556 = vld [vmem:[%s555] sm:$0xff]
  %v557 = vpack.c.bf16 %v548, %v548
  %559 = vrot.lane.b32.xlu0 %v557, 32
  %v560 = vpop.permute.xlu0 %559
  %v562 = vsel %vm237, %v560, 0
  %564 = vmatprep.subr.bf16.mxu0 0
  %565 = vmatpush1.bf16.msra.mxu0 %v233
  %566 = vmatprep.subr.bf16.mxu0 0
  %567 = vmatpush1.bf16.msra.mxu0 %v234
  %568 = vmatprep.subr.bf16.mxu0 0
  %569 = vmatpush1.bf16.msra.mxu0 0
  %570 = vmatprep.subr.bf16.mxu0 0
  %571 = vmatpush1.bf16.msra.mxu0 0
  %572 = vmatprep.subr.bf16.mxu0 0
  %573 = vmatpush1.bf16.msra.mxu0 0
  %574 = vmatprep.subr.bf16.mxu0 0
  %575 = vmatpush1.bf16.msra.mxu0 0
  %576 = vmatprep.subr.bf16.mxu0 0
  %577 = vmatpush1.bf16.msra.mxu0 0
  %578 = vmatprep.subr.bf16.mxu0 0
  %579 = vmatpush1.bf16.msra.mxu0 0
  %580 = vmatprep.subr.bf16.mxu0 0
  %581 = vmatpush1.bf16.msra.mxu0 0
  %582 = vmatprep.subr.bf16.mxu0 0
  %583 = vmatpush1.bf16.msra.mxu0 0
  %584 = vmatprep.subr.bf16.mxu0 0
  %585 = vmatpush1.bf16.msra.mxu0 0
  %586 = vmatprep.subr.bf16.mxu0 0
  %587 = vmatpush1.bf16.msra.mxu0 0
  %588 = vmatprep.subr.bf16.mxu0 0
  %589 = vmatpush1.bf16.msra.mxu0 0
  %590 = vmatprep.subr.bf16.mxu0 0
  %591 = vmatpush1.bf16.msra.mxu0 0
  %592 = vmatprep.subr.bf16.mxu0 0
  %593 = vmatpush1.bf16.msra.mxu0 0
  %594 = vmatprep.subr.bf16.mxu0 0
  %595 = vmatpush1.bf16.msra.mxu0 0
  %596 = vmatprep.mubr.bf16.mxu0 0
  %597 = vmatmul.mubr.bf16.gmra.mrb[0].mxu0 %v562
  %v598 = vpop.f32.mrb[0].mxu0
  %v599 = vadd.f32 0.0, %v598
  %v600 = vpop.f32.mrb[0].mxu0
  %v601 = vpop.f32.mrb[0].mxu0
  %v602 = vpop.f32.mrb[0].mxu0
  %603 = vdwg.mxu0
  %v604 = vadd.f32 %v556, %v599
  %v605 = vtanh.pop %v604
  %v606 = vxor.u32 %v604, 2147483648
  %v607 = vmul.f32 %v606, 1.442695
  %v608 = vpow.pop %v607
  %v609 = vadd.f32 %v608, 1.0
  %v610 = vrcp.pop %v609
  %v611 = vmul.f32 1.0, %v610
  %v612 = vsel %vm43, %v605, %v611
  %v613 = vmul.f32 %v612, %v542
  %615 = vrot.lane.b32.xlu0 %v612, 64
  %v616 = vpop.permute.xlu0 %615
  %v618 = vmul.f32 %v612, %v616
  %620 = vrot.lane.b32.xlu0 %v618, 32
  %v621 = vpop.permute.xlu0 %620
  %v623 = vadd.f32 %v613, %v621
  %v624 = vtanh.pop %v623
  %626 = vrot.lane.b32.xlu0 %v624, 64
  %v627 = vpop.permute.xlu0 %626
  %v629 = vmul.f32 %v612, %v627
  %631 = vrot.lane.b32.xlu0 %v629, 32
  %v632 = vpop.permute.xlu0 %631
  %s634 = scalar_lea.vmem [#allocation3], 32
  %635 = vst.msk [vmem:[%s634] sm:$0xff] %vm237, %v632
  %s636 = scalar_lea.vmem [#allocation2], 40
  %v637 = vld [vmem:[%s636] sm:$0xff]
  %v638 = vpack.c.bf16 %v629, %v629
  %640 = vrot.lane.b32.xlu0 %v638, 32
  %v641 = vpop.permute.xlu0 %640
  %v643 = vsel %vm237, %v641, 0
  %645 = vmatprep.subr.bf16.mxu0 0
  %646 = vmatpush1.bf16.msra.mxu0 %v233
  %647 = vmatprep.subr.bf16.mxu0 0
  %648 = vmatpush1.bf16.msra.mxu0 %v234
  %649 = vmatprep.subr.bf16.mxu0 0
  %650 = vmatpush1.bf16.msra.mxu0 0
  %651 = vmatprep.subr.bf16.mxu0 0
  %652 = vmatpush1.bf16.msra.mxu0 0
  %653 = vmatprep.subr.bf16.mxu0 0
  %654 = vmatpush1.bf16.msra.mxu0 0
  %655 = vmatprep.subr.bf16.mxu0 0
  %656 = vmatpush1.bf16.msra.mxu0 0
  %657 = vmatprep.subr.bf16.mxu0 0
  %658 = vmatpush1.bf16.msra.mxu0 0
  %659 = vmatprep.subr.bf16.mxu0 0
  %660 = vmatpush1.bf16.msra.mxu0 0
  %661 = vmatprep.subr.bf16.mxu0 0
  %662 = vmatpush1.bf16.msra.mxu0 0
  %663 = vmatprep.subr.bf16.mxu0 0
  %664 = vmatpush1.bf16.msra.mxu0 0
  %665 = vmatprep.subr.bf16.mxu0 0
  %666 = vmatpush1.bf16.msra.mxu0 0
  %667 = vmatprep.subr.bf16.mxu0 0
  %668 = vmatpush1.bf16.msra.mxu0 0
  %669 = vmatprep.subr.bf16.mxu0 0
  %670 = vmatpush1.bf16.msra.mxu0 0
  %671 = vmatprep.subr.bf16.mxu0 0
  %672 = vmatpush1.bf16.msra.mxu0 0
  %673 = vmatprep.subr.bf16.mxu0 0
  %674 = vmatpush1.bf16.msra.mxu0 0
  %675 = vmatprep.subr.bf16.mxu0 0
  %676 = vmatpush1.bf16.msra.mxu0 0
  %677 = vmatprep.mubr.bf16.mxu0 0
  %678 = vmatmul.mubr.bf16.gmra.mrb[0].mxu0 %v643
  %v679 = vpop.f32.mrb[0].mxu0
  %v680 = vadd.f32 0.0, %v679
  %v681 = vpop.f32.mrb[0].mxu0
  %v682 = vpop.f32.mrb[0].mxu0
  %v683 = vpop.f32.mrb[0].mxu0
  %684 = vdwg.mxu0
  %v685 = vadd.f32 %v637, %v680
  %v686 = vtanh.pop %v685
  %v687 = vxor.u32 %v685, 2147483648
  %v688 = vmul.f32 %v687, 1.442695
  %v689 = vpow.pop %v688
  %v690 = vadd.f32 %v689, 1.0
  %v691 = vrcp.pop %v690
  %v692 = vmul.f32 1.0, %v691
  %v693 = vsel %vm43, %v686, %v692
  %v694 = vmul.f32 %v693, %v623
  %696 = vrot.lane.b32.xlu0 %v693, 64
  %v697 = vpop.permute.xlu0 %696
  %v699 = vmul.f32 %v693, %v697
  %701 = vrot.lane.b32.xlu0 %v699, 32
  %v702 = vpop.permute.xlu0 %701
  %v704 = vadd.f32 %v694, %v702
  %v705 = vtanh.pop %v704
  %707 = vrot.lane.b32.xlu0 %v705, 64
  %v708 = vpop.permute.xlu0 %707
  %v710 = vmul.f32 %v693, %v708
  %712 = vrot.lane.b32.xlu0 %v710, 32
  %v713 = vpop.permute.xlu0 %712
  %s715 = scalar_lea.vmem [#allocation3], 40
  %716 = vst.msk [vmem:[%s715] sm:$0xff] %vm237, %v713
  %s717 = scalar_lea.vmem [#allocation2], 48
  %v718 = vld [vmem:[%s717] sm:$0xff]
  %v719 = vpack.c.bf16 %v710, %v710
  %721 = vrot.lane.b32.xlu0 %v719, 32
  %v722 = vpop.permute.xlu0 %721
  %v724 = vsel %vm237, %v722, 0
  %726 = vmatprep.subr.bf16.mxu0 0
  %727 = vmatpush1.bf16.msra.mxu0 %v233
  %728 = vmatprep.subr.bf16.mxu0 0
  %729 = vmatpush1.bf16.msra.mxu0 %v234
  %730 = vmatprep.subr.bf16.mxu0 0
  %731 = vmatpush1.bf16.msra.mxu0 0
  %732 = vmatprep.subr.bf16.mxu0 0
  %733 = vmatpush1.bf16.msra.mxu0 0
  %734 = vmatprep.subr.bf16.mxu0 0
  %735 = vmatpush1.bf16.msra.mxu0 0
  %736 = vmatprep.subr.bf16.mxu0 0
  %737 = vmatpush1.bf16.msra.mxu0 0
  %738 = vmatprep.subr.bf16.mxu0 0
  %739 = vmatpush1.bf16.msra.mxu0 0
  %740 = vmatprep.subr.bf16.mxu0 0
  %741 = vmatpush1.bf16.msra.mxu0 0
  %742 = vmatprep.subr.bf16.mxu0 0
  %743 = vmatpush1.bf16.msra.mxu0 0
  %744 = vmatprep.subr.bf16.mxu0 0
  %745 = vmatpush1.bf16.msra.mxu0 0
  %746 = vmatprep.subr.bf16.mxu0 0
  %747 = vmatpush1.bf16.msra.mxu0 0
  %748 = vmatprep.subr.bf16.mxu0 0
  %749 = vmatpush1.bf16.msra.mxu0 0
  %750 = vmatprep.subr.bf16.mxu0 0
  %751 = vmatpush1.bf16.msra.mxu0 0
  %752 = vmatprep.subr.bf16.mxu0 0
  %753 = vmatpush1.bf16.msra.mxu0 0
  %754 = vmatprep.subr.bf16.mxu0 0
  %755 = vmatpush1.bf16.msra.mxu0 0
  %756 = vmatprep.subr.bf16.mxu0 0
  %757 = vmatpush1.bf16.msra.mxu0 0
  %758 = vmatprep.mubr.bf16.mxu0 0
  %759 = vmatmul.mubr.bf16.gmra.mrb[0].mxu0 %v724
  %v760 = vpop.f32.mrb[0].mxu0
  %v761 = vadd.f32 0.0, %v760
  %v762 = vpop.f32.mrb[0].mxu0
  %v763 = vpop.f32.mrb[0].mxu0
  %v764 = vpop.f32.mrb[0].mxu0
  %765 = vdwg.mxu0
  %v766 = vadd.f32 %v718, %v761
  %v767 = vtanh.pop %v766
  %v768 = vxor.u32 %v766, 2147483648
  %v769 = vmul.f32 %v768, 1.442695
  %v770 = vpow.pop %v769
  %v771 = vadd.f32 %v770, 1.0
  %v772 = vrcp.pop %v771
  %v773 = vmul.f32 1.0, %v772
  %v774 = vsel %vm43, %v767, %v773
  %v775 = vmul.f32 %v774, %v704
  %777 = vrot.lane.b32.xlu0 %v774, 64
  %v778 = vpop.permute.xlu0 %777
  %v780 = vmul.f32 %v774, %v778
  %782 = vrot.lane.b32.xlu0 %v780, 32
  %v783 = vpop.permute.xlu0 %782
  %v785 = vadd.f32 %v775, %v783
  %v786 = vtanh.pop %v785
  %788 = vrot.lane.b32.xlu0 %v786, 64
  %v789 = vpop.permute.xlu0 %788
  %v791 = vmul.f32 %v774, %v789
  %793 = vrot.lane.b32.xlu0 %v791, 32
  %v794 = vpop.permute.xlu0 %793
  %s796 = scalar_lea.vmem [#allocation3], 48
  %797 = vst.msk [vmem:[%s796] sm:$0xff] %vm237, %v794
  %s798 = scalar_lea.vmem [#allocation2], 56
  %v799 = vld [vmem:[%s798] sm:$0xff]
  %v800 = vpack.c.bf16 %v791, %v791
  %802 = vrot.lane.b32.xlu0 %v800, 32
  %v803 = vpop.permute.xlu0 %802
  %v805 = vsel %vm237, %v803, 0
  %807 = vmatprep.subr.bf16.mxu0 0
  %808 = vmatpush1.bf16.msra.mxu0 %v233
  %809 = vmatprep.subr.bf16.mxu0 0
  %810 = vmatpush1.bf16.msra.mxu0 %v234
  %811 = vmatprep.subr.bf16.mxu0 0
  %812 = vmatpush1.bf16.msra.mxu0 0
  %813 = vmatprep.subr.bf16.mxu0 0
  %814 = vmatpush1.bf16.msra.mxu0 0
  %815 = vmatprep.subr.bf16.mxu0 0
  %816 = vmatpush1.bf16.msra.mxu0 0
  %817 = vmatprep.subr.bf16.mxu0 0
  %818 = vmatpush1.bf16.msra.mxu0 0
  %819 = vmatprep.subr.bf16.mxu0 0
  %820 = vmatpush1.bf16.msra.mxu0 0
  %821 = vmatprep.subr.bf16.mxu0 0
  %822 = vmatpush1.bf16.msra.mxu0 0
  %823 = vmatprep.subr.bf16.mxu0 0
  %824 = vmatpush1.bf16.msra.mxu0 0
  %825 = vmatprep.subr.bf16.mxu0 0
  %826 = vmatpush1.bf16.msra.mxu0 0
  %827 = vmatprep.subr.bf16.mxu0 0
  %828 = vmatpush1.bf16.msra.mxu0 0
  %829 = vmatprep.subr.bf16.mxu0 0
  %830 = vmatpush1.bf16.msra.mxu0 0
  %831 = vmatprep.subr.bf16.mxu0 0
  %832 = vmatpush1.bf16.msra.mxu0 0
  %833 = vmatprep.subr.bf16.mxu0 0
  %834 = vmatpush1.bf16.msra.mxu0 0
  %835 = vmatprep.subr.bf16.mxu0 0
  %836 = vmatpush1.bf16.msra.mxu0 0
  %837 = vmatprep.subr.bf16.mxu0 0
  %838 = vmatpush1.bf16.msra.mxu0 0
  %839 = vmatprep.mubr.bf16.mxu0 0
  %840 = vmatmul.mubr.bf16.gmra.mrb[0].mxu0 %v805
  %v841 = vpop.f32.mrb[0].mxu0
  %v842 = vadd.f32 0.0, %v841
  %v843 = vpop.f32.mrb[0].mxu0
  %v844 = vpop.f32.mrb[0].mxu0
  %v845 = vpop.f32.mrb[0].mxu0
  %846 = vdwg.mxu0
  %v847 = vadd.f32 %v799, %v842
  %v848 = vtanh.pop %v847
  %v849 = vxor.u32 %v847, 2147483648
  %v850 = vmul.f32 %v849, 1.442695
  %v851 = vpow.pop %v850
  %v852 = vadd.f32 %v851, 1.0
  %v853 = vrcp.pop %v852
  %v854 = vmul.f32 1.0, %v853
  %v855 = vsel %vm43, %v848, %v854
  %v856 = vmul.f32 %v855, %v785
  %858 = vrot.lane.b32.xlu0 %v855, 64
  %v859 = vpop.permute.xlu0 %858
  %v861 = vmul.f32 %v855, %v859
  %863 = vrot.lane.b32.xlu0 %v861, 32
  %v864 = vpop.permute.xlu0 %863
  %v866 = vadd.f32 %v856, %v864
  %v867 = vtanh.pop %v866
  %869 = vrot.lane.b32.xlu0 %v867, 64
  %v870 = vpop.permute.xlu0 %869
  %v872 = vmul.f32 %v855, %v870
  %874 = vrot.lane.b32.xlu0 %v872, 32
  %v875 = vpop.permute.xlu0 %874
  %s877 = scalar_lea.vmem [#allocation3], 56
  %878 = vst.msk [vmem:[%s877] sm:$0xff] %vm237, %v875
  %v879 = vld [vmem:[#allocation3] sm:$0xff]
  %v880 = vld [vmem:[#allocation3 + $0x8] sm:$0xff]
  %v881 = vld [vmem:[#allocation3 + $0x10] sm:$0xff]
  %v882 = vld [vmem:[#allocation3 + $0x18] sm:$0xff]
  %v883 = vld [vmem:[#allocation3 + $0x20] sm:$0xff]
  %v884 = vld [vmem:[#allocation3 + $0x28] sm:$0xff]
  %v885 = vld [vmem:[#allocation3 + $0x30] sm:$0xff]
  %v886 = vld [vmem:[#allocation3 + $0x38] sm:$0xff]
  %v887 = vpack.c.bf16 %v880, %v879
  %v888 = vpack.c.bf16 %v882, %v881
  %v889 = vpack.c.bf16 %v884, %v883
  %v890 = vpack.c.bf16 %v886, %v885
  %v891 = vld [vmem:[%s4] sm:$0xf]
  %v892 = vld [vmem:[%s4 + $0x4] sm:$0xf]
  %v893 = vld [vmem:[%s4 + $0x8] sm:$0xf]
  %v894 = vld [vmem:[%s4 + $0xc] sm:$0xf]
  %v895 = vld [vmem:[%s6] sm:$0x1]
  %v897 = vlaneseq
  %v898 = vshrl.u32 %v897, 7
  %v899 = vsub.s32 0, %v898
  %v900 = vrot.slane %v895, %v899
  %v906 = vunpack.c.l.b16 %v891
  %v907 = vunpack.c.l.b16 %v892
  %v908 = vunpack.c.l.b16 %v893
  %v909 = vunpack.c.l.b16 %v894
  %v910 = vpack.c.b16 %v907, %v906
  %v911 = vpack.c.b16 %v909, %v908
  %v915 = vsel %vm237, %v887, 0
  %v918 = vsel %vm237, %v888, 0
  %v921 = vsel %vm237, %v889, 0
  %v924 = vsel %vm237, %v890, 0
  %926 = vmatprep.subr.bf16.mxu0 0
  %927 = vmatpush1.bf16.msra.mxu0 %v910
  %928 = vmatprep.subr.bf16.mxu0 0
  %929 = vmatpush1.bf16.msra.mxu0 %v911
  %930 = vmatprep.subr.bf16.mxu0 0
  %931 = vmatpush1.bf16.msra.mxu0 0
  %932 = vmatprep.subr.bf16.mxu0 0
  %933 = vmatpush1.bf16.msra.mxu0 0
  %934 = vmatprep.subr.bf16.mxu0 0
  %935 = vmatpush1.bf16.msra.mxu0 0
  %936 = vmatprep.subr.bf16.mxu0 0
  %937 = vmatpush1.bf16.msra.mxu0 0
  %938 = vmatprep.subr.bf16.mxu0 0
  %939 = vmatpush1.bf16.msra.mxu0 0
  %940 = vmatprep.subr.bf16.mxu0 0
  %941 = vmatpush1.bf16.msra.mxu0 0
  %942 = vmatprep.subr.bf16.mxu0 0
  %943 = vmatpush1.bf16.msra.mxu0 0
  %944 = vmatprep.subr.bf16.mxu0 0
  %945 = vmatpush1.bf16.msra.mxu0 0
  %946 = vmatprep.subr.bf16.mxu0 0
  %947 = vmatpush1.bf16.msra.mxu0 0
  %948 = vmatprep.subr.bf16.mxu0 0
  %949 = vmatpush1.bf16.msra.mxu0 0
  %950 = vmatprep.subr.bf16.mxu0 0
  %951 = vmatpush1.bf16.msra.mxu0 0
  %952 = vmatprep.subr.bf16.mxu0 0
  %953 = vmatpush1.bf16.msra.mxu0 0
  %954 = vmatprep.subr.bf16.mxu0 0
  %955 = vmatpush1.bf16.msra.mxu0 0
  %956 = vmatprep.subr.bf16.mxu0 0
  %957 = vmatpush1.bf16.msra.mxu0 0
  %958 = vmatprep.mubr.bf16.mxu0 0
  %959 = vmatmul.mubr.bf16.gmra.mrb[0].mxu0 %v915
  %v960 = vpop.f32.mrb[0].mxu0
  %v961 = vadd.f32 %v900, %v960
  %v962 = vpop.f32.mrb[0].mxu0
  %v963 = vpop.f32.mrb[0].mxu0
  %v964 = vadd.f32 %v900, %v963
  %v965 = vpop.f32.mrb[0].mxu0
  %966 = vmatprep.mubr.bf16.mxu0 0
  %967 = vmatmul.mubr.bf16.gmra.mrb[0].mxu0 %v918
  %v968 = vpop.f32.mrb[0].mxu0
  %v969 = vadd.f32 %v900, %v968
  %v970 = vpop.f32.mrb[0].mxu0
  %v971 = vpop.f32.mrb[0].mxu0
  %v972 = vadd.f32 %v900, %v971
  %v973 = vpop.f32.mrb[0].mxu0
  %974 = vmatprep.mubr.bf16.mxu0 0
  %975 = vmatmul.mubr.bf16.gmra.mrb[0].mxu0 %v921
  %v976 = vpop.f32.mrb[0].mxu0
  %v977 = vadd.f32 %v900, %v976
  %v978 = vpop.f32.mrb[0].mxu0
  %v979 = vpop.f32.mrb[0].mxu0
  %v980 = vadd.f32 %v900, %v979
  %v981 = vpop.f32.mrb[0].mxu0
  %982 = vmatprep.mubr.bf16.mxu0 0
  %983 = vmatmul.mubr.bf16.gmra.mrb[0].mxu0 %v924
  %v984 = vpop.f32.mrb[0].mxu0
  %v985 = vadd.f32 %v900, %v984
  %v986 = vpop.f32.mrb[0].mxu0
  %v987 = vpop.f32.mrb[0].mxu0
  %v988 = vadd.f32 %v900, %v987
  %v989 = vpop.f32.mrb[0].mxu0
  %990 = vdwg.mxu0
  %991 = vst [vmem:[#allocation2] sm:$0xff] %v961
  %992 = vst [vmem:[#allocation2 + $0x8] sm:$0xff] %v964
  %993 = vst [vmem:[#allocation2 + $0x10] sm:$0xff] %v969
  %994 = vst [vmem:[#allocation2 + $0x18] sm:$0xff] %v972
  %995 = vst [vmem:[#allocation2 + $0x20] sm:$0xff] %v977
  %996 = vst [vmem:[#allocation2 + $0x28] sm:$0xff] %v980
  %997 = vst [vmem:[#allocation2 + $0x30] sm:$0xff] %v985
  %998 = vst [vmem:[#allocation2 + $0x38] sm:$0xff] %v988
  %v999 = vld [vmem:[%s5] sm:$0xf]
  %v1000 = vld [vmem:[%s5 + $0x4] sm:$0xf]
  %v1001 = vld [vmem:[%s5 + $0x8] sm:$0xf]
  %v1002 = vld [vmem:[%s5 + $0xc] sm:$0xf]
  %v1003 = vld [vmem:[#allocation2] sm:$0xff]
  %v1008 = vunpack.c.l.b16 %v999
  %v1009 = vunpack.c.l.b16 %v1000
  %v1010 = vunpack.c.l.b16 %v1001
  %v1011 = vunpack.c.l.b16 %v1002
  %v1012 = vpack.c.b16 %v1009, %v1008
  %v1013 = vpack.c.b16 %v1011, %v1010
  %1016 = vmatprep.subr.bf16.mxu0 0
  %1017 = vmatpush1.bf16.msra.mxu0 %v1012
  %1018 = vmatprep.subr.bf16.mxu0 0
  %1019 = vmatpush1.bf16.msra.mxu0 %v1013
  %1020 = vmatprep.subr.bf16.mxu0 0
  %1021 = vmatpush1.bf16.msra.mxu0 0
  %1022 = vmatprep.subr.bf16.mxu0 0
  %1023 = vmatpush1.bf16.msra.mxu0 0
  %1024 = vmatprep.subr.bf16.mxu0 0
  %1025 = vmatpush1.bf16.msra.mxu0 0
  %1026 = vmatprep.subr.bf16.mxu0 0
  %1027 = vmatpush1.bf16.msra.mxu0 0
  %1028 = vmatprep.subr.bf16.mxu0 0
  %1029 = vmatpush1.bf16.msra.mxu0 0
  %1030 = vmatprep.subr.bf16.mxu0 0
  %1031 = vmatpush1.bf16.msra.mxu0 0
  %1032 = vmatprep.subr.bf16.mxu0 0
  %1033 = vmatpush1.bf16.msra.mxu0 0
  %1034 = vmatprep.subr.bf16.mxu0 0
  %1035 = vmatpush1.bf16.msra.mxu0 0
  %1036 = vmatprep.subr.bf16.mxu0 0
  %1037 = vmatpush1.bf16.msra.mxu0 0
  %1038 = vmatprep.subr.bf16.mxu0 0
  %1039 = vmatpush1.bf16.msra.mxu0 0
  %1040 = vmatprep.subr.bf16.mxu0 0
  %1041 = vmatpush1.bf16.msra.mxu0 0
  %1042 = vmatprep.subr.bf16.mxu0 0
  %1043 = vmatpush1.bf16.msra.mxu0 0
  %1044 = vmatprep.subr.bf16.mxu0 0
  %1045 = vmatpush1.bf16.msra.mxu0 0
  %1046 = vmatprep.subr.bf16.mxu0 0
  %1047 = vmatpush1.bf16.msra.mxu0 0
  %1048 = vmatprep.mubr.bf16.mxu0 0
  %1049 = vmatmul.mubr.bf16.gmra.mrb[0].mxu0 %v239
  %v1050 = vpop.f32.mrb[0].mxu0
  %v1051 = vadd.f32 0.0, %v1050
  %v1052 = vpop.f32.mrb[0].mxu0
  %v1053 = vpop.f32.mrb[0].mxu0
  %v1054 = vpop.f32.mrb[0].mxu0
  %1055 = vdwg.mxu0
  %v1056 = vadd.f32 %v1003, %v1051
  %v1057 = vtanh.pop %v1056
  %v1058 = vxor.u32 %v1056, 2147483648
  %v1059 = vmul.f32 %v1058, 1.442695
  %v1060 = vpow.pop %v1059
  %v1061 = vadd.f32 %v1060, 1.0
  %v1062 = vrcp.pop %v1061
  %v1063 = vmul.f32 1.0, %v1062
  %v1064 = vsel %vm43, %v1057, %v1063
  %v1065 = vmul.f32 %v1064, 0.0
  %1067 = vrot.lane.b32.xlu0 %v1064, 64
  %v1068 = vpop.permute.xlu0 %1067
  %v1070 = vmul.f32 %v1064, %v1068
  %1072 = vrot.lane.b32.xlu0 %v1070, 32
  %v1073 = vpop.permute.xlu0 %1072
  %v1075 = vadd.f32 %v1065, %v1073
  %v1076 = vtanh.pop %v1075
  %1078 = vrot.lane.b32.xlu0 %v1076, 64
  %v1079 = vpop.permute.xlu0 %1078
  %v1081 = vmul.f32 %v1064, %v1079
  %1083 = vrot.lane.b32.xlu0 %v1081, 32
  %v1084 = vpop.permute.xlu0 %1083
  %1086 = vst.msk [vmem:[#allocation3] sm:$0xff] %vm237, %v1084
  %v1087 = vld [vmem:[%s312] sm:$0xff]
  %v1088 = vpack.c.bf16 %v1081, %v1081
  %1090 = vrot.lane.b32.xlu0 %v1088, 32
  %v1091 = vpop.permute.xlu0 %1090
  %v1093 = vsel %vm237, %v1091, 0
  %1095 = vmatprep.subr.bf16.mxu0 0
  %1096 = vmatpush1.bf16.msra.mxu0 %v1012
  %1097 = vmatprep.subr.bf16.mxu0 0
  %1098 = vmatpush1.bf16.msra.mxu0 %v1013
  %1099 = vmatprep.subr.bf16.mxu0 0
  %1100 = vmatpush1.bf16.msra.mxu0 0
  %1101 = vmatprep.subr.bf16.mxu0 0
  %1102 = vmatpush1.bf16.msra.mxu0 0
  %1103 = vmatprep.subr.bf16.mxu0 0
  %1104 = vmatpush1.bf16.msra.mxu0 0
  %1105 = vmatprep.subr.bf16.mxu0 0
  %1106 = vmatpush1.bf16.msra.mxu0 0
  %1107 = vmatprep.subr.bf16.mxu0 0
  %1108 = vmatpush1.bf16.msra.mxu0 0
  %1109 = vmatprep.subr.bf16.mxu0 0
  %1110 = vmatpush1.bf16.msra.mxu0 0
  %1111 = vmatprep.subr.bf16.mxu0 0
  %1112 = vmatpush1.bf16.msra.mxu0 0
  %1113 = vmatprep.subr.bf16.mxu0 0
  %1114 = vmatpush1.bf16.msra.mxu0 0
  %1115 = vmatprep.subr.bf16.mxu0 0
  %1116 = vmatpush1.bf16.msra.mxu0 0
  %1117 = vmatprep.subr.bf16.mxu0 0
  %1118 = vmatpush1.bf16.msra.mxu0 0
  %1119 = vmatprep.subr.bf16.mxu0 0
  %1120 = vmatpush1.bf16.msra.mxu0 0
  %1121 = vmatprep.subr.bf16.mxu0 0
  %1122 = vmatpush1.bf16.msra.mxu0 0
  %1123 = vmatprep.subr.bf16.mxu0 0
  %1124 = vmatpush1.bf16.msra.mxu0 0
  %1125 = vmatprep.subr.bf16.mxu0 0
  %1126 = vmatpush1.bf16.msra.mxu0 0
  %1127 = vmatprep.mubr.bf16.mxu0 0
  %1128 = vmatmul.mubr.bf16.gmra.mrb[0].mxu0 %v1093
  %v1129 = vpop.f32.mrb[0].mxu0
  %v1130 = vadd.f32 0.0, %v1129
  %v1131 = vpop.f32.mrb[0].mxu0
  %v1132 = vpop.f32.mrb[0].mxu0
  %v1133 = vpop.f32.mrb[0].mxu0
  %1134 = vdwg.mxu0
  %v1135 = vadd.f32 %v1087, %v1130
  %v1136 = vtanh.pop %v1135
  %v1137 = vxor.u32 %v1135, 2147483648
  %v1138 = vmul.f32 %v1137, 1.442695
  %v1139 = vpow.pop %v1138
  %v1140 = vadd.f32 %v1139, 1.0
  %v1141 = vrcp.pop %v1140
  %v1142 = vmul.f32 1.0, %v1141
  %v1143 = vsel %vm43, %v1136, %v1142
  %v1144 = vmul.f32 %v1143, %v1075
  %1146 = vrot.lane.b32.xlu0 %v1143, 64
  %v1147 = vpop.permute.xlu0 %1146
  %v1149 = vmul.f32 %v1143, %v1147
  %1151 = vrot.lane.b32.xlu0 %v1149, 32
  %v1152 = vpop.permute.xlu0 %1151
  %v1154 = vadd.f32 %v1144, %v1152
  %v1155 = vtanh.pop %v1154
  %1157 = vrot.lane.b32.xlu0 %v1155, 64
  %v1158 = vpop.permute.xlu0 %1157
  %v1160 = vmul.f32 %v1143, %v1158
  %1162 = vrot.lane.b32.xlu0 %v1160, 32
  %v1163 = vpop.permute.xlu0 %1162
  %1165 = vst.msk [vmem:[%s391] sm:$0xff] %vm237, %v1163
  %v1166 = vld [vmem:[%s393] sm:$0xff]
  %v1167 = vpack.c.bf16 %v1160, %v1160
  %1169 = vrot.lane.b32.xlu0 %v1167, 32
  %v1170 = vpop.permute.xlu0 %1169
  %v1172 = vsel %vm237, %v1170, 0
  %1174 = vmatprep.subr.bf16.mxu0 0
  %1175 = vmatpush1.bf16.msra.mxu0 %v1012
  %1176 = vmatprep.subr.bf16.mxu0 0
  %1177 = vmatpush1.bf16.msra.mxu0 %v1013
  %1178 = vmatprep.subr.bf16.mxu0 0
  %1179 = vmatpush1.bf16.msra.mxu0 0
  %1180 = vmatprep.subr.bf16.mxu0 0
  %1181 = vmatpush1.bf16.msra.mxu0 0
  %1182 = vmatprep.subr.bf16.mxu0 0
  %1183 = vmatpush1.bf16.msra.mxu0 0
  %1184 = vmatprep.subr.bf16.mxu0 0
  %1185 = vmatpush1.bf16.msra.mxu0 0
  %1186 = vmatprep.subr.bf16.mxu0 0
  %1187 = vmatpush1.bf16.msra.mxu0 0
  %1188 = vmatprep.subr.bf16.mxu0 0
  %1189 = vmatpush1.bf16.msra.mxu0 0
  %1190 = vmatprep.subr.bf16.mxu0 0
  %1191 = vmatpush1.bf16.msra.mxu0 0
  %1192 = vmatprep.subr.bf16.mxu0 0
  %1193 = vmatpush1.bf16.msra.mxu0 0
  %1194 = vmatprep.subr.bf16.mxu0 0
  %1195 = vmatpush1.bf16.msra.mxu0 0
  %1196 = vmatprep.subr.bf16.mxu0 0
  %1197 = vmatpush1.bf16.msra.mxu0 0
  %1198 = vmatprep.subr.bf16.mxu0 0
  %1199 = vmatpush1.bf16.msra.mxu0 0
  %1200 = vmatprep.subr.bf16.mxu0 0
  %1201 = vmatpush1.bf16.msra.mxu0 0
  %1202 = vmatprep.subr.bf16.mxu0 0
  %1203 = vmatpush1.bf16.msra.mxu0 0
  %1204 = vmatprep.subr.bf16.mxu0 0
  %1205 = vmatpush1.bf16.msra.mxu0 0
  %1206 = vmatprep.mubr.bf16.mxu0 0
  %1207 = vmatmul.mubr.bf16.gmra.mrb[0].mxu0 %v1172
  %v1208 = vpop.f32.mrb[0].mxu0
  %v1209 = vadd.f32 0.0, %v1208
  %v1210 = vpop.f32.mrb[0].mxu0
  %v1211 = vpop.f32.mrb[0].mxu0
  %v1212 = vpop.f32.mrb[0].mxu0
  %1213 = vdwg.mxu0
  %v1214 = vadd.f32 %v1166, %v1209
  %v1215 = vtanh.pop %v1214
  %v1216 = vxor.u32 %v1214, 2147483648
  %v1217 = vmul.f32 %v1216, 1.442695
  %v1218 = vpow.pop %v1217
  %v1219 = vadd.f32 %v1218, 1.0
  %v1220 = vrcp.pop %v1219
  %v1221 = vmul.f32 1.0, %v1220
  %v1222 = vsel %vm43, %v1215, %v1221
  %v1223 = vmul.f32 %v1222, %v1154
  %1225 = vrot.lane.b32.xlu0 %v1222, 64
  %v1226 = vpop.permute.xlu0 %1225
  %v1228 = vmul.f32 %v1222, %v1226
  %1230 = vrot.lane.b32.xlu0 %v1228, 32
  %v1231 = vpop.permute.xlu0 %1230
  %v1233 = vadd.f32 %v1223, %v1231
  %v1234 = vtanh.pop %v1233
  %1236 = vrot.lane.b32.xlu0 %v1234, 64
  %v1237 = vpop.permute.xlu0 %1236
  %v1239 = vmul.f32 %v1222, %v1237
  %1241 = vrot.lane.b32.xlu0 %v1239, 32
  %v1242 = vpop.permute.xlu0 %1241
  %1244 = vst.msk [vmem:[%s472] sm:$0xff] %vm237, %v1242
  %v1245 = vld [vmem:[%s474] sm:$0xff]
  %v1246 = vpack.c.bf16 %v1239, %v1239
  %1248 = vrot.lane.b32.xlu0 %v1246, 32
  %v1249 = vpop.permute.xlu0 %1248
  %v1251 = vsel %vm237, %v1249, 0
  %1253 = vmatprep.subr.bf16.mxu0 0
  %1254 = vmatpush1.bf16.msra.mxu0 %v1012
  %1255 = vmatprep.subr.bf16.mxu0 0
  %1256 = vmatpush1.bf16.msra.mxu0 %v1013
  %1257 = vmatprep.subr.bf16.mxu0 0
  %1258 = vmatpush1.bf16.msra.mxu0 0
  %1259 = vmatprep.subr.bf16.mxu0 0
  %1260 = vmatpush1.bf16.msra.mxu0 0
  %1261 = vmatprep.subr.bf16.mxu0 0
  %1262 = vmatpush1.bf16.msra.mxu0 0
  %1263 = vmatprep.subr.bf16.mxu0 0
  %1264 = vmatpush1.bf16.msra.mxu0 0
  %1265 = vmatprep.subr.bf16.mxu0 0
  %1266 = vmatpush1.bf16.msra.mxu0 0
  %1267 = vmatprep.subr.bf16.mxu0 0
  %1268 = vmatpush1.bf16.msra.mxu0 0
  %1269 = vmatprep.subr.bf16.mxu0 0
  %1270 = vmatpush1.bf16.msra.mxu0 0
  %1271 = vmatprep.subr.bf16.mxu0 0
  %1272 = vmatpush1.bf16.msra.mxu0 0
  %1273 = vmatprep.subr.bf16.mxu0 0
  %1274 = vmatpush1.bf16.msra.mxu0 0
  %1275 = vmatprep.subr.bf16.mxu0 0
  %1276 = vmatpush1.bf16.msra.mxu0 0
  %1277 = vmatprep.subr.bf16.mxu0 0
  %1278 = vmatpush1.bf16.msra.mxu0 0
  %1279 = vmatprep.subr.bf16.mxu0 0
  %1280 = vmatpush1.bf16.msra.mxu0 0
  %1281 = vmatprep.subr.bf16.mxu0 0
  %1282 = vmatpush1.bf16.msra.mxu0 0
  %1283 = vmatprep.subr.bf16.mxu0 0
  %1284 = vmatpush1.bf16.msra.mxu0 0
  %1285 = vmatprep.mubr.bf16.mxu0 0
  %1286 = vmatmul.mubr.bf16.gmra.mrb[0].mxu0 %v1251
  %v1287 = vpop.f32.mrb[0].mxu0
  %v1288 = vadd.f32 0.0, %v1287
  %v1289 = vpop.f32.mrb[0].mxu0
  %v1290 = vpop.f32.mrb[0].mxu0
  %v1291 = vpop.f32.mrb[0].mxu0
  %1292 = vdwg.mxu0
  %v1293 = vadd.f32 %v1245, %v1288
  %v1294 = vtanh.pop %v1293
  %v1295 = vxor.u32 %v1293, 2147483648
  %v1296 = vmul.f32 %v1295, 1.442695
  %v1297 = vpow.pop %v1296
  %v1298 = vadd.f32 %v1297, 1.0
  %v1299 = vrcp.pop %v1298
  %v1300 = vmul.f32 1.0, %v1299
  %v1301 = vsel %vm43, %v1294, %v1300
  %v1302 = vmul.f32 %v1301, %v1233
  %1304 = vrot.lane.b32.xlu0 %v1301, 64
  %v1305 = vpop.permute.xlu0 %1304
  %v1307 = vmul.f32 %v1301, %v1305
  %1309 = vrot.lane.b32.xlu0 %v1307, 32
  %v1310 = vpop.permute.xlu0 %1309
  %v1312 = vadd.f32 %v1302, %v1310
  %v1313 = vtanh.pop %v1312
  %1315 = vrot.lane.b32.xlu0 %v1313, 64
  %v1316 = vpop.permute.xlu0 %1315
  %v1318 = vmul.f32 %v1301, %v1316
  %1320 = vrot.lane.b32.xlu0 %v1318, 32
  %v1321 = vpop.permute.xlu0 %1320
  %1323 = vst.msk [vmem:[%s553] sm:$0xff] %vm237, %v1321
  %v1324 = vld [vmem:[%s555] sm:$0xff]
  %v1325 = vpack.c.bf16 %v1318, %v1318
  %1327 = vrot.lane.b32.xlu0 %v1325, 32
  %v1328 = vpop.permute.xlu0 %1327
  %v1330 = vsel %vm237, %v1328, 0
  %1332 = vmatprep.subr.bf16.mxu0 0
  %1333 = vmatpush1.bf16.msra.mxu0 %v1012
  %1334 = vmatprep.subr.bf16.mxu0 0
  %1335 = vmatpush1.bf16.msra.mxu0 %v1013
  %1336 = vmatprep.subr.bf16.mxu0 0
  %1337 = vmatpush1.bf16.msra.mxu0 0
  %1338 = vmatprep.subr.bf16.mxu0 0
  %1339 = vmatpush1.bf16.msra.mxu0 0
  %1340 = vmatprep.subr.bf16.mxu0 0
  %1341 = vmatpush1.bf16.msra.mxu0 0
  %1342 = vmatprep.subr.bf16.mxu0 0
  %1343 = vmatpush1.bf16.msra.mxu0 0
  %1344 = vmatprep.subr.bf16.mxu0 0
  %1345 = vmatpush1.bf16.msra.mxu0 0
  %1346 = vmatprep.subr.bf16.mxu0 0
  %1347 = vmatpush1.bf16.msra.mxu0 0
  %1348 = vmatprep.subr.bf16.mxu0 0
  %1349 = vmatpush1.bf16.msra.mxu0 0
  %1350 = vmatprep.subr.bf16.mxu0 0
  %1351 = vmatpush1.bf16.msra.mxu0 0
  %1352 = vmatprep.subr.bf16.mxu0 0
  %1353 = vmatpush1.bf16.msra.mxu0 0
  %1354 = vmatprep.subr.bf16.mxu0 0
  %1355 = vmatpush1.bf16.msra.mxu0 0
  %1356 = vmatprep.subr.bf16.mxu0 0
  %1357 = vmatpush1.bf16.msra.mxu0 0
  %1358 = vmatprep.subr.bf16.mxu0 0
  %1359 = vmatpush1.bf16.msra.mxu0 0
  %1360 = vmatprep.subr.bf16.mxu0 0
  %1361 = vmatpush1.bf16.msra.mxu0 0
  %1362 = vmatprep.subr.bf16.mxu0 0
  %1363 = vmatpush1.bf16.msra.mxu0 0
  %1364 = vmatprep.mubr.bf16.mxu0 0
  %1365 = vmatmul.mubr.bf16.gmra.mrb[0].mxu0 %v1330
  %v1366 = vpop.f32.mrb[0].mxu0
  %v1367 = vadd.f32 0.0, %v1366
  %v1368 = vpop.f32.mrb[0].mxu0
  %v1369 = vpop.f32.mrb[0].mxu0
  %v1370 = vpop.f32.mrb[0].mxu0
  %1371 = vdwg.mxu0
  %v1372 = vadd.f32 %v1324, %v1367
  %v1373 = vtanh.pop %v1372
  %v1374 = vxor.u32 %v1372, 2147483648
  %v1375 = vmul.f32 %v1374, 1.442695
  %v1376 = vpow.pop %v1375
  %v1377 = vadd.f32 %v1376, 1.0
  %v1378 = vrcp.pop %v1377
  %v1379 = vmul.f32 1.0, %v1378
  %v1380 = vsel %vm43, %v1373, %v1379
  %v1381 = vmul.f32 %v1380, %v1312
  %1383 = vrot.lane.b32.xlu0 %v1380, 64
  %v1384 = vpop.permute.xlu0 %1383
  %v1386 = vmul.f32 %v1380, %v1384
  %1388 = vrot.lane.b32.xlu0 %v1386, 32
  %v1389 = vpop.permute.xlu0 %1388
  %v1391 = vadd.f32 %v1381, %v1389
  %v1392 = vtanh.pop %v1391
  %1394 = vrot.lane.b32.xlu0 %v1392, 64
  %v1395 = vpop.permute.xlu0 %1394
  %v1397 = vmul.f32 %v1380, %v1395
  %1399 = vrot.lane.b32.xlu0 %v1397, 32
  %v1400 = vpop.permute.xlu0 %1399
  %1402 = vst.msk [vmem:[%s634] sm:$0xff] %vm237, %v1400
  %v1403 = vld [vmem:[%s636] sm:$0xff]
  %v1404 = vpack.c.bf16 %v1397, %v1397
  %1406 = vrot.lane.b32.xlu0 %v1404, 32
  %v1407 = vpop.permute.xlu0 %1406
  %v1409 = vsel %vm237, %v1407, 0
  %1411 = vmatprep.subr.bf16.mxu0 0
  %1412 = vmatpush1.bf16.msra.mxu0 %v1012
  %1413 = vmatprep.subr.bf16.mxu0 0
  %1414 = vmatpush1.bf16.msra.mxu0 %v1013
  %1415 = vmatprep.subr.bf16.mxu0 0
  %1416 = vmatpush1.bf16.msra.mxu0 0
  %1417 = vmatprep.subr.bf16.mxu0 0
  %1418 = vmatpush1.bf16.msra.mxu0 0
  %1419 = vmatprep.subr.bf16.mxu0 0
  %1420 = vmatpush1.bf16.msra.mxu0 0
  %1421 = vmatprep.subr.bf16.mxu0 0
  %1422 = vmatpush1.bf16.msra.mxu0 0
  %1423 = vmatprep.subr.bf16.mxu0 0
  %1424 = vmatpush1.bf16.msra.mxu0 0
  %1425 = vmatprep.subr.bf16.mxu0 0
  %1426 = vmatpush1.bf16.msra.mxu0 0
  %1427 = vmatprep.subr.bf16.mxu0 0
  %1428 = vmatpush1.bf16.msra.mxu0 0
  %1429 = vmatprep.subr.bf16.mxu0 0
  %1430 = vmatpush1.bf16.msra.mxu0 0
  %1431 = vmatprep.subr.bf16.mxu0 0
  %1432 = vmatpush1.bf16.msra.mxu0 0
  %1433 = vmatprep.subr.bf16.mxu0 0
  %1434 = vmatpush1.bf16.msra.mxu0 0
  %1435 = vmatprep.subr.bf16.mxu0 0
  %1436 = vmatpush1.bf16.msra.mxu0 0
  %1437 = vmatprep.subr.bf16.mxu0 0
  %1438 = vmatpush1.bf16.msra.mxu0 0
  %1439 = vmatprep.subr.bf16.mxu0 0
  %1440 = vmatpush1.bf16.msra.mxu0 0
  %1441 = vmatprep.subr.bf16.mxu0 0
  %1442 = vmatpush1.bf16.msra.mxu0 0
  %1443 = vmatprep.mubr.bf16.mxu0 0
  %1444 = vmatmul.mubr.bf16.gmra.mrb[0].mxu0 %v1409
  %v1445 = vpop.f32.mrb[0].mxu0
  %v1446 = vadd.f32 0.0, %v1445
  %v1447 = vpop.f32.mrb[0].mxu0
  %v1448 = vpop.f32.mrb[0].mxu0
  %v1449 = vpop.f32.mrb[0].mxu0
  %1450 = vdwg.mxu0
  %v1451 = vadd.f32 %v1403, %v1446
  %v1452 = vtanh.pop %v1451
  %v1453 = vxor.u32 %v1451, 2147483648
  %v1454 = vmul.f32 %v1453, 1.442695
  %v1455 = vpow.pop %v1454
  %v1456 = vadd.f32 %v1455, 1.0
  %v1457 = vrcp.pop %v1456
  %v1458 = vmul.f32 1.0, %v1457
  %v1459 = vsel %vm43, %v1452, %v1458
  %v1460 = vmul.f32 %v1459, %v1391
  %1462 = vrot.lane.b32.xlu0 %v1459, 64
  %v1463 = vpop.permute.xlu0 %1462
  %v1465 = vmul.f32 %v1459, %v1463
  %1467 = vrot.lane.b32.xlu0 %v1465, 32
  %v1468 = vpop.permute.xlu0 %1467
  %v1470 = vadd.f32 %v1460, %v1468
  %v1471 = vtanh.pop %v1470
  %1473 = vrot.lane.b32.xlu0 %v1471, 64
  %v1474 = vpop.permute.xlu0 %1473
  %v1476 = vmul.f32 %v1459, %v1474
  %1478 = vrot.lane.b32.xlu0 %v1476, 32
  %v1479 = vpop.permute.xlu0 %1478
  %1481 = vst.msk [vmem:[%s715] sm:$0xff] %vm237, %v1479
  %v1482 = vld [vmem:[%s717] sm:$0xff]
  %v1483 = vpack.c.bf16 %v1476, %v1476
  %1485 = vrot.lane.b32.xlu0 %v1483, 32
  %v1486 = vpop.permute.xlu0 %1485
  %v1488 = vsel %vm237, %v1486, 0
  %1490 = vmatprep.subr.bf16.mxu0 0
  %1491 = vmatpush1.bf16.msra.mxu0 %v1012
  %1492 = vmatprep.subr.bf16.mxu0 0
  %1493 = vmatpush1.bf16.msra.mxu0 %v1013
  %1494 = vmatprep.subr.bf16.mxu0 0
  %1495 = vmatpush1.bf16.msra.mxu0 0
  %1496 = vmatprep.subr.bf16.mxu0 0
  %1497 = vmatpush1.bf16.msra.mxu0 0
  %1498 = vmatprep.subr.bf16.mxu0 0
  %1499 = vmatpush1.bf16.msra.mxu0 0
  %1500 = vmatprep.subr.bf16.mxu0 0
  %1501 = vmatpush1.bf16.msra.mxu0 0
  %1502 = vmatprep.subr.bf16.mxu0 0
  %1503 = vmatpush1.bf16.msra.mxu0 0
  %1504 = vmatprep.subr.bf16.mxu0 0
  %1505 = vmatpush1.bf16.msra.mxu0 0
  %1506 = vmatprep.subr.bf16.mxu0 0
  %1507 = vmatpush1.bf16.msra.mxu0 0
  %1508 = vmatprep.subr.bf16.mxu0 0
  %1509 = vmatpush1.bf16.msra.mxu0 0
  %1510 = vmatprep.subr.bf16.mxu0 0
  %1511 = vmatpush1.bf16.msra.mxu0 0
  %1512 = vmatprep.subr.bf16.mxu0 0
  %1513 = vmatpush1.bf16.msra.mxu0 0
  %1514 = vmatprep.subr.bf16.mxu0 0
  %1515 = vmatpush1.bf16.msra.mxu0 0
  %1516 = vmatprep.subr.bf16.mxu0 0
  %1517 = vmatpush1.bf16.msra.mxu0 0
  %1518 = vmatprep.subr.bf16.mxu0 0
  %1519 = vmatpush1.bf16.msra.mxu0 0
  %1520 = vmatprep.subr.bf16.mxu0 0
  %1521 = vmatpush1.bf16.msra.mxu0 0
  %1522 = vmatprep.mubr.bf16.mxu0 0
  %1523 = vmatmul.mubr.bf16.gmra.mrb[0].mxu0 %v1488
  %v1524 = vpop.f32.mrb[0].mxu0
  %v1525 = vadd.f32 0.0, %v1524
  %v1526 = vpop.f32.mrb[0].mxu0
  %v1527 = vpop.f32.mrb[0].mxu0
  %v1528 = vpop.f32.mrb[0].mxu0
  %1529 = vdwg.mxu0
  %v1530 = vadd.f32 %v1482, %v1525
  %v1531 = vtanh.pop %v1530
  %v1532 = vxor.u32 %v1530, 2147483648
  %v1533 = vmul.f32 %v1532, 1.442695
  %v1534 = vpow.pop %v1533
  %v1535 = vadd.f32 %v1534, 1.0
  %v1536 = vrcp.pop %v1535
  %v1537 = vmul.f32 1.0, %v1536
  %v1538 = vsel %vm43, %v1531, %v1537
  %v1539 = vmul.f32 %v1538, %v1470
  %1541 = vrot.lane.b32.xlu0 %v1538, 64
  %v1542 = vpop.permute.xlu0 %1541
  %v1544 = vmul.f32 %v1538, %v1542
  %1546 = vrot.lane.b32.xlu0 %v1544, 32
  %v1547 = vpop.permute.xlu0 %1546
  %v1549 = vadd.f32 %v1539, %v1547
  %v1550 = vtanh.pop %v1549
  %1552 = vrot.lane.b32.xlu0 %v1550, 64
  %v1553 = vpop.permute.xlu0 %1552
  %v1555 = vmul.f32 %v1538, %v1553
  %1557 = vrot.lane.b32.xlu0 %v1555, 32
  %v1558 = vpop.permute.xlu0 %1557
  %1560 = vst.msk [vmem:[%s796] sm:$0xff] %vm237, %v1558
  %v1561 = vld [vmem:[%s798] sm:$0xff]
  %v1562 = vpack.c.bf16 %v1555, %v1555
  %1564 = vrot.lane.b32.xlu0 %v1562, 32
  %v1565 = vpop.permute.xlu0 %1564
  %v1567 = vsel %vm237, %v1565, 0
  %1569 = vmatprep.subr.bf16.mxu0 0
  %1570 = vmatpush1.bf16.msra.mxu0 %v1012
  %1571 = vmatprep.subr.bf16.mxu0 0
  %1572 = vmatpush1.bf16.msra.mxu0 %v1013
  %1573 = vmatprep.subr.bf16.mxu0 0
  %1574 = vmatpush1.bf16.msra.mxu0 0
  %1575 = vmatprep.subr.bf16.mxu0 0
  %1576 = vmatpush1.bf16.msra.mxu0 0
  %1577 = vmatprep.subr.bf16.mxu0 0
  %1578 = vmatpush1.bf16.msra.mxu0 0
  %1579 = vmatprep.subr.bf16.mxu0 0
  %1580 = vmatpush1.bf16.msra.mxu0 0
  %1581 = vmatprep.subr.bf16.mxu0 0
  %1582 = vmatpush1.bf16.msra.mxu0 0
  %1583 = vmatprep.subr.bf16.mxu0 0
  %1584 = vmatpush1.bf16.msra.mxu0 0
  %1585 = vmatprep.subr.bf16.mxu0 0
  %1586 = vmatpush1.bf16.msra.mxu0 0
  %1587 = vmatprep.subr.bf16.mxu0 0
  %1588 = vmatpush1.bf16.msra.mxu0 0
  %1589 = vmatprep.subr.bf16.mxu0 0
  %1590 = vmatpush1.bf16.msra.mxu0 0
  %1591 = vmatprep.subr.bf16.mxu0 0
  %1592 = vmatpush1.bf16.msra.mxu0 0
  %1593 = vmatprep.subr.bf16.mxu0 0
  %1594 = vmatpush1.bf16.msra.mxu0 0
  %1595 = vmatprep.subr.bf16.mxu0 0
  %1596 = vmatpush1.bf16.msra.mxu0 0
  %1597 = vmatprep.subr.bf16.mxu0 0
  %1598 = vmatpush1.bf16.msra.mxu0 0
  %1599 = vmatprep.subr.bf16.mxu0 0
  %1600 = vmatpush1.bf16.msra.mxu0 0
  %1601 = vmatprep.mubr.bf16.mxu0 0
  %1602 = vmatmul.mubr.bf16.gmra.mrb[0].mxu0 %v1567
  %v1603 = vpop.f32.mrb[0].mxu0
  %v1604 = vadd.f32 0.0, %v1603
  %v1605 = vpop.f32.mrb[0].mxu0
  %v1606 = vpop.f32.mrb[0].mxu0
  %v1607 = vpop.f32.mrb[0].mxu0
  %1608 = vdwg.mxu0
  %v1609 = vadd.f32 %v1561, %v1604
  %v1610 = vtanh.pop %v1609
  %v1611 = vxor.u32 %v1609, 2147483648
  %v1612 = vmul.f32 %v1611, 1.442695
  %v1613 = vpow.pop %v1612
  %v1614 = vadd.f32 %v1613, 1.0
  %v1615 = vrcp.pop %v1614
  %v1616 = vmul.f32 1.0, %v1615
  %v1617 = vsel %vm43, %v1610, %v1616
  %v1618 = vmul.f32 %v1617, %v1549
  %1620 = vrot.lane.b32.xlu0 %v1617, 64
  %v1621 = vpop.permute.xlu0 %1620
  %v1623 = vmul.f32 %v1617, %v1621
  %1625 = vrot.lane.b32.xlu0 %v1623, 32
  %v1626 = vpop.permute.xlu0 %1625
  %v1628 = vadd.f32 %v1618, %v1626
  %v1629 = vtanh.pop %v1628
  %1631 = vrot.lane.b32.xlu0 %v1629, 64
  %v1632 = vpop.permute.xlu0 %1631
  %v1634 = vmul.f32 %v1617, %v1632
  %1636 = vrot.lane.b32.xlu0 %v1634, 32
  %v1637 = vpop.permute.xlu0 %1636
  %1639 = vst.msk [vmem:[%s877] sm:$0xff] %vm237, %v1637
  %v1640 = vpack.c.bf16 %v1634, %v1634
  %v1641 = vld [vmem:[%s7] sm:$0xf]
  %v1642 = vld [vmem:[%s7 + $0x4] sm:$0xf]
  %v1643 = vld [vmem:[%s7 + $0x8] sm:$0xf]
  %v1644 = vld [vmem:[%s7 + $0xc] sm:$0xf]
  %v1645 = vld [vmem:[%s8] sm:$0x1]
  %v1647 = vlaneseq
  %v1648 = vshrl.u32 %v1647, 7
  %v1649 = vsub.s32 0, %v1648
  %v1650 = vrot.slane %v1645, %v1649
  %1653 = vrot.lane.b32.xlu0 %v1640, 32
  %v1654 = vpop.permute.xlu0 %1653
  %v1659 = vunpack.c.l.b16 %v1641
  %v1660 = vunpack.c.l.b16 %v1642
  %v1661 = vunpack.c.l.b16 %v1643
  %v1662 = vunpack.c.l.b16 %v1644
  %v1663 = vpack.c.b16 %v1660, %v1659
  %v1664 = vpack.c.b16 %v1662, %v1661
  %v1668 = vsel %vm237, %v1654, 0
  %1670 = vmatprep.subr.bf16.mxu0 0
  %1671 = vmatpush1.bf16.msra.mxu0 %v1663
  %1672 = vmatprep.subr.bf16.mxu0 0
  %1673 = vmatpush1.bf16.msra.mxu0 %v1664
  %1674 = vmatprep.subr.bf16.mxu0 0
  %1675 = vmatpush1.bf16.msra.mxu0 0
  %1676 = vmatprep.subr.bf16.mxu0 0
  %1677 = vmatpush1.bf16.msra.mxu0 0
  %1678 = vmatprep.subr.bf16.mxu0 0
  %1679 = vmatpush1.bf16.msra.mxu0 0
  %1680 = vmatprep.subr.bf16.mxu0 0
  %1681 = vmatpush1.bf16.msra.mxu0 0
  %1682 = vmatprep.subr.bf16.mxu0 0
  %1683 = vmatpush1.bf16.msra.mxu0 0
  %1684 = vmatprep.subr.bf16.mxu0 0
  %1685 = vmatpush1.bf16.msra.mxu0 0
  %1686 = vmatprep.subr.bf16.mxu0 0
  %1687 = vmatpush1.bf16.msra.mxu0 0
  %1688 = vmatprep.subr.bf16.mxu0 0
  %1689 = vmatpush1.bf16.msra.mxu0 0
  %1690 = vmatprep.subr.bf16.mxu0 0
  %1691 = vmatpush1.bf16.msra.mxu0 0
  %1692 = vmatprep.subr.bf16.mxu0 0
  %1693 = vmatpush1.bf16.msra.mxu0 0
  %1694 = vmatprep.subr.bf16.mxu0 0
  %1695 = vmatpush1.bf16.msra.mxu0 0
  %1696 = vmatprep.subr.bf16.mxu0 0
  %1697 = vmatpush1.bf16.msra.mxu0 0
  %1698 = vmatprep.subr.bf16.mxu0 0
  %1699 = vmatpush1.bf16.msra.mxu0 0
  %1700 = vmatprep.subr.bf16.mxu0 0
  %1701 = vmatpush1.bf16.msra.mxu0 0
  %1702 = vmatprep.mubr.bf16.mxu0 0
  %1703 = vmatmul.mubr.bf16.gmra.mrb[0].mxu0 %v1668
  %v1704 = vpop.f32.mrb[0].mxu0
  %v1705 = vadd.f32 %v1650, %v1704
  %v1706 = vpop.f32.mrb[0].mxu0
  %v1707 = vpop.f32.mrb[0].mxu0
  %v1708 = vpop.f32.mrb[0].mxu0
  %1709 = vdwg.mxu0
  %v1710 = vmax.f32 %v1705, 0.0
  %v1711 = vpack.c.bf16 %v1710, %v1710
  %v1712 = vld [vmem:[%s9] sm:$0xf]
  %v1713 = vld [vmem:[%s9 + $0x4] sm:$0xf]
  %v1714 = vld [vmem:[%s9 + $0x8] sm:$0xf]
  %v1715 = vld [vmem:[%s9 + $0xc] sm:$0xf]
  %v1716 = vld [vmem:[%s9 + $0x10] sm:$0xf]
  %v1717 = vld [vmem:[%s9 + $0x14] sm:$0xf]
  %v1718 = vld [vmem:[%s9 + $0x18] sm:$0xf]
  %v1719 = vld [vmem:[%s9 + $0x1c] sm:$0xf]
  %v1720 = vld [vmem:[%s9 + $0x20] sm:$0xf]
  %v1721 = vld [vmem:[%s9 + $0x24] sm:$0xf]
  %v1722 = vld [vmem:[%s9 + $0x28] sm:$0xf]
  %v1723 = vld [vmem:[%s9 + $0x2c] sm:$0xf]
  %v1724 = vld [vmem:[%s9 + $0x30] sm:$0xf]
  %v1725 = vld [vmem:[%s9 + $0x34] sm:$0xf]
  %v1726 = vld [vmem:[%s9 + $0x38] sm:$0xf]
  %v1727 = vld [vmem:[%s9 + $0x3c] sm:$0xf]
  %v1728 = vld [vmem:[%s10] sm:$0x1]
  %v1730 = vlaneseq
  %v1731 = vshrl.u32 %v1730, 7
  %v1732 = vsub.s32 0, %v1731
  %v1733 = vrot.slane %v1728, %v1732
  %v1751 = vunpack.c.l.b16 %v1712
  %v1752 = vunpack.c.l.b16 %v1713
  %v1753 = vunpack.c.l.b16 %v1714
  %v1754 = vunpack.c.l.b16 %v1715
  %v1755 = vunpack.c.l.b16 %v1716
  %v1756 = vunpack.c.l.b16 %v1717
  %v1757 = vunpack.c.l.b16 %v1718
  %v1758 = vunpack.c.l.b16 %v1719
  %v1759 = vunpack.c.l.b16 %v1720
  %v1760 = vunpack.c.l.b16 %v1721
  %v1761 = vunpack.c.l.b16 %v1722
  %v1762 = vunpack.c.l.b16 %v1723
  %v1763 = vunpack.c.l.b16 %v1724
  %v1764 = vunpack.c.l.b16 %v1725
  %v1765 = vunpack.c.l.b16 %v1726
  %v1766 = vunpack.c.l.b16 %v1727
  %v1767 = vpack.c.b16 %v1752, %v1751
  %v1768 = vpack.c.b16 %v1754, %v1753
  %v1769 = vpack.c.b16 %v1756, %v1755
  %v1770 = vpack.c.b16 %v1758, %v1757
  %v1771 = vpack.c.b16 %v1760, %v1759
  %v1772 = vpack.c.b16 %v1762, %v1761
  %v1773 = vpack.c.b16 %v1764, %v1763
  %v1774 = vpack.c.b16 %v1766, %v1765
  %1783 = vmatprep.subr.bf16.mxu0 0
  %1784 = vmatpush1.bf16.msra.mxu0 %v1767
  %1785 = vmatprep.subr.bf16.mxu0 0
  %1786 = vmatpush1.bf16.msra.mxu0 %v1768
  %1787 = vmatprep.subr.bf16.mxu0 0
  %1788 = vmatpush1.bf16.msra.mxu0 %v1769
  %1789 = vmatprep.subr.bf16.mxu0 0
  %1790 = vmatpush1.bf16.msra.mxu0 %v1770
  %1791 = vmatprep.subr.bf16.mxu0 0
  %1792 = vmatpush1.bf16.msra.mxu0 %v1771
  %1793 = vmatprep.subr.bf16.mxu0 0
  %1794 = vmatpush1.bf16.msra.mxu0 %v1772
  %1795 = vmatprep.subr.bf16.mxu0 0
  %1796 = vmatpush1.bf16.msra.mxu0 %v1773
  %1797 = vmatprep.subr.bf16.mxu0 0
  %1798 = vmatpush1.bf16.msra.mxu0 %v1774
  %1799 = vmatprep.subr.bf16.mxu0 0
  %1800 = vmatpush1.bf16.msra.mxu0 0
  %1801 = vmatprep.subr.bf16.mxu0 0
  %1802 = vmatpush1.bf16.msra.mxu0 0
  %1803 = vmatprep.subr.bf16.mxu0 0
  %1804 = vmatpush1.bf16.msra.mxu0 0
  %1805 = vmatprep.subr.bf16.mxu0 0
  %1806 = vmatpush1.bf16.msra.mxu0 0
  %1807 = vmatprep.subr.bf16.mxu0 0
  %1808 = vmatpush1.bf16.msra.mxu0 0
  %1809 = vmatprep.subr.bf16.mxu0 0
  %1810 = vmatpush1.bf16.msra.mxu0 0
  %1811 = vmatprep.subr.bf16.mxu0 0
  %1812 = vmatpush1.bf16.msra.mxu0 0
  %1813 = vmatprep.subr.bf16.mxu0 0
  %1814 = vmatpush1.bf16.msra.mxu0 0
  %1815 = vmatprep.mubr.bf16.mxu0 0
  %1816 = vmatmul.mubr.bf16.gmra.mrb[0].mxu0 %v1711
  %v1817 = vpop.f32.mrb[0].mxu0
  %v1818 = vadd.f32 %v1733, %v1817
  %v1819 = vpop.f32.mrb[0].mxu0
  %v1820 = vpop.f32.mrb[0].mxu0
  %v1821 = vpop.f32.mrb[0].mxu0
  %1822 = vdwg.mxu0
  %1823 = vst [vmem:[%s11] sm:$0xff] %v1818
  // Predicated region
  $region46: #{visual_odometry_forward.3} parent=0 // pred_check
    _
  $region47: #{visual_odometry_forward.3} parent=0 // pred_check_branch
    %1825 = sbr.rel (0) target = $region49
  $region48: #{visual_odometry_forward.3} parent=0 // pred_region
    _
  $region49: #{visual_odometry_forward.3} parent=0 // pred_fallthru
    _
  // Predicated region
  $region50: #{visual_odometry_forward.3} parent=0 // pred_check
    _
  $region51: #{visual_odometry_forward.3} parent=0 // pred_check_branch
    %1827 = sbr.rel (0) target = $region53
  $region52: #{visual_odometry_forward.3} parent=0 // pred_region
    _
  $region53: #{visual_odometry_forward.3} parent=0 // pred_fallthru
    _

// kernel: visual_odometry_forward.2
$region0: #{visual_odometry_forward.2}
  #allocation0 [shape = 'u32[]', space=smem, size = 0x4, offset = 0x4, fixed_abs, tag = 'smem constant byte address 0x4 - core index']
  #allocation1 [shape = 'u32[144,128]{1,0:T(1,128)}', space=vmem, size = 0x12000, scoped, tag = 'internal scratch']
  %s0 = inlined_call_operand.vmem [shape: bf16[4096,128], index: 0, kind: input, shape index: {}]
  %s1 = inlined_call_operand.vmem [shape: bf16[128,128], index: 1, kind: input, shape index: {}]
  %s2 = inlined_call_operand.vmem [shape: f32[1,128], index: 2, kind: input, shape index: {}]
  %s3 = inlined_call_operand.vmem [shape: f32[16,4096], index: 3, kind: input, shape index: {}]
  %s4 = inlined_call_operand.vmem [shape: f32[16,128], index: 4, kind: output, shape index: {}]
  %s5 = sld [smem:[#allocation0]]
  $region26: #{visual_odometry_forward.2} parent=0
    _
  %s7 = ssub.s32 1, %s5
  %s8 = scalar_select 0, %s7, %s5
  // Predicated region
  $region2: #{visual_odometry_forward.2} parent=0 // pred_check
    _
  $region3: #{visual_odometry_forward.2} parent=0 // pred_check_branch
    %10 = sbr.rel (0) target = $region5
  $region4: #{visual_odometry_forward.2} parent=0 // pred_region
    _
  $region5: #{visual_odometry_forward.2} parent=0 // pred_fallthru
    _
  // Predicated region
  $region6: #{visual_odometry_forward.2} parent=0 // pred_check
    _
  $region7: #{visual_odometry_forward.2} parent=0 // pred_check_branch
    %12 = sbr.rel (0) target = $region9
  $region8: #{visual_odometry_forward.2} parent=0 // pred_region
    _
  $region9: #{visual_odometry_forward.2} parent=0 // pred_fallthru
    _
  // Predicated region
  $region10: #{visual_odometry_forward.2} parent=0 // pred_check
    _
  $region11: #{visual_odometry_forward.2} parent=0 // pred_check_branch
    %14 = sbr.rel (0) target = $region13
  $region12: #{visual_odometry_forward.2} parent=0 // pred_region
    _
  $region13: #{visual_odometry_forward.2} parent=0 // pred_fallthru
    _
  // Predicated region
  $region14: #{visual_odometry_forward.2} parent=0 // pred_check
    _
  $region15: #{visual_odometry_forward.2} parent=0 // pred_check_branch
    %16 = sbr.rel (0) target = $region17
  $region16: #{visual_odometry_forward.2} parent=0 // pred_region
    _
  $region17: #{visual_odometry_forward.2} parent=0 // pred_fallthru
    _
  %v18 = vld [vmem:[%s0] sm:$0xf]
  %v19 = vld [vmem:[%s0 + $0x4] sm:$0xf]
  %v20 = vld [vmem:[%s0 + $0x8] sm:$0xf]
  %v21 = vld [vmem:[%s0 + $0xc] sm:$0xf]
  %v22 = vld [vmem:[%s0 + $0x10] sm:$0xf]
  %v23 = vld [vmem:[%s0 + $0x14] sm:$0xf]
  %v24 = vld [vmem:[%s0 + $0x18] sm:$0xf]
  %v25 = vld [vmem:[%s0 + $0x1c] sm:$0xf]
  %v26 = vld [vmem:[%s0 + $0x20] sm:$0xf]
  %v27 = vld [vmem:[%s0 + $0x24] sm:$0xf]
  %v28 = vld [vmem:[%s0 + $0x28] sm:$0xf]
  %v29 = vld [vmem:[%s0 + $0x2c] sm:$0xf]
  %v30 = vld [vmem:[%s0 + $0x30] sm:$0xf]
  %v31 = vld [vmem:[%s0 + $0x34] sm:$0xf]
  %v32 = vld [vmem:[%s0 + $0x38] sm:$0xf]
  %v33 = vld [vmem:[%s0 + $0x3c] sm:$0xf]
  %v34 = vld [vmem:[%s0 + $0x40] sm:$0xf]
  %v35 = vld [vmem:[%s0 + $0x44] sm:$0xf]
  %v36 = vld [vmem:[%s0 + $0x48] sm:$0xf]
  %v37 = vld [vmem:[%s0 + $0x4c] sm:$0xf]
  %v38 = vld [vmem:[%s0 + $0x50] sm:$0xf]
  %v39 = vld [vmem:[%s0 + $0x54] sm:$0xf]
  %v40 = vld [vmem:[%s0 + $0x58] sm:$0xf]
  %v41 = vld [vmem:[%s0 + $0x5c] sm:$0xf]
  %v42 = vld [vmem:[%s0 + $0x60] sm:$0xf]
  %v43 = vld [vmem:[%s0 + $0x64] sm:$0xf]
  %v44 = vld [vmem:[%s0 + $0x68] sm:$0xf]
  %v45 = vld [vmem:[%s0 + $0x6c] sm:$0xf]
  %v46 = vld [vmem:[%s0 + $0x70] sm:$0xf]
  %v47 = vld [vmem:[%s0 + $0x74] sm:$0xf]
  %v48 = vld [vmem:[%s0 + $0x78] sm:$0xf]
  %v49 = vld [vmem:[%s0 + $0x7c] sm:$0xf]
  %v50 = vld [vmem:[%s0 + $0x80] sm:$0xf]
  %v51 = vld [vmem:[%s0 + $0x84] sm:$0xf]
  %v52 = vld [vmem:[%s0 + $0x88] sm:$0xf]
  %v53 = vld [vmem:[%s0 + $0x8c] sm:$0xf]
  %v54 = vld [vmem:[%s0 + $0x90] sm:$0xf]
  %v55 = vld [vmem:[%s0 + $0x94] sm:$0xf]
  %v56 = vld [vmem:[%s0 + $0x98] sm:$0xf]
  %v57 = vld [vmem:[%s0 + $0x9c] sm:$0xf]
  %v58 = vld [vmem:[%s0 + $0xa0] sm:$0xf]
  %v59 = vld [vmem:[%s0 + $0xa4] sm:$0xf]
  %v60 = vld [vmem:[%s0 + $0xa8] sm:$0xf]
  %v61 = vld [vmem:[%s0 + $0xac] sm:$0xf]
  %v62 = vld [vmem:[%s0 + $0xb0] sm:$0xf]
  %v63 = vld [vmem:[%s0 + $0xb4] sm:$0xf]
  %v64 = vld [vmem:[%s0 + $0xb8] sm:$0xf]
  %v65 = vld [vmem:[%s0 + $0xbc] sm:$0xf]
  %v66 = vld [vmem:[%s0 + $0xc0] sm:$0xf]
  %v67 = vld [vmem:[%s0 + $0xc4] sm:$0xf]
  %v68 = vld [vmem:[%s0 + $0xc8] sm:$0xf]
  %v69 = vld [vmem:[%s0 + $0xcc] sm:$0xf]
  %v70 = vld [vmem:[%s0 + $0xd0] sm:$0xf]
  %v71 = vld [vmem:[%s0 + $0xd4] sm:$0xf]
  %v72 = vld [vmem:[%s0 + $0xd8] sm:$0xf]
  %v73 = vld [vmem:[%s0 + $0xdc] sm:$0xf]
  %v74 = vld [vmem:[%s0 + $0xe0] sm:$0xf]
  %v75 = vld [vmem:[%s0 + $0xe4] sm:$0xf]
  %v76 = vld [vmem:[%s0 + $0xe8] sm:$0xf]
  %v77 = vld [vmem:[%s0 + $0xec] sm:$0xf]
  %v78 = vld [vmem:[%s0 + $0xf0] sm:$0xf]
  %v79 = vld [vmem:[%s0 + $0xf4] sm:$0xf]
  %v80 = vld [vmem:[%s0 + $0xf8] sm:$0xf]
  %v81 = vld [vmem:[%s0 + $0xfc] sm:$0xf]
  %v82 = vld [vmem:[%s0 + $0x100] sm:$0xf]
  %v83 = vld [vmem:[%s0 + $0x104] sm:$0xf]
  %v84 = vld [vmem:[%s0 + $0x108] sm:$0xf]
  %v85 = vld [vmem:[%s0 + $0x10c] sm:$0xf]
  %v86 = vld [vmem:[%s0 + $0x110] sm:$0xf]
  %v87 = vld [vmem:[%s0 + $0x114] sm:$0xf]
  %v88 = vld [vmem:[%s0 + $0x118] sm:$0xf]
  %v89 = vld [vmem:[%s0 + $0x11c] sm:$0xf]
  %v90 = vld [vmem:[%s0 + $0x120] sm:$0xf]
  %v91 = vld [vmem:[%s0 + $0x124] sm:$0xf]
  %v92 = vld [vmem:[%s0 + $0x128] sm:$0xf]
  %v93 = vld [vmem:[%s0 + $0x12c] sm:$0xf]
  %v94 = vld [vmem:[%s0 + $0x130] sm:$0xf]
  %v95 = vld [vmem:[%s0 + $0x134] sm:$0xf]
  %v96 = vld [vmem:[%s0 + $0x138] sm:$0xf]
  %v97 = vld [vmem:[%s0 + $0x13c] sm:$0xf]
  %v98 = vld [vmem:[%s0 + $0x140] sm:$0xf]
  %v99 = vld [vmem:[%s0 + $0x144] sm:$0xf]
  %v100 = vld [vmem:[%s0 + $0x148] sm:$0xf]
  %v101 = vld [vmem:[%s0 + $0x14c] sm:$0xf]
  %v102 = vld [vmem:[%s0 + $0x150] sm:$0xf]
  %v103 = vld [vmem:[%s0 + $0x154] sm:$0xf]
  %v104 = vld [vmem:[%s0 + $0x158] sm:$0xf]
  %v105 = vld [vmem:[%s0 + $0x15c] sm:$0xf]
  %v106 = vld [vmem:[%s0 + $0x160] sm:$0xf]
  %v107 = vld [vmem:[%s0 + $0x164] sm:$0xf]
  %v108 = vld [vmem:[%s0 + $0x168] sm:$0xf]
  %v109 = vld [vmem:[%s0 + $0x16c] sm:$0xf]
  %v110 = vld [vmem:[%s0 + $0x170] sm:$0xf]
  %v111 = vld [vmem:[%s0 + $0x174] sm:$0xf]
  %v112 = vld [vmem:[%s0 + $0x178] sm:$0xf]
  %v113 = vld [vmem:[%s0 + $0x17c] sm:$0xf]
  %v114 = vld [vmem:[%s0 + $0x180] sm:$0xf]
  %v115 = vld [vmem:[%s0 + $0x184] sm:$0xf]
  %v116 = vld [vmem:[%s0 + $0x188] sm:$0xf]
  %v117 = vld [vmem:[%s0 + $0x18c] sm:$0xf]
  %v118 = vld [vmem:[%s0 + $0x190] sm:$0xf]
  %v119 = vld [vmem:[%s0 + $0x194] sm:$0xf]
  %v120 = vld [vmem:[%s0 + $0x198] sm:$0xf]
  %v121 = vld [vmem:[%s0 + $0x19c] sm:$0xf]
  %v122 = vld [vmem:[%s0 + $0x1a0] sm:$0xf]
  %v123 = vld [vmem:[%s0 + $0x1a4] sm:$0xf]
  %v124 = vld [vmem:[%s0 + $0x1a8] sm:$0xf]
  %v125 = vld [vmem:[%s0 + $0x1ac] sm:$0xf]
  %v126 = vld [vmem:[%s0 + $0x1b0] sm:$0xf]
  %v127 = vld [vmem:[%s0 + $0x1b4] sm:$0xf]
  %v128 = vld [vmem:[%s0 + $0x1b8] sm:$0xf]
  %v129 = vld [vmem:[%s0 + $0x1bc] sm:$0xf]
  %v130 = vld [vmem:[%s0 + $0x1c0] sm:$0xf]
  %v131 = vld [vmem:[%s0 + $0x1c4] sm:$0xf]
  %v132 = vld [vmem:[%s0 + $0x1c8] sm:$0xf]
  %v133 = vld [vmem:[%s0 + $0x1cc] sm:$0xf]
  %v134 = vld [vmem:[%s0 + $0x1d0] sm:$0xf]
  %v135 = vld [vmem:[%s0 + $0x1d4] sm:$0xf]
  %v136 = vld [vmem:[%s0 + $0x1d8] sm:$0xf]
  %v137 = vld [vmem:[%s0 + $0x1dc] sm:$0xf]
  %v138 = vld [vmem:[%s0 + $0x1e0] sm:$0xf]
  %v139 = vld [vmem:[%s0 + $0x1e4] sm:$0xf]
  %v140 = vld [vmem:[%s0 + $0x1e8] sm:$0xf]
  %v141 = vld [vmem:[%s0 + $0x1ec] sm:$0xf]
  %v142 = vld [vmem:[%s0 + $0x1f0] sm:$0xf]
  %v143 = vld [vmem:[%s0 + $0x1f4] sm:$0xf]
  %v144 = vld [vmem:[%s0 + $0x1f8] sm:$0xf]
  %v145 = vld [vmem:[%s0 + $0x1fc] sm:$0xf]
  %v146 = vld [vmem:[%s0 + $0x200] sm:$0xf]
  %v147 = vld [vmem:[%s0 + $0x204] sm:$0xf]
  %v148 = vld [vmem:[%s0 + $0x208] sm:$0xf]
  %v149 = vld [vmem:[%s0 + $0x20c] sm:$0xf]
  %v150 = vld [vmem:[%s0 + $0x210] sm:$0xf]
  %v151 = vld [vmem:[%s0 + $0x214] sm:$0xf]
  %v152 = vld [vmem:[%s0 + $0x218] sm:$0xf]
  %v153 = vld [vmem:[%s0 + $0x21c] sm:$0xf]
  %v154 = vld [vmem:[%s0 + $0x220] sm:$0xf]
  %v155 = vld [vmem:[%s0 + $0x224] sm:$0xf]
  %v156 = vld [vmem:[%s0 + $0x228] sm:$0xf]
  %v157 = vld [vmem:[%s0 + $0x22c] sm:$0xf]
  %v158 = vld [vmem:[%s0 + $0x230] sm:$0xf]
  %v159 = vld [vmem:[%s0 + $0x234] sm:$0xf]
  %v160 = vld [vmem:[%s0 + $0x238] sm:$0xf]
  %v161 = vld [vmem:[%s0 + $0x23c] sm:$0xf]
  %v162 = vld [vmem:[%s0 + $0x240] sm:$0xf]
  %v163 = vld [vmem:[%s0 + $0x244] sm:$0xf]
  %v164 = vld [vmem:[%s0 + $0x248] sm:$0xf]
  %v165 = vld [vmem:[%s0 + $0x24c] sm:$0xf]
  %v166 = vld [vmem:[%s0 + $0x250] sm:$0xf]
  %v167 = vld [vmem:[%s0 + $0x254] sm:$0xf]
  %v168 = vld [vmem:[%s0 + $0x258] sm:$0xf]
  %v169 = vld [vmem:[%s0 + $0x25c] sm:$0xf]
  %v170 = vld [vmem:[%s0 + $0x260] sm:$0xf]
  %v171 = vld [vmem:[%s0 + $0x264] sm:$0xf]
  %v172 = vld [vmem:[%s0 + $0x268] sm:$0xf]
  %v173 = vld [vmem:[%s0 + $0x26c] sm:$0xf]
  %v174 = vld [vmem:[%s0 + $0x270] sm:$0xf]
  %v175 = vld [vmem:[%s0 + $0x274] sm:$0xf]
  %v176 = vld [vmem:[%s0 + $0x278] sm:$0xf]
  %v177 = vld [vmem:[%s0 + $0x27c] sm:$0xf]
  %v178 = vld [vmem:[%s0 + $0x280] sm:$0xf]
  %v179 = vld [vmem:[%s0 + $0x284] sm:$0xf]
  %v180 = vld [vmem:[%s0 + $0x288] sm:$0xf]
  %v181 = vld [vmem:[%s0 + $0x28c] sm:$0xf]
  %v182 = vld [vmem:[%s0 + $0x290] sm:$0xf]
  %v183 = vld [vmem:[%s0 + $0x294] sm:$0xf]
  %v184 = vld [vmem:[%s0 + $0x298] sm:$0xf]
  %v185 = vld [vmem:[%s0 + $0x29c] sm:$0xf]
  %v186 = vld [vmem:[%s0 + $0x2a0] sm:$0xf]
  %v187 = vld [vmem:[%s0 + $0x2a4] sm:$0xf]
  %v188 = vld [vmem:[%s0 + $0x2a8] sm:$0xf]
  %v189 = vld [vmem:[%s0 + $0x2ac] sm:$0xf]
  %v190 = vld [vmem:[%s0 + $0x2b0] sm:$0xf]
  %v191 = vld [vmem:[%s0 + $0x2b4] sm:$0xf]
  %v192 = vld [vmem:[%s0 + $0x2b8] sm:$0xf]
  %v193 = vld [vmem:[%s0 + $0x2bc] sm:$0xf]
  %v194 = vld [vmem:[%s0 + $0x2c0] sm:$0xf]
  %v195 = vld [vmem:[%s0 + $0x2c4] sm:$0xf]
  %v196 = vld [vmem:[%s0 + $0x2c8] sm:$0xf]
  %v197 = vld [vmem:[%s0 + $0x2cc] sm:$0xf]
  %v198 = vld [vmem:[%s0 + $0x2d0] sm:$0xf]
  %v199 = vld [vmem:[%s0 + $0x2d4] sm:$0xf]
  %v200 = vld [vmem:[%s0 + $0x2d8] sm:$0xf]
  %v201 = vld [vmem:[%s0 + $0x2dc] sm:$0xf]
  %v202 = vld [vmem:[%s0 + $0x2e0] sm:$0xf]
  %v203 = vld [vmem:[%s0 + $0x2e4] sm:$0xf]
  %v204 = vld [vmem:[%s0 + $0x2e8] sm:$0xf]
  %v205 = vld [vmem:[%s0 + $0x2ec] sm:$0xf]
  %v206 = vld [vmem:[%s0 + $0x2f0] sm:$0xf]
  %v207 = vld [vmem:[%s0 + $0x2f4] sm:$0xf]
  %v208 = vld [vmem:[%s0 + $0x2f8] sm:$0xf]
  %v209 = vld [vmem:[%s0 + $0x2fc] sm:$0xf]
  %v210 = vld [vmem:[%s0 + $0x300] sm:$0xf]
  %v211 = vld [vmem:[%s0 + $0x304] sm:$0xf]
  %v212 = vld [vmem:[%s0 + $0x308] sm:$0xf]
  %v213 = vld [vmem:[%s0 + $0x30c] sm:$0xf]
  %v214 = vld [vmem:[%s0 + $0x310] sm:$0xf]
  %v215 = vld [vmem:[%s0 + $0x314] sm:$0xf]
  %v216 = vld [vmem:[%s0 + $0x318] sm:$0xf]
  %v217 = vld [vmem:[%s0 + $0x31c] sm:$0xf]
  %v218 = vld [vmem:[%s0 + $0x320] sm:$0xf]
  %v219 = vld [vmem:[%s0 + $0x324] sm:$0xf]
  %v220 = vld [vmem:[%s0 + $0x328] sm:$0xf]
  %v221 = vld [vmem:[%s0 + $0x32c] sm:$0xf]
  %v222 = vld [vmem:[%s0 + $0x330] sm:$0xf]
  %v223 = vld [vmem:[%s0 + $0x334] sm:$0xf]
  %v224 = vld [vmem:[%s0 + $0x338] sm:$0xf]
  %v225 = vld [vmem:[%s0 + $0x33c] sm:$0xf]
  %v226 = vld [vmem:[%s0 + $0x340] sm:$0xf]
  %v227 = vld [vmem:[%s0 + $0x344] sm:$0xf]
  %v228 = vld [vmem:[%s0 + $0x348] sm:$0xf]
  %v229 = vld [vmem:[%s0 + $0x34c] sm:$0xf]
  %v230 = vld [vmem:[%s0 + $0x350] sm:$0xf]
  %v231 = vld [vmem:[%s0 + $0x354] sm:$0xf]
  %v232 = vld [vmem:[%s0 + $0x358] sm:$0xf]
  %v233 = vld [vmem:[%s0 + $0x35c] sm:$0xf]
  %v234 = vld [vmem:[%s0 + $0x360] sm:$0xf]
  %v235 = vld [vmem:[%s0 + $0x364] sm:$0xf]
  %v236 = vld [vmem:[%s0 + $0x368] sm:$0xf]
  %v237 = vld [vmem:[%s0 + $0x36c] sm:$0xf]
  %v238 = vld [vmem:[%s0 + $0x370] sm:$0xf]
  %v239 = vld [vmem:[%s0 + $0x374] sm:$0xf]
  %v240 = vld [vmem:[%s0 + $0x378] sm:$0xf]
  %v241 = vld [vmem:[%s0 + $0x37c] sm:$0xf]
  %v242 = vld [vmem:[%s0 + $0x380] sm:$0xf]
  %v243 = vld [vmem:[%s0 + $0x384] sm:$0xf]
  %v244 = vld [vmem:[%s0 + $0x388] sm:$0xf]
  %v245 = vld [vmem:[%s0 + $0x38c] sm:$0xf]
  %v246 = vld [vmem:[%s0 + $0x390] sm:$0xf]
  %v247 = vld [vmem:[%s0 + $0x394] sm:$0xf]
  %v248 = vld [vmem:[%s0 + $0x398] sm:$0xf]
  %v249 = vld [vmem:[%s0 + $0x39c] sm:$0xf]
  %v250 = vld [vmem:[%s0 + $0x3a0] sm:$0xf]
  %v251 = vld [vmem:[%s0 + $0x3a4] sm:$0xf]
  %v252 = vld [vmem:[%s0 + $0x3a8] sm:$0xf]
  %v253 = vld [vmem:[%s0 + $0x3ac] sm:$0xf]
  %v254 = vld [vmem:[%s0 + $0x3b0] sm:$0xf]
  %v255 = vld [vmem:[%s0 + $0x3b4] sm:$0xf]
  %v256 = vld [vmem:[%s0 + $0x3b8] sm:$0xf]
  %v257 = vld [vmem:[%s0 + $0x3bc] sm:$0xf]
  %v258 = vld [vmem:[%s0 + $0x3c0] sm:$0xf]
  %v259 = vld [vmem:[%s0 + $0x3c4] sm:$0xf]
  %v260 = vld [vmem:[%s0 + $0x3c8] sm:$0xf]
  %v261 = vld [vmem:[%s0 + $0x3cc] sm:$0xf]
  %v262 = vld [vmem:[%s0 + $0x3d0] sm:$0xf]
  %v263 = vld [vmem:[%s0 + $0x3d4] sm:$0xf]
  %v264 = vld [vmem:[%s0 + $0x3d8] sm:$0xf]
  %v265 = vld [vmem:[%s0 + $0x3dc] sm:$0xf]
  %v266 = vld [vmem:[%s0 + $0x3e0] sm:$0xf]
  %v267 = vld [vmem:[%s0 + $0x3e4] sm:$0xf]
  %v268 = vld [vmem:[%s0 + $0x3e8] sm:$0xf]
  %v269 = vld [vmem:[%s0 + $0x3ec] sm:$0xf]
  %v270 = vld [vmem:[%s0 + $0x3f0] sm:$0xf]
  %v271 = vld [vmem:[%s0 + $0x3f4] sm:$0xf]
  %v272 = vld [vmem:[%s0 + $0x3f8] sm:$0xf]
  %v273 = vld [vmem:[%s0 + $0x3fc] sm:$0xf]
  %v274 = vld [vmem:[%s0 + $0x400] sm:$0xf]
  %v275 = vld [vmem:[%s0 + $0x404] sm:$0xf]
  %v276 = vld [vmem:[%s0 + $0x408] sm:$0xf]
  %v277 = vld [vmem:[%s0 + $0x40c] sm:$0xf]
  %v278 = vld [vmem:[%s0 + $0x410] sm:$0xf]
  %v279 = vld [vmem:[%s0 + $0x414] sm:$0xf]
  %v280 = vld [vmem:[%s0 + $0x418] sm:$0xf]
  %v281 = vld [vmem:[%s0 + $0x41c] sm:$0xf]
  %v282 = vld [vmem:[%s0 + $0x420] sm:$0xf]
  %v283 = vld [vmem:[%s0 + $0x424] sm:$0xf]
  %v284 = vld [vmem:[%s0 + $0x428] sm:$0xf]
  %v285 = vld [vmem:[%s0 + $0x42c] sm:$0xf]
  %v286 = vld [vmem:[%s0 + $0x430] sm:$0xf]
  %v287 = vld [vmem:[%s0 + $0x434] sm:$0xf]
  %v288 = vld [vmem:[%s0 + $0x438] sm:$0xf]
  %v289 = vld [vmem:[%s0 + $0x43c] sm:$0xf]
  %v290 = vld [vmem:[%s0 + $0x440] sm:$0xf]
  %v291 = vld [vmem:[%s0 + $0x444] sm:$0xf]
  %v292 = vld [vmem:[%s0 + $0x448] sm:$0xf]
  %v293 = vld [vmem:[%s0 + $0x44c] sm:$0xf]
  %v294 = vld [vmem:[%s0 + $0x450] sm:$0xf]
  %v295 = vld [vmem:[%s0 + $0x454] sm:$0xf]
  %v296 = vld [vmem:[%s0 + $0x458] sm:$0xf]
  %v297 = vld [vmem:[%s0 + $0x45c] sm:$0xf]
  %v298 = vld [vmem:[%s0 + $0x460] sm:$0xf]
  %v299 = vld [vmem:[%s0 + $0x464] sm:$0xf]
  %v300 = vld [vmem:[%s0 + $0x468] sm:$0xf]
  %v301 = vld [vmem:[%s0 + $0x46c] sm:$0xf]
  %v302 = vld [vmem:[%s0 + $0x470] sm:$0xf]
  %v303 = vld [vmem:[%s0 + $0x474] sm:$0xf]
  %v304 = vld [vmem:[%s0 + $0x478] sm:$0xf]
  %v305 = vld [vmem:[%s0 + $0x47c] sm:$0xf]
  %v306 = vld [vmem:[%s0 + $0x480] sm:$0xf]
  %v307 = vld [vmem:[%s0 + $0x484] sm:$0xf]
  %v308 = vld [vmem:[%s0 + $0x488] sm:$0xf]
  %v309 = vld [vmem:[%s0 + $0x48c] sm:$0xf]
  %v310 = vld [vmem:[%s0 + $0x490] sm:$0xf]
  %v311 = vld [vmem:[%s0 + $0x494] sm:$0xf]
  %v312 = vld [vmem:[%s0 + $0x498] sm:$0xf]
  %v313 = vld [vmem:[%s0 + $0x49c] sm:$0xf]
  %v314 = vld [vmem:[%s0 + $0x4a0] sm:$0xf]
  %v315 = vld [vmem:[%s0 + $0x4a4] sm:$0xf]
  %v316 = vld [vmem:[%s0 + $0x4a8] sm:$0xf]
  %v317 = vld [vmem:[%s0 + $0x4ac] sm:$0xf]
  %v318 = vld [vmem:[%s0 + $0x4b0] sm:$0xf]
  %v319 = vld [vmem:[%s0 + $0x4b4] sm:$0xf]
  %v320 = vld [vmem:[%s0 + $0x4b8] sm:$0xf]
  %v321 = vld [vmem:[%s0 + $0x4bc] sm:$0xf]
  %v322 = vld [vmem:[%s0 + $0x4c0] sm:$0xf]
  %v323 = vld [vmem:[%s0 + $0x4c4] sm:$0xf]
  %v324 = vld [vmem:[%s0 + $0x4c8] sm:$0xf]
  %v325 = vld [vmem:[%s0 + $0x4cc] sm:$0xf]
  %v326 = vld [vmem:[%s0 + $0x4d0] sm:$0xf]
  %v327 = vld [vmem:[%s0 + $0x4d4] sm:$0xf]
  %v328 = vld [vmem:[%s0 + $0x4d8] sm:$0xf]
  %v329 = vld [vmem:[%s0 + $0x4dc] sm:$0xf]
  %v330 = vld [vmem:[%s0 + $0x4e0] sm:$0xf]
  %v331 = vld [vmem:[%s0 + $0x4e4] sm:$0xf]
  %v332 = vld [vmem:[%s0 + $0x4e8] sm:$0xf]
  %v333 = vld [vmem:[%s0 + $0x4ec] sm:$0xf]
  %v334 = vld [vmem:[%s0 + $0x4f0] sm:$0xf]
  %v335 = vld [vmem:[%s0 + $0x4f4] sm:$0xf]
  %v336 = vld [vmem:[%s0 + $0x4f8] sm:$0xf]
  %v337 = vld [vmem:[%s0 + $0x4fc] sm:$0xf]
  %v338 = vld [vmem:[%s0 + $0x500] sm:$0xf]
  %v339 = vld [vmem:[%s0 + $0x504] sm:$0xf]
  %v340 = vld [vmem:[%s0 + $0x508] sm:$0xf]
  %v341 = vld [vmem:[%s0 + $0x50c] sm:$0xf]
  %v342 = vld [vmem:[%s0 + $0x510] sm:$0xf]
  %v343 = vld [vmem:[%s0 + $0x514] sm:$0xf]
  %v344 = vld [vmem:[%s0 + $0x518] sm:$0xf]
  %v345 = vld [vmem:[%s0 + $0x51c] sm:$0xf]
  %v346 = vld [vmem:[%s0 + $0x520] sm:$0xf]
  %v347 = vld [vmem:[%s0 + $0x524] sm:$0xf]
  %v348 = vld [vmem:[%s0 + $0x528] sm:$0xf]
  %v349 = vld [vmem:[%s0 + $0x52c] sm:$0xf]
  %v350 = vld [vmem:[%s0 + $0x530] sm:$0xf]
  %v351 = vld [vmem:[%s0 + $0x534] sm:$0xf]
  %v352 = vld [vmem:[%s0 + $0x538] sm:$0xf]
  %v353 = vld [vmem:[%s0 + $0x53c] sm:$0xf]
  %v354 = vld [vmem:[%s0 + $0x540] sm:$0xf]
  %v355 = vld [vmem:[%s0 + $0x544] sm:$0xf]
  %v356 = vld [vmem:[%s0 + $0x548] sm:$0xf]
  %v357 = vld [vmem:[%s0 + $0x54c] sm:$0xf]
  %v358 = vld [vmem:[%s0 + $0x550] sm:$0xf]
  %v359 = vld [vmem:[%s0 + $0x554] sm:$0xf]
  %v360 = vld [vmem:[%s0 + $0x558] sm:$0xf]
  %v361 = vld [vmem:[%s0 + $0x55c] sm:$0xf]
  %v362 = vld [vmem:[%s0 + $0x560] sm:$0xf]
  %v363 = vld [vmem:[%s0 + $0x564] sm:$0xf]
  %v364 = vld [vmem:[%s0 + $0x568] sm:$0xf]
  %v365 = vld [vmem:[%s0 + $0x56c] sm:$0xf]
  %v366 = vld [vmem:[%s0 + $0x570] sm:$0xf]
  %v367 = vld [vmem:[%s0 + $0x574] sm:$0xf]
  %v368 = vld [vmem:[%s0 + $0x578] sm:$0xf]
  %v369 = vld [vmem:[%s0 + $0x57c] sm:$0xf]
  %v370 = vld [vmem:[%s0 + $0x580] sm:$0xf]
  %v371 = vld [vmem:[%s0 + $0x584] sm:$0xf]
  %v372 = vld [vmem:[%s0 + $0x588] sm:$0xf]
  %v373 = vld [vmem:[%s0 + $0x58c] sm:$0xf]
  %v374 = vld [vmem:[%s0 + $0x590] sm:$0xf]
  %v375 = vld [vmem:[%s0 + $0x594] sm:$0xf]
  %v376 = vld [vmem:[%s0 + $0x598] sm:$0xf]
  %v377 = vld [vmem:[%s0 + $0x59c] sm:$0xf]
  %v378 = vld [vmem:[%s0 + $0x5a0] sm:$0xf]
  %v379 = vld [vmem:[%s0 + $0x5a4] sm:$0xf]
  %v380 = vld [vmem:[%s0 + $0x5a8] sm:$0xf]
  %v381 = vld [vmem:[%s0 + $0x5ac] sm:$0xf]
  %v382 = vld [vmem:[%s0 + $0x5b0] sm:$0xf]
  %v383 = vld [vmem:[%s0 + $0x5b4] sm:$0xf]
  %v384 = vld [vmem:[%s0 + $0x5b8] sm:$0xf]
  %v385 = vld [vmem:[%s0 + $0x5bc] sm:$0xf]
  %v386 = vld [vmem:[%s0 + $0x5c0] sm:$0xf]
  %v387 = vld [vmem:[%s0 + $0x5c4] sm:$0xf]
  %v388 = vld [vmem:[%s0 + $0x5c8] sm:$0xf]
  %v389 = vld [vmem:[%s0 + $0x5cc] sm:$0xf]
  %v390 = vld [vmem:[%s0 + $0x5d0] sm:$0xf]
  %v391 = vld [vmem:[%s0 + $0x5d4] sm:$0xf]
  %v392 = vld [vmem:[%s0 + $0x5d8] sm:$0xf]
  %v393 = vld [vmem:[%s0 + $0x5dc] sm:$0xf]
  %v394 = vld [vmem:[%s0 + $0x5e0] sm:$0xf]
  %v395 = vld [vmem:[%s0 + $0x5e4] sm:$0xf]
  %v396 = vld [vmem:[%s0 + $0x5e8] sm:$0xf]
  %v397 = vld [vmem:[%s0 + $0x5ec] sm:$0xf]
  %v398 = vld [vmem:[%s0 + $0x5f0] sm:$0xf]
  %v399 = vld [vmem:[%s0 + $0x5f4] sm:$0xf]
  %v400 = vld [vmem:[%s0 + $0x5f8] sm:$0xf]
  %v401 = vld [vmem:[%s0 + $0x5fc] sm:$0xf]
  %v402 = vld [vmem:[%s0 + $0x600] sm:$0xf]
  %v403 = vld [vmem:[%s0 + $0x604] sm:$0xf]
  %v404 = vld [vmem:[%s0 + $0x608] sm:$0xf]
  %v405 = vld [vmem:[%s0 + $0x60c] sm:$0xf]
  %v406 = vld [vmem:[%s0 + $0x610] sm:$0xf]
  %v407 = vld [vmem:[%s0 + $0x614] sm:$0xf]
  %v408 = vld [vmem:[%s0 + $0x618] sm:$0xf]
  %v409 = vld [vmem:[%s0 + $0x61c] sm:$0xf]
  %v410 = vld [vmem:[%s0 + $0x620] sm:$0xf]
  %v411 = vld [vmem:[%s0 + $0x624] sm:$0xf]
  %v412 = vld [vmem:[%s0 + $0x628] sm:$0xf]
  %v413 = vld [vmem:[%s0 + $0x62c] sm:$0xf]
  %v414 = vld [vmem:[%s0 + $0x630] sm:$0xf]
  %v415 = vld [vmem:[%s0 + $0x634] sm:$0xf]
  %v416 = vld [vmem:[%s0 + $0x638] sm:$0xf]
  %v417 = vld [vmem:[%s0 + $0x63c] sm:$0xf]
  %v418 = vld [vmem:[%s0 + $0x640] sm:$0xf]
  %v419 = vld [vmem:[%s0 + $0x644] sm:$0xf]
  %v420 = vld [vmem:[%s0 + $0x648] sm:$0xf]
  %v421 = vld [vmem:[%s0 + $0x64c] sm:$0xf]
  %v422 = vld [vmem:[%s0 + $0x650] sm:$0xf]
  %v423 = vld [vmem:[%s0 + $0x654] sm:$0xf]
  %v424 = vld [vmem:[%s0 + $0x658] sm:$0xf]
  %v425 = vld [vmem:[%s0 + $0x65c] sm:$0xf]
  %v426 = vld [vmem:[%s0 + $0x660] sm:$0xf]
  %v427 = vld [vmem:[%s0 + $0x664] sm:$0xf]
  %v428 = vld [vmem:[%s0 + $0x668] sm:$0xf]
  %v429 = vld [vmem:[%s0 + $0x66c] sm:$0xf]
  %v430 = vld [vmem:[%s0 + $0x670] sm:$0xf]
  %v431 = vld [vmem:[%s0 + $0x674] sm:$0xf]
  %v432 = vld [vmem:[%s0 + $0x678] sm:$0xf]
  %v433 = vld [vmem:[%s0 + $0x67c] sm:$0xf]
  %v434 = vld [vmem:[%s0 + $0x680] sm:$0xf]
  %v435 = vld [vmem:[%s0 + $0x684] sm:$0xf]
  %v436 = vld [vmem:[%s0 + $0x688] sm:$0xf]
  %v437 = vld [vmem:[%s0 + $0x68c] sm:$0xf]
  %v438 = vld [vmem:[%s0 + $0x690] sm:$0xf]
  %v439 = vld [vmem:[%s0 + $0x694] sm:$0xf]
  %v440 = vld [vmem:[%s0 + $0x698] sm:$0xf]
  %v441 = vld [vmem:[%s0 + $0x69c] sm:$0xf]
  %v442 = vld [vmem:[%s0 + $0x6a0] sm:$0xf]
  %v443 = vld [vmem:[%s0 + $0x6a4] sm:$0xf]
  %v444 = vld [vmem:[%s0 + $0x6a8] sm:$0xf]
  %v445 = vld [vmem:[%s0 + $0x6ac] sm:$0xf]
  %v446 = vld [vmem:[%s0 + $0x6b0] sm:$0xf]
  %v447 = vld [vmem:[%s0 + $0x6b4] sm:$0xf]
  %v448 = vld [vmem:[%s0 + $0x6b8] sm:$0xf]
  %v449 = vld [vmem:[%s0 + $0x6bc] sm:$0xf]
  %v450 = vld [vmem:[%s0 + $0x6c0] sm:$0xf]
  %v451 = vld [vmem:[%s0 + $0x6c4] sm:$0xf]
  %v452 = vld [vmem:[%s0 + $0x6c8] sm:$0xf]
  %v453 = vld [vmem:[%s0 + $0x6cc] sm:$0xf]
  %v454 = vld [vmem:[%s0 + $0x6d0] sm:$0xf]
  %v455 = vld [vmem:[%s0 + $0x6d4] sm:$0xf]
  %v456 = vld [vmem:[%s0 + $0x6d8] sm:$0xf]
  %v457 = vld [vmem:[%s0 + $0x6dc] sm:$0xf]
  %v458 = vld [vmem:[%s0 + $0x6e0] sm:$0xf]
  %v459 = vld [vmem:[%s0 + $0x6e4] sm:$0xf]
  %v460 = vld [vmem:[%s0 + $0x6e8] sm:$0xf]
  %v461 = vld [vmem:[%s0 + $0x6ec] sm:$0xf]
  %v462 = vld [vmem:[%s0 + $0x6f0] sm:$0xf]
  %v463 = vld [vmem:[%s0 + $0x6f4] sm:$0xf]
  %v464 = vld [vmem:[%s0 + $0x6f8] sm:$0xf]
  %v465 = vld [vmem:[%s0 + $0x6fc] sm:$0xf]
  %v466 = vld [vmem:[%s0 + $0x700] sm:$0xf]
  %v467 = vld [vmem:[%s0 + $0x704] sm:$0xf]
  %v468 = vld [vmem:[%s0 + $0x708] sm:$0xf]
  %v469 = vld [vmem:[%s0 + $0x70c] sm:$0xf]
  %v470 = vld [vmem:[%s0 + $0x710] sm:$0xf]
  %v471 = vld [vmem:[%s0 + $0x714] sm:$0xf]
  %v472 = vld [vmem:[%s0 + $0x718] sm:$0xf]
  %v473 = vld [vmem:[%s0 + $0x71c] sm:$0xf]
  %v474 = vld [vmem:[%s0 + $0x720] sm:$0xf]
  %v475 = vld [vmem:[%s0 + $0x724] sm:$0xf]
  %v476 = vld [vmem:[%s0 + $0x728] sm:$0xf]
  %v477 = vld [vmem:[%s0 + $0x72c] sm:$0xf]
  %v478 = vld [vmem:[%s0 + $0x730] sm:$0xf]
  %v479 = vld [vmem:[%s0 + $0x734] sm:$0xf]
  %v480 = vld [vmem:[%s0 + $0x738] sm:$0xf]
  %v481 = vld [vmem:[%s0 + $0x73c] sm:$0xf]
  %v482 = vld [vmem:[%s0 + $0x740] sm:$0xf]
  %v483 = vld [vmem:[%s0 + $0x744] sm:$0xf]
  %v484 = vld [vmem:[%s0 + $0x748] sm:$0xf]
  %v485 = vld [vmem:[%s0 + $0x74c] sm:$0xf]
  %v486 = vld [vmem:[%s0 + $0x750] sm:$0xf]
  %v487 = vld [vmem:[%s0 + $0x754] sm:$0xf]
  %v488 = vld [vmem:[%s0 + $0x758] sm:$0xf]
  %v489 = vld [vmem:[%s0 + $0x75c] sm:$0xf]
  %v490 = vld [vmem:[%s0 + $0x760] sm:$0xf]
  %v491 = vld [vmem:[%s0 + $0x764] sm:$0xf]
  %v492 = vld [vmem:[%s0 + $0x768] sm:$0xf]
  %v493 = vld [vmem:[%s0 + $0x76c] sm:$0xf]
  %v494 = vld [vmem:[%s0 + $0x770] sm:$0xf]
  %v495 = vld [vmem:[%s0 + $0x774] sm:$0xf]
  %v496 = vld [vmem:[%s0 + $0x778] sm:$0xf]
  %v497 = vld [vmem:[%s0 + $0x77c] sm:$0xf]
  %v498 = vld [vmem:[%s0 + $0x780] sm:$0xf]
  %v499 = vld [vmem:[%s0 + $0x784] sm:$0xf]
  %v500 = vld [vmem:[%s0 + $0x788] sm:$0xf]
  %v501 = vld [vmem:[%s0 + $0x78c] sm:$0xf]
  %v502 = vld [vmem:[%s0 + $0x790] sm:$0xf]
  %v503 = vld [vmem:[%s0 + $0x794] sm:$0xf]
  %v504 = vld [vmem:[%s0 + $0x798] sm:$0xf]
  %v505 = vld [vmem:[%s0 + $0x79c] sm:$0xf]
  %v506 = vld [vmem:[%s0 + $0x7a0] sm:$0xf]
  %v507 = vld [vmem:[%s0 + $0x7a4] sm:$0xf]
  %v508 = vld [vmem:[%s0 + $0x7a8] sm:$0xf]
  %v509 = vld [vmem:[%s0 + $0x7ac] sm:$0xf]
  %v510 = vld [vmem:[%s0 + $0x7b0] sm:$0xf]
  %v511 = vld [vmem:[%s0 + $0x7b4] sm:$0xf]
  %v512 = vld [vmem:[%s0 + $0x7b8] sm:$0xf]
  %v513 = vld [vmem:[%s0 + $0x7bc] sm:$0xf]
  %v514 = vld [vmem:[%s0 + $0x7c0] sm:$0xf]
  %v515 = vld [vmem:[%s0 + $0x7c4] sm:$0xf]
  %v516 = vld [vmem:[%s0 + $0x7c8] sm:$0xf]
  %v517 = vld [vmem:[%s0 + $0x7cc] sm:$0xf]
  %v518 = vld [vmem:[%s0 + $0x7d0] sm:$0xf]
  %v519 = vld [vmem:[%s0 + $0x7d4] sm:$0xf]
  %v520 = vld [vmem:[%s0 + $0x7d8] sm:$0xf]
  %v521 = vld [vmem:[%s0 + $0x7dc] sm:$0xf]
  %v522 = vld [vmem:[%s0 + $0x7e0] sm:$0xf]
  %v523 = vld [vmem:[%s0 + $0x7e4] sm:$0xf]
  %v524 = vld [vmem:[%s0 + $0x7e8] sm:$0xf]
  %v525 = vld [vmem:[%s0 + $0x7ec] sm:$0xf]
  %v526 = vld [vmem:[%s0 + $0x7f0] sm:$0xf]
  %v527 = vld [vmem:[%s0 + $0x7f4] sm:$0xf]
  %v528 = vld [vmem:[%s0 + $0x7f8] sm:$0xf]
  %v529 = vld [vmem:[%s0 + $0x7fc] sm:$0xf]
  %v530 = vld [vmem:[%s1] sm:$0xf]
  %v531 = vld [vmem:[%s1 + $0x4] sm:$0xf]
  %v532 = vld [vmem:[%s1 + $0x8] sm:$0xf]
  %v533 = vld [vmem:[%s1 + $0xc] sm:$0xf]
  %v534 = vld [vmem:[%s1 + $0x10] sm:$0xf]
  %v535 = vld [vmem:[%s1 + $0x14] sm:$0xf]
  %v536 = vld [vmem:[%s1 + $0x18] sm:$0xf]
  %v537 = vld [vmem:[%s1 + $0x1c] sm:$0xf]
  %v538 = vld [vmem:[%s1 + $0x20] sm:$0xf]
  %v539 = vld [vmem:[%s1 + $0x24] sm:$0xf]
  %v540 = vld [vmem:[%s1 + $0x28] sm:$0xf]
  %v541 = vld [vmem:[%s1 + $0x2c] sm:$0xf]
  %v542 = vld [vmem:[%s1 + $0x30] sm:$0xf]
  %v543 = vld [vmem:[%s1 + $0x34] sm:$0xf]
  %v544 = vld [vmem:[%s1 + $0x38] sm:$0xf]
  %v545 = vld [vmem:[%s1 + $0x3c] sm:$0xf]
  %v546 = vld [vmem:[%s2] sm:$0x1]
  %v548 = vlaneseq
  %v549 = vshrl.u32 %v548, 7
  %v550 = vsub.s32 0, %v549
  %v551 = vrot.slane %v546, %v550
  %v1065 = vunpack.c.l.b16 %v18
  %v1066 = vunpack.c.l.b16 %v19
  %v1067 = vunpack.c.l.b16 %v20
  %v1068 = vunpack.c.l.b16 %v21
  %v1069 = vunpack.c.l.b16 %v22
  %v1070 = vunpack.c.l.b16 %v23
  %v1071 = vunpack.c.l.b16 %v24
  %v1072 = vunpack.c.l.b16 %v25
  %v1073 = vunpack.c.l.b16 %v26
  %v1074 = vunpack.c.l.b16 %v27
  %v1075 = vunpack.c.l.b16 %v28
  %v1076 = vunpack.c.l.b16 %v29
  %v1077 = vunpack.c.l.b16 %v30
  %v1078 = vunpack.c.l.b16 %v31
  %v1079 = vunpack.c.l.b16 %v32
  %v1080 = vunpack.c.l.b16 %v33
  %v1081 = vunpack.c.l.b16 %v34
  %v1082 = vunpack.c.l.b16 %v35
  %v1083 = vunpack.c.l.b16 %v36
  %v1084 = vunpack.c.l.b16 %v37
  %v1085 = vunpack.c.l.b16 %v38
  %v1086 = vunpack.c.l.b16 %v39
  %v1087 = vunpack.c.l.b16 %v40
  %v1088 = vunpack.c.l.b16 %v41
  %v1089 = vunpack.c.l.b16 %v42
  %v1090 = vunpack.c.l.b16 %v43
  %v1091 = vunpack.c.l.b16 %v44
  %v1092 = vunpack.c.l.b16 %v45
  %v1093 = vunpack.c.l.b16 %v46
  %v1094 = vunpack.c.l.b16 %v47
  %v1095 = vunpack.c.l.b16 %v48
  %v1096 = vunpack.c.l.b16 %v49
  %v1097 = vunpack.c.l.b16 %v50
  %v1098 = vunpack.c.l.b16 %v51
  %v1099 = vunpack.c.l.b16 %v52
  %v1100 = vunpack.c.l.b16 %v53
  %v1101 = vunpack.c.l.b16 %v54
  %v1102 = vunpack.c.l.b16 %v55
  %v1103 = vunpack.c.l.b16 %v56
  %v1104 = vunpack.c.l.b16 %v57
  %v1105 = vunpack.c.l.b16 %v58
  %v1106 = vunpack.c.l.b16 %v59
  %v1107 = vunpack.c.l.b16 %v60
  %v1108 = vunpack.c.l.b16 %v61
  %v1109 = vunpack.c.l.b16 %v62
  %v1110 = vunpack.c.l.b16 %v63
  %v1111 = vunpack.c.l.b16 %v64
  %v1112 = vunpack.c.l.b16 %v65
  %v1113 = vunpack.c.l.b16 %v66
  %v1114 = vunpack.c.l.b16 %v67
  %v1115 = vunpack.c.l.b16 %v68
  %v1116 = vunpack.c.l.b16 %v69
  %v1117 = vunpack.c.l.b16 %v70
  %v1118 = vunpack.c.l.b16 %v71
  %v1119 = vunpack.c.l.b16 %v72
  %v1120 = vunpack.c.l.b16 %v73
  %v1121 = vunpack.c.l.b16 %v74
  %v1122 = vunpack.c.l.b16 %v75
  %v1123 = vunpack.c.l.b16 %v76
  %v1124 = vunpack.c.l.b16 %v77
  %v1125 = vunpack.c.l.b16 %v78
  %v1126 = vunpack.c.l.b16 %v79
  %v1127 = vunpack.c.l.b16 %v80
  %v1128 = vunpack.c.l.b16 %v81
  %v1129 = vunpack.c.l.b16 %v82
  %v1130 = vunpack.c.l.b16 %v83
  %v1131 = vunpack.c.l.b16 %v84
  %v1132 = vunpack.c.l.b16 %v85
  %v1133 = vunpack.c.l.b16 %v86
  %v1134 = vunpack.c.l.b16 %v87
  %v1135 = vunpack.c.l.b16 %v88
  %v1136 = vunpack.c.l.b16 %v89
  %v1137 = vunpack.c.l.b16 %v90
  %v1138 = vunpack.c.l.b16 %v91
  %v1139 = vunpack.c.l.b16 %v92
  %v1140 = vunpack.c.l.b16 %v93
  %v1141 = vunpack.c.l.b16 %v94
  %v1142 = vunpack.c.l.b16 %v95
  %v1143 = vunpack.c.l.b16 %v96
  %v1144 = vunpack.c.l.b16 %v97
  %v1145 = vunpack.c.l.b16 %v98
  %v1146 = vunpack.c.l.b16 %v99
  %v1147 = vunpack.c.l.b16 %v100
  %v1148 = vunpack.c.l.b16 %v101
  %v1149 = vunpack.c.l.b16 %v102
  %v1150 = vunpack.c.l.b16 %v103
  %v1151 = vunpack.c.l.b16 %v104
  %v1152 = vunpack.c.l.b16 %v105
  %v1153 = vunpack.c.l.b16 %v106
  %v1154 = vunpack.c.l.b16 %v107
  %v1155 = vunpack.c.l.b16 %v108
  %v1156 = vunpack.c.l.b16 %v109
  %v1157 = vunpack.c.l.b16 %v110
  %v1158 = vunpack.c.l.b16 %v111
  %v1159 = vunpack.c.l.b16 %v112
  %v1160 = vunpack.c.l.b16 %v113
  %v1161 = vunpack.c.l.b16 %v114
  %v1162 = vunpack.c.l.b16 %v115
  %v1163 = vunpack.c.l.b16 %v116
  %v1164 = vunpack.c.l.b16 %v117
  %v1165 = vunpack.c.l.b16 %v118
  %v1166 = vunpack.c.l.b16 %v119
  %v1167 = vunpack.c.l.b16 %v120
  %v1168 = vunpack.c.l.b16 %v121
  %v1169 = vunpack.c.l.b16 %v122
  %v1170 = vunpack.c.l.b16 %v123
  %v1171 = vunpack.c.l.b16 %v124
  %v1172 = vunpack.c.l.b16 %v125
  %v1173 = vunpack.c.l.b16 %v126
  %v1174 = vunpack.c.l.b16 %v127
  %v1175 = vunpack.c.l.b16 %v128
  %v1176 = vunpack.c.l.b16 %v129
  %v1177 = vunpack.c.l.b16 %v130
  %v1178 = vunpack.c.l.b16 %v131
  %v1179 = vunpack.c.l.b16 %v132
  %v1180 = vunpack.c.l.b16 %v133
  %v1181 = vunpack.c.l.b16 %v134
  %v1182 = vunpack.c.l.b16 %v135
  %v1183 = vunpack.c.l.b16 %v136
  %v1184 = vunpack.c.l.b16 %v137
  %v1185 = vunpack.c.l.b16 %v138
  %v1186 = vunpack.c.l.b16 %v139
  %v1187 = vunpack.c.l.b16 %v140
  %v1188 = vunpack.c.l.b16 %v141
  %v1189 = vunpack.c.l.b16 %v142
  %v1190 = vunpack.c.l.b16 %v143
  %v1191 = vunpack.c.l.b16 %v144
  %v1192 = vunpack.c.l.b16 %v145
  %v1193 = vunpack.c.l.b16 %v146
  %v1194 = vunpack.c.l.b16 %v147
  %v1195 = vunpack.c.l.b16 %v148
  %v1196 = vunpack.c.l.b16 %v149
  %v1197 = vunpack.c.l.b16 %v150
  %v1198 = vunpack.c.l.b16 %v151
  %v1199 = vunpack.c.l.b16 %v152
  %v1200 = vunpack.c.l.b16 %v153
  %v1201 = vunpack.c.l.b16 %v154
  %v1202 = vunpack.c.l.b16 %v155
  %v1203 = vunpack.c.l.b16 %v156
  %v1204 = vunpack.c.l.b16 %v157
  %v1205 = vunpack.c.l.b16 %v158
  %v1206 = vunpack.c.l.b16 %v159
  %v1207 = vunpack.c.l.b16 %v160
  %v1208 = vunpack.c.l.b16 %v161
  %v1209 = vunpack.c.l.b16 %v162
  %v1210 = vunpack.c.l.b16 %v163
  %v1211 = vunpack.c.l.b16 %v164
  %v1212 = vunpack.c.l.b16 %v165
  %v1213 = vunpack.c.l.b16 %v166
  %v1214 = vunpack.c.l.b16 %v167
  %v1215 = vunpack.c.l.b16 %v168
  %v1216 = vunpack.c.l.b16 %v169
  %v1217 = vunpack.c.l.b16 %v170
  %v1218 = vunpack.c.l.b16 %v171
  %v1219 = vunpack.c.l.b16 %v172
  %v1220 = vunpack.c.l.b16 %v173
  %v1221 = vunpack.c.l.b16 %v174
  %v1222 = vunpack.c.l.b16 %v175
  %v1223 = vunpack.c.l.b16 %v176
  %v1224 = vunpack.c.l.b16 %v177
  %v1225 = vunpack.c.l.b16 %v178
  %v1226 = vunpack.c.l.b16 %v179
  %v1227 = vunpack.c.l.b16 %v180
  %v1228 = vunpack.c.l.b16 %v181
  %v1229 = vunpack.c.l.b16 %v182
  %v1230 = vunpack.c.l.b16 %v183
  %v1231 = vunpack.c.l.b16 %v184
  %v1232 = vunpack.c.l.b16 %v185
  %v1233 = vunpack.c.l.b16 %v186
  %v1234 = vunpack.c.l.b16 %v187
  %v1235 = vunpack.c.l.b16 %v188
  %v1236 = vunpack.c.l.b16 %v189
  %v1237 = vunpack.c.l.b16 %v190
  %v1238 = vunpack.c.l.b16 %v191
  %v1239 = vunpack.c.l.b16 %v192
  %v1240 = vunpack.c.l.b16 %v193
  %v1241 = vunpack.c.l.b16 %v194
  %v1242 = vunpack.c.l.b16 %v195
  %v1243 = vunpack.c.l.b16 %v196
  %v1244 = vunpack.c.l.b16 %v197
  %v1245 = vunpack.c.l.b16 %v198
  %v1246 = vunpack.c.l.b16 %v199
  %v1247 = vunpack.c.l.b16 %v200
  %v1248 = vunpack.c.l.b16 %v201
  %v1249 = vunpack.c.l.b16 %v202
  %v1250 = vunpack.c.l.b16 %v203
  %v1251 = vunpack.c.l.b16 %v204
  %v1252 = vunpack.c.l.b16 %v205
  %v1253 = vunpack.c.l.b16 %v206
  %v1254 = vunpack.c.l.b16 %v207
  %v1255 = vunpack.c.l.b16 %v208
  %v1256 = vunpack.c.l.b16 %v209
  %v1257 = vunpack.c.l.b16 %v210
  %v1258 = vunpack.c.l.b16 %v211
  %v1259 = vunpack.c.l.b16 %v212
  %v1260 = vunpack.c.l.b16 %v213
  %v1261 = vunpack.c.l.b16 %v214
  %v1262 = vunpack.c.l.b16 %v215
  %v1263 = vunpack.c.l.b16 %v216
  %v1264 = vunpack.c.l.b16 %v217
  %v1265 = vunpack.c.l.b16 %v218
  %v1266 = vunpack.c.l.b16 %v219
  %v1267 = vunpack.c.l.b16 %v220
  %v1268 = vunpack.c.l.b16 %v221
  %v1269 = vunpack.c.l.b16 %v222
  %v1270 = vunpack.c.l.b16 %v223
  %v1271 = vunpack.c.l.b16 %v224
  %v1272 = vunpack.c.l.b16 %v225
  %v1273 = vunpack.c.l.b16 %v226
  %v1274 = vunpack.c.l.b16 %v227
  %v1275 = vunpack.c.l.b16 %v228
  %v1276 = vunpack.c.l.b16 %v229
  %v1277 = vunpack.c.l.b16 %v230
  %v1278 = vunpack.c.l.b16 %v231
  %v1279 = vunpack.c.l.b16 %v232
  %v1280 = vunpack.c.l.b16 %v233
  %v1281 = vunpack.c.l.b16 %v234
  %v1282 = vunpack.c.l.b16 %v235
  %v1283 = vunpack.c.l.b16 %v236
  %v1284 = vunpack.c.l.b16 %v237
  %v1285 = vunpack.c.l.b16 %v238
  %v1286 = vunpack.c.l.b16 %v239
  %v1287 = vunpack.c.l.b16 %v240
  %v1288 = vunpack.c.l.b16 %v241
  %v1289 = vunpack.c.l.b16 %v242
  %v1290 = vunpack.c.l.b16 %v243
  %v1291 = vunpack.c.l.b16 %v244
  %v1292 = vunpack.c.l.b16 %v245
  %v1293 = vunpack.c.l.b16 %v246
  %v1294 = vunpack.c.l.b16 %v247
  %v1295 = vunpack.c.l.b16 %v248
  %v1296 = vunpack.c.l.b16 %v249
  %v1297 = vunpack.c.l.b16 %v250
  %v1298 = vunpack.c.l.b16 %v251
  %v1299 = vunpack.c.l.b16 %v252
  %v1300 = vunpack.c.l.b16 %v253
  %v1301 = vunpack.c.l.b16 %v254
  %v1302 = vunpack.c.l.b16 %v255
  %v1303 = vunpack.c.l.b16 %v256
  %v1304 = vunpack.c.l.b16 %v257
  %v1305 = vunpack.c.l.b16 %v258
  %v1306 = vunpack.c.l.b16 %v259
  %v1307 = vunpack.c.l.b16 %v260
  %v1308 = vunpack.c.l.b16 %v261
  %v1309 = vunpack.c.l.b16 %v262
  %v1310 = vunpack.c.l.b16 %v263
  %v1311 = vunpack.c.l.b16 %v264
  %v1312 = vunpack.c.l.b16 %v265
  %v1313 = vunpack.c.l.b16 %v266
  %v1314 = vunpack.c.l.b16 %v267
  %v1315 = vunpack.c.l.b16 %v268
  %v1316 = vunpack.c.l.b16 %v269
  %v1317 = vunpack.c.l.b16 %v270
  %v1318 = vunpack.c.l.b16 %v271
  %v1319 = vunpack.c.l.b16 %v272
  %v1320 = vunpack.c.l.b16 %v273
  %v1321 = vunpack.c.l.b16 %v274
  %v1322 = vunpack.c.l.b16 %v275
  %v1323 = vunpack.c.l.b16 %v276
  %v1324 = vunpack.c.l.b16 %v277
  %v1325 = vunpack.c.l.b16 %v278
  %v1326 = vunpack.c.l.b16 %v279
  %v1327 = vunpack.c.l.b16 %v280
  %v1328 = vunpack.c.l.b16 %v281
  %v1329 = vunpack.c.l.b16 %v282
  %v1330 = vunpack.c.l.b16 %v283
  %v1331 = vunpack.c.l.b16 %v284
  %v1332 = vunpack.c.l.b16 %v285
  %v1333 = vunpack.c.l.b16 %v286
  %v1334 = vunpack.c.l.b16 %v287
  %v1335 = vunpack.c.l.b16 %v288
  %v1336 = vunpack.c.l.b16 %v289
  %v1337 = vunpack.c.l.b16 %v290
  %v1338 = vunpack.c.l.b16 %v291
  %v1339 = vunpack.c.l.b16 %v292
  %v1340 = vunpack.c.l.b16 %v293
  %v1341 = vunpack.c.l.b16 %v294
  %v1342 = vunpack.c.l.b16 %v295
  %v1343 = vunpack.c.l.b16 %v296
  %v1344 = vunpack.c.l.b16 %v297
  %v1345 = vunpack.c.l.b16 %v298
  %v1346 = vunpack.c.l.b16 %v299
  %v1347 = vunpack.c.l.b16 %v300
  %v1348 = vunpack.c.l.b16 %v301
  %v1349 = vunpack.c.l.b16 %v302
  %v1350 = vunpack.c.l.b16 %v303
  %v1351 = vunpack.c.l.b16 %v304
  %v1352 = vunpack.c.l.b16 %v305
  %v1353 = vunpack.c.l.b16 %v306
  %v1354 = vunpack.c.l.b16 %v307
  %v1355 = vunpack.c.l.b16 %v308
  %v1356 = vunpack.c.l.b16 %v309
  %v1357 = vunpack.c.l.b16 %v310
  %v1358 = vunpack.c.l.b16 %v311
  %v1359 = vunpack.c.l.b16 %v312
  %v1360 = vunpack.c.l.b16 %v313
  %v1361 = vunpack.c.l.b16 %v314
  %v1362 = vunpack.c.l.b16 %v315
  %v1363 = vunpack.c.l.b16 %v316
  %v1364 = vunpack.c.l.b16 %v317
  %v1365 = vunpack.c.l.b16 %v318
  %v1366 = vunpack.c.l.b16 %v319
  %v1367 = vunpack.c.l.b16 %v320
  %v1368 = vunpack.c.l.b16 %v321
  %v1369 = vunpack.c.l.b16 %v322
  %v1370 = vunpack.c.l.b16 %v323
  %v1371 = vunpack.c.l.b16 %v324
  %v1372 = vunpack.c.l.b16 %v325
  %v1373 = vunpack.c.l.b16 %v326
  %v1374 = vunpack.c.l.b16 %v327
  %v1375 = vunpack.c.l.b16 %v328
  %v1376 = vunpack.c.l.b16 %v329
  %v1377 = vunpack.c.l.b16 %v330
  %v1378 = vunpack.c.l.b16 %v331
  %v1379 = vunpack.c.l.b16 %v332
  %v1380 = vunpack.c.l.b16 %v333
  %v1381 = vunpack.c.l.b16 %v334
  %v1382 = vunpack.c.l.b16 %v335
  %v1383 = vunpack.c.l.b16 %v336
  %v1384 = vunpack.c.l.b16 %v337
  %v1385 = vunpack.c.l.b16 %v338
  %v1386 = vunpack.c.l.b16 %v339
  %v1387 = vunpack.c.l.b16 %v340
  %v1388 = vunpack.c.l.b16 %v341
  %v1389 = vunpack.c.l.b16 %v342
  %v1390 = vunpack.c.l.b16 %v343
  %v1391 = vunpack.c.l.b16 %v344
  %v1392 = vunpack.c.l.b16 %v345
  %v1393 = vunpack.c.l.b16 %v346
  %v1394 = vunpack.c.l.b16 %v347
  %v1395 = vunpack.c.l.b16 %v348
  %v1396 = vunpack.c.l.b16 %v349
  %v1397 = vunpack.c.l.b16 %v350
  %v1398 = vunpack.c.l.b16 %v351
  %v1399 = vunpack.c.l.b16 %v352
  %v1400 = vunpack.c.l.b16 %v353
  %v1401 = vunpack.c.l.b16 %v354
  %v1402 = vunpack.c.l.b16 %v355
  %v1403 = vunpack.c.l.b16 %v356
  %v1404 = vunpack.c.l.b16 %v357
  %v1405 = vunpack.c.l.b16 %v358
  %v1406 = vunpack.c.l.b16 %v359
  %v1407 = vunpack.c.l.b16 %v360
  %v1408 = vunpack.c.l.b16 %v361
  %v1409 = vunpack.c.l.b16 %v362
  %v1410 = vunpack.c.l.b16 %v363
  %v1411 = vunpack.c.l.b16 %v364
  %v1412 = vunpack.c.l.b16 %v365
  %v1413 = vunpack.c.l.b16 %v366
  %v1414 = vunpack.c.l.b16 %v367
  %v1415 = vunpack.c.l.b16 %v368
  %v1416 = vunpack.c.l.b16 %v369
  %v1417 = vunpack.c.l.b16 %v370
  %v1418 = vunpack.c.l.b16 %v371
  %v1419 = vunpack.c.l.b16 %v372
  %v1420 = vunpack.c.l.b16 %v373
  %v1421 = vunpack.c.l.b16 %v374
  %v1422 = vunpack.c.l.b16 %v375
  %v1423 = vunpack.c.l.b16 %v376
  %v1424 = vunpack.c.l.b16 %v377
  %v1425 = vunpack.c.l.b16 %v378
  %v1426 = vunpack.c.l.b16 %v379
  %v1427 = vunpack.c.l.b16 %v380
  %v1428 = vunpack.c.l.b16 %v381
  %v1429 = vunpack.c.l.b16 %v382
  %v1430 = vunpack.c.l.b16 %v383
  %v1431 = vunpack.c.l.b16 %v384
  %v1432 = vunpack.c.l.b16 %v385
  %v1433 = vunpack.c.l.b16 %v386
  %v1434 = vunpack.c.l.b16 %v387
  %v1435 = vunpack.c.l.b16 %v388
  %v1436 = vunpack.c.l.b16 %v389
  %v1437 = vunpack.c.l.b16 %v390
  %v1438 = vunpack.c.l.b16 %v391
  %v1439 = vunpack.c.l.b16 %v392
  %v1440 = vunpack.c.l.b16 %v393
  %v1441 = vunpack.c.l.b16 %v394
  %v1442 = vunpack.c.l.b16 %v395
  %v1443 = vunpack.c.l.b16 %v396
  %v1444 = vunpack.c.l.b16 %v397
  %v1445 = vunpack.c.l.b16 %v398
  %v1446 = vunpack.c.l.b16 %v399
  %v1447 = vunpack.c.l.b16 %v400
  %v1448 = vunpack.c.l.b16 %v401
  %v1449 = vunpack.c.l.b16 %v402
  %v1450 = vunpack.c.l.b16 %v403
  %v1451 = vunpack.c.l.b16 %v404
  %v1452 = vunpack.c.l.b16 %v405
  %v1453 = vunpack.c.l.b16 %v406
  %v1454 = vunpack.c.l.b16 %v407
  %v1455 = vunpack.c.l.b16 %v408
  %v1456 = vunpack.c.l.b16 %v409
  %v1457 = vunpack.c.l.b16 %v410
  %v1458 = vunpack.c.l.b16 %v411
  %v1459 = vunpack.c.l.b16 %v412
  %v1460 = vunpack.c.l.b16 %v413
  %v1461 = vunpack.c.l.b16 %v414
  %v1462 = vunpack.c.l.b16 %v415
  %v1463 = vunpack.c.l.b16 %v416
  %v1464 = vunpack.c.l.b16 %v417
  %v1465 = vunpack.c.l.b16 %v418
  %v1466 = vunpack.c.l.b16 %v419
  %v1467 = vunpack.c.l.b16 %v420
  %v1468 = vunpack.c.l.b16 %v421
  %v1469 = vunpack.c.l.b16 %v422
  %v1470 = vunpack.c.l.b16 %v423
  %v1471 = vunpack.c.l.b16 %v424
  %v1472 = vunpack.c.l.b16 %v425
  %v1473 = vunpack.c.l.b16 %v426
  %v1474 = vunpack.c.l.b16 %v427
  %v1475 = vunpack.c.l.b16 %v428
  %v1476 = vunpack.c.l.b16 %v429
  %v1477 = vunpack.c.l.b16 %v430
  %v1478 = vunpack.c.l.b16 %v431
  %v1479 = vunpack.c.l.b16 %v432
  %v1480 = vunpack.c.l.b16 %v433
  %v1481 = vunpack.c.l.b16 %v434
  %v1482 = vunpack.c.l.b16 %v435
  %v1483 = vunpack.c.l.b16 %v436
  %v1484 = vunpack.c.l.b16 %v437
  %v1485 = vunpack.c.l.b16 %v438
  %v1486 = vunpack.c.l.b16 %v439
  %v1487 = vunpack.c.l.b16 %v440
  %v1488 = vunpack.c.l.b16 %v441
  %v1489 = vunpack.c.l.b16 %v442
  %v1490 = vunpack.c.l.b16 %v443
  %v1491 = vunpack.c.l.b16 %v444
  %v1492 = vunpack.c.l.b16 %v445
  %v1493 = vunpack.c.l.b16 %v446
  %v1494 = vunpack.c.l.b16 %v447
  %v1495 = vunpack.c.l.b16 %v448
  %v1496 = vunpack.c.l.b16 %v449
  %v1497 = vunpack.c.l.b16 %v450
  %v1498 = vunpack.c.l.b16 %v451
  %v1499 = vunpack.c.l.b16 %v452
  %v1500 = vunpack.c.l.b16 %v453
  %v1501 = vunpack.c.l.b16 %v454
  %v1502 = vunpack.c.l.b16 %v455
  %v1503 = vunpack.c.l.b16 %v456
  %v1504 = vunpack.c.l.b16 %v457
  %v1505 = vunpack.c.l.b16 %v458
  %v1506 = vunpack.c.l.b16 %v459
  %v1507 = vunpack.c.l.b16 %v460
  %v1508 = vunpack.c.l.b16 %v461
  %v1509 = vunpack.c.l.b16 %v462
  %v1510 = vunpack.c.l.b16 %v463
  %v1511 = vunpack.c.l.b16 %v464
  %v1512 = vunpack.c.l.b16 %v465
  %v1513 = vunpack.c.l.b16 %v466
  %v1514 = vunpack.c.l.b16 %v467
  %v1515 = vunpack.c.l.b16 %v468
  %v1516 = vunpack.c.l.b16 %v469
  %v1517 = vunpack.c.l.b16 %v470
  %v1518 = vunpack.c.l.b16 %v471
  %v1519 = vunpack.c.l.b16 %v472
  %v1520 = vunpack.c.l.b16 %v473
  %v1521 = vunpack.c.l.b16 %v474
  %v1522 = vunpack.c.l.b16 %v475
  %v1523 = vunpack.c.l.b16 %v476
  %v1524 = vunpack.c.l.b16 %v477
  %v1525 = vunpack.c.l.b16 %v478
  %v1526 = vunpack.c.l.b16 %v479
  %v1527 = vunpack.c.l.b16 %v480
  %v1528 = vunpack.c.l.b16 %v481
  %v1529 = vunpack.c.l.b16 %v482
  %v1530 = vunpack.c.l.b16 %v483
  %v1531 = vunpack.c.l.b16 %v484
  %v1532 = vunpack.c.l.b16 %v485
  %v1533 = vunpack.c.l.b16 %v486
  %v1534 = vunpack.c.l.b16 %v487
  %v1535 = vunpack.c.l.b16 %v488
  %v1536 = vunpack.c.l.b16 %v489
  %v1537 = vunpack.c.l.b16 %v490
  %v1538 = vunpack.c.l.b16 %v491
  %v1539 = vunpack.c.l.b16 %v492
  %v1540 = vunpack.c.l.b16 %v493
  %v1541 = vunpack.c.l.b16 %v494
  %v1542 = vunpack.c.l.b16 %v495
  %v1543 = vunpack.c.l.b16 %v496
  %v1544 = vunpack.c.l.b16 %v497
  %v1545 = vunpack.c.l.b16 %v498
  %v1546 = vunpack.c.l.b16 %v499
  %v1547 = vunpack.c.l.b16 %v500
  %v1548 = vunpack.c.l.b16 %v501
  %v1549 = vunpack.c.l.b16 %v502
  %v1550 = vunpack.c.l.b16 %v503
  %v1551 = vunpack.c.l.b16 %v504
  %v1552 = vunpack.c.l.b16 %v505
  %v1553 = vunpack.c.l.b16 %v506
  %v1554 = vunpack.c.l.b16 %v507
  %v1555 = vunpack.c.l.b16 %v508
  %v1556 = vunpack.c.l.b16 %v509
  %v1557 = vunpack.c.l.b16 %v510
  %v1558 = vunpack.c.l.b16 %v511
  %v1559 = vunpack.c.l.b16 %v512
  %v1560 = vunpack.c.l.b16 %v513
  %v1561 = vunpack.c.l.b16 %v514
  %v1562 = vunpack.c.l.b16 %v515
  %v1563 = vunpack.c.l.b16 %v516
  %v1564 = vunpack.c.l.b16 %v517
  %v1565 = vunpack.c.l.b16 %v518
  %v1566 = vunpack.c.l.b16 %v519
  %v1567 = vunpack.c.l.b16 %v520
  %v1568 = vunpack.c.l.b16 %v521
  %v1569 = vunpack.c.l.b16 %v522
  %v1570 = vunpack.c.l.b16 %v523
  %v1571 = vunpack.c.l.b16 %v524
  %v1572 = vunpack.c.l.b16 %v525
  %v1573 = vunpack.c.l.b16 %v526
  %v1574 = vunpack.c.l.b16 %v527
  %v1575 = vunpack.c.l.b16 %v528
  %v1576 = vunpack.c.l.b16 %v529
  %v1577 = vpack.c.b16 %v1066, %v1065
  %v1578 = vpack.c.b16 %v1068, %v1067
  %v1579 = vpack.c.b16 %v1070, %v1069
  %v1580 = vpack.c.b16 %v1072, %v1071
  %v1581 = vpack.c.b16 %v1074, %v1073
  %v1582 = vpack.c.b16 %v1076, %v1075
  %v1583 = vpack.c.b16 %v1078, %v1077
  %v1584 = vpack.c.b16 %v1080, %v1079
  %v1585 = vpack.c.b16 %v1082, %v1081
  %v1586 = vpack.c.b16 %v1084, %v1083
  %v1587 = vpack.c.b16 %v1086, %v1085
  %v1588 = vpack.c.b16 %v1088, %v1087
  %v1589 = vpack.c.b16 %v1090, %v1089
  %v1590 = vpack.c.b16 %v1092, %v1091
  %v1591 = vpack.c.b16 %v1094, %v1093
  %v1592 = vpack.c.b16 %v1096, %v1095
  %v1593 = vpack.c.b16 %v1098, %v1097
  %v1594 = vpack.c.b16 %v1100, %v1099
  %v1595 = vpack.c.b16 %v1102, %v1101
  %v1596 = vpack.c.b16 %v1104, %v1103
  %v1597 = vpack.c.b16 %v1106, %v1105
  %v1598 = vpack.c.b16 %v1108, %v1107
  %v1599 = vpack.c.b16 %v1110, %v1109
  %v1600 = vpack.c.b16 %v1112, %v1111
  %v1601 = vpack.c.b16 %v1114, %v1113
  %v1602 = vpack.c.b16 %v1116, %v1115
  %v1603 = vpack.c.b16 %v1118, %v1117
  %v1604 = vpack.c.b16 %v1120, %v1119
  %v1605 = vpack.c.b16 %v1122, %v1121
  %v1606 = vpack.c.b16 %v1124, %v1123
  %v1607 = vpack.c.b16 %v1126, %v1125
  %v1608 = vpack.c.b16 %v1128, %v1127
  %v1609 = vpack.c.b16 %v1130, %v1129
  %v1610 = vpack.c.b16 %v1132, %v1131
  %v1611 = vpack.c.b16 %v1134, %v1133
  %v1612 = vpack.c.b16 %v1136, %v1135
  %v1613 = vpack.c.b16 %v1138, %v1137
  %v1614 = vpack.c.b16 %v1140, %v1139
  %v1615 = vpack.c.b16 %v1142, %v1141
  %v1616 = vpack.c.b16 %v1144, %v1143
  %v1617 = vpack.c.b16 %v1146, %v1145
  %v1618 = vpack.c.b16 %v1148, %v1147
  %v1619 = vpack.c.b16 %v1150, %v1149
  %v1620 = vpack.c.b16 %v1152, %v1151
  %v1621 = vpack.c.b16 %v1154, %v1153
  %v1622 = vpack.c.b16 %v1156, %v1155
  %v1623 = vpack.c.b16 %v1158, %v1157
  %v1624 = vpack.c.b16 %v1160, %v1159
  %v1625 = vpack.c.b16 %v1162, %v1161
  %v1626 = vpack.c.b16 %v1164, %v1163
  %v1627 = vpack.c.b16 %v1166, %v1165
  %v1628 = vpack.c.b16 %v1168, %v1167
  %v1629 = vpack.c.b16 %v1170, %v1169
  %v1630 = vpack.c.b16 %v1172, %v1171
  %v1631 = vpack.c.b16 %v1174, %v1173
  %v1632 = vpack.c.b16 %v1176, %v1175
  %v1633 = vpack.c.b16 %v1178, %v1177
  %v1634 = vpack.c.b16 %v1180, %v1179
  %v1635 = vpack.c.b16 %v1182, %v1181
  %v1636 = vpack.c.b16 %v1184, %v1183
  %v1637 = vpack.c.b16 %v1186, %v1185
  %v1638 = vpack.c.b16 %v1188, %v1187
  %v1639 = vpack.c.b16 %v1190, %v1189
  %v1640 = vpack.c.b16 %v1192, %v1191
  %v1641 = vpack.c.b16 %v1194, %v1193
  %v1642 = vpack.c.b16 %v1196, %v1195
  %v1643 = vpack.c.b16 %v1198, %v1197
  %v1644 = vpack.c.b16 %v1200, %v1199
  %v1645 = vpack.c.b16 %v1202, %v1201
  %v1646 = vpack.c.b16 %v1204, %v1203
  %v1647 = vpack.c.b16 %v1206, %v1205
  %v1648 = vpack.c.b16 %v1208, %v1207
  %v1649 = vpack.c.b16 %v1210, %v1209
  %v1650 = vpack.c.b16 %v1212, %v1211
  %v1651 = vpack.c.b16 %v1214, %v1213
  %v1652 = vpack.c.b16 %v1216, %v1215
  %v1653 = vpack.c.b16 %v1218, %v1217
  %v1654 = vpack.c.b16 %v1220, %v1219
  %v1655 = vpack.c.b16 %v1222, %v1221
  %v1656 = vpack.c.b16 %v1224, %v1223
  %v1657 = vpack.c.b16 %v1226, %v1225
  %v1658 = vpack.c.b16 %v1228, %v1227
  %v1659 = vpack.c.b16 %v1230, %v1229
  %v1660 = vpack.c.b16 %v1232, %v1231
  %v1661 = vpack.c.b16 %v1234, %v1233
  %v1662 = vpack.c.b16 %v1236, %v1235
  %v1663 = vpack.c.b16 %v1238, %v1237
  %v1664 = vpack.c.b16 %v1240, %v1239
  %v1665 = vpack.c.b16 %v1242, %v1241
  %v1666 = vpack.c.b16 %v1244, %v1243
  %v1667 = vpack.c.b16 %v1246, %v1245
  %v1668 = vpack.c.b16 %v1248, %v1247
  %v1669 = vpack.c.b16 %v1250, %v1249
  %v1670 = vpack.c.b16 %v1252, %v1251
  %v1671 = vpack.c.b16 %v1254, %v1253
  %v1672 = vpack.c.b16 %v1256, %v1255
  %v1673 = vpack.c.b16 %v1258, %v1257
  %v1674 = vpack.c.b16 %v1260, %v1259
  %v1675 = vpack.c.b16 %v1262, %v1261
  %v1676 = vpack.c.b16 %v1264, %v1263
  %v1677 = vpack.c.b16 %v1266, %v1265
  %v1678 = vpack.c.b16 %v1268, %v1267
  %v1679 = vpack.c.b16 %v1270, %v1269
  %v1680 = vpack.c.b16 %v1272, %v1271
  %v1681 = vpack.c.b16 %v1274, %v1273
  %v1682 = vpack.c.b16 %v1276, %v1275
  %v1683 = vpack.c.b16 %v1278, %v1277
  %v1684 = vpack.c.b16 %v1280, %v1279
  %v1685 = vpack.c.b16 %v1282, %v1281
  %v1686 = vpack.c.b16 %v1284, %v1283
  %v1687 = vpack.c.b16 %v1286, %v1285
  %v1688 = vpack.c.b16 %v1288, %v1287
  %v1689 = vpack.c.b16 %v1290, %v1289
  %v1690 = vpack.c.b16 %v1292, %v1291
  %v1691 = vpack.c.b16 %v1294, %v1293
  %v1692 = vpack.c.b16 %v1296, %v1295
  %v1693 = vpack.c.b16 %v1298, %v1297
  %v1694 = vpack.c.b16 %v1300, %v1299
  %v1695 = vpack.c.b16 %v1302, %v1301
  %v1696 = vpack.c.b16 %v1304, %v1303
  %v1697 = vpack.c.b16 %v1306, %v1305
  %v1698 = vpack.c.b16 %v1308, %v1307
  %v1699 = vpack.c.b16 %v1310, %v1309
  %v1700 = vpack.c.b16 %v1312, %v1311
  %v1701 = vpack.c.b16 %v1314, %v1313
  %v1702 = vpack.c.b16 %v1316, %v1315
  %v1703 = vpack.c.b16 %v1318, %v1317
  %v1704 = vpack.c.b16 %v1320, %v1319
  %v1705 = vpack.c.b16 %v1322, %v1321
  %v1706 = vpack.c.b16 %v1324, %v1323
  %v1707 = vpack.c.b16 %v1326, %v1325
  %v1708 = vpack.c.b16 %v1328, %v1327
  %v1709 = vpack.c.b16 %v1330, %v1329
  %v1710 = vpack.c.b16 %v1332, %v1331
  %v1711 = vpack.c.b16 %v1334, %v1333
  %v1712 = vpack.c.b16 %v1336, %v1335
  %v1713 = vpack.c.b16 %v1338, %v1337
  %v1714 = vpack.c.b16 %v1340, %v1339
  %v1715 = vpack.c.b16 %v1342, %v1341
  %v1716 = vpack.c.b16 %v1344, %v1343
  %v1717 = vpack.c.b16 %v1346, %v1345
  %v1718 = vpack.c.b16 %v1348, %v1347
  %v1719 = vpack.c.b16 %v1350, %v1349
  %v1720 = vpack.c.b16 %v1352, %v1351
  %v1721 = vpack.c.b16 %v1354, %v1353
  %v1722 = vpack.c.b16 %v1356, %v1355
  %v1723 = vpack.c.b16 %v1358, %v1357
  %v1724 = vpack.c.b16 %v1360, %v1359
  %v1725 = vpack.c.b16 %v1362, %v1361
  %v1726 = vpack.c.b16 %v1364, %v1363
  %v1727 = vpack.c.b16 %v1366, %v1365
  %v1728 = vpack.c.b16 %v1368, %v1367
  %v1729 = vpack.c.b16 %v1370, %v1369
  %v1730 = vpack.c.b16 %v1372, %v1371
  %v1731 = vpack.c.b16 %v1374, %v1373
  %v1732 = vpack.c.b16 %v1376, %v1375
  %v1733 = vpack.c.b16 %v1378, %v1377
  %v1734 = vpack.c.b16 %v1380, %v1379
  %v1735 = vpack.c.b16 %v1382, %v1381
  %v1736 = vpack.c.b16 %v1384, %v1383
  %v1737 = vpack.c.b16 %v1386, %v1385
  %v1738 = vpack.c.b16 %v1388, %v1387
  %v1739 = vpack.c.b16 %v1390, %v1389
  %v1740 = vpack.c.b16 %v1392, %v1391
  %v1741 = vpack.c.b16 %v1394, %v1393
  %v1742 = vpack.c.b16 %v1396, %v1395
  %v1743 = vpack.c.b16 %v1398, %v1397
  %v1744 = vpack.c.b16 %v1400, %v1399
  %v1745 = vpack.c.b16 %v1402, %v1401
  %v1746 = vpack.c.b16 %v1404, %v1403
  %v1747 = vpack.c.b16 %v1406, %v1405
  %v1748 = vpack.c.b16 %v1408, %v1407
  %v1749 = vpack.c.b16 %v1410, %v1409
  %v1750 = vpack.c.b16 %v1412, %v1411
  %v1751 = vpack.c.b16 %v1414, %v1413
  %v1752 = vpack.c.b16 %v1416, %v1415
  %v1753 = vpack.c.b16 %v1418, %v1417
  %v1754 = vpack.c.b16 %v1420, %v1419
  %v1755 = vpack.c.b16 %v1422, %v1421
  %v1756 = vpack.c.b16 %v1424, %v1423
  %v1757 = vpack.c.b16 %v1426, %v1425
  %v1758 = vpack.c.b16 %v1428, %v1427
  %v1759 = vpack.c.b16 %v1430, %v1429
  %v1760 = vpack.c.b16 %v1432, %v1431
  %v1761 = vpack.c.b16 %v1434, %v1433
  %v1762 = vpack.c.b16 %v1436, %v1435
  %v1763 = vpack.c.b16 %v1438, %v1437
  %v1764 = vpack.c.b16 %v1440, %v1439
  %v1765 = vpack.c.b16 %v1442, %v1441
  %v1766 = vpack.c.b16 %v1444, %v1443
  %v1767 = vpack.c.b16 %v1446, %v1445
  %v1768 = vpack.c.b16 %v1448, %v1447
  %v1769 = vpack.c.b16 %v1450, %v1449
  %v1770 = vpack.c.b16 %v1452, %v1451
  %v1771 = vpack.c.b16 %v1454, %v1453
  %v1772 = vpack.c.b16 %v1456, %v1455
  %v1773 = vpack.c.b16 %v1458, %v1457
  %v1774 = vpack.c.b16 %v1460, %v1459
  %v1775 = vpack.c.b16 %v1462, %v1461
  %v1776 = vpack.c.b16 %v1464, %v1463
  %v1777 = vpack.c.b16 %v1466, %v1465
  %v1778 = vpack.c.b16 %v1468, %v1467
  %v1779 = vpack.c.b16 %v1470, %v1469
  %v1780 = vpack.c.b16 %v1472, %v1471
  %v1781 = vpack.c.b16 %v1474, %v1473
  %v1782 = vpack.c.b16 %v1476, %v1475
  %v1783 = vpack.c.b16 %v1478, %v1477
  %v1784 = vpack.c.b16 %v1480, %v1479
  %v1785 = vpack.c.b16 %v1482, %v1481
  %v1786 = vpack.c.b16 %v1484, %v1483
  %v1787 = vpack.c.b16 %v1486, %v1485
  %v1788 = vpack.c.b16 %v1488, %v1487
  %v1789 = vpack.c.b16 %v1490, %v1489
  %v1790 = vpack.c.b16 %v1492, %v1491
  %v1791 = vpack.c.b16 %v1494, %v1493
  %v1792 = vpack.c.b16 %v1496, %v1495
  %v1793 = vpack.c.b16 %v1498, %v1497
  %v1794 = vpack.c.b16 %v1500, %v1499
  %v1795 = vpack.c.b16 %v1502, %v1501
  %v1796 = vpack.c.b16 %v1504, %v1503
  %v1797 = vpack.c.b16 %v1506, %v1505
  %v1798 = vpack.c.b16 %v1508, %v1507
  %v1799 = vpack.c.b16 %v1510, %v1509
  %v1800 = vpack.c.b16 %v1512, %v1511
  %v1801 = vpack.c.b16 %v1514, %v1513
  %v1802 = vpack.c.b16 %v1516, %v1515
  %v1803 = vpack.c.b16 %v1518, %v1517
  %v1804 = vpack.c.b16 %v1520, %v1519
  %v1805 = vpack.c.b16 %v1522, %v1521
  %v1806 = vpack.c.b16 %v1524, %v1523
  %v1807 = vpack.c.b16 %v1526, %v1525
  %v1808 = vpack.c.b16 %v1528, %v1527
  %v1809 = vpack.c.b16 %v1530, %v1529
  %v1810 = vpack.c.b16 %v1532, %v1531
  %v1811 = vpack.c.b16 %v1534, %v1533
  %v1812 = vpack.c.b16 %v1536, %v1535
  %v1813 = vpack.c.b16 %v1538, %v1537
  %v1814 = vpack.c.b16 %v1540, %v1539
  %v1815 = vpack.c.b16 %v1542, %v1541
  %v1816 = vpack.c.b16 %v1544, %v1543
  %v1817 = vpack.c.b16 %v1546, %v1545
  %v1818 = vpack.c.b16 %v1548, %v1547
  %v1819 = vpack.c.b16 %v1550, %v1549
  %v1820 = vpack.c.b16 %v1552, %v1551
  %v1821 = vpack.c.b16 %v1554, %v1553
  %v1822 = vpack.c.b16 %v1556, %v1555
  %v1823 = vpack.c.b16 %v1558, %v1557
  %v1824 = vpack.c.b16 %v1560, %v1559
  %v1825 = vpack.c.b16 %v1562, %v1561
  %v1826 = vpack.c.b16 %v1564, %v1563
  %v1827 = vpack.c.b16 %v1566, %v1565
  %v1828 = vpack.c.b16 %v1568, %v1567
  %v1829 = vpack.c.b16 %v1570, %v1569
  %v1830 = vpack.c.b16 %v1572, %v1571
  %v1831 = vpack.c.b16 %v1574, %v1573
  %v1832 = vpack.c.b16 %v1576, %v1575
  %v2105 = vunpack.c.l.b16 %v530
  %v2106 = vunpack.c.l.b16 %v531
  %v2107 = vunpack.c.l.b16 %v532
  %v2108 = vunpack.c.l.b16 %v533
  %v2109 = vunpack.c.l.b16 %v534
  %v2110 = vunpack.c.l.b16 %v535
  %v2111 = vunpack.c.l.b16 %v536
  %v2112 = vunpack.c.l.b16 %v537
  %v2113 = vunpack.c.l.b16 %v538
  %v2114 = vunpack.c.l.b16 %v539
  %v2115 = vunpack.c.l.b16 %v540
  %v2116 = vunpack.c.l.b16 %v541
  %v2117 = vunpack.c.l.b16 %v542
  %v2118 = vunpack.c.l.b16 %v543
  %v2119 = vunpack.c.l.b16 %v544
  %v2120 = vunpack.c.l.b16 %v545
  %v2121 = vpack.c.b16 %v2106, %v2105
  %v2122 = vpack.c.b16 %v2108, %v2107
  %v2123 = vpack.c.b16 %v2110, %v2109
  %v2124 = vpack.c.b16 %v2112, %v2111
  %v2125 = vpack.c.b16 %v2114, %v2113
  %v2126 = vpack.c.b16 %v2116, %v2115
  %v2127 = vpack.c.b16 %v2118, %v2117
  %v2128 = vpack.c.b16 %v2120, %v2119
  %2137 = vmatprep.subr.bf16.mxu0 0
  %2138 = vmatpush1.bf16.msra.mxu0 %v2121
  %2139 = vmatprep.subr.bf16.mxu0 0
  %2140 = vmatpush1.bf16.msra.mxu0 %v2122
  %2141 = vmatprep.subr.bf16.mxu0 0
  %2142 = vmatpush1.bf16.msra.mxu0 %v2123
  %2143 = vmatprep.subr.bf16.mxu0 0
  %2144 = vmatpush1.bf16.msra.mxu0 %v2124
  %2145 = vmatprep.subr.bf16.mxu0 0
  %2146 = vmatpush1.bf16.msra.mxu0 %v2125
  %2147 = vmatprep.subr.bf16.mxu0 0
  %2148 = vmatpush1.bf16.msra.mxu0 %v2126
  %2149 = vmatprep.subr.bf16.mxu0 0
  %2150 = vmatpush1.bf16.msra.mxu0 %v2127
  %2151 = vmatprep.subr.bf16.mxu0 0
  %2152 = vmatpush1.bf16.msra.mxu0 %v2128
  %2153 = vmatprep.subr.bf16.mxu0 0
  %2154 = vmatpush1.bf16.msra.mxu0 0
  %2155 = vmatprep.subr.bf16.mxu0 0
  %2156 = vmatpush1.bf16.msra.mxu0 0
  %2157 = vmatprep.subr.bf16.mxu0 0
  %2158 = vmatpush1.bf16.msra.mxu0 0
  %2159 = vmatprep.subr.bf16.mxu0 0
  %2160 = vmatpush1.bf16.msra.mxu0 0
  %2161 = vmatprep.subr.bf16.mxu0 0
  %2162 = vmatpush1.bf16.msra.mxu0 0
  %2163 = vmatprep.subr.bf16.mxu0 0
  %2164 = vmatpush1.bf16.msra.mxu0 0
  %2165 = vmatprep.subr.bf16.mxu0 0
  %2166 = vmatpush1.bf16.msra.mxu0 0
  %2167 = vmatprep.subr.bf16.mxu0 0
  %2168 = vmatpush1.bf16.msra.mxu0 0
  %2169 = vmatprep.mubr.bf16.mxu0 0
  %2170 = vmatmul.mubr.bf16.gmra.mrb[0].mxu0 %v1577
  %v2171 = vpop.f32.mrb[0].mxu0
  %v2172 = vadd.f32 %v551, %v2171
  %v2173 = vpop.f32.mrb[0].mxu0
  %v2174 = vpop.f32.mrb[0].mxu0
  %v2175 = vadd.f32 %v551, %v2174
  %v2176 = vpop.f32.mrb[0].mxu0
  %2177 = vmatprep.mubr.bf16.mxu0 0
  %2178 = vmatmul.mubr.bf16.gmra.mrb[0].mxu0 %v1578
  %v2179 = vpop.f32.mrb[0].mxu0
  %v2180 = vadd.f32 %v551, %v2179
  %v2181 = vpop.f32.mrb[0].mxu0
  %v2182 = vpop.f32.mrb[0].mxu0
  %v2183 = vadd.f32 %v551, %v2182
  %v2184 = vpop.f32.mrb[0].mxu0
  %2185 = vmatprep.mubr.bf16.mxu0 0
  %2186 = vmatmul.mubr.bf16.gmra.mrb[0].mxu0 %v1579
  %v2187 = vpop.f32.mrb[0].mxu0
  %v2188 = vadd.f32 %v551, %v2187
  %v2189 = vpop.f32.mrb[0].mxu0
  %v2190 = vpop.f32.mrb[0].mxu0
  %v2191 = vadd.f32 %v551, %v2190
  %v2192 = vpop.f32.mrb[0].mxu0
  %2193 = vmatprep.mubr.bf16.mxu0 0
  %2194 = vmatmul.mubr.bf16.gmra.mrb[0].mxu0 %v1580
  %v2195 = vpop.f32.mrb[0].mxu0
  %v2196 = vadd.f32 %v551, %v2195
  %v2197 = vpop.f32.mrb[0].mxu0
  %v2198 = vpop.f32.mrb[0].mxu0
  %v2199 = vadd.f32 %v551, %v2198
  %v2200 = vpop.f32.mrb[0].mxu0
  %2201 = vmatprep.mubr.bf16.mxu0 0
  %2202 = vmatmul.mubr.bf16.gmra.mrb[0].mxu0 %v1581
  %v2203 = vpop.f32.mrb[0].mxu0
  %v2204 = vadd.f32 %v551, %v2203
  %v2205 = vpop.f32.mrb[0].mxu0
  %v2206 = vpop.f32.mrb[0].mxu0
  %v2207 = vadd.f32 %v551, %v2206
  %v2208 = vpop.f32.mrb[0].mxu0
  %2209 = vmatprep.mubr.bf16.mxu0 0
  %2210 = vmatmul.mubr.bf16.gmra.mrb[0].mxu0 %v1582
  %v2211 = vpop.f32.mrb[0].mxu0
  %v2212 = vadd.f32 %v551, %v2211
  %v2213 = vpop.f32.mrb[0].mxu0
  %v2214 = vpop.f32.mrb[0].mxu0
  %v2215 = vadd.f32 %v551, %v2214
  %v2216 = vpop.f32.mrb[0].mxu0
  %2217 = vmatprep.mubr.bf16.mxu0 0
  %2218 = vmatmul.mubr.bf16.gmra.mrb[0].mxu0 %v1583
  %v2219 = vpop.f32.mrb[0].mxu0
  %v2220 = vadd.f32 %v551, %v2219
  %v2221 = vpop.f32.mrb[0].mxu0
  %v2222 = vpop.f32.mrb[0].mxu0
  %v2223 = vadd.f32 %v551, %v2222
  %v2224 = vpop.f32.mrb[0].mxu0
  %2225 = vmatprep.mubr.bf16.mxu0 0
  %2226 = vmatmul.mubr.bf16.gmra.mrb[0].mxu0 %v1584
  %v2227 = vpop.f32.mrb[0].mxu0
  %v2228 = vadd.f32 %v551, %v2227
  %v2229 = vpop.f32.mrb[0].mxu0
  %v2230 = vpop.f32.mrb[0].mxu0
  %v2231 = vadd.f32 %v551, %v2230
  %v2232 = vpop.f32.mrb[0].mxu0
  %2233 = vmatprep.mubr.bf16.mxu0 0
  %2234 = vmatmul.mubr.bf16.gmra.mrb[0].mxu0 %v1585
  %v2235 = vpop.f32.mrb[0].mxu0
  %v2236 = vadd.f32 %v551, %v2235
  %v2237 = vpop.f32.mrb[0].mxu0
  %v2238 = vpop.f32.mrb[0].mxu0
  %v2239 = vadd.f32 %v551, %v2238
  %v2240 = vpop.f32.mrb[0].mxu0
  %2241 = vmatprep.mubr.bf16.mxu0 0
  %2242 = vmatmul.mubr.bf16.gmra.mrb[0].mxu0 %v1586
  %v2243 = vpop.f32.mrb[0].mxu0
  %v2244 = vadd.f32 %v551, %v2243
  %v2245 = vpop.f32.mrb[0].mxu0
  %v2246 = vpop.f32.mrb[0].mxu0
  %v2247 = vadd.f32 %v551, %v2246
  %v2248 = vpop.f32.mrb[0].mxu0
  %2249 = vmatprep.mubr.bf16.mxu0 0
  %2250 = vmatmul.mubr.bf16.gmra.mrb[0].mxu0 %v1587
  %v2251 = vpop.f32.mrb[0].mxu0
  %v2252 = vadd.f32 %v551, %v2251
  %v2253 = vpop.f32.mrb[0].mxu0
  %v2254 = vpop.f32.mrb[0].mxu0
  %v2255 = vadd.f32 %v551, %v2254
  %v2256 = vpop.f32.mrb[0].mxu0
  %2257 = vmatprep.mubr.bf16.mxu0 0
  %2258 = vmatmul.mubr.bf16.gmra.mrb[0].mxu0 %v1588
  %v2259 = vpop.f32.mrb[0].mxu0
  %v2260 = vadd.f32 %v551, %v2259
  %v2261 = vpop.f32.mrb[0].mxu0
  %v2262 = vpop.f32.mrb[0].mxu0
  %v2263 = vadd.f32 %v551, %v2262
  %v2264 = vpop.f32.mrb[0].mxu0
  %2265 = vmatprep.mubr.bf16.mxu0 0
  %2266 = vmatmul.mubr.bf16.gmra.mrb[0].mxu0 %v1589
  %v2267 = vpop.f32.mrb[0].mxu0
  %v2268 = vadd.f32 %v551, %v2267
  %v2269 = vpop.f32.mrb[0].mxu0
  %v2270 = vpop.f32.mrb[0].mxu0
  %v2271 = vadd.f32 %v551, %v2270
  %v2272 = vpop.f32.mrb[0].mxu0
  %2273 = vmatprep.mubr.bf16.mxu0 0
  %2274 = vmatmul.mubr.bf16.gmra.mrb[0].mxu0 %v1590
  %v2275 = vpop.f32.mrb[0].mxu0
  %v2276 = vadd.f32 %v551, %v2275
  %v2277 = vpop.f32.mrb[0].mxu0
  %v2278 = vpop.f32.mrb[0].mxu0
  %v2279 = vadd.f32 %v551, %v2278
  %v2280 = vpop.f32.mrb[0].mxu0
  %2281 = vmatprep.mubr.bf16.mxu0 0
  %2282 = vmatmul.mubr.bf16.gmra.mrb[0].mxu0 %v1591
  %v2283 = vpop.f32.mrb[0].mxu0
  %v2284 = vadd.f32 %v551, %v2283
  %v2285 = vpop.f32.mrb[0].mxu0
  %v2286 = vpop.f32.mrb[0].mxu0
  %v2287 = vadd.f32 %v551, %v2286
  %v2288 = vpop.f32.mrb[0].mxu0
  %2289 = vmatprep.mubr.bf16.mxu0 0
  %2290 = vmatmul.mubr.bf16.gmra.mrb[0].mxu0 %v1592
  %v2291 = vpop.f32.mrb[0].mxu0
  %v2292 = vadd.f32 %v551, %v2291
  %v2293 = vpop.f32.mrb[0].mxu0
  %v2294 = vpop.f32.mrb[0].mxu0
  %v2295 = vadd.f32 %v551, %v2294
  %v2296 = vpop.f32.mrb[0].mxu0
  %2297 = vmatprep.mubr.bf16.mxu0 0
  %2298 = vmatmul.mubr.bf16.gmra.mrb[0].mxu0 %v1593
  %v2299 = vpop.f32.mrb[0].mxu0
  %v2300 = vadd.f32 %v551, %v2299
  %v2301 = vpop.f32.mrb[0].mxu0
  %v2302 = vpop.f32.mrb[0].mxu0
  %v2303 = vadd.f32 %v551, %v2302
  %v2304 = vpop.f32.mrb[0].mxu0
  %2305 = vmatprep.mubr.bf16.mxu0 0
  %2306 = vmatmul.mubr.bf16.gmra.mrb[0].mxu0 %v1594
  %v2307 = vpop.f32.mrb[0].mxu0
  %v2308 = vadd.f32 %v551, %v2307
  %v2309 = vpop.f32.mrb[0].mxu0
  %v2310 = vpop.f32.mrb[0].mxu0
  %v2311 = vadd.f32 %v551, %v2310
  %v2312 = vpop.f32.mrb[0].mxu0
  %2313 = vmatprep.mubr.bf16.mxu0 0
  %2314 = vmatmul.mubr.bf16.gmra.mrb[0].mxu0 %v1595
  %v2315 = vpop.f32.mrb[0].mxu0
  %v2316 = vadd.f32 %v551, %v2315
  %v2317 = vpop.f32.mrb[0].mxu0
  %v2318 = vpop.f32.mrb[0].mxu0
  %v2319 = vadd.f32 %v551, %v2318
  %v2320 = vpop.f32.mrb[0].mxu0
  %2321 = vmatprep.mubr.bf16.mxu0 0
  %2322 = vmatmul.mubr.bf16.gmra.mrb[0].mxu0 %v1596
  %v2323 = vpop.f32.mrb[0].mxu0
  %v2324 = vadd.f32 %v551, %v2323
  %v2325 = vpop.f32.mrb[0].mxu0
  %v2326 = vpop.f32.mrb[0].mxu0
  %v2327 = vadd.f32 %v551, %v2326
  %v2328 = vpop.f32.mrb[0].mxu0
  %2329 = vmatprep.mubr.bf16.mxu0 0
  %2330 = vmatmul.mubr.bf16.gmra.mrb[0].mxu0 %v1597
  %v2331 = vpop.f32.mrb[0].mxu0
  %v2332 = vadd.f32 %v551, %v2331
  %v2333 = vpop.f32.mrb[0].mxu0
  %v2334 = vpop.f32.mrb[0].mxu0
  %v2335 = vadd.f32 %v551, %v2334
  %v2336 = vpop.f32.mrb[0].mxu0
  %2337 = vmatprep.mubr.bf16.mxu0 0
  %2338 = vmatmul.mubr.bf16.gmra.mrb[0].mxu0 %v1598
  %v2339 = vpop.f32.mrb[0].mxu0
  %v2340 = vadd.f32 %v551, %v2339
  %v2341 = vpop.f32.mrb[0].mxu0
  %v2342 = vpop.f32.mrb[0].mxu0
  %v2343 = vadd.f32 %v551, %v2342
  %v2344 = vpop.f32.mrb[0].mxu0
  %2345 = vmatprep.mubr.bf16.mxu0 0
  %2346 = vmatmul.mubr.bf16.gmra.mrb[0].mxu0 %v1599
  %v2347 = vpop.f32.mrb[0].mxu0
  %v2348 = vadd.f32 %v551, %v2347
  %v2349 = vpop.f32.mrb[0].mxu0
  %v2350 = vpop.f32.mrb[0].mxu0
  %v2351 = vadd.f32 %v551, %v2350
  %v2352 = vpop.f32.mrb[0].mxu0
  %2353 = vmatprep.mubr.bf16.mxu0 0
  %2354 = vmatmul.mubr.bf16.gmra.mrb[0].mxu0 %v1600
  %v2355 = vpop.f32.mrb[0].mxu0
  %v2356 = vadd.f32 %v551, %v2355
  %v2357 = vpop.f32.mrb[0].mxu0
  %v2358 = vpop.f32.mrb[0].mxu0
  %v2359 = vadd.f32 %v551, %v2358
  %v2360 = vpop.f32.mrb[0].mxu0
  %2361 = vmatprep.mubr.bf16.mxu0 0
  %2362 = vmatmul.mubr.bf16.gmra.mrb[0].mxu0 %v1601
  %v2363 = vpop.f32.mrb[0].mxu0
  %v2364 = vadd.f32 %v551, %v2363
  %v2365 = vpop.f32.mrb[0].mxu0
  %v2366 = vpop.f32.mrb[0].mxu0
  %v2367 = vadd.f32 %v551, %v2366
  %v2368 = vpop.f32.mrb[0].mxu0
  %2369 = vmatprep.mubr.bf16.mxu0 0
  %2370 = vmatmul.mubr.bf16.gmra.mrb[0].mxu0 %v1602
  %v2371 = vpop.f32.mrb[0].mxu0
  %v2372 = vadd.f32 %v551, %v2371
  %v2373 = vpop.f32.mrb[0].mxu0
  %v2374 = vpop.f32.mrb[0].mxu0
  %v2375 = vadd.f32 %v551, %v2374
  %v2376 = vpop.f32.mrb[0].mxu0
  %2377 = vmatprep.mubr.bf16.mxu0 0
  %2378 = vmatmul.mubr.bf16.gmra.mrb[0].mxu0 %v1603
  %v2379 = vpop.f32.mrb[0].mxu0
  %v2380 = vadd.f32 %v551, %v2379
  %v2381 = vpop.f32.mrb[0].mxu0
  %v2382 = vpop.f32.mrb[0].mxu0
  %v2383 = vadd.f32 %v551, %v2382
  %v2384 = vpop.f32.mrb[0].mxu0
  %2385 = vmatprep.mubr.bf16.mxu0 0
  %2386 = vmatmul.mubr.bf16.gmra.mrb[0].mxu0 %v1604
  %v2387 = vpop.f32.mrb[0].mxu0
  %v2388 = vadd.f32 %v551, %v2387
  %v2389 = vpop.f32.mrb[0].mxu0
  %v2390 = vpop.f32.mrb[0].mxu0
  %v2391 = vadd.f32 %v551, %v2390
  %v2392 = vpop.f32.mrb[0].mxu0
  %2393 = vmatprep.mubr.bf16.mxu0 0
  %2394 = vmatmul.mubr.bf16.gmra.mrb[0].mxu0 %v1605
  %v2395 = vpop.f32.mrb[0].mxu0
  %v2396 = vadd.f32 %v551, %v2395
  %v2397 = vpop.f32.mrb[0].mxu0
  %v2398 = vpop.f32.mrb[0].mxu0
  %v2399 = vadd.f32 %v551, %v2398
  %v2400 = vpop.f32.mrb[0].mxu0
  %2401 = vmatprep.mubr.bf16.mxu0 0
  %2402 = vmatmul.mubr.bf16.gmra.mrb[0].mxu0 %v1606
  %v2403 = vpop.f32.mrb[0].mxu0
  %v2404 = vadd.f32 %v551, %v2403
  %v2405 = vpop.f32.mrb[0].mxu0
  %v2406 = vpop.f32.mrb[0].mxu0
  %v2407 = vadd.f32 %v551, %v2406
  %v2408 = vpop.f32.mrb[0].mxu0
  %2409 = vmatprep.mubr.bf16.mxu0 0
  %2410 = vmatmul.mubr.bf16.gmra.mrb[0].mxu0 %v1607
  %v2411 = vpop.f32.mrb[0].mxu0
  %v2412 = vadd.f32 %v551, %v2411
  %v2413 = vpop.f32.mrb[0].mxu0
  %v2414 = vpop.f32.mrb[0].mxu0
  %v2415 = vadd.f32 %v551, %v2414
  %v2416 = vpop.f32.mrb[0].mxu0
  %2417 = vmatprep.mubr.bf16.mxu0 0
  %2418 = vmatmul.mubr.bf16.gmra.mrb[0].mxu0 %v1608
  %v2419 = vpop.f32.mrb[0].mxu0
  %v2420 = vadd.f32 %v551, %v2419
  %v2421 = vpop.f32.mrb[0].mxu0
  %v2422 = vpop.f32.mrb[0].mxu0
  %v2423 = vadd.f32 %v551, %v2422
  %v2424 = vpop.f32.mrb[0].mxu0
  %2425 = vmatprep.mubr.bf16.mxu0 0
  %2426 = vmatmul.mubr.bf16.gmra.mrb[0].mxu0 %v1609
  %v2427 = vpop.f32.mrb[0].mxu0
  %v2428 = vadd.f32 %v551, %v2427
  %v2429 = vpop.f32.mrb[0].mxu0
  %v2430 = vpop.f32.mrb[0].mxu0
  %v2431 = vadd.f32 %v551, %v2430
  %v2432 = vpop.f32.mrb[0].mxu0
  %2433 = vmatprep.mubr.bf16.mxu0 0
  %2434 = vmatmul.mubr.bf16.gmra.mrb[0].mxu0 %v1610
  %v2435 = vpop.f32.mrb[0].mxu0
  %v2436 = vadd.f32 %v551, %v2435
  %v2437 = vpop.f32.mrb[0].mxu0
  %v2438 = vpop.f32.mrb[0].mxu0
  %v2439 = vadd.f32 %v551, %v2438
  %v2440 = vpop.f32.mrb[0].mxu0
  %2441 = vmatprep.mubr.bf16.mxu0 0
  %2442 = vmatmul.mubr.bf16.gmra.mrb[0].mxu0 %v1611
  %v2443 = vpop.f32.mrb[0].mxu0
  %v2444 = vadd.f32 %v551, %v2443
  %v2445 = vpop.f32.mrb[0].mxu0
  %v2446 = vpop.f32.mrb[0].mxu0
  %v2447 = vadd.f32 %v551, %v2446
  %v2448 = vpop.f32.mrb[0].mxu0
  %2449 = vmatprep.mubr.bf16.mxu0 0
  %2450 = vmatmul.mubr.bf16.gmra.mrb[0].mxu0 %v1612
  %v2451 = vpop.f32.mrb[0].mxu0
  %v2452 = vadd.f32 %v551, %v2451
  %v2453 = vpop.f32.mrb[0].mxu0
  %v2454 = vpop.f32.mrb[0].mxu0
  %v2455 = vadd.f32 %v551, %v2454
  %v2456 = vpop.f32.mrb[0].mxu0
  %2457 = vmatprep.mubr.bf16.mxu0 0
  %2458 = vmatmul.mubr.bf16.gmra.mrb[0].mxu0 %v1613
  %v2459 = vpop.f32.mrb[0].mxu0
  %v2460 = vadd.f32 %v551, %v2459
  %v2461 = vpop.f32.mrb[0].mxu0
  %v2462 = vpop.f32.mrb[0].mxu0
  %v2463 = vadd.f32 %v551, %v2462
  %v2464 = vpop.f32.mrb[0].mxu0
  %2465 = vmatprep.mubr.bf16.mxu0 0
  %2466 = vmatmul.mubr.bf16.gmra.mrb[0].mxu0 %v1614
  %v2467 = vpop.f32.mrb[0].mxu0
  %v2468 = vadd.f32 %v551, %v2467
  %v2469 = vpop.f32.mrb[0].mxu0
  %v2470 = vpop.f32.mrb[0].mxu0
  %v2471 = vadd.f32 %v551, %v2470
  %v2472 = vpop.f32.mrb[0].mxu0
  %2473 = vmatprep.mubr.bf16.mxu0 0
  %2474 = vmatmul.mubr.bf16.gmra.mrb[0].mxu0 %v1615
  %v2475 = vpop.f32.mrb[0].mxu0
  %v2476 = vadd.f32 %v551, %v2475
  %v2477 = vpop.f32.mrb[0].mxu0
  %v2478 = vpop.f32.mrb[0].mxu0
  %v2479 = vadd.f32 %v551, %v2478
  %v2480 = vpop.f32.mrb[0].mxu0
  %2481 = vmatprep.mubr.bf16.mxu0 0
  %2482 = vmatmul.mubr.bf16.gmra.mrb[0].mxu0 %v1616
  %v2483 = vpop.f32.mrb[0].mxu0
  %v2484 = vadd.f32 %v551, %v2483
  %v2485 = vpop.f32.mrb[0].mxu0
  %v2486 = vpop.f32.mrb[0].mxu0
  %v2487 = vadd.f32 %v551, %v2486
  %v2488 = vpop.f32.mrb[0].mxu0
  %2489 = vmatprep.mubr.bf16.mxu0 0
  %2490 = vmatmul.mubr.bf16.gmra.mrb[0].mxu0 %v1617
  %v2491 = vpop.f32.mrb[0].mxu0
  %v2492 = vadd.f32 %v551, %v2491
  %v2493 = vpop.f32.mrb[0].mxu0
  %v2494 = vpop.f32.mrb[0].mxu0
  %v2495 = vadd.f32 %v551, %v2494
  %v2496 = vpop.f32.mrb[0].mxu0
  %2497 = vmatprep.mubr.bf16.mxu0 0
  %2498 = vmatmul.mubr.bf16.gmra.mrb[0].mxu0 %v1618
  %v2499 = vpop.f32.mrb[0].mxu0
  %v2500 = vadd.f32 %v551, %v2499
  %v2501 = vpop.f32.mrb[0].mxu0
  %v2502 = vpop.f32.mrb[0].mxu0
  %v2503 = vadd.f32 %v551, %v2502
  %v2504 = vpop.f32.mrb[0].mxu0
  %2505 = vmatprep.mubr.bf16.mxu0 0
  %2506 = vmatmul.mubr.bf16.gmra.mrb[0].mxu0 %v1619
  %v2507 = vpop.f32.mrb[0].mxu0
  %v2508 = vadd.f32 %v551, %v2507
  %v2509 = vpop.f32.mrb[0].mxu0
  %v2510 = vpop.f32.mrb[0].mxu0
  %v2511 = vadd.f32 %v551, %v2510
  %v2512 = vpop.f32.mrb[0].mxu0
  %2513 = vmatprep.mubr.bf16.mxu0 0
  %2514 = vmatmul.mubr.bf16.gmra.mrb[0].mxu0 %v1620
  %v2515 = vpop.f32.mrb[0].mxu0
  %v2516 = vadd.f32 %v551, %v2515
  %v2517 = vpop.f32.mrb[0].mxu0
  %v2518 = vpop.f32.mrb[0].mxu0
  %v2519 = vadd.f32 %v551, %v2518
  %v2520 = vpop.f32.mrb[0].mxu0
  %2521 = vmatprep.mubr.bf16.mxu0 0
  %2522 = vmatmul.mubr.bf16.gmra.mrb[0].mxu0 %v1621
  %v2523 = vpop.f32.mrb[0].mxu0
  %v2524 = vadd.f32 %v551, %v2523
  %v2525 = vpop.f32.mrb[0].mxu0
  %v2526 = vpop.f32.mrb[0].mxu0
  %v2527 = vadd.f32 %v551, %v2526
  %v2528 = vpop.f32.mrb[0].mxu0
  %2529 = vmatprep.mubr.bf16.mxu0 0
  %2530 = vmatmul.mubr.bf16.gmra.mrb[0].mxu0 %v1622
  %v2531 = vpop.f32.mrb[0].mxu0
  %v2532 = vadd.f32 %v551, %v2531
  %v2533 = vpop.f32.mrb[0].mxu0
  %v2534 = vpop.f32.mrb[0].mxu0
  %v2535 = vadd.f32 %v551, %v2534
  %v2536 = vpop.f32.mrb[0].mxu0
  %2537 = vmatprep.mubr.bf16.mxu0 0
  %2538 = vmatmul.mubr.bf16.gmra.mrb[0].mxu0 %v1623
  %v2539 = vpop.f32.mrb[0].mxu0
  %v2540 = vadd.f32 %v551, %v2539
  %v2541 = vpop.f32.mrb[0].mxu0
  %v2542 = vpop.f32.mrb[0].mxu0
  %v2543 = vadd.f32 %v551, %v2542
  %v2544 = vpop.f32.mrb[0].mxu0
  %2545 = vmatprep.mubr.bf16.mxu0 0
  %2546 = vmatmul.mubr.bf16.gmra.mrb[0].mxu0 %v1624
  %v2547 = vpop.f32.mrb[0].mxu0
  %v2548 = vadd.f32 %v551, %v2547
  %v2549 = vpop.f32.mrb[0].mxu0
  %v2550 = vpop.f32.mrb[0].mxu0
  %v2551 = vadd.f32 %v551, %v2550
  %v2552 = vpop.f32.mrb[0].mxu0
  %2553 = vmatprep.mubr.bf16.mxu0 0
  %2554 = vmatmul.mubr.bf16.gmra.mrb[0].mxu0 %v1625
  %v2555 = vpop.f32.mrb[0].mxu0
  %v2556 = vadd.f32 %v551, %v2555
  %v2557 = vpop.f32.mrb[0].mxu0
  %v2558 = vpop.f32.mrb[0].mxu0
  %v2559 = vadd.f32 %v551, %v2558
  %v2560 = vpop.f32.mrb[0].mxu0
  %2561 = vmatprep.mubr.bf16.mxu0 0
  %2562 = vmatmul.mubr.bf16.gmra.mrb[0].mxu0 %v1626
  %v2563 = vpop.f32.mrb[0].mxu0
  %v2564 = vadd.f32 %v551, %v2563
  %v2565 = vpop.f32.mrb[0].mxu0
  %v2566 = vpop.f32.mrb[0].mxu0
  %v2567 = vadd.f32 %v551, %v2566
  %v2568 = vpop.f32.mrb[0].mxu0
  %2569 = vmatprep.mubr.bf16.mxu0 0
  %2570 = vmatmul.mubr.bf16.gmra.mrb[0].mxu0 %v1627
  %v2571 = vpop.f32.mrb[0].mxu0
  %v2572 = vadd.f32 %v551, %v2571
  %v2573 = vpop.f32.mrb[0].mxu0
  %v2574 = vpop.f32.mrb[0].mxu0
  %v2575 = vadd.f32 %v551, %v2574
  %v2576 = vpop.f32.mrb[0].mxu0
  %2577 = vmatprep.mubr.bf16.mxu0 0
  %2578 = vmatmul.mubr.bf16.gmra.mrb[0].mxu0 %v1628
  %v2579 = vpop.f32.mrb[0].mxu0
  %v2580 = vadd.f32 %v551, %v2579
  %v2581 = vpop.f32.mrb[0].mxu0
  %v2582 = vpop.f32.mrb[0].mxu0
  %v2583 = vadd.f32 %v551, %v2582
  %v2584 = vpop.f32.mrb[0].mxu0
  %2585 = vmatprep.mubr.bf16.mxu0 0
  %2586 = vmatmul.mubr.bf16.gmra.mrb[0].mxu0 %v1629
  %v2587 = vpop.f32.mrb[0].mxu0
  %v2588 = vadd.f32 %v551, %v2587
  %v2589 = vpop.f32.mrb[0].mxu0
  %v2590 = vpop.f32.mrb[0].mxu0
  %v2591 = vadd.f32 %v551, %v2590
  %v2592 = vpop.f32.mrb[0].mxu0
  %2593 = vmatprep.mubr.bf16.mxu0 0
  %2594 = vmatmul.mubr.bf16.gmra.mrb[0].mxu0 %v1630
  %v2595 = vpop.f32.mrb[0].mxu0
  %v2596 = vadd.f32 %v551, %v2595
  %v2597 = vpop.f32.mrb[0].mxu0
  %v2598 = vpop.f32.mrb[0].mxu0
  %v2599 = vadd.f32 %v551, %v2598
  %v2600 = vpop.f32.mrb[0].mxu0
  %2601 = vmatprep.mubr.bf16.mxu0 0
  %2602 = vmatmul.mubr.bf16.gmra.mrb[0].mxu0 %v1631
  %v2603 = vpop.f32.mrb[0].mxu0
  %v2604 = vadd.f32 %v551, %v2603
  %v2605 = vpop.f32.mrb[0].mxu0
  %v2606 = vpop.f32.mrb[0].mxu0
  %v2607 = vadd.f32 %v551, %v2606
  %v2608 = vpop.f32.mrb[0].mxu0
  %2609 = vmatprep.mubr.bf16.mxu0 0
  %2610 = vmatmul.mubr.bf16.gmra.mrb[0].mxu0 %v1632
  %v2611 = vpop.f32.mrb[0].mxu0
  %v2612 = vadd.f32 %v551, %v2611
  %v2613 = vpop.f32.mrb[0].mxu0
  %v2614 = vpop.f32.mrb[0].mxu0
  %v2615 = vadd.f32 %v551, %v2614
  %v2616 = vpop.f32.mrb[0].mxu0
  %2617 = vmatprep.mubr.bf16.mxu0 0
  %2618 = vmatmul.mubr.bf16.gmra.mrb[0].mxu0 %v1633
  %v2619 = vpop.f32.mrb[0].mxu0
  %v2620 = vadd.f32 %v551, %v2619
  %v2621 = vpop.f32.mrb[0].mxu0
  %v2622 = vpop.f32.mrb[0].mxu0
  %v2623 = vadd.f32 %v551, %v2622
  %v2624 = vpop.f32.mrb[0].mxu0
  %2625 = vmatprep.mubr.bf16.mxu0 0
  %2626 = vmatmul.mubr.bf16.gmra.mrb[0].mxu0 %v1634
  %v2627 = vpop.f32.mrb[0].mxu0
  %v2628 = vadd.f32 %v551, %v2627
  %v2629 = vpop.f32.mrb[0].mxu0
  %v2630 = vpop.f32.mrb[0].mxu0
  %v2631 = vadd.f32 %v551, %v2630
  %v2632 = vpop.f32.mrb[0].mxu0
  %2633 = vmatprep.mubr.bf16.mxu0 0
  %2634 = vmatmul.mubr.bf16.gmra.mrb[0].mxu0 %v1635
  %v2635 = vpop.f32.mrb[0].mxu0
  %v2636 = vadd.f32 %v551, %v2635
  %v2637 = vpop.f32.mrb[0].mxu0
  %v2638 = vpop.f32.mrb[0].mxu0
  %v2639 = vadd.f32 %v551, %v2638
  %v2640 = vpop.f32.mrb[0].mxu0
  %2641 = vmatprep.mubr.bf16.mxu0 0
  %2642 = vmatmul.mubr.bf16.gmra.mrb[0].mxu0 %v1636
  %v2643 = vpop.f32.mrb[0].mxu0
  %v2644 = vadd.f32 %v551, %v2643
  %v2645 = vpop.f32.mrb[0].mxu0
  %v2646 = vpop.f32.mrb[0].mxu0
  %v2647 = vadd.f32 %v551, %v2646
  %v2648 = vpop.f32.mrb[0].mxu0
  %2649 = vmatprep.mubr.bf16.mxu0 0
  %2650 = vmatmul.mubr.bf16.gmra.mrb[0].mxu0 %v1637
  %v2651 = vpop.f32.mrb[0].mxu0
  %v2652 = vadd.f32 %v551, %v2651
  %v2653 = vpop.f32.mrb[0].mxu0
  %v2654 = vpop.f32.mrb[0].mxu0
  %v2655 = vadd.f32 %v551, %v2654
  %v2656 = vpop.f32.mrb[0].mxu0
  %2657 = vmatprep.mubr.bf16.mxu0 0
  %2658 = vmatmul.mubr.bf16.gmra.mrb[0].mxu0 %v1638
  %v2659 = vpop.f32.mrb[0].mxu0
  %v2660 = vadd.f32 %v551, %v2659
  %v2661 = vpop.f32.mrb[0].mxu0
  %v2662 = vpop.f32.mrb[0].mxu0
  %v2663 = vadd.f32 %v551, %v2662
  %v2664 = vpop.f32.mrb[0].mxu0
  %2665 = vmatprep.mubr.bf16.mxu0 0
  %2666 = vmatmul.mubr.bf16.gmra.mrb[0].mxu0 %v1639
  %v2667 = vpop.f32.mrb[0].mxu0
  %v2668 = vadd.f32 %v551, %v2667
  %v2669 = vpop.f32.mrb[0].mxu0
  %v2670 = vpop.f32.mrb[0].mxu0
  %v2671 = vadd.f32 %v551, %v2670
  %v2672 = vpop.f32.mrb[0].mxu0
  %2673 = vmatprep.mubr.bf16.mxu0 0
  %2674 = vmatmul.mubr.bf16.gmra.mrb[0].mxu0 %v1640
  %v2675 = vpop.f32.mrb[0].mxu0
  %v2676 = vadd.f32 %v551, %v2675
  %v2677 = vpop.f32.mrb[0].mxu0
  %v2678 = vpop.f32.mrb[0].mxu0
  %v2679 = vadd.f32 %v551, %v2678
  %v2680 = vpop.f32.mrb[0].mxu0
  %2681 = vmatprep.mubr.bf16.mxu0 0
  %2682 = vmatmul.mubr.bf16.gmra.mrb[0].mxu0 %v1641
  %v2683 = vpop.f32.mrb[0].mxu0
  %v2684 = vadd.f32 %v551, %v2683
  %v2685 = vpop.f32.mrb[0].mxu0
  %v2686 = vpop.f32.mrb[0].mxu0
  %v2687 = vadd.f32 %v551, %v2686
  %v2688 = vpop.f32.mrb[0].mxu0
  %2689 = vmatprep.mubr.bf16.mxu0 0
  %2690 = vmatmul.mubr.bf16.gmra.mrb[0].mxu0 %v1642
  %v2691 = vpop.f32.mrb[0].mxu0
  %v2692 = vadd.f32 %v551, %v2691
  %v2693 = vpop.f32.mrb[0].mxu0
  %v2694 = vpop.f32.mrb[0].mxu0
  %v2695 = vadd.f32 %v551, %v2694
  %v2696 = vpop.f32.mrb[0].mxu0
  %2697 = vmatprep.mubr.bf16.mxu0 0
  %2698 = vmatmul.mubr.bf16.gmra.mrb[0].mxu0 %v1643
  %v2699 = vpop.f32.mrb[0].mxu0
  %v2700 = vadd.f32 %v551, %v2699
  %v2701 = vpop.f32.mrb[0].mxu0
  %v2702 = vpop.f32.mrb[0].mxu0
  %v2703 = vadd.f32 %v551, %v2702
  %v2704 = vpop.f32.mrb[0].mxu0
  %2705 = vmatprep.mubr.bf16.mxu0 0
  %2706 = vmatmul.mubr.bf16.gmra.mrb[0].mxu0 %v1644
  %v2707 = vpop.f32.mrb[0].mxu0
  %v2708 = vadd.f32 %v551, %v2707
  %v2709 = vpop.f32.mrb[0].mxu0
  %v2710 = vpop.f32.mrb[0].mxu0
  %v2711 = vadd.f32 %v551, %v2710
  %v2712 = vpop.f32.mrb[0].mxu0
  %2713 = vmatprep.mubr.bf16.mxu0 0
  %2714 = vmatmul.mubr.bf16.gmra.mrb[0].mxu0 %v1645
  %v2715 = vpop.f32.mrb[0].mxu0
  %v2716 = vadd.f32 %v551, %v2715
  %v2717 = vpop.f32.mrb[0].mxu0
  %v2718 = vpop.f32.mrb[0].mxu0
  %v2719 = vadd.f32 %v551, %v2718
  %v2720 = vpop.f32.mrb[0].mxu0
  %2721 = vmatprep.mubr.bf16.mxu0 0
  %2722 = vmatmul.mubr.bf16.gmra.mrb[0].mxu0 %v1646
  %v2723 = vpop.f32.mrb[0].mxu0
  %v2724 = vadd.f32 %v551, %v2723
  %v2725 = vpop.f32.mrb[0].mxu0
  %v2726 = vpop.f32.mrb[0].mxu0
  %v2727 = vadd.f32 %v551, %v2726
  %v2728 = vpop.f32.mrb[0].mxu0
  %2729 = vmatprep.mubr.bf16.mxu0 0
  %2730 = vmatmul.mubr.bf16.gmra.mrb[0].mxu0 %v1647
  %v2731 = vpop.f32.mrb[0].mxu0
  %v2732 = vadd.f32 %v551, %v2731
  %v2733 = vpop.f32.mrb[0].mxu0
  %v2734 = vpop.f32.mrb[0].mxu0
  %v2735 = vadd.f32 %v551, %v2734
  %v2736 = vpop.f32.mrb[0].mxu0
  %2737 = vmatprep.mubr.bf16.mxu0 0
  %2738 = vmatmul.mubr.bf16.gmra.mrb[0].mxu0 %v1648
  %v2739 = vpop.f32.mrb[0].mxu0
  %v2740 = vadd.f32 %v551, %v2739
  %v2741 = vpop.f32.mrb[0].mxu0
  %v2742 = vpop.f32.mrb[0].mxu0
  %v2743 = vadd.f32 %v551, %v2742
  %v2744 = vpop.f32.mrb[0].mxu0
  %2745 = vmatprep.mubr.bf16.mxu0 0
  %2746 = vmatmul.mubr.bf16.gmra.mrb[0].mxu0 %v1649
  %v2747 = vpop.f32.mrb[0].mxu0
  %v2748 = vadd.f32 %v551, %v2747
  %v2749 = vpop.f32.mrb[0].mxu0
  %v2750 = vpop.f32.mrb[0].mxu0
  %v2751 = vadd.f32 %v551, %v2750
  %v2752 = vpop.f32.mrb[0].mxu0
  %2753 = vmatprep.mubr.bf16.mxu0 0
  %2754 = vmatmul.mubr.bf16.gmra.mrb[0].mxu0 %v1650
  %v2755 = vpop.f32.mrb[0].mxu0
  %v2756 = vadd.f32 %v551, %v2755
  %v2757 = vpop.f32.mrb[0].mxu0
  %v2758 = vpop.f32.mrb[0].mxu0
  %v2759 = vadd.f32 %v551, %v2758
  %v2760 = vpop.f32.mrb[0].mxu0
  %2761 = vmatprep.mubr.bf16.mxu0 0
  %2762 = vmatmul.mubr.bf16.gmra.mrb[0].mxu0 %v1651
  %v2763 = vpop.f32.mrb[0].mxu0
  %v2764 = vadd.f32 %v551, %v2763
  %v2765 = vpop.f32.mrb[0].mxu0
  %v2766 = vpop.f32.mrb[0].mxu0
  %v2767 = vadd.f32 %v551, %v2766
  %v2768 = vpop.f32.mrb[0].mxu0
  %2769 = vmatprep.mubr.bf16.mxu0 0
  %2770 = vmatmul.mubr.bf16.gmra.mrb[0].mxu0 %v1652
  %v2771 = vpop.f32.mrb[0].mxu0
  %v2772 = vadd.f32 %v551, %v2771
  %v2773 = vpop.f32.mrb[0].mxu0
  %v2774 = vpop.f32.mrb[0].mxu0
  %v2775 = vadd.f32 %v551, %v2774
  %v2776 = vpop.f32.mrb[0].mxu0
  %2777 = vmatprep.mubr.bf16.mxu0 0
  %2778 = vmatmul.mubr.bf16.gmra.mrb[0].mxu0 %v1653
  %v2779 = vpop.f32.mrb[0].mxu0
  %v2780 = vadd.f32 %v551, %v2779
  %v2781 = vpop.f32.mrb[0].mxu0
  %v2782 = vpop.f32.mrb[0].mxu0
  %v2783 = vadd.f32 %v551, %v2782
  %v2784 = vpop.f32.mrb[0].mxu0
  %2785 = vmatprep.mubr.bf16.mxu0 0
  %2786 = vmatmul.mubr.bf16.gmra.mrb[0].mxu0 %v1654
  %v2787 = vpop.f32.mrb[0].mxu0
  %v2788 = vadd.f32 %v551, %v2787
  %v2789 = vpop.f32.mrb[0].mxu0
  %v2790 = vpop.f32.mrb[0].mxu0
  %v2791 = vadd.f32 %v551, %v2790
  %v2792 = vpop.f32.mrb[0].mxu0
  %2793 = vmatprep.mubr.bf16.mxu0 0
  %2794 = vmatmul.mubr.bf16.gmra.mrb[0].mxu0 %v1655
  %v2795 = vpop.f32.mrb[0].mxu0
  %v2796 = vadd.f32 %v551, %v2795
  %v2797 = vpop.f32.mrb[0].mxu0
  %v2798 = vpop.f32.mrb[0].mxu0
  %v2799 = vadd.f32 %v551, %v2798
  %v2800 = vpop.f32.mrb[0].mxu0
  %2801 = vmatprep.mubr.bf16.mxu0 0
  %2802 = vmatmul.mubr.bf16.gmra.mrb[0].mxu0 %v1656
  %v2803 = vpop.f32.mrb[0].mxu0
  %v2804 = vadd.f32 %v551, %v2803
  %v2805 = vpop.f32.mrb[0].mxu0
  %v2806 = vpop.f32.mrb[0].mxu0
  %v2807 = vadd.f32 %v551, %v2806
  %v2808 = vpop.f32.mrb[0].mxu0
  %2809 = vmatprep.mubr.bf16.mxu0 0
  %2810 = vmatmul.mubr.bf16.gmra.mrb[0].mxu0 %v1657
  %v2811 = vpop.f32.mrb[0].mxu0
  %v2812 = vadd.f32 %v551, %v2811
  %v2813 = vpop.f32.mrb[0].mxu0
  %v2814 = vpop.f32.mrb[0].mxu0
  %v2815 = vadd.f32 %v551, %v2814
  %v2816 = vpop.f32.mrb[0].mxu0
  %2817 = vmatprep.mubr.bf16.mxu0 0
  %2818 = vmatmul.mubr.bf16.gmra.mrb[0].mxu0 %v1658
  %v2819 = vpop.f32.mrb[0].mxu0
  %v2820 = vadd.f32 %v551, %v2819
  %v2821 = vpop.f32.mrb[0].mxu0
  %v2822 = vpop.f32.mrb[0].mxu0
  %v2823 = vadd.f32 %v551, %v2822
  %v2824 = vpop.f32.mrb[0].mxu0
  %2825 = vmatprep.mubr.bf16.mxu0 0
  %2826 = vmatmul.mubr.bf16.gmra.mrb[0].mxu0 %v1659
  %v2827 = vpop.f32.mrb[0].mxu0
  %v2828 = vadd.f32 %v551, %v2827
  %v2829 = vpop.f32.mrb[0].mxu0
  %v2830 = vpop.f32.mrb[0].mxu0
  %v2831 = vadd.f32 %v551, %v2830
  %v2832 = vpop.f32.mrb[0].mxu0
  %2833 = vmatprep.mubr.bf16.mxu0 0
  %2834 = vmatmul.mubr.bf16.gmra.mrb[0].mxu0 %v1660
  %v2835 = vpop.f32.mrb[0].mxu0
  %v2836 = vadd.f32 %v551, %v2835
  %v2837 = vpop.f32.mrb[0].mxu0
  %v2838 = vpop.f32.mrb[0].mxu0
  %v2839 = vadd.f32 %v551, %v2838
  %v2840 = vpop.f32.mrb[0].mxu0
  %2841 = vmatprep.mubr.bf16.mxu0 0
  %2842 = vmatmul.mubr.bf16.gmra.mrb[0].mxu0 %v1661
  %v2843 = vpop.f32.mrb[0].mxu0
  %v2844 = vadd.f32 %v551, %v2843
  %v2845 = vpop.f32.mrb[0].mxu0
  %v2846 = vpop.f32.mrb[0].mxu0
  %v2847 = vadd.f32 %v551, %v2846
  %v2848 = vpop.f32.mrb[0].mxu0
  %2849 = vmatprep.mubr.bf16.mxu0 0
  %2850 = vmatmul.mubr.bf16.gmra.mrb[0].mxu0 %v1662
  %v2851 = vpop.f32.mrb[0].mxu0
  %v2852 = vadd.f32 %v551, %v2851
  %v2853 = vpop.f32.mrb[0].mxu0
  %v2854 = vpop.f32.mrb[0].mxu0
  %v2855 = vadd.f32 %v551, %v2854
  %v2856 = vpop.f32.mrb[0].mxu0
  %2857 = vmatprep.mubr.bf16.mxu0 0
  %2858 = vmatmul.mubr.bf16.gmra.mrb[0].mxu0 %v1663
  %v2859 = vpop.f32.mrb[0].mxu0
  %v2860 = vadd.f32 %v551, %v2859
  %v2861 = vpop.f32.mrb[0].mxu0
  %v2862 = vpop.f32.mrb[0].mxu0
  %v2863 = vadd.f32 %v551, %v2862
  %v2864 = vpop.f32.mrb[0].mxu0
  %2865 = vmatprep.mubr.bf16.mxu0 0
  %2866 = vmatmul.mubr.bf16.gmra.mrb[0].mxu0 %v1664
  %v2867 = vpop.f32.mrb[0].mxu0
  %v2868 = vadd.f32 %v551, %v2867
  %v2869 = vpop.f32.mrb[0].mxu0
  %v2870 = vpop.f32.mrb[0].mxu0
  %v2871 = vadd.f32 %v551, %v2870
  %v2872 = vpop.f32.mrb[0].mxu0
  %2873 = vmatprep.mubr.bf16.mxu0 0
  %2874 = vmatmul.mubr.bf16.gmra.mrb[0].mxu0 %v1665
  %v2875 = vpop.f32.mrb[0].mxu0
  %v2876 = vadd.f32 %v551, %v2875
  %v2877 = vpop.f32.mrb[0].mxu0
  %v2878 = vpop.f32.mrb[0].mxu0
  %v2879 = vadd.f32 %v551, %v2878
  %v2880 = vpop.f32.mrb[0].mxu0
  %2881 = vmatprep.mubr.bf16.mxu0 0
  %2882 = vmatmul.mubr.bf16.gmra.mrb[0].mxu0 %v1666
  %v2883 = vpop.f32.mrb[0].mxu0
  %v2884 = vadd.f32 %v551, %v2883
  %v2885 = vpop.f32.mrb[0].mxu0
  %v2886 = vpop.f32.mrb[0].mxu0
  %v2887 = vadd.f32 %v551, %v2886
  %v2888 = vpop.f32.mrb[0].mxu0
  %2889 = vmatprep.mubr.bf16.mxu0 0
  %2890 = vmatmul.mubr.bf16.gmra.mrb[0].mxu0 %v1667
  %v2891 = vpop.f32.mrb[0].mxu0
  %v2892 = vadd.f32 %v551, %v2891
  %v2893 = vpop.f32.mrb[0].mxu0
  %v2894 = vpop.f32.mrb[0].mxu0
  %v2895 = vadd.f32 %v551, %v2894
  %v2896 = vpop.f32.mrb[0].mxu0
  %2897 = vmatprep.mubr.bf16.mxu0 0
  %2898 = vmatmul.mubr.bf16.gmra.mrb[0].mxu0 %v1668
  %v2899 = vpop.f32.mrb[0].mxu0
  %v2900 = vadd.f32 %v551, %v2899
  %v2901 = vpop.f32.mrb[0].mxu0
  %v2902 = vpop.f32.mrb[0].mxu0
  %v2903 = vadd.f32 %v551, %v2902
  %v2904 = vpop.f32.mrb[0].mxu0
  %2905 = vmatprep.mubr.bf16.mxu0 0
  %2906 = vmatmul.mubr.bf16.gmra.mrb[0].mxu0 %v1669
  %v2907 = vpop.f32.mrb[0].mxu0
  %v2908 = vadd.f32 %v551, %v2907
  %v2909 = vpop.f32.mrb[0].mxu0
  %v2910 = vpop.f32.mrb[0].mxu0
  %v2911 = vadd.f32 %v551, %v2910
  %v2912 = vpop.f32.mrb[0].mxu0
  %2913 = vmatprep.mubr.bf16.mxu0 0
  %2914 = vmatmul.mubr.bf16.gmra.mrb[0].mxu0 %v1670
  %v2915 = vpop.f32.mrb[0].mxu0
  %v2916 = vadd.f32 %v551, %v2915
  %v2917 = vpop.f32.mrb[0].mxu0
  %v2918 = vpop.f32.mrb[0].mxu0
  %v2919 = vadd.f32 %v551, %v2918
  %v2920 = vpop.f32.mrb[0].mxu0
  %2921 = vmatprep.mubr.bf16.mxu0 0
  %2922 = vmatmul.mubr.bf16.gmra.mrb[0].mxu0 %v1671
  %v2923 = vpop.f32.mrb[0].mxu0
  %v2924 = vadd.f32 %v551, %v2923
  %v2925 = vpop.f32.mrb[0].mxu0
  %v2926 = vpop.f32.mrb[0].mxu0
  %v2927 = vadd.f32 %v551, %v2926
  %v2928 = vpop.f32.mrb[0].mxu0
  %2929 = vmatprep.mubr.bf16.mxu0 0
  %2930 = vmatmul.mubr.bf16.gmra.mrb[0].mxu0 %v1672
  %v2931 = vpop.f32.mrb[0].mxu0
  %v2932 = vadd.f32 %v551, %v2931
  %v2933 = vpop.f32.mrb[0].mxu0
  %v2934 = vpop.f32.mrb[0].mxu0
  %v2935 = vadd.f32 %v551, %v2934
  %v2936 = vpop.f32.mrb[0].mxu0
  %2937 = vmatprep.mubr.bf16.mxu0 0
  %2938 = vmatmul.mubr.bf16.gmra.mrb[0].mxu0 %v1673
  %v2939 = vpop.f32.mrb[0].mxu0
  %v2940 = vadd.f32 %v551, %v2939
  %v2941 = vpop.f32.mrb[0].mxu0
  %v2942 = vpop.f32.mrb[0].mxu0
  %v2943 = vadd.f32 %v551, %v2942
  %v2944 = vpop.f32.mrb[0].mxu0
  %2945 = vmatprep.mubr.bf16.mxu0 0
  %2946 = vmatmul.mubr.bf16.gmra.mrb[0].mxu0 %v1674
  %v2947 = vpop.f32.mrb[0].mxu0
  %v2948 = vadd.f32 %v551, %v2947
  %v2949 = vpop.f32.mrb[0].mxu0
  %v2950 = vpop.f32.mrb[0].mxu0
  %v2951 = vadd.f32 %v551, %v2950
  %v2952 = vpop.f32.mrb[0].mxu0
  %2953 = vmatprep.mubr.bf16.mxu0 0
  %2954 = vmatmul.mubr.bf16.gmra.mrb[0].mxu0 %v1675
  %v2955 = vpop.f32.mrb[0].mxu0
  %v2956 = vadd.f32 %v551, %v2955
  %v2957 = vpop.f32.mrb[0].mxu0
  %v2958 = vpop.f32.mrb[0].mxu0
  %v2959 = vadd.f32 %v551, %v2958
  %v2960 = vpop.f32.mrb[0].mxu0
  %2961 = vmatprep.mubr.bf16.mxu0 0
  %2962 = vmatmul.mubr.bf16.gmra.mrb[0].mxu0 %v1676
  %v2963 = vpop.f32.mrb[0].mxu0
  %v2964 = vadd.f32 %v551, %v2963
  %v2965 = vpop.f32.mrb[0].mxu0
  %v2966 = vpop.f32.mrb[0].mxu0
  %v2967 = vadd.f32 %v551, %v2966
  %v2968 = vpop.f32.mrb[0].mxu0
  %2969 = vmatprep.mubr.bf16.mxu0 0
  %2970 = vmatmul.mubr.bf16.gmra.mrb[0].mxu0 %v1677
  %v2971 = vpop.f32.mrb[0].mxu0
  %v2972 = vadd.f32 %v551, %v2971
  %v2973 = vpop.f32.mrb[0].mxu0
  %v2974 = vpop.f32.mrb[0].mxu0
  %v2975 = vadd.f32 %v551, %v2974
  %v2976 = vpop.f32.mrb[0].mxu0
  %2977 = vmatprep.mubr.bf16.mxu0 0
  %2978 = vmatmul.mubr.bf16.gmra.mrb[0].mxu0 %v1678
  %v2979 = vpop.f32.mrb[0].mxu0
  %v2980 = vadd.f32 %v551, %v2979
  %v2981 = vpop.f32.mrb[0].mxu0
  %v2982 = vpop.f32.mrb[0].mxu0
  %v2983 = vadd.f32 %v551, %v2982
  %v2984 = vpop.f32.mrb[0].mxu0
  %2985 = vmatprep.mubr.bf16.mxu0 0
  %2986 = vmatmul.mubr.bf16.gmra.mrb[0].mxu0 %v1679
  %v2987 = vpop.f32.mrb[0].mxu0
  %v2988 = vadd.f32 %v551, %v2987
  %v2989 = vpop.f32.mrb[0].mxu0
  %v2990 = vpop.f32.mrb[0].mxu0
  %v2991 = vadd.f32 %v551, %v2990
  %v2992 = vpop.f32.mrb[0].mxu0
  %2993 = vmatprep.mubr.bf16.mxu0 0
  %2994 = vmatmul.mubr.bf16.gmra.mrb[0].mxu0 %v1680
  %v2995 = vpop.f32.mrb[0].mxu0
  %v2996 = vadd.f32 %v551, %v2995
  %v2997 = vpop.f32.mrb[0].mxu0
  %v2998 = vpop.f32.mrb[0].mxu0
  %v2999 = vadd.f32 %v551, %v2998
  %v3000 = vpop.f32.mrb[0].mxu0
  %3001 = vmatprep.mubr.bf16.mxu0 0
  %3002 = vmatmul.mubr.bf16.gmra.mrb[0].mxu0 %v1681
  %v3003 = vpop.f32.mrb[0].mxu0
  %v3004 = vadd.f32 %v551, %v3003
  %v3005 = vpop.f32.mrb[0].mxu0
  %v3006 = vpop.f32.mrb[0].mxu0
  %v3007 = vadd.f32 %v551, %v3006
  %v3008 = vpop.f32.mrb[0].mxu0
  %3009 = vmatprep.mubr.bf16.mxu0 0
  %3010 = vmatmul.mubr.bf16.gmra.mrb[0].mxu0 %v1682
  %v3011 = vpop.f32.mrb[0].mxu0
  %v3012 = vadd.f32 %v551, %v3011
  %v3013 = vpop.f32.mrb[0].mxu0
  %v3014 = vpop.f32.mrb[0].mxu0
  %v3015 = vadd.f32 %v551, %v3014
  %v3016 = vpop.f32.mrb[0].mxu0
  %3017 = vmatprep.mubr.bf16.mxu0 0
  %3018 = vmatmul.mubr.bf16.gmra.mrb[0].mxu0 %v1683
  %v3019 = vpop.f32.mrb[0].mxu0
  %v3020 = vadd.f32 %v551, %v3019
  %v3021 = vpop.f32.mrb[0].mxu0
  %v3022 = vpop.f32.mrb[0].mxu0
  %v3023 = vadd.f32 %v551, %v3022
  %v3024 = vpop.f32.mrb[0].mxu0
  %3025 = vmatprep.mubr.bf16.mxu0 0
  %3026 = vmatmul.mubr.bf16.gmra.mrb[0].mxu0 %v1684
  %v3027 = vpop.f32.mrb[0].mxu0
  %v3028 = vadd.f32 %v551, %v3027
  %v3029 = vpop.f32.mrb[0].mxu0
  %v3030 = vpop.f32.mrb[0].mxu0
  %v3031 = vadd.f32 %v551, %v3030
  %v3032 = vpop.f32.mrb[0].mxu0
  %3033 = vmatprep.mubr.bf16.mxu0 0
  %3034 = vmatmul.mubr.bf16.gmra.mrb[0].mxu0 %v1685
  %v3035 = vpop.f32.mrb[0].mxu0
  %v3036 = vadd.f32 %v551, %v3035
  %v3037 = vpop.f32.mrb[0].mxu0
  %v3038 = vpop.f32.mrb[0].mxu0
  %v3039 = vadd.f32 %v551, %v3038
  %v3040 = vpop.f32.mrb[0].mxu0
  %3041 = vmatprep.mubr.bf16.mxu0 0
  %3042 = vmatmul.mubr.bf16.gmra.mrb[0].mxu0 %v1686
  %v3043 = vpop.f32.mrb[0].mxu0
  %v3044 = vadd.f32 %v551, %v3043
  %v3045 = vpop.f32.mrb[0].mxu0
  %v3046 = vpop.f32.mrb[0].mxu0
  %v3047 = vadd.f32 %v551, %v3046
  %v3048 = vpop.f32.mrb[0].mxu0
  %3049 = vmatprep.mubr.bf16.mxu0 0
  %3050 = vmatmul.mubr.bf16.gmra.mrb[0].mxu0 %v1687
  %v3051 = vpop.f32.mrb[0].mxu0
  %v3052 = vadd.f32 %v551, %v3051
  %v3053 = vpop.f32.mrb[0].mxu0
  %v3054 = vpop.f32.mrb[0].mxu0
  %v3055 = vadd.f32 %v551, %v3054
  %v3056 = vpop.f32.mrb[0].mxu0
  %3057 = vmatprep.mubr.bf16.mxu0 0
  %3058 = vmatmul.mubr.bf16.gmra.mrb[0].mxu0 %v1688
  %v3059 = vpop.f32.mrb[0].mxu0
  %v3060 = vadd.f32 %v551, %v3059
  %v3061 = vpop.f32.mrb[0].mxu0
  %v3062 = vpop.f32.mrb[0].mxu0
  %v3063 = vadd.f32 %v551, %v3062
  %v3064 = vpop.f32.mrb[0].mxu0
  %3065 = vmatprep.mubr.bf16.mxu0 0
  %3066 = vmatmul.mubr.bf16.gmra.mrb[0].mxu0 %v1689
  %v3067 = vpop.f32.mrb[0].mxu0
  %v3068 = vadd.f32 %v551, %v3067
  %v3069 = vpop.f32.mrb[0].mxu0
  %v3070 = vpop.f32.mrb[0].mxu0
  %v3071 = vadd.f32 %v551, %v3070
  %v3072 = vpop.f32.mrb[0].mxu0
  %3073 = vmatprep.mubr.bf16.mxu0 0
  %3074 = vmatmul.mubr.bf16.gmra.mrb[0].mxu0 %v1690
  %v3075 = vpop.f32.mrb[0].mxu0
  %v3076 = vadd.f32 %v551, %v3075
  %v3077 = vpop.f32.mrb[0].mxu0
  %v3078 = vpop.f32.mrb[0].mxu0
  %v3079 = vadd.f32 %v551, %v3078
  %v3080 = vpop.f32.mrb[0].mxu0
  %3081 = vmatprep.mubr.bf16.mxu0 0
  %3082 = vmatmul.mubr.bf16.gmra.mrb[0].mxu0 %v1691
  %v3083 = vpop.f32.mrb[0].mxu0
  %v3084 = vadd.f32 %v551, %v3083
  %v3085 = vpop.f32.mrb[0].mxu0
  %v3086 = vpop.f32.mrb[0].mxu0
  %v3087 = vadd.f32 %v551, %v3086
  %v3088 = vpop.f32.mrb[0].mxu0
  %3089 = vmatprep.mubr.bf16.mxu0 0
  %3090 = vmatmul.mubr.bf16.gmra.mrb[0].mxu0 %v1692
  %v3091 = vpop.f32.mrb[0].mxu0
  %v3092 = vadd.f32 %v551, %v3091
  %v3093 = vpop.f32.mrb[0].mxu0
  %v3094 = vpop.f32.mrb[0].mxu0
  %v3095 = vadd.f32 %v551, %v3094
  %v3096 = vpop.f32.mrb[0].mxu0
  %3097 = vmatprep.mubr.bf16.mxu0 0
  %3098 = vmatmul.mubr.bf16.gmra.mrb[0].mxu0 %v1693
  %v3099 = vpop.f32.mrb[0].mxu0
  %v3100 = vadd.f32 %v551, %v3099
  %v3101 = vpop.f32.mrb[0].mxu0
  %v3102 = vpop.f32.mrb[0].mxu0
  %v3103 = vadd.f32 %v551, %v3102
  %v3104 = vpop.f32.mrb[0].mxu0
  %3105 = vmatprep.mubr.bf16.mxu0 0
  %3106 = vmatmul.mubr.bf16.gmra.mrb[0].mxu0 %v1694
  %v3107 = vpop.f32.mrb[0].mxu0
  %v3108 = vadd.f32 %v551, %v3107
  %v3109 = vpop.f32.mrb[0].mxu0
  %v3110 = vpop.f32.mrb[0].mxu0
  %v3111 = vadd.f32 %v551, %v3110
  %v3112 = vpop.f32.mrb[0].mxu0
  %3113 = vmatprep.mubr.bf16.mxu0 0
  %3114 = vmatmul.mubr.bf16.gmra.mrb[0].mxu0 %v1695
  %v3115 = vpop.f32.mrb[0].mxu0
  %v3116 = vadd.f32 %v551, %v3115
  %v3117 = vpop.f32.mrb[0].mxu0
  %v3118 = vpop.f32.mrb[0].mxu0
  %v3119 = vadd.f32 %v551, %v3118
  %v3120 = vpop.f32.mrb[0].mxu0
  %3121 = vmatprep.mubr.bf16.mxu0 0
  %3122 = vmatmul.mubr.bf16.gmra.mrb[0].mxu0 %v1696
  %v3123 = vpop.f32.mrb[0].mxu0
  %v3124 = vadd.f32 %v551, %v3123
  %v3125 = vpop.f32.mrb[0].mxu0
  %v3126 = vpop.f32.mrb[0].mxu0
  %v3127 = vadd.f32 %v551, %v3126
  %v3128 = vpop.f32.mrb[0].mxu0
  %3129 = vmatprep.mubr.bf16.mxu0 0
  %3130 = vmatmul.mubr.bf16.gmra.mrb[0].mxu0 %v1697
  %v3131 = vpop.f32.mrb[0].mxu0
  %v3132 = vadd.f32 %v551, %v3131
  %v3133 = vpop.f32.mrb[0].mxu0
  %v3134 = vpop.f32.mrb[0].mxu0
  %v3135 = vadd.f32 %v551, %v3134
  %v3136 = vpop.f32.mrb[0].mxu0
  %3137 = vmatprep.mubr.bf16.mxu0 0
  %3138 = vmatmul.mubr.bf16.gmra.mrb[0].mxu0 %v1698
  %v3139 = vpop.f32.mrb[0].mxu0
  %v3140 = vadd.f32 %v551, %v3139
  %v3141 = vpop.f32.mrb[0].mxu0
  %v3142 = vpop.f32.mrb[0].mxu0
  %v3143 = vadd.f32 %v551, %v3142
  %v3144 = vpop.f32.mrb[0].mxu0
  %3145 = vmatprep.mubr.bf16.mxu0 0
  %3146 = vmatmul.mubr.bf16.gmra.mrb[0].mxu0 %v1699
  %v3147 = vpop.f32.mrb[0].mxu0
  %v3148 = vadd.f32 %v551, %v3147
  %v3149 = vpop.f32.mrb[0].mxu0
  %v3150 = vpop.f32.mrb[0].mxu0
  %v3151 = vadd.f32 %v551, %v3150
  %v3152 = vpop.f32.mrb[0].mxu0
  %3153 = vmatprep.mubr.bf16.mxu0 0
  %3154 = vmatmul.mubr.bf16.gmra.mrb[0].mxu0 %v1700
  %v3155 = vpop.f32.mrb[0].mxu0
  %v3156 = vadd.f32 %v551, %v3155
  %v3157 = vpop.f32.mrb[0].mxu0
  %v3158 = vpop.f32.mrb[0].mxu0
  %v3159 = vadd.f32 %v551, %v3158
  %v3160 = vpop.f32.mrb[0].mxu0
  %3161 = vmatprep.mubr.bf16.mxu0 0
  %3162 = vmatmul.mubr.bf16.gmra.mrb[0].mxu0 %v1701
  %v3163 = vpop.f32.mrb[0].mxu0
  %v3164 = vadd.f32 %v551, %v3163
  %v3165 = vpop.f32.mrb[0].mxu0
  %v3166 = vpop.f32.mrb[0].mxu0
  %v3167 = vadd.f32 %v551, %v3166
  %v3168 = vpop.f32.mrb[0].mxu0
  %3169 = vmatprep.mubr.bf16.mxu0 0
  %3170 = vmatmul.mubr.bf16.gmra.mrb[0].mxu0 %v1702
  %v3171 = vpop.f32.mrb[0].mxu0
  %v3172 = vadd.f32 %v551, %v3171
  %v3173 = vpop.f32.mrb[0].mxu0
  %v3174 = vpop.f32.mrb[0].mxu0
  %v3175 = vadd.f32 %v551, %v3174
  %v3176 = vpop.f32.mrb[0].mxu0
  %3177 = vmatprep.mubr.bf16.mxu0 0
  %3178 = vmatmul.mubr.bf16.gmra.mrb[0].mxu0 %v1703
  %v3179 = vpop.f32.mrb[0].mxu0
  %v3180 = vadd.f32 %v551, %v3179
  %v3181 = vpop.f32.mrb[0].mxu0
  %v3182 = vpop.f32.mrb[0].mxu0
  %v3183 = vadd.f32 %v551, %v3182
  %v3184 = vpop.f32.mrb[0].mxu0
  %3185 = vmatprep.mubr.bf16.mxu0 0
  %3186 = vmatmul.mubr.bf16.gmra.mrb[0].mxu0 %v1704
  %v3187 = vpop.f32.mrb[0].mxu0
  %v3188 = vadd.f32 %v551, %v3187
  %v3189 = vpop.f32.mrb[0].mxu0
  %v3190 = vpop.f32.mrb[0].mxu0
  %v3191 = vadd.f32 %v551, %v3190
  %v3192 = vpop.f32.mrb[0].mxu0
  %3193 = vmatprep.mubr.bf16.mxu0 0
  %3194 = vmatmul.mubr.bf16.gmra.mrb[0].mxu0 %v1705
  %v3195 = vpop.f32.mrb[0].mxu0
  %v3196 = vadd.f32 %v551, %v3195
  %v3197 = vpop.f32.mrb[0].mxu0
  %v3198 = vpop.f32.mrb[0].mxu0
  %v3199 = vadd.f32 %v551, %v3198
  %v3200 = vpop.f32.mrb[0].mxu0
  %3201 = vmatprep.mubr.bf16.mxu0 0
  %3202 = vmatmul.mubr.bf16.gmra.mrb[0].mxu0 %v1706
  %v3203 = vpop.f32.mrb[0].mxu0
  %v3204 = vadd.f32 %v551, %v3203
  %v3205 = vpop.f32.mrb[0].mxu0
  %v3206 = vpop.f32.mrb[0].mxu0
  %v3207 = vadd.f32 %v551, %v3206
  %v3208 = vpop.f32.mrb[0].mxu0
  %3209 = vmatprep.mubr.bf16.mxu0 0
  %3210 = vmatmul.mubr.bf16.gmra.mrb[0].mxu0 %v1707
  %v3211 = vpop.f32.mrb[0].mxu0
  %v3212 = vadd.f32 %v551, %v3211
  %v3213 = vpop.f32.mrb[0].mxu0
  %v3214 = vpop.f32.mrb[0].mxu0
  %v3215 = vadd.f32 %v551, %v3214
  %v3216 = vpop.f32.mrb[0].mxu0
  %3217 = vmatprep.mubr.bf16.mxu0 0
  %3218 = vmatmul.mubr.bf16.gmra.mrb[0].mxu0 %v1708
  %v3219 = vpop.f32.mrb[0].mxu0
  %v3220 = vadd.f32 %v551, %v3219
  %v3221 = vpop.f32.mrb[0].mxu0
  %v3222 = vpop.f32.mrb[0].mxu0
  %v3223 = vadd.f32 %v551, %v3222
  %v3224 = vpop.f32.mrb[0].mxu0
  %3225 = vmatprep.mubr.bf16.mxu0 0
  %3226 = vmatmul.mubr.bf16.gmra.mrb[0].mxu0 %v1709
  %v3227 = vpop.f32.mrb[0].mxu0
  %v3228 = vadd.f32 %v551, %v3227
  %v3229 = vpop.f32.mrb[0].mxu0
  %v3230 = vpop.f32.mrb[0].mxu0
  %v3231 = vadd.f32 %v551, %v3230
  %v3232 = vpop.f32.mrb[0].mxu0
  %3233 = vmatprep.mubr.bf16.mxu0 0
  %3234 = vmatmul.mubr.bf16.gmra.mrb[0].mxu0 %v1710
  %v3235 = vpop.f32.mrb[0].mxu0
  %v3236 = vadd.f32 %v551, %v3235
  %v3237 = vpop.f32.mrb[0].mxu0
  %v3238 = vpop.f32.mrb[0].mxu0
  %v3239 = vadd.f32 %v551, %v3238
  %v3240 = vpop.f32.mrb[0].mxu0
  %3241 = vmatprep.mubr.bf16.mxu0 0
  %3242 = vmatmul.mubr.bf16.gmra.mrb[0].mxu0 %v1711
  %v3243 = vpop.f32.mrb[0].mxu0
  %v3244 = vadd.f32 %v551, %v3243
  %v3245 = vpop.f32.mrb[0].mxu0
  %v3246 = vpop.f32.mrb[0].mxu0
  %v3247 = vadd.f32 %v551, %v3246
  %v3248 = vpop.f32.mrb[0].mxu0
  %3249 = vmatprep.mubr.bf16.mxu0 0
  %3250 = vmatmul.mubr.bf16.gmra.mrb[0].mxu0 %v1712
  %v3251 = vpop.f32.mrb[0].mxu0
  %v3252 = vadd.f32 %v551, %v3251
  %v3253 = vpop.f32.mrb[0].mxu0
  %v3254 = vpop.f32.mrb[0].mxu0
  %v3255 = vadd.f32 %v551, %v3254
  %v3256 = vpop.f32.mrb[0].mxu0
  %3257 = vmatprep.mubr.bf16.mxu0 0
  %3258 = vmatmul.mubr.bf16.gmra.mrb[0].mxu0 %v1713
  %v3259 = vpop.f32.mrb[0].mxu0
  %v3260 = vadd.f32 %v551, %v3259
  %v3261 = vpop.f32.mrb[0].mxu0
  %v3262 = vpop.f32.mrb[0].mxu0
  %v3263 = vadd.f32 %v551, %v3262
  %v3264 = vpop.f32.mrb[0].mxu0
  %3265 = vmatprep.mubr.bf16.mxu0 0
  %3266 = vmatmul.mubr.bf16.gmra.mrb[0].mxu0 %v1714
  %v3267 = vpop.f32.mrb[0].mxu0
  %v3268 = vadd.f32 %v551, %v3267
  %v3269 = vpop.f32.mrb[0].mxu0
  %v3270 = vpop.f32.mrb[0].mxu0
  %v3271 = vadd.f32 %v551, %v3270
  %v3272 = vpop.f32.mrb[0].mxu0
  %3273 = vmatprep.mubr.bf16.mxu0 0
  %3274 = vmatmul.mubr.bf16.gmra.mrb[0].mxu0 %v1715
  %v3275 = vpop.f32.mrb[0].mxu0
  %v3276 = vadd.f32 %v551, %v3275
  %v3277 = vpop.f32.mrb[0].mxu0
  %v3278 = vpop.f32.mrb[0].mxu0
  %v3279 = vadd.f32 %v551, %v3278
  %v3280 = vpop.f32.mrb[0].mxu0
  %3281 = vmatprep.mubr.bf16.mxu0 0
  %3282 = vmatmul.mubr.bf16.gmra.mrb[0].mxu0 %v1716
  %v3283 = vpop.f32.mrb[0].mxu0
  %v3284 = vadd.f32 %v551, %v3283
  %v3285 = vpop.f32.mrb[0].mxu0
  %v3286 = vpop.f32.mrb[0].mxu0
  %v3287 = vadd.f32 %v551, %v3286
  %v3288 = vpop.f32.mrb[0].mxu0
  %3289 = vmatprep.mubr.bf16.mxu0 0
  %3290 = vmatmul.mubr.bf16.gmra.mrb[0].mxu0 %v1717
  %v3291 = vpop.f32.mrb[0].mxu0
  %v3292 = vadd.f32 %v551, %v3291
  %v3293 = vpop.f32.mrb[0].mxu0
  %v3294 = vpop.f32.mrb[0].mxu0
  %v3295 = vadd.f32 %v551, %v3294
  %v3296 = vpop.f32.mrb[0].mxu0
  %3297 = vmatprep.mubr.bf16.mxu0 0
  %3298 = vmatmul.mubr.bf16.gmra.mrb[0].mxu0 %v1718
  %v3299 = vpop.f32.mrb[0].mxu0
  %v3300 = vadd.f32 %v551, %v3299
  %v3301 = vpop.f32.mrb[0].mxu0
  %v3302 = vpop.f32.mrb[0].mxu0
  %v3303 = vadd.f32 %v551, %v3302
  %v3304 = vpop.f32.mrb[0].mxu0
  %3305 = vmatprep.mubr.bf16.mxu0 0
  %3306 = vmatmul.mubr.bf16.gmra.mrb[0].mxu0 %v1719
  %v3307 = vpop.f32.mrb[0].mxu0
  %v3308 = vadd.f32 %v551, %v3307
  %v3309 = vpop.f32.mrb[0].mxu0
  %v3310 = vpop.f32.mrb[0].mxu0
  %v3311 = vadd.f32 %v551, %v3310
  %v3312 = vpop.f32.mrb[0].mxu0
  %3313 = vmatprep.mubr.bf16.mxu0 0
  %3314 = vmatmul.mubr.bf16.gmra.mrb[0].mxu0 %v1720
  %v3315 = vpop.f32.mrb[0].mxu0
  %v3316 = vadd.f32 %v551, %v3315
  %v3317 = vpop.f32.mrb[0].mxu0
  %v3318 = vpop.f32.mrb[0].mxu0
  %v3319 = vadd.f32 %v551, %v3318
  %v3320 = vpop.f32.mrb[0].mxu0
  %3321 = vmatprep.mubr.bf16.mxu0 0
  %3322 = vmatmul.mubr.bf16.gmra.mrb[0].mxu0 %v1721
  %v3323 = vpop.f32.mrb[0].mxu0
  %v3324 = vadd.f32 %v551, %v3323
  %v3325 = vpop.f32.mrb[0].mxu0
  %v3326 = vpop.f32.mrb[0].mxu0
  %v3327 = vadd.f32 %v551, %v3326
  %v3328 = vpop.f32.mrb[0].mxu0
  %3329 = vmatprep.mubr.bf16.mxu0 0
  %3330 = vmatmul.mubr.bf16.gmra.mrb[0].mxu0 %v1722
  %v3331 = vpop.f32.mrb[0].mxu0
  %v3332 = vadd.f32 %v551, %v3331
  %v3333 = vpop.f32.mrb[0].mxu0
  %v3334 = vpop.f32.mrb[0].mxu0
  %v3335 = vadd.f32 %v551, %v3334
  %v3336 = vpop.f32.mrb[0].mxu0
  %3337 = vmatprep.mubr.bf16.mxu0 0
  %3338 = vmatmul.mubr.bf16.gmra.mrb[0].mxu0 %v1723
  %v3339 = vpop.f32.mrb[0].mxu0
  %v3340 = vadd.f32 %v551, %v3339
  %v3341 = vpop.f32.mrb[0].mxu0
  %v3342 = vpop.f32.mrb[0].mxu0
  %v3343 = vadd.f32 %v551, %v3342
  %v3344 = vpop.f32.mrb[0].mxu0
  %3345 = vmatprep.mubr.bf16.mxu0 0
  %3346 = vmatmul.mubr.bf16.gmra.mrb[0].mxu0 %v1724
  %v3347 = vpop.f32.mrb[0].mxu0
  %v3348 = vadd.f32 %v551, %v3347
  %v3349 = vpop.f32.mrb[0].mxu0
  %v3350 = vpop.f32.mrb[0].mxu0
  %v3351 = vadd.f32 %v551, %v3350
  %v3352 = vpop.f32.mrb[0].mxu0
  %3353 = vmatprep.mubr.bf16.mxu0 0
  %3354 = vmatmul.mubr.bf16.gmra.mrb[0].mxu0 %v1725
  %v3355 = vpop.f32.mrb[0].mxu0
  %v3356 = vadd.f32 %v551, %v3355
  %v3357 = vpop.f32.mrb[0].mxu0
  %v3358 = vpop.f32.mrb[0].mxu0
  %v3359 = vadd.f32 %v551, %v3358
  %v3360 = vpop.f32.mrb[0].mxu0
  %3361 = vmatprep.mubr.bf16.mxu0 0
  %3362 = vmatmul.mubr.bf16.gmra.mrb[0].mxu0 %v1726
  %v3363 = vpop.f32.mrb[0].mxu0
  %v3364 = vadd.f32 %v551, %v3363
  %v3365 = vpop.f32.mrb[0].mxu0
  %v3366 = vpop.f32.mrb[0].mxu0
  %v3367 = vadd.f32 %v551, %v3366
  %v3368 = vpop.f32.mrb[0].mxu0
  %3369 = vmatprep.mubr.bf16.mxu0 0
  %3370 = vmatmul.mubr.bf16.gmra.mrb[0].mxu0 %v1727
  %v3371 = vpop.f32.mrb[0].mxu0
  %v3372 = vadd.f32 %v551, %v3371
  %v3373 = vpop.f32.mrb[0].mxu0
  %v3374 = vpop.f32.mrb[0].mxu0
  %v3375 = vadd.f32 %v551, %v3374
  %v3376 = vpop.f32.mrb[0].mxu0
  %3377 = vmatprep.mubr.bf16.mxu0 0
  %3378 = vmatmul.mubr.bf16.gmra.mrb[0].mxu0 %v1728
  %v3379 = vpop.f32.mrb[0].mxu0
  %v3380 = vadd.f32 %v551, %v3379
  %v3381 = vpop.f32.mrb[0].mxu0
  %v3382 = vpop.f32.mrb[0].mxu0
  %v3383 = vadd.f32 %v551, %v3382
  %v3384 = vpop.f32.mrb[0].mxu0
  %3385 = vmatprep.mubr.bf16.mxu0 0
  %3386 = vmatmul.mubr.bf16.gmra.mrb[0].mxu0 %v1729
  %v3387 = vpop.f32.mrb[0].mxu0
  %v3388 = vadd.f32 %v551, %v3387
  %v3389 = vpop.f32.mrb[0].mxu0
  %v3390 = vpop.f32.mrb[0].mxu0
  %v3391 = vadd.f32 %v551, %v3390
  %v3392 = vpop.f32.mrb[0].mxu0
  %3393 = vmatprep.mubr.bf16.mxu0 0
  %3394 = vmatmul.mubr.bf16.gmra.mrb[0].mxu0 %v1730
  %v3395 = vpop.f32.mrb[0].mxu0
  %v3396 = vadd.f32 %v551, %v3395
  %v3397 = vpop.f32.mrb[0].mxu0
  %v3398 = vpop.f32.mrb[0].mxu0
  %v3399 = vadd.f32 %v551, %v3398
  %v3400 = vpop.f32.mrb[0].mxu0
  %3401 = vmatprep.mubr.bf16.mxu0 0
  %3402 = vmatmul.mubr.bf16.gmra.mrb[0].mxu0 %v1731
  %v3403 = vpop.f32.mrb[0].mxu0
  %v3404 = vadd.f32 %v551, %v3403
  %v3405 = vpop.f32.mrb[0].mxu0
  %v3406 = vpop.f32.mrb[0].mxu0
  %v3407 = vadd.f32 %v551, %v3406
  %v3408 = vpop.f32.mrb[0].mxu0
  %3409 = vmatprep.mubr.bf16.mxu0 0
  %3410 = vmatmul.mubr.bf16.gmra.mrb[0].mxu0 %v1732
  %v3411 = vpop.f32.mrb[0].mxu0
  %v3412 = vadd.f32 %v551, %v3411
  %v3413 = vpop.f32.mrb[0].mxu0
  %v3414 = vpop.f32.mrb[0].mxu0
  %v3415 = vadd.f32 %v551, %v3414
  %v3416 = vpop.f32.mrb[0].mxu0
  %3417 = vmatprep.mubr.bf16.mxu0 0
  %3418 = vmatmul.mubr.bf16.gmra.mrb[0].mxu0 %v1733
  %v3419 = vpop.f32.mrb[0].mxu0
  %v3420 = vadd.f32 %v551, %v3419
  %v3421 = vpop.f32.mrb[0].mxu0
  %v3422 = vpop.f32.mrb[0].mxu0
  %v3423 = vadd.f32 %v551, %v3422
  %v3424 = vpop.f32.mrb[0].mxu0
  %3425 = vmatprep.mubr.bf16.mxu0 0
  %3426 = vmatmul.mubr.bf16.gmra.mrb[0].mxu0 %v1734
  %v3427 = vpop.f32.mrb[0].mxu0
  %v3428 = vadd.f32 %v551, %v3427
  %v3429 = vpop.f32.mrb[0].mxu0
  %v3430 = vpop.f32.mrb[0].mxu0
  %v3431 = vadd.f32 %v551, %v3430
  %v3432 = vpop.f32.mrb[0].mxu0
  %3433 = vmatprep.mubr.bf16.mxu0 0
  %3434 = vmatmul.mubr.bf16.gmra.mrb[0].mxu0 %v1735
  %v3435 = vpop.f32.mrb[0].mxu0
  %v3436 = vadd.f32 %v551, %v3435
  %v3437 = vpop.f32.mrb[0].mxu0
  %v3438 = vpop.f32.mrb[0].mxu0
  %v3439 = vadd.f32 %v551, %v3438
  %v3440 = vpop.f32.mrb[0].mxu0
  %3441 = vmatprep.mubr.bf16.mxu0 0
  %3442 = vmatmul.mubr.bf16.gmra.mrb[0].mxu0 %v1736
  %v3443 = vpop.f32.mrb[0].mxu0
  %v3444 = vadd.f32 %v551, %v3443
  %v3445 = vpop.f32.mrb[0].mxu0
  %v3446 = vpop.f32.mrb[0].mxu0
  %v3447 = vadd.f32 %v551, %v3446
  %v3448 = vpop.f32.mrb[0].mxu0
  %3449 = vmatprep.mubr.bf16.mxu0 0
  %3450 = vmatmul.mubr.bf16.gmra.mrb[0].mxu0 %v1737
  %v3451 = vpop.f32.mrb[0].mxu0
  %v3452 = vadd.f32 %v551, %v3451
  %v3453 = vpop.f32.mrb[0].mxu0
  %v3454 = vpop.f32.mrb[0].mxu0
  %v3455 = vadd.f32 %v551, %v3454
  %v3456 = vpop.f32.mrb[0].mxu0
  %3457 = vmatprep.mubr.bf16.mxu0 0
  %3458 = vmatmul.mubr.bf16.gmra.mrb[0].mxu0 %v1738
  %v3459 = vpop.f32.mrb[0].mxu0
  %v3460 = vadd.f32 %v551, %v3459
  %v3461 = vpop.f32.mrb[0].mxu0
  %v3462 = vpop.f32.mrb[0].mxu0
  %v3463 = vadd.f32 %v551, %v3462
  %v3464 = vpop.f32.mrb[0].mxu0
  %3465 = vmatprep.mubr.bf16.mxu0 0
  %3466 = vmatmul.mubr.bf16.gmra.mrb[0].mxu0 %v1739
  %v3467 = vpop.f32.mrb[0].mxu0
  %v3468 = vadd.f32 %v551, %v3467
  %v3469 = vpop.f32.mrb[0].mxu0
  %v3470 = vpop.f32.mrb[0].mxu0
  %v3471 = vadd.f32 %v551, %v3470
  %v3472 = vpop.f32.mrb[0].mxu0
  %3473 = vmatprep.mubr.bf16.mxu0 0
  %3474 = vmatmul.mubr.bf16.gmra.mrb[0].mxu0 %v1740
  %v3475 = vpop.f32.mrb[0].mxu0
  %v3476 = vadd.f32 %v551, %v3475
  %v3477 = vpop.f32.mrb[0].mxu0
  %v3478 = vpop.f32.mrb[0].mxu0
  %v3479 = vadd.f32 %v551, %v3478
  %v3480 = vpop.f32.mrb[0].mxu0
  %3481 = vmatprep.mubr.bf16.mxu0 0
  %3482 = vmatmul.mubr.bf16.gmra.mrb[0].mxu0 %v1741
  %v3483 = vpop.f32.mrb[0].mxu0
  %v3484 = vadd.f32 %v551, %v3483
  %v3485 = vpop.f32.mrb[0].mxu0
  %v3486 = vpop.f32.mrb[0].mxu0
  %v3487 = vadd.f32 %v551, %v3486
  %v3488 = vpop.f32.mrb[0].mxu0
  %3489 = vmatprep.mubr.bf16.mxu0 0
  %3490 = vmatmul.mubr.bf16.gmra.mrb[0].mxu0 %v1742
  %v3491 = vpop.f32.mrb[0].mxu0
  %v3492 = vadd.f32 %v551, %v3491
  %v3493 = vpop.f32.mrb[0].mxu0
  %v3494 = vpop.f32.mrb[0].mxu0
  %v3495 = vadd.f32 %v551, %v3494
  %v3496 = vpop.f32.mrb[0].mxu0
  %3497 = vmatprep.mubr.bf16.mxu0 0
  %3498 = vmatmul.mubr.bf16.gmra.mrb[0].mxu0 %v1743
  %v3499 = vpop.f32.mrb[0].mxu0
  %v3500 = vadd.f32 %v551, %v3499
  %v3501 = vpop.f32.mrb[0].mxu0
  %v3502 = vpop.f32.mrb[0].mxu0
  %v3503 = vadd.f32 %v551, %v3502
  %v3504 = vpop.f32.mrb[0].mxu0
  %3505 = vmatprep.mubr.bf16.mxu0 0
  %3506 = vmatmul.mubr.bf16.gmra.mrb[0].mxu0 %v1744
  %v3507 = vpop.f32.mrb[0].mxu0
  %v3508 = vadd.f32 %v551, %v3507
  %v3509 = vpop.f32.mrb[0].mxu0
  %v3510 = vpop.f32.mrb[0].mxu0
  %v3511 = vadd.f32 %v551, %v3510
  %v3512 = vpop.f32.mrb[0].mxu0
  %3513 = vmatprep.mubr.bf16.mxu0 0
  %3514 = vmatmul.mubr.bf16.gmra.mrb[0].mxu0 %v1745
  %v3515 = vpop.f32.mrb[0].mxu0
  %v3516 = vadd.f32 %v551, %v3515
  %v3517 = vpop.f32.mrb[0].mxu0
  %v3518 = vpop.f32.mrb[0].mxu0
  %v3519 = vadd.f32 %v551, %v3518
  %v3520 = vpop.f32.mrb[0].mxu0
  %3521 = vmatprep.mubr.bf16.mxu0 0
  %3522 = vmatmul.mubr.bf16.gmra.mrb[0].mxu0 %v1746
  %v3523 = vpop.f32.mrb[0].mxu0
  %v3524 = vadd.f32 %v551, %v3523
  %v3525 = vpop.f32.mrb[0].mxu0
  %v3526 = vpop.f32.mrb[0].mxu0
  %v3527 = vadd.f32 %v551, %v3526
  %v3528 = vpop.f32.mrb[0].mxu0
  %3529 = vmatprep.mubr.bf16.mxu0 0
  %3530 = vmatmul.mubr.bf16.gmra.mrb[0].mxu0 %v1747
  %v3531 = vpop.f32.mrb[0].mxu0
  %v3532 = vadd.f32 %v551, %v3531
  %v3533 = vpop.f32.mrb[0].mxu0
  %v3534 = vpop.f32.mrb[0].mxu0
  %v3535 = vadd.f32 %v551, %v3534
  %v3536 = vpop.f32.mrb[0].mxu0
  %3537 = vmatprep.mubr.bf16.mxu0 0
  %3538 = vmatmul.mubr.bf16.gmra.mrb[0].mxu0 %v1748
  %v3539 = vpop.f32.mrb[0].mxu0
  %v3540 = vadd.f32 %v551, %v3539
  %v3541 = vpop.f32.mrb[0].mxu0
  %v3542 = vpop.f32.mrb[0].mxu0
  %v3543 = vadd.f32 %v551, %v3542
  %v3544 = vpop.f32.mrb[0].mxu0
  %3545 = vmatprep.mubr.bf16.mxu0 0
  %3546 = vmatmul.mubr.bf16.gmra.mrb[0].mxu0 %v1749
  %v3547 = vpop.f32.mrb[0].mxu0
  %v3548 = vadd.f32 %v551, %v3547
  %v3549 = vpop.f32.mrb[0].mxu0
  %v3550 = vpop.f32.mrb[0].mxu0
  %v3551 = vadd.f32 %v551, %v3550
  %v3552 = vpop.f32.mrb[0].mxu0
  %3553 = vmatprep.mubr.bf16.mxu0 0
  %3554 = vmatmul.mubr.bf16.gmra.mrb[0].mxu0 %v1750
  %v3555 = vpop.f32.mrb[0].mxu0
  %v3556 = vadd.f32 %v551, %v3555
  %v3557 = vpop.f32.mrb[0].mxu0
  %v3558 = vpop.f32.mrb[0].mxu0
  %v3559 = vadd.f32 %v551, %v3558
  %v3560 = vpop.f32.mrb[0].mxu0
  %3561 = vmatprep.mubr.bf16.mxu0 0
  %3562 = vmatmul.mubr.bf16.gmra.mrb[0].mxu0 %v1751
  %v3563 = vpop.f32.mrb[0].mxu0
  %v3564 = vadd.f32 %v551, %v3563
  %v3565 = vpop.f32.mrb[0].mxu0
  %v3566 = vpop.f32.mrb[0].mxu0
  %v3567 = vadd.f32 %v551, %v3566
  %v3568 = vpop.f32.mrb[0].mxu0
  %3569 = vmatprep.mubr.bf16.mxu0 0
  %3570 = vmatmul.mubr.bf16.gmra.mrb[0].mxu0 %v1752
  %v3571 = vpop.f32.mrb[0].mxu0
  %v3572 = vadd.f32 %v551, %v3571
  %v3573 = vpop.f32.mrb[0].mxu0
  %v3574 = vpop.f32.mrb[0].mxu0
  %v3575 = vadd.f32 %v551, %v3574
  %v3576 = vpop.f32.mrb[0].mxu0
  %3577 = vmatprep.mubr.bf16.mxu0 0
  %3578 = vmatmul.mubr.bf16.gmra.mrb[0].mxu0 %v1753
  %v3579 = vpop.f32.mrb[0].mxu0
  %v3580 = vadd.f32 %v551, %v3579
  %v3581 = vpop.f32.mrb[0].mxu0
  %v3582 = vpop.f32.mrb[0].mxu0
  %v3583 = vadd.f32 %v551, %v3582
  %v3584 = vpop.f32.mrb[0].mxu0
  %3585 = vmatprep.mubr.bf16.mxu0 0
  %3586 = vmatmul.mubr.bf16.gmra.mrb[0].mxu0 %v1754
  %v3587 = vpop.f32.mrb[0].mxu0
  %v3588 = vadd.f32 %v551, %v3587
  %v3589 = vpop.f32.mrb[0].mxu0
  %v3590 = vpop.f32.mrb[0].mxu0
  %v3591 = vadd.f32 %v551, %v3590
  %v3592 = vpop.f32.mrb[0].mxu0
  %3593 = vmatprep.mubr.bf16.mxu0 0
  %3594 = vmatmul.mubr.bf16.gmra.mrb[0].mxu0 %v1755
  %v3595 = vpop.f32.mrb[0].mxu0
  %v3596 = vadd.f32 %v551, %v3595
  %v3597 = vpop.f32.mrb[0].mxu0
  %v3598 = vpop.f32.mrb[0].mxu0
  %v3599 = vadd.f32 %v551, %v3598
  %v3600 = vpop.f32.mrb[0].mxu0
  %3601 = vmatprep.mubr.bf16.mxu0 0
  %3602 = vmatmul.mubr.bf16.gmra.mrb[0].mxu0 %v1756
  %v3603 = vpop.f32.mrb[0].mxu0
  %v3604 = vadd.f32 %v551, %v3603
  %v3605 = vpop.f32.mrb[0].mxu0
  %v3606 = vpop.f32.mrb[0].mxu0
  %v3607 = vadd.f32 %v551, %v3606
  %v3608 = vpop.f32.mrb[0].mxu0
  %3609 = vmatprep.mubr.bf16.mxu0 0
  %3610 = vmatmul.mubr.bf16.gmra.mrb[0].mxu0 %v1757
  %v3611 = vpop.f32.mrb[0].mxu0
  %v3612 = vadd.f32 %v551, %v3611
  %v3613 = vpop.f32.mrb[0].mxu0
  %v3614 = vpop.f32.mrb[0].mxu0
  %v3615 = vadd.f32 %v551, %v3614
  %v3616 = vpop.f32.mrb[0].mxu0
  %3617 = vmatprep.mubr.bf16.mxu0 0
  %3618 = vmatmul.mubr.bf16.gmra.mrb[0].mxu0 %v1758
  %v3619 = vpop.f32.mrb[0].mxu0
  %v3620 = vadd.f32 %v551, %v3619
  %v3621 = vpop.f32.mrb[0].mxu0
  %v3622 = vpop.f32.mrb[0].mxu0
  %v3623 = vadd.f32 %v551, %v3622
  %v3624 = vpop.f32.mrb[0].mxu0
  %3625 = vmatprep.mubr.bf16.mxu0 0
  %3626 = vmatmul.mubr.bf16.gmra.mrb[0].mxu0 %v1759
  %v3627 = vpop.f32.mrb[0].mxu0
  %v3628 = vadd.f32 %v551, %v3627
  %v3629 = vpop.f32.mrb[0].mxu0
  %v3630 = vpop.f32.mrb[0].mxu0
  %v3631 = vadd.f32 %v551, %v3630
  %v3632 = vpop.f32.mrb[0].mxu0
  %3633 = vmatprep.mubr.bf16.mxu0 0
  %3634 = vmatmul.mubr.bf16.gmra.mrb[0].mxu0 %v1760
  %v3635 = vpop.f32.mrb[0].mxu0
  %v3636 = vadd.f32 %v551, %v3635
  %v3637 = vpop.f32.mrb[0].mxu0
  %v3638 = vpop.f32.mrb[0].mxu0
  %v3639 = vadd.f32 %v551, %v3638
  %v3640 = vpop.f32.mrb[0].mxu0
  %3641 = vmatprep.mubr.bf16.mxu0 0
  %3642 = vmatmul.mubr.bf16.gmra.mrb[0].mxu0 %v1761
  %v3643 = vpop.f32.mrb[0].mxu0
  %v3644 = vadd.f32 %v551, %v3643
  %v3645 = vpop.f32.mrb[0].mxu0
  %v3646 = vpop.f32.mrb[0].mxu0
  %v3647 = vadd.f32 %v551, %v3646
  %v3648 = vpop.f32.mrb[0].mxu0
  %3649 = vmatprep.mubr.bf16.mxu0 0
  %3650 = vmatmul.mubr.bf16.gmra.mrb[0].mxu0 %v1762
  %v3651 = vpop.f32.mrb[0].mxu0
  %v3652 = vadd.f32 %v551, %v3651
  %v3653 = vpop.f32.mrb[0].mxu0
  %v3654 = vpop.f32.mrb[0].mxu0
  %v3655 = vadd.f32 %v551, %v3654
  %v3656 = vpop.f32.mrb[0].mxu0
  %3657 = vmatprep.mubr.bf16.mxu0 0
  %3658 = vmatmul.mubr.bf16.gmra.mrb[0].mxu0 %v1763
  %v3659 = vpop.f32.mrb[0].mxu0
  %v3660 = vadd.f32 %v551, %v3659
  %v3661 = vpop.f32.mrb[0].mxu0
  %v3662 = vpop.f32.mrb[0].mxu0
  %v3663 = vadd.f32 %v551, %v3662
  %v3664 = vpop.f32.mrb[0].mxu0
  %3665 = vmatprep.mubr.bf16.mxu0 0
  %3666 = vmatmul.mubr.bf16.gmra.mrb[0].mxu0 %v1764
  %v3667 = vpop.f32.mrb[0].mxu0
  %v3668 = vadd.f32 %v551, %v3667
  %v3669 = vpop.f32.mrb[0].mxu0
  %v3670 = vpop.f32.mrb[0].mxu0
  %v3671 = vadd.f32 %v551, %v3670
  %v3672 = vpop.f32.mrb[0].mxu0
  %3673 = vmatprep.mubr.bf16.mxu0 0
  %3674 = vmatmul.mubr.bf16.gmra.mrb[0].mxu0 %v1765
  %v3675 = vpop.f32.mrb[0].mxu0
  %v3676 = vadd.f32 %v551, %v3675
  %v3677 = vpop.f32.mrb[0].mxu0
  %v3678 = vpop.f32.mrb[0].mxu0
  %v3679 = vadd.f32 %v551, %v3678
  %v3680 = vpop.f32.mrb[0].mxu0
  %3681 = vmatprep.mubr.bf16.mxu0 0
  %3682 = vmatmul.mubr.bf16.gmra.mrb[0].mxu0 %v1766
  %v3683 = vpop.f32.mrb[0].mxu0
  %v3684 = vadd.f32 %v551, %v3683
  %v3685 = vpop.f32.mrb[0].mxu0
  %v3686 = vpop.f32.mrb[0].mxu0
  %v3687 = vadd.f32 %v551, %v3686
  %v3688 = vpop.f32.mrb[0].mxu0
  %3689 = vmatprep.mubr.bf16.mxu0 0
  %3690 = vmatmul.mubr.bf16.gmra.mrb[0].mxu0 %v1767
  %v3691 = vpop.f32.mrb[0].mxu0
  %v3692 = vadd.f32 %v551, %v3691
  %v3693 = vpop.f32.mrb[0].mxu0
  %v3694 = vpop.f32.mrb[0].mxu0
  %v3695 = vadd.f32 %v551, %v3694
  %v3696 = vpop.f32.mrb[0].mxu0
  %3697 = vmatprep.mubr.bf16.mxu0 0
  %3698 = vmatmul.mubr.bf16.gmra.mrb[0].mxu0 %v1768
  %v3699 = vpop.f32.mrb[0].mxu0
  %v3700 = vadd.f32 %v551, %v3699
  %v3701 = vpop.f32.mrb[0].mxu0
  %v3702 = vpop.f32.mrb[0].mxu0
  %v3703 = vadd.f32 %v551, %v3702
  %v3704 = vpop.f32.mrb[0].mxu0
  %3705 = vmatprep.mubr.bf16.mxu0 0
  %3706 = vmatmul.mubr.bf16.gmra.mrb[0].mxu0 %v1769
  %v3707 = vpop.f32.mrb[0].mxu0
  %v3708 = vadd.f32 %v551, %v3707
  %v3709 = vpop.f32.mrb[0].mxu0
  %v3710 = vpop.f32.mrb[0].mxu0
  %v3711 = vadd.f32 %v551, %v3710
  %v3712 = vpop.f32.mrb[0].mxu0
  %3713 = vmatprep.mubr.bf16.mxu0 0
  %3714 = vmatmul.mubr.bf16.gmra.mrb[0].mxu0 %v1770
  %v3715 = vpop.f32.mrb[0].mxu0
  %v3716 = vadd.f32 %v551, %v3715
  %v3717 = vpop.f32.mrb[0].mxu0
  %v3718 = vpop.f32.mrb[0].mxu0
  %v3719 = vadd.f32 %v551, %v3718
  %v3720 = vpop.f32.mrb[0].mxu0
  %3721 = vmatprep.mubr.bf16.mxu0 0
  %3722 = vmatmul.mubr.bf16.gmra.mrb[0].mxu0 %v1771
  %v3723 = vpop.f32.mrb[0].mxu0
  %v3724 = vadd.f32 %v551, %v3723
  %v3725 = vpop.f32.mrb[0].mxu0
  %v3726 = vpop.f32.mrb[0].mxu0
  %v3727 = vadd.f32 %v551, %v3726
  %v3728 = vpop.f32.mrb[0].mxu0
  %3729 = vmatprep.mubr.bf16.mxu0 0
  %3730 = vmatmul.mubr.bf16.gmra.mrb[0].mxu0 %v1772
  %v3731 = vpop.f32.mrb[0].mxu0
  %v3732 = vadd.f32 %v551, %v3731
  %v3733 = vpop.f32.mrb[0].mxu0
  %v3734 = vpop.f32.mrb[0].mxu0
  %v3735 = vadd.f32 %v551, %v3734
  %v3736 = vpop.f32.mrb[0].mxu0
  %3737 = vmatprep.mubr.bf16.mxu0 0
  %3738 = vmatmul.mubr.bf16.gmra.mrb[0].mxu0 %v1773
  %v3739 = vpop.f32.mrb[0].mxu0
  %v3740 = vadd.f32 %v551, %v3739
  %v3741 = vpop.f32.mrb[0].mxu0
  %v3742 = vpop.f32.mrb[0].mxu0
  %v3743 = vadd.f32 %v551, %v3742
  %v3744 = vpop.f32.mrb[0].mxu0
  %3745 = vmatprep.mubr.bf16.mxu0 0
  %3746 = vmatmul.mubr.bf16.gmra.mrb[0].mxu0 %v1774
  %v3747 = vpop.f32.mrb[0].mxu0
  %v3748 = vadd.f32 %v551, %v3747
  %v3749 = vpop.f32.mrb[0].mxu0
  %v3750 = vpop.f32.mrb[0].mxu0
  %v3751 = vadd.f32 %v551, %v3750
  %v3752 = vpop.f32.mrb[0].mxu0
  %3753 = vmatprep.mubr.bf16.mxu0 0
  %3754 = vmatmul.mubr.bf16.gmra.mrb[0].mxu0 %v1775
  %v3755 = vpop.f32.mrb[0].mxu0
  %v3756 = vadd.f32 %v551, %v3755
  %v3757 = vpop.f32.mrb[0].mxu0
  %v3758 = vpop.f32.mrb[0].mxu0
  %v3759 = vadd.f32 %v551, %v3758
  %v3760 = vpop.f32.mrb[0].mxu0
  %3761 = vmatprep.mubr.bf16.mxu0 0
  %3762 = vmatmul.mubr.bf16.gmra.mrb[0].mxu0 %v1776
  %v3763 = vpop.f32.mrb[0].mxu0
  %v3764 = vadd.f32 %v551, %v3763
  %v3765 = vpop.f32.mrb[0].mxu0
  %v3766 = vpop.f32.mrb[0].mxu0
  %v3767 = vadd.f32 %v551, %v3766
  %v3768 = vpop.f32.mrb[0].mxu0
  %3769 = vmatprep.mubr.bf16.mxu0 0
  %3770 = vmatmul.mubr.bf16.gmra.mrb[0].mxu0 %v1777
  %v3771 = vpop.f32.mrb[0].mxu0
  %v3772 = vadd.f32 %v551, %v3771
  %v3773 = vpop.f32.mrb[0].mxu0
  %v3774 = vpop.f32.mrb[0].mxu0
  %v3775 = vadd.f32 %v551, %v3774
  %v3776 = vpop.f32.mrb[0].mxu0
  %3777 = vmatprep.mubr.bf16.mxu0 0
  %3778 = vmatmul.mubr.bf16.gmra.mrb[0].mxu0 %v1778
  %v3779 = vpop.f32.mrb[0].mxu0
  %v3780 = vadd.f32 %v551, %v3779
  %v3781 = vpop.f32.mrb[0].mxu0
  %v3782 = vpop.f32.mrb[0].mxu0
  %v3783 = vadd.f32 %v551, %v3782
  %v3784 = vpop.f32.mrb[0].mxu0
  %3785 = vmatprep.mubr.bf16.mxu0 0
  %3786 = vmatmul.mubr.bf16.gmra.mrb[0].mxu0 %v1779
  %v3787 = vpop.f32.mrb[0].mxu0
  %v3788 = vadd.f32 %v551, %v3787
  %v3789 = vpop.f32.mrb[0].mxu0
  %v3790 = vpop.f32.mrb[0].mxu0
  %v3791 = vadd.f32 %v551, %v3790
  %v3792 = vpop.f32.mrb[0].mxu0
  %3793 = vmatprep.mubr.bf16.mxu0 0
  %3794 = vmatmul.mubr.bf16.gmra.mrb[0].mxu0 %v1780
  %v3795 = vpop.f32.mrb[0].mxu0
  %v3796 = vadd.f32 %v551, %v3795
  %v3797 = vpop.f32.mrb[0].mxu0
  %v3798 = vpop.f32.mrb[0].mxu0
  %v3799 = vadd.f32 %v551, %v3798
  %v3800 = vpop.f32.mrb[0].mxu0
  %3801 = vmatprep.mubr.bf16.mxu0 0
  %3802 = vmatmul.mubr.bf16.gmra.mrb[0].mxu0 %v1781
  %v3803 = vpop.f32.mrb[0].mxu0
  %v3804 = vadd.f32 %v551, %v3803
  %v3805 = vpop.f32.mrb[0].mxu0
  %v3806 = vpop.f32.mrb[0].mxu0
  %v3807 = vadd.f32 %v551, %v3806
  %v3808 = vpop.f32.mrb[0].mxu0
  %3809 = vmatprep.mubr.bf16.mxu0 0
  %3810 = vmatmul.mubr.bf16.gmra.mrb[0].mxu0 %v1782
  %v3811 = vpop.f32.mrb[0].mxu0
  %v3812 = vadd.f32 %v551, %v3811
  %v3813 = vpop.f32.mrb[0].mxu0
  %v3814 = vpop.f32.mrb[0].mxu0
  %v3815 = vadd.f32 %v551, %v3814
  %v3816 = vpop.f32.mrb[0].mxu0
  %3817 = vmatprep.mubr.bf16.mxu0 0
  %3818 = vmatmul.mubr.bf16.gmra.mrb[0].mxu0 %v1783
  %v3819 = vpop.f32.mrb[0].mxu0
  %v3820 = vadd.f32 %v551, %v3819
  %v3821 = vpop.f32.mrb[0].mxu0
  %v3822 = vpop.f32.mrb[0].mxu0
  %v3823 = vadd.f32 %v551, %v3822
  %v3824 = vpop.f32.mrb[0].mxu0
  %3825 = vmatprep.mubr.bf16.mxu0 0
  %3826 = vmatmul.mubr.bf16.gmra.mrb[0].mxu0 %v1784
  %v3827 = vpop.f32.mrb[0].mxu0
  %v3828 = vadd.f32 %v551, %v3827
  %v3829 = vpop.f32.mrb[0].mxu0
  %v3830 = vpop.f32.mrb[0].mxu0
  %v3831 = vadd.f32 %v551, %v3830
  %v3832 = vpop.f32.mrb[0].mxu0
  %3833 = vmatprep.mubr.bf16.mxu0 0
  %3834 = vmatmul.mubr.bf16.gmra.mrb[0].mxu0 %v1785
  %v3835 = vpop.f32.mrb[0].mxu0
  %v3836 = vadd.f32 %v551, %v3835
  %v3837 = vpop.f32.mrb[0].mxu0
  %v3838 = vpop.f32.mrb[0].mxu0
  %v3839 = vadd.f32 %v551, %v3838
  %v3840 = vpop.f32.mrb[0].mxu0
  %3841 = vmatprep.mubr.bf16.mxu0 0
  %3842 = vmatmul.mubr.bf16.gmra.mrb[0].mxu0 %v1786
  %v3843 = vpop.f32.mrb[0].mxu0
  %v3844 = vadd.f32 %v551, %v3843
  %v3845 = vpop.f32.mrb[0].mxu0
  %v3846 = vpop.f32.mrb[0].mxu0
  %v3847 = vadd.f32 %v551, %v3846
  %v3848 = vpop.f32.mrb[0].mxu0
  %3849 = vmatprep.mubr.bf16.mxu0 0
  %3850 = vmatmul.mubr.bf16.gmra.mrb[0].mxu0 %v1787
  %v3851 = vpop.f32.mrb[0].mxu0
  %v3852 = vadd.f32 %v551, %v3851
  %v3853 = vpop.f32.mrb[0].mxu0
  %v3854 = vpop.f32.mrb[0].mxu0
  %v3855 = vadd.f32 %v551, %v3854
  %v3856 = vpop.f32.mrb[0].mxu0
  %3857 = vmatprep.mubr.bf16.mxu0 0
  %3858 = vmatmul.mubr.bf16.gmra.mrb[0].mxu0 %v1788
  %v3859 = vpop.f32.mrb[0].mxu0
  %v3860 = vadd.f32 %v551, %v3859
  %v3861 = vpop.f32.mrb[0].mxu0
  %v3862 = vpop.f32.mrb[0].mxu0
  %v3863 = vadd.f32 %v551, %v3862
  %v3864 = vpop.f32.mrb[0].mxu0
  %3865 = vmatprep.mubr.bf16.mxu0 0
  %3866 = vmatmul.mubr.bf16.gmra.mrb[0].mxu0 %v1789
  %v3867 = vpop.f32.mrb[0].mxu0
  %v3868 = vadd.f32 %v551, %v3867
  %v3869 = vpop.f32.mrb[0].mxu0
  %v3870 = vpop.f32.mrb[0].mxu0
  %v3871 = vadd.f32 %v551, %v3870
  %v3872 = vpop.f32.mrb[0].mxu0
  %3873 = vmatprep.mubr.bf16.mxu0 0
  %3874 = vmatmul.mubr.bf16.gmra.mrb[0].mxu0 %v1790
  %v3875 = vpop.f32.mrb[0].mxu0
  %v3876 = vadd.f32 %v551, %v3875
  %v3877 = vpop.f32.mrb[0].mxu0
  %v3878 = vpop.f32.mrb[0].mxu0
  %v3879 = vadd.f32 %v551, %v3878
  %v3880 = vpop.f32.mrb[0].mxu0
  %3881 = vmatprep.mubr.bf16.mxu0 0
  %3882 = vmatmul.mubr.bf16.gmra.mrb[0].mxu0 %v1791
  %v3883 = vpop.f32.mrb[0].mxu0
  %v3884 = vadd.f32 %v551, %v3883
  %v3885 = vpop.f32.mrb[0].mxu0
  %v3886 = vpop.f32.mrb[0].mxu0
  %v3887 = vadd.f32 %v551, %v3886
  %v3888 = vpop.f32.mrb[0].mxu0
  %3889 = vmatprep.mubr.bf16.mxu0 0
  %3890 = vmatmul.mubr.bf16.gmra.mrb[0].mxu0 %v1792
  %v3891 = vpop.f32.mrb[0].mxu0
  %v3892 = vadd.f32 %v551, %v3891
  %v3893 = vpop.f32.mrb[0].mxu0
  %v3894 = vpop.f32.mrb[0].mxu0
  %v3895 = vadd.f32 %v551, %v3894
  %v3896 = vpop.f32.mrb[0].mxu0
  %3897 = vmatprep.mubr.bf16.mxu0 0
  %3898 = vmatmul.mubr.bf16.gmra.mrb[0].mxu0 %v1793
  %v3899 = vpop.f32.mrb[0].mxu0
  %v3900 = vadd.f32 %v551, %v3899
  %v3901 = vpop.f32.mrb[0].mxu0
  %v3902 = vpop.f32.mrb[0].mxu0
  %v3903 = vadd.f32 %v551, %v3902
  %v3904 = vpop.f32.mrb[0].mxu0
  %3905 = vmatprep.mubr.bf16.mxu0 0
  %3906 = vmatmul.mubr.bf16.gmra.mrb[0].mxu0 %v1794
  %v3907 = vpop.f32.mrb[0].mxu0
  %v3908 = vadd.f32 %v551, %v3907
  %v3909 = vpop.f32.mrb[0].mxu0
  %v3910 = vpop.f32.mrb[0].mxu0
  %v3911 = vadd.f32 %v551, %v3910
  %v3912 = vpop.f32.mrb[0].mxu0
  %3913 = vmatprep.mubr.bf16.mxu0 0
  %3914 = vmatmul.mubr.bf16.gmra.mrb[0].mxu0 %v1795
  %v3915 = vpop.f32.mrb[0].mxu0
  %v3916 = vadd.f32 %v551, %v3915
  %v3917 = vpop.f32.mrb[0].mxu0
  %v3918 = vpop.f32.mrb[0].mxu0
  %v3919 = vadd.f32 %v551, %v3918
  %v3920 = vpop.f32.mrb[0].mxu0
  %3921 = vmatprep.mubr.bf16.mxu0 0
  %3922 = vmatmul.mubr.bf16.gmra.mrb[0].mxu0 %v1796
  %v3923 = vpop.f32.mrb[0].mxu0
  %v3924 = vadd.f32 %v551, %v3923
  %v3925 = vpop.f32.mrb[0].mxu0
  %v3926 = vpop.f32.mrb[0].mxu0
  %v3927 = vadd.f32 %v551, %v3926
  %v3928 = vpop.f32.mrb[0].mxu0
  %3929 = vmatprep.mubr.bf16.mxu0 0
  %3930 = vmatmul.mubr.bf16.gmra.mrb[0].mxu0 %v1797
  %v3931 = vpop.f32.mrb[0].mxu0
  %v3932 = vadd.f32 %v551, %v3931
  %v3933 = vpop.f32.mrb[0].mxu0
  %v3934 = vpop.f32.mrb[0].mxu0
  %v3935 = vadd.f32 %v551, %v3934
  %v3936 = vpop.f32.mrb[0].mxu0
  %3937 = vmatprep.mubr.bf16.mxu0 0
  %3938 = vmatmul.mubr.bf16.gmra.mrb[0].mxu0 %v1798
  %v3939 = vpop.f32.mrb[0].mxu0
  %v3940 = vadd.f32 %v551, %v3939
  %v3941 = vpop.f32.mrb[0].mxu0
  %v3942 = vpop.f32.mrb[0].mxu0
  %v3943 = vadd.f32 %v551, %v3942
  %v3944 = vpop.f32.mrb[0].mxu0
  %3945 = vmatprep.mubr.bf16.mxu0 0
  %3946 = vmatmul.mubr.bf16.gmra.mrb[0].mxu0 %v1799
  %v3947 = vpop.f32.mrb[0].mxu0
  %v3948 = vadd.f32 %v551, %v3947
  %v3949 = vpop.f32.mrb[0].mxu0
  %v3950 = vpop.f32.mrb[0].mxu0
  %v3951 = vadd.f32 %v551, %v3950
  %v3952 = vpop.f32.mrb[0].mxu0
  %3953 = vmatprep.mubr.bf16.mxu0 0
  %3954 = vmatmul.mubr.bf16.gmra.mrb[0].mxu0 %v1800
  %v3955 = vpop.f32.mrb[0].mxu0
  %v3956 = vadd.f32 %v551, %v3955
  %v3957 = vpop.f32.mrb[0].mxu0
  %v3958 = vpop.f32.mrb[0].mxu0
  %v3959 = vadd.f32 %v551, %v3958
  %v3960 = vpop.f32.mrb[0].mxu0
  %3961 = vmatprep.mubr.bf16.mxu0 0
  %3962 = vmatmul.mubr.bf16.gmra.mrb[0].mxu0 %v1801
  %v3963 = vpop.f32.mrb[0].mxu0
  %v3964 = vadd.f32 %v551, %v3963
  %v3965 = vpop.f32.mrb[0].mxu0
  %v3966 = vpop.f32.mrb[0].mxu0
  %v3967 = vadd.f32 %v551, %v3966
  %v3968 = vpop.f32.mrb[0].mxu0
  %3969 = vmatprep.mubr.bf16.mxu0 0
  %3970 = vmatmul.mubr.bf16.gmra.mrb[0].mxu0 %v1802
  %v3971 = vpop.f32.mrb[0].mxu0
  %v3972 = vadd.f32 %v551, %v3971
  %v3973 = vpop.f32.mrb[0].mxu0
  %v3974 = vpop.f32.mrb[0].mxu0
  %v3975 = vadd.f32 %v551, %v3974
  %v3976 = vpop.f32.mrb[0].mxu0
  %3977 = vmatprep.mubr.bf16.mxu0 0
  %3978 = vmatmul.mubr.bf16.gmra.mrb[0].mxu0 %v1803
  %v3979 = vpop.f32.mrb[0].mxu0
  %v3980 = vadd.f32 %v551, %v3979
  %v3981 = vpop.f32.mrb[0].mxu0
  %v3982 = vpop.f32.mrb[0].mxu0
  %v3983 = vadd.f32 %v551, %v3982
  %v3984 = vpop.f32.mrb[0].mxu0
  %3985 = vmatprep.mubr.bf16.mxu0 0
  %3986 = vmatmul.mubr.bf16.gmra.mrb[0].mxu0 %v1804
  %v3987 = vpop.f32.mrb[0].mxu0
  %v3988 = vadd.f32 %v551, %v3987
  %v3989 = vpop.f32.mrb[0].mxu0
  %v3990 = vpop.f32.mrb[0].mxu0
  %v3991 = vadd.f32 %v551, %v3990
  %v3992 = vpop.f32.mrb[0].mxu0
  %3993 = vmatprep.mubr.bf16.mxu0 0
  %3994 = vmatmul.mubr.bf16.gmra.mrb[0].mxu0 %v1805
  %v3995 = vpop.f32.mrb[0].mxu0
  %v3996 = vadd.f32 %v551, %v3995
  %v3997 = vpop.f32.mrb[0].mxu0
  %v3998 = vpop.f32.mrb[0].mxu0
  %v3999 = vadd.f32 %v551, %v3998
  %v4000 = vpop.f32.mrb[0].mxu0
  %4001 = vmatprep.mubr.bf16.mxu0 0
  %4002 = vmatmul.mubr.bf16.gmra.mrb[0].mxu0 %v1806
  %v4003 = vpop.f32.mrb[0].mxu0
  %v4004 = vadd.f32 %v551, %v4003
  %v4005 = vpop.f32.mrb[0].mxu0
  %v4006 = vpop.f32.mrb[0].mxu0
  %v4007 = vadd.f32 %v551, %v4006
  %v4008 = vpop.f32.mrb[0].mxu0
  %4009 = vmatprep.mubr.bf16.mxu0 0
  %4010 = vmatmul.mubr.bf16.gmra.mrb[0].mxu0 %v1807
  %v4011 = vpop.f32.mrb[0].mxu0
  %v4012 = vadd.f32 %v551, %v4011
  %v4013 = vpop.f32.mrb[0].mxu0
  %v4014 = vpop.f32.mrb[0].mxu0
  %v4015 = vadd.f32 %v551, %v4014
  %v4016 = vpop.f32.mrb[0].mxu0
  %4017 = vmatprep.mubr.bf16.mxu0 0
  %4018 = vmatmul.mubr.bf16.gmra.mrb[0].mxu0 %v1808
  %v4019 = vpop.f32.mrb[0].mxu0
  %v4020 = vadd.f32 %v551, %v4019
  %v4021 = vpop.f32.mrb[0].mxu0
  %v4022 = vpop.f32.mrb[0].mxu0
  %v4023 = vadd.f32 %v551, %v4022
  %v4024 = vpop.f32.mrb[0].mxu0
  %4025 = vmatprep.mubr.bf16.mxu0 0
  %4026 = vmatmul.mubr.bf16.gmra.mrb[0].mxu0 %v1809
  %v4027 = vpop.f32.mrb[0].mxu0
  %v4028 = vadd.f32 %v551, %v4027
  %v4029 = vpop.f32.mrb[0].mxu0
  %v4030 = vpop.f32.mrb[0].mxu0
  %v4031 = vadd.f32 %v551, %v4030
  %v4032 = vpop.f32.mrb[0].mxu0
  %4033 = vmatprep.mubr.bf16.mxu0 0
  %4034 = vmatmul.mubr.bf16.gmra.mrb[0].mxu0 %v1810
  %v4035 = vpop.f32.mrb[0].mxu0
  %v4036 = vadd.f32 %v551, %v4035
  %v4037 = vpop.f32.mrb[0].mxu0
  %v4038 = vpop.f32.mrb[0].mxu0
  %v4039 = vadd.f32 %v551, %v4038
  %v4040 = vpop.f32.mrb[0].mxu0
  %4041 = vmatprep.mubr.bf16.mxu0 0
  %4042 = vmatmul.mubr.bf16.gmra.mrb[0].mxu0 %v1811
  %v4043 = vpop.f32.mrb[0].mxu0
  %v4044 = vadd.f32 %v551, %v4043
  %v4045 = vpop.f32.mrb[0].mxu0
  %v4046 = vpop.f32.mrb[0].mxu0
  %v4047 = vadd.f32 %v551, %v4046
  %v4048 = vpop.f32.mrb[0].mxu0
  %4049 = vmatprep.mubr.bf16.mxu0 0
  %4050 = vmatmul.mubr.bf16.gmra.mrb[0].mxu0 %v1812
  %v4051 = vpop.f32.mrb[0].mxu0
  %v4052 = vadd.f32 %v551, %v4051
  %v4053 = vpop.f32.mrb[0].mxu0
  %v4054 = vpop.f32.mrb[0].mxu0
  %v4055 = vadd.f32 %v551, %v4054
  %v4056 = vpop.f32.mrb[0].mxu0
  %4057 = vmatprep.mubr.bf16.mxu0 0
  %4058 = vmatmul.mubr.bf16.gmra.mrb[0].mxu0 %v1813
  %v4059 = vpop.f32.mrb[0].mxu0
  %v4060 = vadd.f32 %v551, %v4059
  %v4061 = vpop.f32.mrb[0].mxu0
  %v4062 = vpop.f32.mrb[0].mxu0
  %v4063 = vadd.f32 %v551, %v4062
  %v4064 = vpop.f32.mrb[0].mxu0
  %4065 = vmatprep.mubr.bf16.mxu0 0
  %4066 = vmatmul.mubr.bf16.gmra.mrb[0].mxu0 %v1814
  %v4067 = vpop.f32.mrb[0].mxu0
  %v4068 = vadd.f32 %v551, %v4067
  %v4069 = vpop.f32.mrb[0].mxu0
  %v4070 = vpop.f32.mrb[0].mxu0
  %v4071 = vadd.f32 %v551, %v4070
  %v4072 = vpop.f32.mrb[0].mxu0
  %4073 = vmatprep.mubr.bf16.mxu0 0
  %4074 = vmatmul.mubr.bf16.gmra.mrb[0].mxu0 %v1815
  %v4075 = vpop.f32.mrb[0].mxu0
  %v4076 = vadd.f32 %v551, %v4075
  %v4077 = vpop.f32.mrb[0].mxu0
  %v4078 = vpop.f32.mrb[0].mxu0
  %v4079 = vadd.f32 %v551, %v4078
  %v4080 = vpop.f32.mrb[0].mxu0
  %4081 = vmatprep.mubr.bf16.mxu0 0
  %4082 = vmatmul.mubr.bf16.gmra.mrb[0].mxu0 %v1816
  %v4083 = vpop.f32.mrb[0].mxu0
  %v4084 = vadd.f32 %v551, %v4083
  %v4085 = vpop.f32.mrb[0].mxu0
  %v4086 = vpop.f32.mrb[0].mxu0
  %v4087 = vadd.f32 %v551, %v4086
  %v4088 = vpop.f32.mrb[0].mxu0
  %4089 = vmatprep.mubr.bf16.mxu0 0
  %4090 = vmatmul.mubr.bf16.gmra.mrb[0].mxu0 %v1817
  %v4091 = vpop.f32.mrb[0].mxu0
  %v4092 = vadd.f32 %v551, %v4091
  %v4093 = vpop.f32.mrb[0].mxu0
  %v4094 = vpop.f32.mrb[0].mxu0
  %v4095 = vadd.f32 %v551, %v4094
  %v4096 = vpop.f32.mrb[0].mxu0
  %4097 = vmatprep.mubr.bf16.mxu0 0
  %4098 = vmatmul.mubr.bf16.gmra.mrb[0].mxu0 %v1818
  %v4099 = vpop.f32.mrb[0].mxu0
  %v4100 = vadd.f32 %v551, %v4099
  %v4101 = vpop.f32.mrb[0].mxu0
  %v4102 = vpop.f32.mrb[0].mxu0
  %v4103 = vadd.f32 %v551, %v4102
  %v4104 = vpop.f32.mrb[0].mxu0
  %4105 = vmatprep.mubr.bf16.mxu0 0
  %4106 = vmatmul.mubr.bf16.gmra.mrb[0].mxu0 %v1819
  %v4107 = vpop.f32.mrb[0].mxu0
  %v4108 = vadd.f32 %v551, %v4107
  %v4109 = vpop.f32.mrb[0].mxu0
  %v4110 = vpop.f32.mrb[0].mxu0
  %v4111 = vadd.f32 %v551, %v4110
  %v4112 = vpop.f32.mrb[0].mxu0
  %4113 = vmatprep.mubr.bf16.mxu0 0
  %4114 = vmatmul.mubr.bf16.gmra.mrb[0].mxu0 %v1820
  %v4115 = vpop.f32.mrb[0].mxu0
  %v4116 = vadd.f32 %v551, %v4115
  %v4117 = vpop.f32.mrb[0].mxu0
  %v4118 = vpop.f32.mrb[0].mxu0
  %v4119 = vadd.f32 %v551, %v4118
  %v4120 = vpop.f32.mrb[0].mxu0
  %4121 = vmatprep.mubr.bf16.mxu0 0
  %4122 = vmatmul.mubr.bf16.gmra.mrb[0].mxu0 %v1821
  %v4123 = vpop.f32.mrb[0].mxu0
  %v4124 = vadd.f32 %v551, %v4123
  %v4125 = vpop.f32.mrb[0].mxu0
  %v4126 = vpop.f32.mrb[0].mxu0
  %v4127 = vadd.f32 %v551, %v4126
  %v4128 = vpop.f32.mrb[0].mxu0
  %4129 = vmatprep.mubr.bf16.mxu0 0
  %4130 = vmatmul.mubr.bf16.gmra.mrb[0].mxu0 %v1822
  %v4131 = vpop.f32.mrb[0].mxu0
  %v4132 = vadd.f32 %v551, %v4131
  %v4133 = vpop.f32.mrb[0].mxu0
  %v4134 = vpop.f32.mrb[0].mxu0
  %v4135 = vadd.f32 %v551, %v4134
  %v4136 = vpop.f32.mrb[0].mxu0
  %4137 = vmatprep.mubr.bf16.mxu0 0
  %4138 = vmatmul.mubr.bf16.gmra.mrb[0].mxu0 %v1823
  %v4139 = vpop.f32.mrb[0].mxu0
  %v4140 = vadd.f32 %v551, %v4139
  %v4141 = vpop.f32.mrb[0].mxu0
  %v4142 = vpop.f32.mrb[0].mxu0
  %v4143 = vadd.f32 %v551, %v4142
  %v4144 = vpop.f32.mrb[0].mxu0
  %4145 = vmatprep.mubr.bf16.mxu0 0
  %4146 = vmatmul.mubr.bf16.gmra.mrb[0].mxu0 %v1824
  %v4147 = vpop.f32.mrb[0].mxu0
  %v4148 = vadd.f32 %v551, %v4147
  %v4149 = vpop.f32.mrb[0].mxu0
  %v4150 = vpop.f32.mrb[0].mxu0
  %v4151 = vadd.f32 %v551, %v4150
  %v4152 = vpop.f32.mrb[0].mxu0
  %4153 = vmatprep.mubr.bf16.mxu0 0
  %4154 = vmatmul.mubr.bf16.gmra.mrb[0].mxu0 %v1825
  %v4155 = vpop.f32.mrb[0].mxu0
  %v4156 = vadd.f32 %v551, %v4155
  %v4157 = vpop.f32.mrb[0].mxu0
  %v4158 = vpop.f32.mrb[0].mxu0
  %v4159 = vadd.f32 %v551, %v4158
  %v4160 = vpop.f32.mrb[0].mxu0
  %4161 = vmatprep.mubr.bf16.mxu0 0
  %4162 = vmatmul.mubr.bf16.gmra.mrb[0].mxu0 %v1826
  %v4163 = vpop.f32.mrb[0].mxu0
  %v4164 = vadd.f32 %v551, %v4163
  %v4165 = vpop.f32.mrb[0].mxu0
  %v4166 = vpop.f32.mrb[0].mxu0
  %v4167 = vadd.f32 %v551, %v4166
  %v4168 = vpop.f32.mrb[0].mxu0
  %4169 = vmatprep.mubr.bf16.mxu0 0
  %4170 = vmatmul.mubr.bf16.gmra.mrb[0].mxu0 %v1827
  %v4171 = vpop.f32.mrb[0].mxu0
  %v4172 = vadd.f32 %v551, %v4171
  %v4173 = vpop.f32.mrb[0].mxu0
  %v4174 = vpop.f32.mrb[0].mxu0
  %v4175 = vadd.f32 %v551, %v4174
  %v4176 = vpop.f32.mrb[0].mxu0
  %4177 = vmatprep.mubr.bf16.mxu0 0
  %4178 = vmatmul.mubr.bf16.gmra.mrb[0].mxu0 %v1828
  %v4179 = vpop.f32.mrb[0].mxu0
  %v4180 = vadd.f32 %v551, %v4179
  %v4181 = vpop.f32.mrb[0].mxu0
  %v4182 = vpop.f32.mrb[0].mxu0
  %v4183 = vadd.f32 %v551, %v4182
  %v4184 = vpop.f32.mrb[0].mxu0
  %4185 = vmatprep.mubr.bf16.mxu0 0
  %4186 = vmatmul.mubr.bf16.gmra.mrb[0].mxu0 %v1829
  %v4187 = vpop.f32.mrb[0].mxu0
  %v4188 = vadd.f32 %v551, %v4187
  %v4189 = vpop.f32.mrb[0].mxu0
  %v4190 = vpop.f32.mrb[0].mxu0
  %v4191 = vadd.f32 %v551, %v4190
  %v4192 = vpop.f32.mrb[0].mxu0
  %4193 = vmatprep.mubr.bf16.mxu0 0
  %4194 = vmatmul.mubr.bf16.gmra.mrb[0].mxu0 %v1830
  %v4195 = vpop.f32.mrb[0].mxu0
  %v4196 = vadd.f32 %v551, %v4195
  %v4197 = vpop.f32.mrb[0].mxu0
  %v4198 = vpop.f32.mrb[0].mxu0
  %v4199 = vadd.f32 %v551, %v4198
  %v4200 = vpop.f32.mrb[0].mxu0
  %4201 = vmatprep.mubr.bf16.mxu0 0
  %4202 = vmatmul.mubr.bf16.gmra.mrb[0].mxu0 %v1831
  %v4203 = vpop.f32.mrb[0].mxu0
  %v4204 = vadd.f32 %v551, %v4203
  %v4205 = vpop.f32.mrb[0].mxu0
  %v4206 = vpop.f32.mrb[0].mxu0
  %v4207 = vadd.f32 %v551, %v4206
  %v4208 = vpop.f32.mrb[0].mxu0
  %4209 = vmatprep.mubr.bf16.mxu0 0
  %4210 = vmatmul.mubr.bf16.gmra.mrb[0].mxu0 %v1832
  %v4211 = vpop.f32.mrb[0].mxu0
  %v4212 = vadd.f32 %v551, %v4211
  %v4213 = vpop.f32.mrb[0].mxu0
  %v4214 = vpop.f32.mrb[0].mxu0
  %v4215 = vadd.f32 %v551, %v4214
  %v4216 = vpop.f32.mrb[0].mxu0
  %4217 = vdwg.mxu0
  %v4218 = vmax.f32 %v2172, 0.0
  %v4219 = vmax.f32 %v2175, 0.0
  %v4220 = vmax.f32 %v2180, 0.0
  %v4221 = vmax.f32 %v2183, 0.0
  %v4222 = vmax.f32 %v2188, 0.0
  %v4223 = vmax.f32 %v2191, 0.0
  %v4224 = vmax.f32 %v2196, 0.0
  %v4225 = vmax.f32 %v2199, 0.0
  %v4226 = vmax.f32 %v2204, 0.0
  %v4227 = vmax.f32 %v2207, 0.0
  %v4228 = vmax.f32 %v2212, 0.0
  %v4229 = vmax.f32 %v2215, 0.0
  %v4230 = vmax.f32 %v2220, 0.0
  %v4231 = vmax.f32 %v2223, 0.0
  %v4232 = vmax.f32 %v2228, 0.0
  %v4233 = vmax.f32 %v2231, 0.0
  %v4234 = vmax.f32 %v2236, 0.0
  %v4235 = vmax.f32 %v2239, 0.0
  %v4236 = vmax.f32 %v2244, 0.0
  %v4237 = vmax.f32 %v2247, 0.0
  %v4238 = vmax.f32 %v2252, 0.0
  %v4239 = vmax.f32 %v2255, 0.0
  %v4240 = vmax.f32 %v2260, 0.0
  %v4241 = vmax.f32 %v2263, 0.0
  %v4242 = vmax.f32 %v2268, 0.0
  %v4243 = vmax.f32 %v2271, 0.0
  %v4244 = vmax.f32 %v2276, 0.0
  %v4245 = vmax.f32 %v2279, 0.0
  %v4246 = vmax.f32 %v2284, 0.0
  %v4247 = vmax.f32 %v2287, 0.0
  %v4248 = vmax.f32 %v2292, 0.0
  %v4249 = vmax.f32 %v2295, 0.0
  %v4250 = vmax.f32 %v2300, 0.0
  %v4251 = vmax.f32 %v2303, 0.0
  %v4252 = vmax.f32 %v2308, 0.0
  %v4253 = vmax.f32 %v2311, 0.0
  %v4254 = vmax.f32 %v2316, 0.0
  %v4255 = vmax.f32 %v2319, 0.0
  %v4256 = vmax.f32 %v2324, 0.0
  %v4257 = vmax.f32 %v2327, 0.0
  %v4258 = vmax.f32 %v2332, 0.0
  %v4259 = vmax.f32 %v2335, 0.0
  %v4260 = vmax.f32 %v2340, 0.0
  %v4261 = vmax.f32 %v2343, 0.0
  %v4262 = vmax.f32 %v2348, 0.0
  %v4263 = vmax.f32 %v2351, 0.0
  %v4264 = vmax.f32 %v2356, 0.0
  %v4265 = vmax.f32 %v2359, 0.0
  %v4266 = vmax.f32 %v2364, 0.0
  %v4267 = vmax.f32 %v2367, 0.0
  %v4268 = vmax.f32 %v2372, 0.0
  %v4269 = vmax.f32 %v2375, 0.0
  %v4270 = vmax.f32 %v2380, 0.0
  %v4271 = vmax.f32 %v2383, 0.0
  %v4272 = vmax.f32 %v2388, 0.0
  %v4273 = vmax.f32 %v2391, 0.0
  %v4274 = vmax.f32 %v2396, 0.0
  %v4275 = vmax.f32 %v2399, 0.0
  %v4276 = vmax.f32 %v2404, 0.0
  %v4277 = vmax.f32 %v2407, 0.0
  %v4278 = vmax.f32 %v2412, 0.0
  %v4279 = vmax.f32 %v2415, 0.0
  %v4280 = vmax.f32 %v2420, 0.0
  %v4281 = vmax.f32 %v2423, 0.0
  %v4282 = vmax.f32 %v2428, 0.0
  %v4283 = vmax.f32 %v2431, 0.0
  %v4284 = vmax.f32 %v2436, 0.0
  %v4285 = vmax.f32 %v2439, 0.0
  %v4286 = vmax.f32 %v2444, 0.0
  %v4287 = vmax.f32 %v2447, 0.0
  %v4288 = vmax.f32 %v2452, 0.0
  %v4289 = vmax.f32 %v2455, 0.0
  %v4290 = vmax.f32 %v2460, 0.0
  %v4291 = vmax.f32 %v2463, 0.0
  %v4292 = vmax.f32 %v2468, 0.0
  %v4293 = vmax.f32 %v2471, 0.0
  %v4294 = vmax.f32 %v2476, 0.0
  %v4295 = vmax.f32 %v2479, 0.0
  %v4296 = vmax.f32 %v2484, 0.0
  %v4297 = vmax.f32 %v2487, 0.0
  %v4298 = vmax.f32 %v2492, 0.0
  %v4299 = vmax.f32 %v2495, 0.0
  %v4300 = vmax.f32 %v2500, 0.0
  %v4301 = vmax.f32 %v2503, 0.0
  %v4302 = vmax.f32 %v2508, 0.0
  %v4303 = vmax.f32 %v2511, 0.0
  %v4304 = vmax.f32 %v2516, 0.0
  %v4305 = vmax.f32 %v2519, 0.0
  %v4306 = vmax.f32 %v2524, 0.0
  %v4307 = vmax.f32 %v2527, 0.0
  %v4308 = vmax.f32 %v2532, 0.0
  %v4309 = vmax.f32 %v2535, 0.0
  %v4310 = vmax.f32 %v2540, 0.0
  %v4311 = vmax.f32 %v2543, 0.0
  %v4312 = vmax.f32 %v2548, 0.0
  %v4313 = vmax.f32 %v2551, 0.0
  %v4314 = vmax.f32 %v2556, 0.0
  %v4315 = vmax.f32 %v2559, 0.0
  %v4316 = vmax.f32 %v2564, 0.0
  %v4317 = vmax.f32 %v2567, 0.0
  %v4318 = vmax.f32 %v2572, 0.0
  %v4319 = vmax.f32 %v2575, 0.0
  %v4320 = vmax.f32 %v2580, 0.0
  %v4321 = vmax.f32 %v2583, 0.0
  %v4322 = vmax.f32 %v2588, 0.0
  %v4323 = vmax.f32 %v2591, 0.0
  %v4324 = vmax.f32 %v2596, 0.0
  %v4325 = vmax.f32 %v2599, 0.0
  %v4326 = vmax.f32 %v2604, 0.0
  %v4327 = vmax.f32 %v2607, 0.0
  %v4328 = vmax.f32 %v2612, 0.0
  %v4329 = vmax.f32 %v2615, 0.0
  %v4330 = vmax.f32 %v2620, 0.0
  %v4331 = vmax.f32 %v2623, 0.0
  %v4332 = vmax.f32 %v2628, 0.0
  %v4333 = vmax.f32 %v2631, 0.0
  %v4334 = vmax.f32 %v2636, 0.0
  %v4335 = vmax.f32 %v2639, 0.0
  %v4336 = vmax.f32 %v2644, 0.0
  %v4337 = vmax.f32 %v2647, 0.0
  %v4338 = vmax.f32 %v2652, 0.0
  %v4339 = vmax.f32 %v2655, 0.0
  %v4340 = vmax.f32 %v2660, 0.0
  %v4341 = vmax.f32 %v2663, 0.0
  %v4342 = vmax.f32 %v2668, 0.0
  %v4343 = vmax.f32 %v2671, 0.0
  %v4344 = vmax.f32 %v2676, 0.0
  %v4345 = vmax.f32 %v2679, 0.0
  %v4346 = vmax.f32 %v2684, 0.0
  %v4347 = vmax.f32 %v2687, 0.0
  %v4348 = vmax.f32 %v2692, 0.0
  %v4349 = vmax.f32 %v2695, 0.0
  %v4350 = vmax.f32 %v2700, 0.0
  %v4351 = vmax.f32 %v2703, 0.0
  %v4352 = vmax.f32 %v2708, 0.0
  %v4353 = vmax.f32 %v2711, 0.0
  %v4354 = vmax.f32 %v2716, 0.0
  %v4355 = vmax.f32 %v2719, 0.0
  %v4356 = vmax.f32 %v2724, 0.0
  %v4357 = vmax.f32 %v2727, 0.0
  %v4358 = vmax.f32 %v2732, 0.0
  %v4359 = vmax.f32 %v2735, 0.0
  %v4360 = vmax.f32 %v2740, 0.0
  %v4361 = vmax.f32 %v2743, 0.0
  %v4362 = vmax.f32 %v2748, 0.0
  %v4363 = vmax.f32 %v2751, 0.0
  %v4364 = vmax.f32 %v2756, 0.0
  %v4365 = vmax.f32 %v2759, 0.0
  %v4366 = vmax.f32 %v2764, 0.0
  %v4367 = vmax.f32 %v2767, 0.0
  %v4368 = vmax.f32 %v2772, 0.0
  %v4369 = vmax.f32 %v2775, 0.0
  %v4370 = vmax.f32 %v2780, 0.0
  %v4371 = vmax.f32 %v2783, 0.0
  %v4372 = vmax.f32 %v2788, 0.0
  %v4373 = vmax.f32 %v2791, 0.0
  %v4374 = vmax.f32 %v2796, 0.0
  %v4375 = vmax.f32 %v2799, 0.0
  %v4376 = vmax.f32 %v2804, 0.0
  %v4377 = vmax.f32 %v2807, 0.0
  %v4378 = vmax.f32 %v2812, 0.0
  %v4379 = vmax.f32 %v2815, 0.0
  %v4380 = vmax.f32 %v2820, 0.0
  %v4381 = vmax.f32 %v2823, 0.0
  %v4382 = vmax.f32 %v2828, 0.0
  %v4383 = vmax.f32 %v2831, 0.0
  %v4384 = vmax.f32 %v2836, 0.0
  %v4385 = vmax.f32 %v2839, 0.0
  %v4386 = vmax.f32 %v2844, 0.0
  %v4387 = vmax.f32 %v2847, 0.0
  %v4388 = vmax.f32 %v2852, 0.0
  %v4389 = vmax.f32 %v2855, 0.0
  %v4390 = vmax.f32 %v2860, 0.0
  %v4391 = vmax.f32 %v2863, 0.0
  %v4392 = vmax.f32 %v2868, 0.0
  %v4393 = vmax.f32 %v2871, 0.0
  %v4394 = vmax.f32 %v2876, 0.0
  %v4395 = vmax.f32 %v2879, 0.0
  %v4396 = vmax.f32 %v2884, 0.0
  %v4397 = vmax.f32 %v2887, 0.0
  %v4398 = vmax.f32 %v2892, 0.0
  %v4399 = vmax.f32 %v2895, 0.0
  %v4400 = vmax.f32 %v2900, 0.0
  %v4401 = vmax.f32 %v2903, 0.0
  %v4402 = vmax.f32 %v2908, 0.0
  %v4403 = vmax.f32 %v2911, 0.0
  %v4404 = vmax.f32 %v2916, 0.0
  %v4405 = vmax.f32 %v2919, 0.0
  %v4406 = vmax.f32 %v2924, 0.0
  %v4407 = vmax.f32 %v2927, 0.0
  %v4408 = vmax.f32 %v2932, 0.0
  %v4409 = vmax.f32 %v2935, 0.0
  %v4410 = vmax.f32 %v2940, 0.0
  %v4411 = vmax.f32 %v2943, 0.0
  %v4412 = vmax.f32 %v2948, 0.0
  %v4413 = vmax.f32 %v2951, 0.0
  %v4414 = vmax.f32 %v2956, 0.0
  %v4415 = vmax.f32 %v2959, 0.0
  %v4416 = vmax.f32 %v2964, 0.0
  %v4417 = vmax.f32 %v2967, 0.0
  %v4418 = vmax.f32 %v2972, 0.0
  %v4419 = vmax.f32 %v2975, 0.0
  %v4420 = vmax.f32 %v2980, 0.0
  %v4421 = vmax.f32 %v2983, 0.0
  %v4422 = vmax.f32 %v2988, 0.0
  %v4423 = vmax.f32 %v2991, 0.0
  %v4424 = vmax.f32 %v2996, 0.0
  %v4425 = vmax.f32 %v2999, 0.0
  %v4426 = vmax.f32 %v3004, 0.0
  %v4427 = vmax.f32 %v3007, 0.0
  %v4428 = vmax.f32 %v3012, 0.0
  %v4429 = vmax.f32 %v3015, 0.0
  %v4430 = vmax.f32 %v3020, 0.0
  %v4431 = vmax.f32 %v3023, 0.0
  %v4432 = vmax.f32 %v3028, 0.0
  %v4433 = vmax.f32 %v3031, 0.0
  %v4434 = vmax.f32 %v3036, 0.0
  %v4435 = vmax.f32 %v3039, 0.0
  %v4436 = vmax.f32 %v3044, 0.0
  %v4437 = vmax.f32 %v3047, 0.0
  %v4438 = vmax.f32 %v3052, 0.0
  %v4439 = vmax.f32 %v3055, 0.0
  %v4440 = vmax.f32 %v3060, 0.0
  %v4441 = vmax.f32 %v3063, 0.0
  %v4442 = vmax.f32 %v3068, 0.0
  %v4443 = vmax.f32 %v3071, 0.0
  %v4444 = vmax.f32 %v3076, 0.0
  %v4445 = vmax.f32 %v3079, 0.0
  %v4446 = vmax.f32 %v3084, 0.0
  %v4447 = vmax.f32 %v3087, 0.0
  %v4448 = vmax.f32 %v3092, 0.0
  %v4449 = vmax.f32 %v3095, 0.0
  %v4450 = vmax.f32 %v3100, 0.0
  %v4451 = vmax.f32 %v3103, 0.0
  %v4452 = vmax.f32 %v3108, 0.0
  %v4453 = vmax.f32 %v3111, 0.0
  %v4454 = vmax.f32 %v3116, 0.0
  %v4455 = vmax.f32 %v3119, 0.0
  %v4456 = vmax.f32 %v3124, 0.0
  %v4457 = vmax.f32 %v3127, 0.0
  %v4458 = vmax.f32 %v3132, 0.0
  %v4459 = vmax.f32 %v3135, 0.0
  %v4460 = vmax.f32 %v3140, 0.0
  %v4461 = vmax.f32 %v3143, 0.0
  %v4462 = vmax.f32 %v3148, 0.0
  %v4463 = vmax.f32 %v3151, 0.0
  %v4464 = vmax.f32 %v3156, 0.0
  %v4465 = vmax.f32 %v3159, 0.0
  %v4466 = vmax.f32 %v3164, 0.0
  %v4467 = vmax.f32 %v3167, 0.0
  %v4468 = vmax.f32 %v3172, 0.0
  %v4469 = vmax.f32 %v3175, 0.0
  %v4470 = vmax.f32 %v3180, 0.0
  %v4471 = vmax.f32 %v3183, 0.0
  %v4472 = vmax.f32 %v3188, 0.0
  %v4473 = vmax.f32 %v3191, 0.0
  %v4474 = vmax.f32 %v3196, 0.0
  %v4475 = vmax.f32 %v3199, 0.0
  %v4476 = vmax.f32 %v3204, 0.0
  %v4477 = vmax.f32 %v3207, 0.0
  %v4478 = vmax.f32 %v3212, 0.0
  %v4479 = vmax.f32 %v3215, 0.0
  %v4480 = vmax.f32 %v3220, 0.0
  %v4481 = vmax.f32 %v3223, 0.0
  %v4482 = vmax.f32 %v3228, 0.0
  %v4483 = vmax.f32 %v3231, 0.0
  %v4484 = vmax.f32 %v3236, 0.0
  %v4485 = vmax.f32 %v3239, 0.0
  %v4486 = vmax.f32 %v3244, 0.0
  %v4487 = vmax.f32 %v3247, 0.0
  %v4488 = vmax.f32 %v3252, 0.0
  %v4489 = vmax.f32 %v3255, 0.0
  %v4490 = vmax.f32 %v3260, 0.0
  %v4491 = vmax.f32 %v3263, 0.0
  %v4492 = vmax.f32 %v3268, 0.0
  %v4493 = vmax.f32 %v3271, 0.0
  %v4494 = vmax.f32 %v3276, 0.0
  %v4495 = vmax.f32 %v3279, 0.0
  %v4496 = vmax.f32 %v3284, 0.0
  %v4497 = vmax.f32 %v3287, 0.0
  %v4498 = vmax.f32 %v3292, 0.0
  %v4499 = vmax.f32 %v3295, 0.0
  %v4500 = vmax.f32 %v3300, 0.0
  %v4501 = vmax.f32 %v3303, 0.0
  %v4502 = vmax.f32 %v3308, 0.0
  %v4503 = vmax.f32 %v3311, 0.0
  %v4504 = vmax.f32 %v3316, 0.0
  %v4505 = vmax.f32 %v3319, 0.0
  %v4506 = vmax.f32 %v3324, 0.0
  %v4507 = vmax.f32 %v3327, 0.0
  %v4508 = vmax.f32 %v3332, 0.0
  %v4509 = vmax.f32 %v3335, 0.0
  %v4510 = vmax.f32 %v3340, 0.0
  %v4511 = vmax.f32 %v3343, 0.0
  %v4512 = vmax.f32 %v3348, 0.0
  %v4513 = vmax.f32 %v3351, 0.0
  %v4514 = vmax.f32 %v3356, 0.0
  %v4515 = vmax.f32 %v3359, 0.0
  %v4516 = vmax.f32 %v3364, 0.0
  %v4517 = vmax.f32 %v3367, 0.0
  %v4518 = vmax.f32 %v3372, 0.0
  %v4519 = vmax.f32 %v3375, 0.0
  %v4520 = vmax.f32 %v3380, 0.0
  %v4521 = vmax.f32 %v3383, 0.0
  %v4522 = vmax.f32 %v3388, 0.0
  %v4523 = vmax.f32 %v3391, 0.0
  %v4524 = vmax.f32 %v3396, 0.0
  %v4525 = vmax.f32 %v3399, 0.0
  %v4526 = vmax.f32 %v3404, 0.0
  %v4527 = vmax.f32 %v3407, 0.0
  %v4528 = vmax.f32 %v3412, 0.0
  %v4529 = vmax.f32 %v3415, 0.0
  %v4530 = vmax.f32 %v3420, 0.0
  %v4531 = vmax.f32 %v3423, 0.0
  %v4532 = vmax.f32 %v3428, 0.0
  %v4533 = vmax.f32 %v3431, 0.0
  %v4534 = vmax.f32 %v3436, 0.0
  %v4535 = vmax.f32 %v3439, 0.0
  %v4536 = vmax.f32 %v3444, 0.0
  %v4537 = vmax.f32 %v3447, 0.0
  %v4538 = vmax.f32 %v3452, 0.0
  %v4539 = vmax.f32 %v3455, 0.0
  %v4540 = vmax.f32 %v3460, 0.0
  %v4541 = vmax.f32 %v3463, 0.0
  %v4542 = vmax.f32 %v3468, 0.0
  %v4543 = vmax.f32 %v3471, 0.0
  %v4544 = vmax.f32 %v3476, 0.0
  %v4545 = vmax.f32 %v3479, 0.0
  %v4546 = vmax.f32 %v3484, 0.0
  %v4547 = vmax.f32 %v3487, 0.0
  %v4548 = vmax.f32 %v3492, 0.0
  %v4549 = vmax.f32 %v3495, 0.0
  %v4550 = vmax.f32 %v3500, 0.0
  %v4551 = vmax.f32 %v3503, 0.0
  %v4552 = vmax.f32 %v3508, 0.0
  %v4553 = vmax.f32 %v3511, 0.0
  %v4554 = vmax.f32 %v3516, 0.0
  %v4555 = vmax.f32 %v3519, 0.0
  %v4556 = vmax.f32 %v3524, 0.0
  %v4557 = vmax.f32 %v3527, 0.0
  %v4558 = vmax.f32 %v3532, 0.0
  %v4559 = vmax.f32 %v3535, 0.0
  %v4560 = vmax.f32 %v3540, 0.0
  %v4561 = vmax.f32 %v3543, 0.0
  %v4562 = vmax.f32 %v3548, 0.0
  %v4563 = vmax.f32 %v3551, 0.0
  %v4564 = vmax.f32 %v3556, 0.0
  %v4565 = vmax.f32 %v3559, 0.0
  %v4566 = vmax.f32 %v3564, 0.0
  %v4567 = vmax.f32 %v3567, 0.0
  %v4568 = vmax.f32 %v3572, 0.0
  %v4569 = vmax.f32 %v3575, 0.0
  %v4570 = vmax.f32 %v3580, 0.0
  %v4571 = vmax.f32 %v3583, 0.0
  %v4572 = vmax.f32 %v3588, 0.0
  %v4573 = vmax.f32 %v3591, 0.0
  %v4574 = vmax.f32 %v3596, 0.0
  %v4575 = vmax.f32 %v3599, 0.0
  %v4576 = vmax.f32 %v3604, 0.0
  %v4577 = vmax.f32 %v3607, 0.0
  %v4578 = vmax.f32 %v3612, 0.0
  %v4579 = vmax.f32 %v3615, 0.0
  %v4580 = vmax.f32 %v3620, 0.0
  %v4581 = vmax.f32 %v3623, 0.0
  %v4582 = vmax.f32 %v3628, 0.0
  %v4583 = vmax.f32 %v3631, 0.0
  %v4584 = vmax.f32 %v3636, 0.0
  %v4585 = vmax.f32 %v3639, 0.0
  %v4586 = vmax.f32 %v3644, 0.0
  %v4587 = vmax.f32 %v3647, 0.0
  %v4588 = vmax.f32 %v3652, 0.0
  %v4589 = vmax.f32 %v3655, 0.0
  %v4590 = vmax.f32 %v3660, 0.0
  %v4591 = vmax.f32 %v3663, 0.0
  %v4592 = vmax.f32 %v3668, 0.0
  %v4593 = vmax.f32 %v3671, 0.0
  %v4594 = vmax.f32 %v3676, 0.0
  %v4595 = vmax.f32 %v3679, 0.0
  %v4596 = vmax.f32 %v3684, 0.0
  %v4597 = vmax.f32 %v3687, 0.0
  %v4598 = vmax.f32 %v3692, 0.0
  %v4599 = vmax.f32 %v3695, 0.0
  %v4600 = vmax.f32 %v3700, 0.0
  %v4601 = vmax.f32 %v3703, 0.0
  %v4602 = vmax.f32 %v3708, 0.0
  %v4603 = vmax.f32 %v3711, 0.0
  %v4604 = vmax.f32 %v3716, 0.0
  %v4605 = vmax.f32 %v3719, 0.0
  %v4606 = vmax.f32 %v3724, 0.0
  %v4607 = vmax.f32 %v3727, 0.0
  %v4608 = vmax.f32 %v3732, 0.0
  %v4609 = vmax.f32 %v3735, 0.0
  %v4610 = vmax.f32 %v3740, 0.0
  %v4611 = vmax.f32 %v3743, 0.0
  %v4612 = vmax.f32 %v3748, 0.0
  %v4613 = vmax.f32 %v3751, 0.0
  %v4614 = vmax.f32 %v3756, 0.0
  %v4615 = vmax.f32 %v3759, 0.0
  %v4616 = vmax.f32 %v3764, 0.0
  %v4617 = vmax.f32 %v3767, 0.0
  %v4618 = vmax.f32 %v3772, 0.0
  %v4619 = vmax.f32 %v3775, 0.0
  %v4620 = vmax.f32 %v3780, 0.0
  %v4621 = vmax.f32 %v3783, 0.0
  %v4622 = vmax.f32 %v3788, 0.0
  %v4623 = vmax.f32 %v3791, 0.0
  %v4624 = vmax.f32 %v3796, 0.0
  %v4625 = vmax.f32 %v3799, 0.0
  %v4626 = vmax.f32 %v3804, 0.0
  %v4627 = vmax.f32 %v3807, 0.0
  %v4628 = vmax.f32 %v3812, 0.0
  %v4629 = vmax.f32 %v3815, 0.0
  %v4630 = vmax.f32 %v3820, 0.0
  %v4631 = vmax.f32 %v3823, 0.0
  %v4632 = vmax.f32 %v3828, 0.0
  %v4633 = vmax.f32 %v3831, 0.0
  %v4634 = vmax.f32 %v3836, 0.0
  %v4635 = vmax.f32 %v3839, 0.0
  %v4636 = vmax.f32 %v3844, 0.0
  %v4637 = vmax.f32 %v3847, 0.0
  %v4638 = vmax.f32 %v3852, 0.0
  %v4639 = vmax.f32 %v3855, 0.0
  %v4640 = vmax.f32 %v3860, 0.0
  %v4641 = vmax.f32 %v3863, 0.0
  %v4642 = vmax.f32 %v3868, 0.0
  %v4643 = vmax.f32 %v3871, 0.0
  %v4644 = vmax.f32 %v3876, 0.0
  %v4645 = vmax.f32 %v3879, 0.0
  %v4646 = vmax.f32 %v3884, 0.0
  %v4647 = vmax.f32 %v3887, 0.0
  %v4648 = vmax.f32 %v3892, 0.0
  %v4649 = vmax.f32 %v3895, 0.0
  %v4650 = vmax.f32 %v3900, 0.0
  %v4651 = vmax.f32 %v3903, 0.0
  %v4652 = vmax.f32 %v3908, 0.0
  %v4653 = vmax.f32 %v3911, 0.0
  %v4654 = vmax.f32 %v3916, 0.0
  %v4655 = vmax.f32 %v3919, 0.0
  %v4656 = vmax.f32 %v3924, 0.0
  %v4657 = vmax.f32 %v3927, 0.0
  %v4658 = vmax.f32 %v3932, 0.0
  %v4659 = vmax.f32 %v3935, 0.0
  %v4660 = vmax.f32 %v3940, 0.0
  %v4661 = vmax.f32 %v3943, 0.0
  %v4662 = vmax.f32 %v3948, 0.0
  %v4663 = vmax.f32 %v3951, 0.0
  %v4664 = vmax.f32 %v3956, 0.0
  %v4665 = vmax.f32 %v3959, 0.0
  %v4666 = vmax.f32 %v3964, 0.0
  %v4667 = vmax.f32 %v3967, 0.0
  %v4668 = vmax.f32 %v3972, 0.0
  %v4669 = vmax.f32 %v3975, 0.0
  %v4670 = vmax.f32 %v3980, 0.0
  %v4671 = vmax.f32 %v3983, 0.0
  %v4672 = vmax.f32 %v3988, 0.0
  %v4673 = vmax.f32 %v3991, 0.0
  %v4674 = vmax.f32 %v3996, 0.0
  %v4675 = vmax.f32 %v3999, 0.0
  %v4676 = vmax.f32 %v4004, 0.0
  %v4677 = vmax.f32 %v4007, 0.0
  %v4678 = vmax.f32 %v4012, 0.0
  %v4679 = vmax.f32 %v4015, 0.0
  %v4680 = vmax.f32 %v4020, 0.0
  %v4681 = vmax.f32 %v4023, 0.0
  %v4682 = vmax.f32 %v4028, 0.0
  %v4683 = vmax.f32 %v4031, 0.0
  %v4684 = vmax.f32 %v4036, 0.0
  %v4685 = vmax.f32 %v4039, 0.0
  %v4686 = vmax.f32 %v4044, 0.0
  %v4687 = vmax.f32 %v4047, 0.0
  %v4688 = vmax.f32 %v4052, 0.0
  %v4689 = vmax.f32 %v4055, 0.0
  %v4690 = vmax.f32 %v4060, 0.0
  %v4691 = vmax.f32 %v4063, 0.0
  %v4692 = vmax.f32 %v4068, 0.0
  %v4693 = vmax.f32 %v4071, 0.0
  %v4694 = vmax.f32 %v4076, 0.0
  %v4695 = vmax.f32 %v4079, 0.0
  %v4696 = vmax.f32 %v4084, 0.0
  %v4697 = vmax.f32 %v4087, 0.0
  %v4698 = vmax.f32 %v4092, 0.0
  %v4699 = vmax.f32 %v4095, 0.0
  %v4700 = vmax.f32 %v4100, 0.0
  %v4701 = vmax.f32 %v4103, 0.0
  %v4702 = vmax.f32 %v4108, 0.0
  %v4703 = vmax.f32 %v4111, 0.0
  %v4704 = vmax.f32 %v4116, 0.0
  %v4705 = vmax.f32 %v4119, 0.0
  %v4706 = vmax.f32 %v4124, 0.0
  %v4707 = vmax.f32 %v4127, 0.0
  %v4708 = vmax.f32 %v4132, 0.0
  %v4709 = vmax.f32 %v4135, 0.0
  %v4710 = vmax.f32 %v4140, 0.0
  %v4711 = vmax.f32 %v4143, 0.0
  %v4712 = vmax.f32 %v4148, 0.0
  %v4713 = vmax.f32 %v4151, 0.0
  %v4714 = vmax.f32 %v4156, 0.0
  %v4715 = vmax.f32 %v4159, 0.0
  %v4716 = vmax.f32 %v4164, 0.0
  %v4717 = vmax.f32 %v4167, 0.0
  %v4718 = vmax.f32 %v4172, 0.0
  %v4719 = vmax.f32 %v4175, 0.0
  %v4720 = vmax.f32 %v4180, 0.0
  %v4721 = vmax.f32 %v4183, 0.0
  %v4722 = vmax.f32 %v4188, 0.0
  %v4723 = vmax.f32 %v4191, 0.0
  %v4724 = vmax.f32 %v4196, 0.0
  %v4725 = vmax.f32 %v4199, 0.0
  %v4726 = vmax.f32 %v4204, 0.0
  %v4727 = vmax.f32 %v4207, 0.0
  %v4728 = vmax.f32 %v4212, 0.0
  %v4729 = vmax.f32 %v4215, 0.0
  %v4730 = vld [vmem:[%s3] sm:$0xff]
  %v4731 = vld [vmem:[%s3 + $0x8] sm:$0xff]
  %v4732 = vld [vmem:[%s3 + $0x10] sm:$0xff]
  %v4733 = vld [vmem:[%s3 + $0x18] sm:$0xff]
  %v4734 = vld [vmem:[%s3 + $0x20] sm:$0xff]
  %v4735 = vld [vmem:[%s3 + $0x28] sm:$0xff]
  %v4736 = vld [vmem:[%s3 + $0x30] sm:$0xff]
  %v4737 = vld [vmem:[%s3 + $0x38] sm:$0xff]
  %v4738 = vld [vmem:[%s3 + $0x40] sm:$0xff]
  %v4739 = vld [vmem:[%s3 + $0x48] sm:$0xff]
  %v4740 = vld [vmem:[%s3 + $0x50] sm:$0xff]
  %v4741 = vld [vmem:[%s3 + $0x58] sm:$0xff]
  %v4742 = vld [vmem:[%s3 + $0x60] sm:$0xff]
  %v4743 = vld [vmem:[%s3 + $0x68] sm:$0xff]
  %v4744 = vld [vmem:[%s3 + $0x70] sm:$0xff]
  %v4745 = vld [vmem:[%s3 + $0x78] sm:$0xff]
  %v4746 = vld [vmem:[%s3 + $0x80] sm:$0xff]
  %v4747 = vld [vmem:[%s3 + $0x88] sm:$0xff]
  %v4748 = vld [vmem:[%s3 + $0x90] sm:$0xff]
  %v4749 = vld [vmem:[%s3 + $0x98] sm:$0xff]
  %v4750 = vld [vmem:[%s3 + $0xa0] sm:$0xff]
  %v4751 = vld [vmem:[%s3 + $0xa8] sm:$0xff]
  %v4752 = vld [vmem:[%s3 + $0xb0] sm:$0xff]
  %v4753 = vld [vmem:[%s3 + $0xb8] sm:$0xff]
  %v4754 = vld [vmem:[%s3 + $0xc0] sm:$0xff]
  %v4755 = vld [vmem:[%s3 + $0xc8] sm:$0xff]
  %v4756 = vld [vmem:[%s3 + $0xd0] sm:$0xff]
  %v4757 = vld [vmem:[%s3 + $0xd8] sm:$0xff]
  %v4758 = vld [vmem:[%s3 + $0xe0] sm:$0xff]
  %v4759 = vld [vmem:[%s3 + $0xe8] sm:$0xff]
  %v4760 = vld [vmem:[%s3 + $0xf0] sm:$0xff]
  %v4761 = vld [vmem:[%s3 + $0xf8] sm:$0xff]
  %v4762 = vld [vmem:[%s3 + $0x100] sm:$0xff]
  %v4763 = vld [vmem:[%s3 + $0x108] sm:$0xff]
  %v4764 = vld [vmem:[%s3 + $0x110] sm:$0xff]
  %v4765 = vld [vmem:[%s3 + $0x118] sm:$0xff]
  %v4766 = vld [vmem:[%s3 + $0x120] sm:$0xff]
  %v4767 = vld [vmem:[%s3 + $0x128] sm:$0xff]
  %v4768 = vld [vmem:[%s3 + $0x130] sm:$0xff]
  %v4769 = vld [vmem:[%s3 + $0x138] sm:$0xff]
  %v4770 = vld [vmem:[%s3 + $0x140] sm:$0xff]
  %v4771 = vld [vmem:[%s3 + $0x148] sm:$0xff]
  %v4772 = vld [vmem:[%s3 + $0x150] sm:$0xff]
  %v4773 = vld [vmem:[%s3 + $0x158] sm:$0xff]
  %v4774 = vld [vmem:[%s3 + $0x160] sm:$0xff]
  %v4775 = vld [vmem:[%s3 + $0x168] sm:$0xff]
  %v4776 = vld [vmem:[%s3 + $0x170] sm:$0xff]
  %v4777 = vld [vmem:[%s3 + $0x178] sm:$0xff]
  %v4778 = vld [vmem:[%s3 + $0x180] sm:$0xff]
  %v4779 = vld [vmem:[%s3 + $0x188] sm:$0xff]
  %v4780 = vld [vmem:[%s3 + $0x190] sm:$0xff]
  %v4781 = vld [vmem:[%s3 + $0x198] sm:$0xff]
  %v4782 = vld [vmem:[%s3 + $0x1a0] sm:$0xff]
  %v4783 = vld [vmem:[%s3 + $0x1a8] sm:$0xff]
  %v4784 = vld [vmem:[%s3 + $0x1b0] sm:$0xff]
  %v4785 = vld [vmem:[%s3 + $0x1b8] sm:$0xff]
  %v4786 = vld [vmem:[%s3 + $0x1c0] sm:$0xff]
  %v4787 = vld [vmem:[%s3 + $0x1c8] sm:$0xff]
  %v4788 = vld [vmem:[%s3 + $0x1d0] sm:$0xff]
  %v4789 = vld [vmem:[%s3 + $0x1d8] sm:$0xff]
  %v4790 = vld [vmem:[%s3 + $0x1e0] sm:$0xff]
  %v4791 = vld [vmem:[%s3 + $0x1e8] sm:$0xff]
  %v4792 = vld [vmem:[%s3 + $0x1f0] sm:$0xff]
  %v4793 = vld [vmem:[%s3 + $0x1f8] sm:$0xff]
  %4794 = vmatprep.subr.mxu0 0.0
  %4795 = vmatpush1.msra.mxu0 %v4218
  %4796 = vmatprep.subr.mxu0 0.0
  %4797 = vmatpush1.msra.mxu0 %v4219
  %4798 = vmatprep.subr.mxu0 0.0
  %4799 = vmatpush1.msra.mxu0 %v4220
  %4800 = vmatprep.subr.mxu0 0.0
  %4801 = vmatpush1.msra.mxu0 %v4221
  %4802 = vmatprep.subr.mxu0 0.0
  %4803 = vmatpush1.msra.mxu0 %v4222
  %4804 = vmatprep.subr.mxu0 0.0
  %4805 = vmatpush1.msra.mxu0 %v4223
  %4806 = vmatprep.subr.mxu0 0.0
  %4807 = vmatpush1.msra.mxu0 %v4224
  %4808 = vmatprep.subr.mxu0 0.0
  %4809 = vmatpush1.msra.mxu0 %v4225
  %4810 = vmatprep.subr.mxu0 0.0
  %4811 = vmatpush1.msra.mxu0 %v4226
  %4812 = vmatprep.subr.mxu0 0.0
  %4813 = vmatpush1.msra.mxu0 %v4227
  %4814 = vmatprep.subr.mxu0 0.0
  %4815 = vmatpush1.msra.mxu0 %v4228
  %4816 = vmatprep.subr.mxu0 0.0
  %4817 = vmatpush1.msra.mxu0 %v4229
  %4818 = vmatprep.subr.mxu0 0.0
  %4819 = vmatpush1.msra.mxu0 %v4230
  %4820 = vmatprep.subr.mxu0 0.0
  %4821 = vmatpush1.msra.mxu0 %v4231
  %4822 = vmatprep.subr.mxu0 0.0
  %4823 = vmatpush1.msra.mxu0 %v4232
  %4824 = vmatprep.subr.mxu0 0.0
  %4825 = vmatpush1.msra.mxu0 %v4233
  %4826 = vmatprep.subr.mxu0 0.0
  %4827 = vmatpush1.msra.mxu0 %v4234
  %4828 = vmatprep.subr.mxu0 0.0
  %4829 = vmatpush1.msra.mxu0 %v4235
  %4830 = vmatprep.subr.mxu0 0.0
  %4831 = vmatpush1.msra.mxu0 %v4236
  %4832 = vmatprep.subr.mxu0 0.0
  %4833 = vmatpush1.msra.mxu0 %v4237
  %4834 = vmatprep.subr.mxu0 0.0
  %4835 = vmatpush1.msra.mxu0 %v4238
  %4836 = vmatprep.subr.mxu0 0.0
  %4837 = vmatpush1.msra.mxu0 %v4239
  %4838 = vmatprep.subr.mxu0 0.0
  %4839 = vmatpush1.msra.mxu0 %v4240
  %4840 = vmatprep.subr.mxu0 0.0
  %4841 = vmatpush1.msra.mxu0 %v4241
  %4842 = vmatprep.subr.mxu0 0.0
  %4843 = vmatpush1.msra.mxu0 %v4242
  %4844 = vmatprep.subr.mxu0 0.0
  %4845 = vmatpush1.msra.mxu0 %v4243
  %4846 = vmatprep.subr.mxu0 0.0
  %4847 = vmatpush1.msra.mxu0 %v4244
  %4848 = vmatprep.subr.mxu0 0.0
  %4849 = vmatpush1.msra.mxu0 %v4245
  %4850 = vmatprep.subr.mxu0 0.0
  %4851 = vmatpush1.msra.mxu0 %v4246
  %4852 = vmatprep.subr.mxu0 0.0
  %4853 = vmatpush1.msra.mxu0 %v4247
  %4854 = vmatprep.subr.mxu0 0.0
  %4855 = vmatpush1.msra.mxu0 %v4248
  %4856 = vmatprep.subr.mxu0 0.0
  %4857 = vmatpush1.msra.mxu0 %v4249
  %4858 = vmatprep.mubr.f32.mxu0 %v4731
  %4859 = vmatmul.mubr.f32.gmra.mrb[0].mxu0 %v4730
  %v4860 = vpop.f32.mrb[0].mxu0
  %v4861 = vadd.f32 0.0, %v4860
  %v4862 = vpop.f32.mrb[0].mxu0
  %4863 = vmatprep.mubr.f32.mxu0 %v4763
  %4864 = vmatmul.mubr.f32.gmra.mrb[0].mxu0 %v4762
  %v4865 = vpop.f32.mrb[0].mxu0
  %v4866 = vadd.f32 0.0, %v4865
  %v4867 = vpop.f32.mrb[0].mxu0
  %4868 = vdwg.mxu0
  %4869 = vmatprep.subr.mxu0 0.0
  %4870 = vmatpush1.msra.mxu0 %v4250
  %4871 = vmatprep.subr.mxu0 0.0
  %4872 = vmatpush1.msra.mxu0 %v4251
  %4873 = vmatprep.subr.mxu0 0.0
  %4874 = vmatpush1.msra.mxu0 %v4252
  %4875 = vmatprep.subr.mxu0 0.0
  %4876 = vmatpush1.msra.mxu0 %v4253
  %4877 = vmatprep.subr.mxu0 0.0
  %4878 = vmatpush1.msra.mxu0 %v4254
  %4879 = vmatprep.subr.mxu0 0.0
  %4880 = vmatpush1.msra.mxu0 %v4255
  %4881 = vmatprep.subr.mxu0 0.0
  %4882 = vmatpush1.msra.mxu0 %v4256
  %4883 = vmatprep.subr.mxu0 0.0
  %4884 = vmatpush1.msra.mxu0 %v4257
  %4885 = vmatprep.subr.mxu0 0.0
  %4886 = vmatpush1.msra.mxu0 %v4258
  %4887 = vmatprep.subr.mxu0 0.0
  %4888 = vmatpush1.msra.mxu0 %v4259
  %4889 = vmatprep.subr.mxu0 0.0
  %4890 = vmatpush1.msra.mxu0 %v4260
  %4891 = vmatprep.subr.mxu0 0.0
  %4892 = vmatpush1.msra.mxu0 %v4261
  %4893 = vmatprep.subr.mxu0 0.0
  %4894 = vmatpush1.msra.mxu0 %v4262
  %4895 = vmatprep.subr.mxu0 0.0
  %4896 = vmatpush1.msra.mxu0 %v4263
  %4897 = vmatprep.subr.mxu0 0.0
  %4898 = vmatpush1.msra.mxu0 %v4264
  %4899 = vmatprep.subr.mxu0 0.0
  %4900 = vmatpush1.msra.mxu0 %v4265
  %4901 = vmatprep.subr.mxu0 0.0
  %4902 = vmatpush1.msra.mxu0 %v4266
  %4903 = vmatprep.subr.mxu0 0.0
  %4904 = vmatpush1.msra.mxu0 %v4267
  %4905 = vmatprep.subr.mxu0 0.0
  %4906 = vmatpush1.msra.mxu0 %v4268
  %4907 = vmatprep.subr.mxu0 0.0
  %4908 = vmatpush1.msra.mxu0 %v4269
  %4909 = vmatprep.subr.mxu0 0.0
  %4910 = vmatpush1.msra.mxu0 %v4270
  %4911 = vmatprep.subr.mxu0 0.0
  %4912 = vmatpush1.msra.mxu0 %v4271
  %4913 = vmatprep.subr.mxu0 0.0
  %4914 = vmatpush1.msra.mxu0 %v4272
  %4915 = vmatprep.subr.mxu0 0.0
  %4916 = vmatpush1.msra.mxu0 %v4273
  %4917 = vmatprep.subr.mxu0 0.0
  %4918 = vmatpush1.msra.mxu0 %v4274
  %4919 = vmatprep.subr.mxu0 0.0
  %4920 = vmatpush1.msra.mxu0 %v4275
  %4921 = vmatprep.subr.mxu0 0.0
  %4922 = vmatpush1.msra.mxu0 %v4276
  %4923 = vmatprep.subr.mxu0 0.0
  %4924 = vmatpush1.msra.mxu0 %v4277
  %4925 = vmatprep.subr.mxu0 0.0
  %4926 = vmatpush1.msra.mxu0 %v4278
  %4927 = vmatprep.subr.mxu0 0.0
  %4928 = vmatpush1.msra.mxu0 %v4279
  %4929 = vmatprep.subr.mxu0 0.0
  %4930 = vmatpush1.msra.mxu0 %v4280
  %4931 = vmatprep.subr.mxu0 0.0
  %4932 = vmatpush1.msra.mxu0 %v4281
  %4933 = vmatprep.mubr.f32.mxu0 %v4733
  %4934 = vmatmul.mubr.f32.gmra.mrb[0].mxu0 %v4732
  %v4935 = vpop.f32.mrb[0].mxu0
  %v4936 = vadd.f32 %v4861, %v4935
  %v4937 = vpop.f32.mrb[0].mxu0
  %4938 = vmatprep.mubr.f32.mxu0 %v4765
  %4939 = vmatmul.mubr.f32.gmra.mrb[0].mxu0 %v4764
  %v4940 = vpop.f32.mrb[0].mxu0
  %v4941 = vadd.f32 %v4866, %v4940
  %v4942 = vpop.f32.mrb[0].mxu0
  %4943 = vdwg.mxu0
  %4944 = vmatprep.subr.mxu0 0.0
  %4945 = vmatpush1.msra.mxu0 %v4282
  %4946 = vmatprep.subr.mxu0 0.0
  %4947 = vmatpush1.msra.mxu0 %v4283
  %4948 = vmatprep.subr.mxu0 0.0
  %4949 = vmatpush1.msra.mxu0 %v4284
  %4950 = vmatprep.subr.mxu0 0.0
  %4951 = vmatpush1.msra.mxu0 %v4285
  %4952 = vmatprep.subr.mxu0 0.0
  %4953 = vmatpush1.msra.mxu0 %v4286
  %4954 = vmatprep.subr.mxu0 0.0
  %4955 = vmatpush1.msra.mxu0 %v4287
  %4956 = vmatprep.subr.mxu0 0.0
  %4957 = vmatpush1.msra.mxu0 %v4288
  %4958 = vmatprep.subr.mxu0 0.0
  %4959 = vmatpush1.msra.mxu0 %v4289
  %4960 = vmatprep.subr.mxu0 0.0
  %4961 = vmatpush1.msra.mxu0 %v4290
  %4962 = vmatprep.subr.mxu0 0.0
  %4963 = vmatpush1.msra.mxu0 %v4291
  %4964 = vmatprep.subr.mxu0 0.0
  %4965 = vmatpush1.msra.mxu0 %v4292
  %4966 = vmatprep.subr.mxu0 0.0
  %4967 = vmatpush1.msra.mxu0 %v4293
  %4968 = vmatprep.subr.mxu0 0.0
  %4969 = vmatpush1.msra.mxu0 %v4294
  %4970 = vmatprep.subr.mxu0 0.0
  %4971 = vmatpush1.msra.mxu0 %v4295
  %4972 = vmatprep.subr.mxu0 0.0
  %4973 = vmatpush1.msra.mxu0 %v4296
  %4974 = vmatprep.subr.mxu0 0.0
  %4975 = vmatpush1.msra.mxu0 %v4297
  %4976 = vmatprep.subr.mxu0 0.0
  %4977 = vmatpush1.msra.mxu0 %v4298
  %4978 = vmatprep.subr.mxu0 0.0
  %4979 = vmatpush1.msra.mxu0 %v4299
  %4980 = vmatprep.subr.mxu0 0.0
  %4981 = vmatpush1.msra.mxu0 %v4300
  %4982 = vmatprep.subr.mxu0 0.0
  %4983 = vmatpush1.msra.mxu0 %v4301
  %4984 = vmatprep.subr.mxu0 0.0
  %4985 = vmatpush1.msra.mxu0 %v4302
  %4986 = vmatprep.subr.mxu0 0.0
  %4987 = vmatpush1.msra.mxu0 %v4303
  %4988 = vmatprep.subr.mxu0 0.0
  %4989 = vmatpush1.msra.mxu0 %v4304
  %4990 = vmatprep.subr.mxu0 0.0
  %4991 = vmatpush1.msra.mxu0 %v4305
  %4992 = vmatprep.subr.mxu0 0.0
  %4993 = vmatpush1.msra.mxu0 %v4306
  %4994 = vmatprep.subr.mxu0 0.0
  %4995 = vmatpush1.msra.mxu0 %v4307
  %4996 = vmatprep.subr.mxu0 0.0
  %4997 = vmatpush1.msra.mxu0 %v4308
  %4998 = vmatprep.subr.mxu0 0.0
  %4999 = vmatpush1.msra.mxu0 %v4309
  %5000 = vmatprep.subr.mxu0 0.0
  %5001 = vmatpush1.msra.mxu0 %v4310
  %5002 = vmatprep.subr.mxu0 0.0
  %5003 = vmatpush1.msra.mxu0 %v4311
  %5004 = vmatprep.subr.mxu0 0.0
  %5005 = vmatpush1.msra.mxu0 %v4312
  %5006 = vmatprep.subr.mxu0 0.0
  %5007 = vmatpush1.msra.mxu0 %v4313
  %5008 = vmatprep.mubr.f32.mxu0 %v4735
  %5009 = vmatmul.mubr.f32.gmra.mrb[0].mxu0 %v4734
  %v5010 = vpop.f32.mrb[0].mxu0
  %v5011 = vadd.f32 %v4936, %v5010
  %v5012 = vpop.f32.mrb[0].mxu0
  %5013 = vmatprep.mubr.f32.mxu0 %v4767
  %5014 = vmatmul.mubr.f32.gmra.mrb[0].mxu0 %v4766
  %v5015 = vpop.f32.mrb[0].mxu0
  %v5016 = vadd.f32 %v4941, %v5015
  %v5017 = vpop.f32.mrb[0].mxu0
  %5018 = vdwg.mxu0
  %5019 = vmatprep.subr.mxu0 0.0
  %5020 = vmatpush1.msra.mxu0 %v4314
  %5021 = vmatprep.subr.mxu0 0.0
  %5022 = vmatpush1.msra.mxu0 %v4315
  %5023 = vmatprep.subr.mxu0 0.0
  %5024 = vmatpush1.msra.mxu0 %v4316
  %5025 = vmatprep.subr.mxu0 0.0
  %5026 = vmatpush1.msra.mxu0 %v4317
  %5027 = vmatprep.subr.mxu0 0.0
  %5028 = vmatpush1.msra.mxu0 %v4318
  %5029 = vmatprep.subr.mxu0 0.0
  %5030 = vmatpush1.msra.mxu0 %v4319
  %5031 = vmatprep.subr.mxu0 0.0
  %5032 = vmatpush1.msra.mxu0 %v4320
  %5033 = vmatprep.subr.mxu0 0.0
  %5034 = vmatpush1.msra.mxu0 %v4321
  %5035 = vmatprep.subr.mxu0 0.0
  %5036 = vmatpush1.msra.mxu0 %v4322
  %5037 = vmatprep.subr.mxu0 0.0
  %5038 = vmatpush1.msra.mxu0 %v4323
  %5039 = vmatprep.subr.mxu0 0.0
  %5040 = vmatpush1.msra.mxu0 %v4324
  %5041 = vmatprep.subr.mxu0 0.0
  %5042 = vmatpush1.msra.mxu0 %v4325
  %5043 = vmatprep.subr.mxu0 0.0
  %5044 = vmatpush1.msra.mxu0 %v4326
  %5045 = vmatprep.subr.mxu0 0.0
  %5046 = vmatpush1.msra.mxu0 %v4327
  %5047 = vmatprep.subr.mxu0 0.0
  %5048 = vmatpush1.msra.mxu0 %v4328
  %5049 = vmatprep.subr.mxu0 0.0
  %5050 = vmatpush1.msra.mxu0 %v4329
  %5051 = vmatprep.subr.mxu0 0.0
  %5052 = vmatpush1.msra.mxu0 %v4330
  %5053 = vmatprep.subr.mxu0 0.0
  %5054 = vmatpush1.msra.mxu0 %v4331
  %5055 = vmatprep.subr.mxu0 0.0
  %5056 = vmatpush1.msra.mxu0 %v4332
  %5057 = vmatprep.subr.mxu0 0.0
  %5058 = vmatpush1.msra.mxu0 %v4333
  %5059 = vmatprep.subr.mxu0 0.0
  %5060 = vmatpush1.msra.mxu0 %v4334
  %5061 = vmatprep.subr.mxu0 0.0
  %5062 = vmatpush1.msra.mxu0 %v4335
  %5063 = vmatprep.subr.mxu0 0.0
  %5064 = vmatpush1.msra.mxu0 %v4336
  %5065 = vmatprep.subr.mxu0 0.0
  %5066 = vmatpush1.msra.mxu0 %v4337
  %5067 = vmatprep.subr.mxu0 0.0
  %5068 = vmatpush1.msra.mxu0 %v4338
  %5069 = vmatprep.subr.mxu0 0.0
  %5070 = vmatpush1.msra.mxu0 %v4339
  %5071 = vmatprep.subr.mxu0 0.0
  %5072 = vmatpush1.msra.mxu0 %v4340
  %5073 = vmatprep.subr.mxu0 0.0
  %5074 = vmatpush1.msra.mxu0 %v4341
  %5075 = vmatprep.subr.mxu0 0.0
  %5076 = vmatpush1.msra.mxu0 %v4342
  %5077 = vmatprep.subr.mxu0 0.0
  %5078 = vmatpush1.msra.mxu0 %v4343
  %5079 = vmatprep.subr.mxu0 0.0
  %5080 = vmatpush1.msra.mxu0 %v4344
  %5081 = vmatprep.subr.mxu0 0.0
  %5082 = vmatpush1.msra.mxu0 %v4345
  %5083 = vmatprep.mubr.f32.mxu0 %v4737
  %5084 = vmatmul.mubr.f32.gmra.mrb[0].mxu0 %v4736
  %v5085 = vpop.f32.mrb[0].mxu0
  %v5086 = vadd.f32 %v5011, %v5085
  %v5087 = vpop.f32.mrb[0].mxu0
  %5088 = vmatprep.mubr.f32.mxu0 %v4769
  %5089 = vmatmul.mubr.f32.gmra.mrb[0].mxu0 %v4768
  %v5090 = vpop.f32.mrb[0].mxu0
  %v5091 = vadd.f32 %v5016, %v5090
  %v5092 = vpop.f32.mrb[0].mxu0
  %5093 = vdwg.mxu0
  %5094 = vmatprep.subr.mxu0 0.0
  %5095 = vmatpush1.msra.mxu0 %v4346
  %5096 = vmatprep.subr.mxu0 0.0
  %5097 = vmatpush1.msra.mxu0 %v4347
  %5098 = vmatprep.subr.mxu0 0.0
  %5099 = vmatpush1.msra.mxu0 %v4348
  %5100 = vmatprep.subr.mxu0 0.0
  %5101 = vmatpush1.msra.mxu0 %v4349
  %5102 = vmatprep.subr.mxu0 0.0
  %5103 = vmatpush1.msra.mxu0 %v4350
  %5104 = vmatprep.subr.mxu0 0.0
  %5105 = vmatpush1.msra.mxu0 %v4351
  %5106 = vmatprep.subr.mxu0 0.0
  %5107 = vmatpush1.msra.mxu0 %v4352
  %5108 = vmatprep.subr.mxu0 0.0
  %5109 = vmatpush1.msra.mxu0 %v4353
  %5110 = vmatprep.subr.mxu0 0.0
  %5111 = vmatpush1.msra.mxu0 %v4354
  %5112 = vmatprep.subr.mxu0 0.0
  %5113 = vmatpush1.msra.mxu0 %v4355
  %5114 = vmatprep.subr.mxu0 0.0
  %5115 = vmatpush1.msra.mxu0 %v4356
  %5116 = vmatprep.subr.mxu0 0.0
  %5117 = vmatpush1.msra.mxu0 %v4357
  %5118 = vmatprep.subr.mxu0 0.0
  %5119 = vmatpush1.msra.mxu0 %v4358
  %5120 = vmatprep.subr.mxu0 0.0
  %5121 = vmatpush1.msra.mxu0 %v4359
  %5122 = vmatprep.subr.mxu0 0.0
  %5123 = vmatpush1.msra.mxu0 %v4360
  %5124 = vmatprep.subr.mxu0 0.0
  %5125 = vmatpush1.msra.mxu0 %v4361
  %5126 = vmatprep.subr.mxu0 0.0
  %5127 = vmatpush1.msra.mxu0 %v4362
  %5128 = vmatprep.subr.mxu0 0.0
  %5129 = vmatpush1.msra.mxu0 %v4363
  %5130 = vmatprep.subr.mxu0 0.0
  %5131 = vmatpush1.msra.mxu0 %v4364
  %5132 = vmatprep.subr.mxu0 0.0
  %5133 = vmatpush1.msra.mxu0 %v4365
  %5134 = vmatprep.subr.mxu0 0.0
  %5135 = vmatpush1.msra.mxu0 %v4366
  %5136 = vmatprep.subr.mxu0 0.0
  %5137 = vmatpush1.msra.mxu0 %v4367
  %5138 = vmatprep.subr.mxu0 0.0
  %5139 = vmatpush1.msra.mxu0 %v4368
  %5140 = vmatprep.subr.mxu0 0.0
  %5141 = vmatpush1.msra.mxu0 %v4369
  %5142 = vmatprep.subr.mxu0 0.0
  %5143 = vmatpush1.msra.mxu0 %v4370
  %5144 = vmatprep.subr.mxu0 0.0
  %5145 = vmatpush1.msra.mxu0 %v4371
  %5146 = vmatprep.subr.mxu0 0.0
  %5147 = vmatpush1.msra.mxu0 %v4372
  %5148 = vmatprep.subr.mxu0 0.0
  %5149 = vmatpush1.msra.mxu0 %v4373
  %5150 = vmatprep.subr.mxu0 0.0
  %5151 = vmatpush1.msra.mxu0 %v4374
  %5152 = vmatprep.subr.mxu0 0.0
  %5153 = vmatpush1.msra.mxu0 %v4375
  %5154 = vmatprep.subr.mxu0 0.0
  %5155 = vmatpush1.msra.mxu0 %v4376
  %5156 = vmatprep.subr.mxu0 0.0
  %5157 = vmatpush1.msra.mxu0 %v4377
  %5158 = vmatprep.mubr.f32.mxu0 %v4739
  %5159 = vmatmul.mubr.f32.gmra.mrb[0].mxu0 %v4738
  %v5160 = vpop.f32.mrb[0].mxu0
  %v5161 = vadd.f32 %v5086, %v5160
  %v5162 = vpop.f32.mrb[0].mxu0
  %5163 = vmatprep.mubr.f32.mxu0 %v4771
  %5164 = vmatmul.mubr.f32.gmra.mrb[0].mxu0 %v4770
  %v5165 = vpop.f32.mrb[0].mxu0
  %v5166 = vadd.f32 %v5091, %v5165
  %v5167 = vpop.f32.mrb[0].mxu0
  %5168 = vdwg.mxu0
  %5169 = vmatprep.subr.mxu0 0.0
  %5170 = vmatpush1.msra.mxu0 %v4378
  %5171 = vmatprep.subr.mxu0 0.0
  %5172 = vmatpush1.msra.mxu0 %v4379
  %5173 = vmatprep.subr.mxu0 0.0
  %5174 = vmatpush1.msra.mxu0 %v4380
  %5175 = vmatprep.subr.mxu0 0.0
  %5176 = vmatpush1.msra.mxu0 %v4381
  %5177 = vmatprep.subr.mxu0 0.0
  %5178 = vmatpush1.msra.mxu0 %v4382
  %5179 = vmatprep.subr.mxu0 0.0
  %5180 = vmatpush1.msra.mxu0 %v4383
  %5181 = vmatprep.subr.mxu0 0.0
  %5182 = vmatpush1.msra.mxu0 %v4384
  %5183 = vmatprep.subr.mxu0 0.0
  %5184 = vmatpush1.msra.mxu0 %v4385
  %5185 = vmatprep.subr.mxu0 0.0
  %5186 = vmatpush1.msra.mxu0 %v4386
  %5187 = vmatprep.subr.mxu0 0.0
  %5188 = vmatpush1.msra.mxu0 %v4387
  %5189 = vmatprep.subr.mxu0 0.0
  %5190 = vmatpush1.msra.mxu0 %v4388
  %5191 = vmatprep.subr.mxu0 0.0
  %5192 = vmatpush1.msra.mxu0 %v4389
  %5193 = vmatprep.subr.mxu0 0.0
  %5194 = vmatpush1.msra.mxu0 %v4390
  %5195 = vmatprep.subr.mxu0 0.0
  %5196 = vmatpush1.msra.mxu0 %v4391
  %5197 = vmatprep.subr.mxu0 0.0
  %5198 = vmatpush1.msra.mxu0 %v4392
  %5199 = vmatprep.subr.mxu0 0.0
  %5200 = vmatpush1.msra.mxu0 %v4393
  %5201 = vmatprep.subr.mxu0 0.0
  %5202 = vmatpush1.msra.mxu0 %v4394
  %5203 = vmatprep.subr.mxu0 0.0
  %5204 = vmatpush1.msra.mxu0 %v4395
  %5205 = vmatprep.subr.mxu0 0.0
  %5206 = vmatpush1.msra.mxu0 %v4396
  %5207 = vmatprep.subr.mxu0 0.0
  %5208 = vmatpush1.msra.mxu0 %v4397
  %5209 = vmatprep.subr.mxu0 0.0
  %5210 = vmatpush1.msra.mxu0 %v4398
  %5211 = vmatprep.subr.mxu0 0.0
  %5212 = vmatpush1.msra.mxu0 %v4399
  %5213 = vmatprep.subr.mxu0 0.0
  %5214 = vmatpush1.msra.mxu0 %v4400
  %5215 = vmatprep.subr.mxu0 0.0
  %5216 = vmatpush1.msra.mxu0 %v4401
  %5217 = vmatprep.subr.mxu0 0.0
  %5218 = vmatpush1.msra.mxu0 %v4402
  %5219 = vmatprep.subr.mxu0 0.0
  %5220 = vmatpush1.msra.mxu0 %v4403
  %5221 = vmatprep.subr.mxu0 0.0
  %5222 = vmatpush1.msra.mxu0 %v4404
  %5223 = vmatprep.subr.mxu0 0.0
  %5224 = vmatpush1.msra.mxu0 %v4405
  %5225 = vmatprep.subr.mxu0 0.0
  %5226 = vmatpush1.msra.mxu0 %v4406
  %5227 = vmatprep.subr.mxu0 0.0
  %5228 = vmatpush1.msra.mxu0 %v4407
  %5229 = vmatprep.subr.mxu0 0.0
  %5230 = vmatpush1.msra.mxu0 %v4408
  %5231 = vmatprep.subr.mxu0 0.0
  %5232 = vmatpush1.msra.mxu0 %v4409
  %5233 = vmatprep.mubr.f32.mxu0 %v4741
  %5234 = vmatmul.mubr.f32.gmra.mrb[0].mxu0 %v4740
  %v5235 = vpop.f32.mrb[0].mxu0
  %v5236 = vadd.f32 %v5161, %v5235
  %v5237 = vpop.f32.mrb[0].mxu0
  %5238 = vmatprep.mubr.f32.mxu0 %v4773
  %5239 = vmatmul.mubr.f32.gmra.mrb[0].mxu0 %v4772
  %v5240 = vpop.f32.mrb[0].mxu0
  %v5241 = vadd.f32 %v5166, %v5240
  %v5242 = vpop.f32.mrb[0].mxu0
  %5243 = vdwg.mxu0
  %5244 = vmatprep.subr.mxu0 0.0
  %5245 = vmatpush1.msra.mxu0 %v4410
  %5246 = vmatprep.subr.mxu0 0.0
  %5247 = vmatpush1.msra.mxu0 %v4411
  %5248 = vmatprep.subr.mxu0 0.0
  %5249 = vmatpush1.msra.mxu0 %v4412
  %5250 = vmatprep.subr.mxu0 0.0
  %5251 = vmatpush1.msra.mxu0 %v4413
  %5252 = vmatprep.subr.mxu0 0.0
  %5253 = vmatpush1.msra.mxu0 %v4414
  %5254 = vmatprep.subr.mxu0 0.0
  %5255 = vmatpush1.msra.mxu0 %v4415
  %5256 = vmatprep.subr.mxu0 0.0
  %5257 = vmatpush1.msra.mxu0 %v4416
  %5258 = vmatprep.subr.mxu0 0.0
  %5259 = vmatpush1.msra.mxu0 %v4417
  %5260 = vmatprep.subr.mxu0 0.0
  %5261 = vmatpush1.msra.mxu0 %v4418
  %5262 = vmatprep.subr.mxu0 0.0
  %5263 = vmatpush1.msra.mxu0 %v4419
  %5264 = vmatprep.subr.mxu0 0.0
  %5265 = vmatpush1.msra.mxu0 %v4420
  %5266 = vmatprep.subr.mxu0 0.0
  %5267 = vmatpush1.msra.mxu0 %v4421
  %5268 = vmatprep.subr.mxu0 0.0
  %5269 = vmatpush1.msra.mxu0 %v4422
  %5270 = vmatprep.subr.mxu0 0.0
  %5271 = vmatpush1.msra.mxu0 %v4423
  %5272 = vmatprep.subr.mxu0 0.0
  %5273 = vmatpush1.msra.mxu0 %v4424
  %5274 = vmatprep.subr.mxu0 0.0
  %5275 = vmatpush1.msra.mxu0 %v4425
  %5276 = vmatprep.subr.mxu0 0.0
  %5277 = vmatpush1.msra.mxu0 %v4426
  %5278 = vmatprep.subr.mxu0 0.0
  %5279 = vmatpush1.msra.mxu0 %v4427
  %5280 = vmatprep.subr.mxu0 0.0
  %5281 = vmatpush1.msra.mxu0 %v4428
  %5282 = vmatprep.subr.mxu0 0.0
  %5283 = vmatpush1.msra.mxu0 %v4429
  %5284 = vmatprep.subr.mxu0 0.0
  %5285 = vmatpush1.msra.mxu0 %v4430
  %5286 = vmatprep.subr.mxu0 0.0
  %5287 = vmatpush1.msra.mxu0 %v4431
  %5288 = vmatprep.subr.mxu0 0.0
  %5289 = vmatpush1.msra.mxu0 %v4432
  %5290 = vmatprep.subr.mxu0 0.0
  %5291 = vmatpush1.msra.mxu0 %v4433
  %5292 = vmatprep.subr.mxu0 0.0
  %5293 = vmatpush1.msra.mxu0 %v4434
  %5294 = vmatprep.subr.mxu0 0.0
  %5295 = vmatpush1.msra.mxu0 %v4435
  %5296 = vmatprep.subr.mxu0 0.0
  %5297 = vmatpush1.msra.mxu0 %v4436
  %5298 = vmatprep.subr.mxu0 0.0
  %5299 = vmatpush1.msra.mxu0 %v4437
  %5300 = vmatprep.subr.mxu0 0.0
  %5301 = vmatpush1.msra.mxu0 %v4438
  %5302 = vmatprep.subr.mxu0 0.0
  %5303 = vmatpush1.msra.mxu0 %v4439
  %5304 = vmatprep.subr.mxu0 0.0
  %5305 = vmatpush1.msra.mxu0 %v4440
  %5306 = vmatprep.subr.mxu0 0.0
  %5307 = vmatpush1.msra.mxu0 %v4441
  %5308 = vmatprep.mubr.f32.mxu0 %v4743
  %5309 = vmatmul.mubr.f32.gmra.mrb[0].mxu0 %v4742
  %v5310 = vpop.f32.mrb[0].mxu0
  %v5311 = vadd.f32 %v5236, %v5310
  %v5312 = vpop.f32.mrb[0].mxu0
  %5313 = vmatprep.mubr.f32.mxu0 %v4775
  %5314 = vmatmul.mubr.f32.gmra.mrb[0].mxu0 %v4774
  %v5315 = vpop.f32.mrb[0].mxu0
  %v5316 = vadd.f32 %v5241, %v5315
  %v5317 = vpop.f32.mrb[0].mxu0
  %5318 = vdwg.mxu0
  %5319 = vmatprep.subr.mxu0 0.0
  %5320 = vmatpush1.msra.mxu0 %v4442
  %5321 = vmatprep.subr.mxu0 0.0
  %5322 = vmatpush1.msra.mxu0 %v4443
  %5323 = vmatprep.subr.mxu0 0.0
  %5324 = vmatpush1.msra.mxu0 %v4444
  %5325 = vmatprep.subr.mxu0 0.0
  %5326 = vmatpush1.msra.mxu0 %v4445
  %5327 = vmatprep.subr.mxu0 0.0
  %5328 = vmatpush1.msra.mxu0 %v4446
  %5329 = vmatprep.subr.mxu0 0.0
  %5330 = vmatpush1.msra.mxu0 %v4447
  %5331 = vmatprep.subr.mxu0 0.0
  %5332 = vmatpush1.msra.mxu0 %v4448
  %5333 = vmatprep.subr.mxu0 0.0
  %5334 = vmatpush1.msra.mxu0 %v4449
  %5335 = vmatprep.subr.mxu0 0.0
  %5336 = vmatpush1.msra.mxu0 %v4450
  %5337 = vmatprep.subr.mxu0 0.0
  %5338 = vmatpush1.msra.mxu0 %v4451
  %5339 = vmatprep.subr.mxu0 0.0
  %5340 = vmatpush1.msra.mxu0 %v4452
  %5341 = vmatprep.subr.mxu0 0.0
  %5342 = vmatpush1.msra.mxu0 %v4453
  %5343 = vmatprep.subr.mxu0 0.0
  %5344 = vmatpush1.msra.mxu0 %v4454
  %5345 = vmatprep.subr.mxu0 0.0
  %5346 = vmatpush1.msra.mxu0 %v4455
  %5347 = vmatprep.subr.mxu0 0.0
  %5348 = vmatpush1.msra.mxu0 %v4456
  %5349 = vmatprep.subr.mxu0 0.0
  %5350 = vmatpush1.msra.mxu0 %v4457
  %5351 = vmatprep.subr.mxu0 0.0
  %5352 = vmatpush1.msra.mxu0 %v4458
  %5353 = vmatprep.subr.mxu0 0.0
  %5354 = vmatpush1.msra.mxu0 %v4459
  %5355 = vmatprep.subr.mxu0 0.0
  %5356 = vmatpush1.msra.mxu0 %v4460
  %5357 = vmatprep.subr.mxu0 0.0
  %5358 = vmatpush1.msra.mxu0 %v4461
  %5359 = vmatprep.subr.mxu0 0.0
  %5360 = vmatpush1.msra.mxu0 %v4462
  %5361 = vmatprep.subr.mxu0 0.0
  %5362 = vmatpush1.msra.mxu0 %v4463
  %5363 = vmatprep.subr.mxu0 0.0
  %5364 = vmatpush1.msra.mxu0 %v4464
  %5365 = vmatprep.subr.mxu0 0.0
  %5366 = vmatpush1.msra.mxu0 %v4465
  %5367 = vmatprep.subr.mxu0 0.0
  %5368 = vmatpush1.msra.mxu0 %v4466
  %5369 = vmatprep.subr.mxu0 0.0
  %5370 = vmatpush1.msra.mxu0 %v4467
  %5371 = vmatprep.subr.mxu0 0.0
  %5372 = vmatpush1.msra.mxu0 %v4468
  %5373 = vmatprep.subr.mxu0 0.0
  %5374 = vmatpush1.msra.mxu0 %v4469
  %5375 = vmatprep.subr.mxu0 0.0
  %5376 = vmatpush1.msra.mxu0 %v4470
  %5377 = vmatprep.subr.mxu0 0.0
  %5378 = vmatpush1.msra.mxu0 %v4471
  %5379 = vmatprep.subr.mxu0 0.0
  %5380 = vmatpush1.msra.mxu0 %v4472
  %5381 = vmatprep.subr.mxu0 0.0
  %5382 = vmatpush1.msra.mxu0 %v4473
  %5383 = vmatprep.mubr.f32.mxu0 %v4745
  %5384 = vmatmul.mubr.f32.gmra.mrb[0].mxu0 %v4744
  %v5385 = vpop.f32.mrb[0].mxu0
  %v5386 = vadd.f32 %v5311, %v5385
  %v5387 = vpop.f32.mrb[0].mxu0
  %5388 = vmatprep.mubr.f32.mxu0 %v4777
  %5389 = vmatmul.mubr.f32.gmra.mrb[0].mxu0 %v4776
  %v5390 = vpop.f32.mrb[0].mxu0
  %v5391 = vadd.f32 %v5316, %v5390
  %v5392 = vpop.f32.mrb[0].mxu0
  %5393 = vdwg.mxu0
  %5394 = vmatprep.subr.mxu0 0.0
  %5395 = vmatpush1.msra.mxu0 %v4474
  %5396 = vmatprep.subr.mxu0 0.0
  %5397 = vmatpush1.msra.mxu0 %v4475
  %5398 = vmatprep.subr.mxu0 0.0
  %5399 = vmatpush1.msra.mxu0 %v4476
  %5400 = vmatprep.subr.mxu0 0.0
  %5401 = vmatpush1.msra.mxu0 %v4477
  %5402 = vmatprep.subr.mxu0 0.0
  %5403 = vmatpush1.msra.mxu0 %v4478
  %5404 = vmatprep.subr.mxu0 0.0
  %5405 = vmatpush1.msra.mxu0 %v4479
  %5406 = vmatprep.subr.mxu0 0.0
  %5407 = vmatpush1.msra.mxu0 %v4480
  %5408 = vmatprep.subr.mxu0 0.0
  %5409 = vmatpush1.msra.mxu0 %v4481
  %5410 = vmatprep.subr.mxu0 0.0
  %5411 = vmatpush1.msra.mxu0 %v4482
  %5412 = vmatprep.subr.mxu0 0.0
  %5413 = vmatpush1.msra.mxu0 %v4483
  %5414 = vmatprep.subr.mxu0 0.0
  %5415 = vmatpush1.msra.mxu0 %v4484
  %5416 = vmatprep.subr.mxu0 0.0
  %5417 = vmatpush1.msra.mxu0 %v4485
  %5418 = vmatprep.subr.mxu0 0.0
  %5419 = vmatpush1.msra.mxu0 %v4486
  %5420 = vmatprep.subr.mxu0 0.0
  %5421 = vmatpush1.msra.mxu0 %v4487
  %5422 = vmatprep.subr.mxu0 0.0
  %5423 = vmatpush1.msra.mxu0 %v4488
  %5424 = vmatprep.subr.mxu0 0.0
  %5425 = vmatpush1.msra.mxu0 %v4489
  %5426 = vmatprep.subr.mxu0 0.0
  %5427 = vmatpush1.msra.mxu0 %v4490
  %5428 = vmatprep.subr.mxu0 0.0
  %5429 = vmatpush1.msra.mxu0 %v4491
  %5430 = vmatprep.subr.mxu0 0.0
  %5431 = vmatpush1.msra.mxu0 %v4492
  %5432 = vmatprep.subr.mxu0 0.0
  %5433 = vmatpush1.msra.mxu0 %v4493
  %5434 = vmatprep.subr.mxu0 0.0
  %5435 = vmatpush1.msra.mxu0 %v4494
  %5436 = vmatprep.subr.mxu0 0.0
  %5437 = vmatpush1.msra.mxu0 %v4495
  %5438 = vmatprep.subr.mxu0 0.0
  %5439 = vmatpush1.msra.mxu0 %v4496
  %5440 = vmatprep.subr.mxu0 0.0
  %5441 = vmatpush1.msra.mxu0 %v4497
  %5442 = vmatprep.subr.mxu0 0.0
  %5443 = vmatpush1.msra.mxu0 %v4498
  %5444 = vmatprep.subr.mxu0 0.0
  %5445 = vmatpush1.msra.mxu0 %v4499
  %5446 = vmatprep.subr.mxu0 0.0
  %5447 = vmatpush1.msra.mxu0 %v4500
  %5448 = vmatprep.subr.mxu0 0.0
  %5449 = vmatpush1.msra.mxu0 %v4501
  %5450 = vmatprep.subr.mxu0 0.0
  %5451 = vmatpush1.msra.mxu0 %v4502
  %5452 = vmatprep.subr.mxu0 0.0
  %5453 = vmatpush1.msra.mxu0 %v4503
  %5454 = vmatprep.subr.mxu0 0.0
  %5455 = vmatpush1.msra.mxu0 %v4504
  %5456 = vmatprep.subr.mxu0 0.0
  %5457 = vmatpush1.msra.mxu0 %v4505
  %5458 = vmatprep.mubr.f32.mxu0 %v4747
  %5459 = vmatmul.mubr.f32.gmra.mrb[0].mxu0 %v4746
  %v5460 = vpop.f32.mrb[0].mxu0
  %v5461 = vadd.f32 %v5386, %v5460
  %v5462 = vpop.f32.mrb[0].mxu0
  %5463 = vmatprep.mubr.f32.mxu0 %v4779
  %5464 = vmatmul.mubr.f32.gmra.mrb[0].mxu0 %v4778
  %v5465 = vpop.f32.mrb[0].mxu0
  %v5466 = vadd.f32 %v5391, %v5465
  %v5467 = vpop.f32.mrb[0].mxu0
  %5468 = vdwg.mxu0
  %5469 = vmatprep.subr.mxu0 0.0
  %5470 = vmatpush1.msra.mxu0 %v4506
  %5471 = vmatprep.subr.mxu0 0.0
  %5472 = vmatpush1.msra.mxu0 %v4507
  %5473 = vmatprep.subr.mxu0 0.0
  %5474 = vmatpush1.msra.mxu0 %v4508
  %5475 = vmatprep.subr.mxu0 0.0
  %5476 = vmatpush1.msra.mxu0 %v4509
  %5477 = vmatprep.subr.mxu0 0.0
  %5478 = vmatpush1.msra.mxu0 %v4510
  %5479 = vmatprep.subr.mxu0 0.0
  %5480 = vmatpush1.msra.mxu0 %v4511
  %5481 = vmatprep.subr.mxu0 0.0
  %5482 = vmatpush1.msra.mxu0 %v4512
  %5483 = vmatprep.subr.mxu0 0.0
  %5484 = vmatpush1.msra.mxu0 %v4513
  %5485 = vmatprep.subr.mxu0 0.0
  %5486 = vmatpush1.msra.mxu0 %v4514
  %5487 = vmatprep.subr.mxu0 0.0
  %5488 = vmatpush1.msra.mxu0 %v4515
  %5489 = vmatprep.subr.mxu0 0.0
  %5490 = vmatpush1.msra.mxu0 %v4516
  %5491 = vmatprep.subr.mxu0 0.0
  %5492 = vmatpush1.msra.mxu0 %v4517
  %5493 = vmatprep.subr.mxu0 0.0
  %5494 = vmatpush1.msra.mxu0 %v4518
  %5495 = vmatprep.subr.mxu0 0.0
  %5496 = vmatpush1.msra.mxu0 %v4519
  %5497 = vmatprep.subr.mxu0 0.0
  %5498 = vmatpush1.msra.mxu0 %v4520
  %5499 = vmatprep.subr.mxu0 0.0
  %5500 = vmatpush1.msra.mxu0 %v4521
  %5501 = vmatprep.subr.mxu0 0.0
  %5502 = vmatpush1.msra.mxu0 %v4522
  %5503 = vmatprep.subr.mxu0 0.0
  %5504 = vmatpush1.msra.mxu0 %v4523
  %5505 = vmatprep.subr.mxu0 0.0
  %5506 = vmatpush1.msra.mxu0 %v4524
  %5507 = vmatprep.subr.mxu0 0.0
  %5508 = vmatpush1.msra.mxu0 %v4525
  %5509 = vmatprep.subr.mxu0 0.0
  %5510 = vmatpush1.msra.mxu0 %v4526
  %5511 = vmatprep.subr.mxu0 0.0
  %5512 = vmatpush1.msra.mxu0 %v4527
  %5513 = vmatprep.subr.mxu0 0.0
  %5514 = vmatpush1.msra.mxu0 %v4528
  %5515 = vmatprep.subr.mxu0 0.0
  %5516 = vmatpush1.msra.mxu0 %v4529
  %5517 = vmatprep.subr.mxu0 0.0
  %5518 = vmatpush1.msra.mxu0 %v4530
  %5519 = vmatprep.subr.mxu0 0.0
  %5520 = vmatpush1.msra.mxu0 %v4531
  %5521 = vmatprep.subr.mxu0 0.0
  %5522 = vmatpush1.msra.mxu0 %v4532
  %5523 = vmatprep.subr.mxu0 0.0
  %5524 = vmatpush1.msra.mxu0 %v4533
  %5525 = vmatprep.subr.mxu0 0.0
  %5526 = vmatpush1.msra.mxu0 %v4534
  %5527 = vmatprep.subr.mxu0 0.0
  %5528 = vmatpush1.msra.mxu0 %v4535
  %5529 = vmatprep.subr.mxu0 0.0
  %5530 = vmatpush1.msra.mxu0 %v4536
  %5531 = vmatprep.subr.mxu0 0.0
  %5532 = vmatpush1.msra.mxu0 %v4537
  %5533 = vmatprep.mubr.f32.mxu0 %v4749
  %5534 = vmatmul.mubr.f32.gmra.mrb[0].mxu0 %v4748
  %v5535 = vpop.f32.mrb[0].mxu0
  %v5536 = vadd.f32 %v5461, %v5535
  %v5537 = vpop.f32.mrb[0].mxu0
  %5538 = vmatprep.mubr.f32.mxu0 %v4781
  %5539 = vmatmul.mubr.f32.gmra.mrb[0].mxu0 %v4780
  %v5540 = vpop.f32.mrb[0].mxu0
  %v5541 = vadd.f32 %v5466, %v5540
  %v5542 = vpop.f32.mrb[0].mxu0
  %5543 = vdwg.mxu0
  %5544 = vmatprep.subr.mxu0 0.0
  %5545 = vmatpush1.msra.mxu0 %v4538
  %5546 = vmatprep.subr.mxu0 0.0
  %5547 = vmatpush1.msra.mxu0 %v4539
  %5548 = vmatprep.subr.mxu0 0.0
  %5549 = vmatpush1.msra.mxu0 %v4540
  %5550 = vmatprep.subr.mxu0 0.0
  %5551 = vmatpush1.msra.mxu0 %v4541
  %5552 = vmatprep.subr.mxu0 0.0
  %5553 = vmatpush1.msra.mxu0 %v4542
  %5554 = vmatprep.subr.mxu0 0.0
  %5555 = vmatpush1.msra.mxu0 %v4543
  %5556 = vmatprep.subr.mxu0 0.0
  %5557 = vmatpush1.msra.mxu0 %v4544
  %5558 = vmatprep.subr.mxu0 0.0
  %5559 = vmatpush1.msra.mxu0 %v4545
  %5560 = vmatprep.subr.mxu0 0.0
  %5561 = vmatpush1.msra.mxu0 %v4546
  %5562 = vmatprep.subr.mxu0 0.0
  %5563 = vmatpush1.msra.mxu0 %v4547
  %5564 = vmatprep.subr.mxu0 0.0
  %5565 = vmatpush1.msra.mxu0 %v4548
  %5566 = vmatprep.subr.mxu0 0.0
  %5567 = vmatpush1.msra.mxu0 %v4549
  %5568 = vmatprep.subr.mxu0 0.0
  %5569 = vmatpush1.msra.mxu0 %v4550
  %5570 = vmatprep.subr.mxu0 0.0
  %5571 = vmatpush1.msra.mxu0 %v4551
  %5572 = vmatprep.subr.mxu0 0.0
  %5573 = vmatpush1.msra.mxu0 %v4552
  %5574 = vmatprep.subr.mxu0 0.0
  %5575 = vmatpush1.msra.mxu0 %v4553
  %5576 = vmatprep.subr.mxu0 0.0
  %5577 = vmatpush1.msra.mxu0 %v4554
  %5578 = vmatprep.subr.mxu0 0.0
  %5579 = vmatpush1.msra.mxu0 %v4555
  %5580 = vmatprep.subr.mxu0 0.0
  %5581 = vmatpush1.msra.mxu0 %v4556
  %5582 = vmatprep.subr.mxu0 0.0
  %5583 = vmatpush1.msra.mxu0 %v4557
  %5584 = vmatprep.subr.mxu0 0.0
  %5585 = vmatpush1.msra.mxu0 %v4558
  %5586 = vmatprep.subr.mxu0 0.0
  %5587 = vmatpush1.msra.mxu0 %v4559
  %5588 = vmatprep.subr.mxu0 0.0
  %5589 = vmatpush1.msra.mxu0 %v4560
  %5590 = vmatprep.subr.mxu0 0.0
  %5591 = vmatpush1.msra.mxu0 %v4561
  %5592 = vmatprep.subr.mxu0 0.0
  %5593 = vmatpush1.msra.mxu0 %v4562
  %5594 = vmatprep.subr.mxu0 0.0
  %5595 = vmatpush1.msra.mxu0 %v4563
  %5596 = vmatprep.subr.mxu0 0.0
  %5597 = vmatpush1.msra.mxu0 %v4564
  %5598 = vmatprep.subr.mxu0 0.0
  %5599 = vmatpush1.msra.mxu0 %v4565
  %5600 = vmatprep.subr.mxu0 0.0
  %5601 = vmatpush1.msra.mxu0 %v4566
  %5602 = vmatprep.subr.mxu0 0.0
  %5603 = vmatpush1.msra.mxu0 %v4567
  %5604 = vmatprep.subr.mxu0 0.0
  %5605 = vmatpush1.msra.mxu0 %v4568
  %5606 = vmatprep.subr.mxu0 0.0
  %5607 = vmatpush1.msra.mxu0 %v4569
  %5608 = vmatprep.mubr.f32.mxu0 %v4751
  %5609 = vmatmul.mubr.f32.gmra.mrb[0].mxu0 %v4750
  %v5610 = vpop.f32.mrb[0].mxu0
  %v5611 = vadd.f32 %v5536, %v5610
  %v5612 = vpop.f32.mrb[0].mxu0
  %5613 = vmatprep.mubr.f32.mxu0 %v4783
  %5614 = vmatmul.mubr.f32.gmra.mrb[0].mxu0 %v4782
  %v5615 = vpop.f32.mrb[0].mxu0
  %v5616 = vadd.f32 %v5541, %v5615
  %v5617 = vpop.f32.mrb[0].mxu0
  %5618 = vdwg.mxu0
  %5619 = vmatprep.subr.mxu0 0.0
  %5620 = vmatpush1.msra.mxu0 %v4570
  %5621 = vmatprep.subr.mxu0 0.0
  %5622 = vmatpush1.msra.mxu0 %v4571
  %5623 = vmatprep.subr.mxu0 0.0
  %5624 = vmatpush1.msra.mxu0 %v4572
  %5625 = vmatprep.subr.mxu0 0.0
  %5626 = vmatpush1.msra.mxu0 %v4573
  %5627 = vmatprep.subr.mxu0 0.0
  %5628 = vmatpush1.msra.mxu0 %v4574
  %5629 = vmatprep.subr.mxu0 0.0
  %5630 = vmatpush1.msra.mxu0 %v4575
  %5631 = vmatprep.subr.mxu0 0.0
  %5632 = vmatpush1.msra.mxu0 %v4576
  %5633 = vmatprep.subr.mxu0 0.0
  %5634 = vmatpush1.msra.mxu0 %v4577
  %5635 = vmatprep.subr.mxu0 0.0
  %5636 = vmatpush1.msra.mxu0 %v4578
  %5637 = vmatprep.subr.mxu0 0.0
  %5638 = vmatpush1.msra.mxu0 %v4579
  %5639 = vmatprep.subr.mxu0 0.0
  %5640 = vmatpush1.msra.mxu0 %v4580
  %5641 = vmatprep.subr.mxu0 0.0
  %5642 = vmatpush1.msra.mxu0 %v4581
  %5643 = vmatprep.subr.mxu0 0.0
  %5644 = vmatpush1.msra.mxu0 %v4582
  %5645 = vmatprep.subr.mxu0 0.0
  %5646 = vmatpush1.msra.mxu0 %v4583
  %5647 = vmatprep.subr.mxu0 0.0
  %5648 = vmatpush1.msra.mxu0 %v4584
  %5649 = vmatprep.subr.mxu0 0.0
  %5650 = vmatpush1.msra.mxu0 %v4585
  %5651 = vmatprep.subr.mxu0 0.0
  %5652 = vmatpush1.msra.mxu0 %v4586
  %5653 = vmatprep.subr.mxu0 0.0
  %5654 = vmatpush1.msra.mxu0 %v4587
  %5655 = vmatprep.subr.mxu0 0.0
  %5656 = vmatpush1.msra.mxu0 %v4588
  %5657 = vmatprep.subr.mxu0 0.0
  %5658 = vmatpush1.msra.mxu0 %v4589
  %5659 = vmatprep.subr.mxu0 0.0
  %5660 = vmatpush1.msra.mxu0 %v4590
  %5661 = vmatprep.subr.mxu0 0.0
  %5662 = vmatpush1.msra.mxu0 %v4591
  %5663 = vmatprep.subr.mxu0 0.0
  %5664 = vmatpush1.msra.mxu0 %v4592
  %5665 = vmatprep.subr.mxu0 0.0
  %5666 = vmatpush1.msra.mxu0 %v4593
  %5667 = vmatprep.subr.mxu0 0.0
  %5668 = vmatpush1.msra.mxu0 %v4594
  %5669 = vmatprep.subr.mxu0 0.0
  %5670 = vmatpush1.msra.mxu0 %v4595
  %5671 = vmatprep.subr.mxu0 0.0
  %5672 = vmatpush1.msra.mxu0 %v4596
  %5673 = vmatprep.subr.mxu0 0.0
  %5674 = vmatpush1.msra.mxu0 %v4597
  %5675 = vmatprep.subr.mxu0 0.0
  %5676 = vmatpush1.msra.mxu0 %v4598
  %5677 = vmatprep.subr.mxu0 0.0
  %5678 = vmatpush1.msra.mxu0 %v4599
  %5679 = vmatprep.subr.mxu0 0.0
  %5680 = vmatpush1.msra.mxu0 %v4600
  %5681 = vmatprep.subr.mxu0 0.0
  %5682 = vmatpush1.msra.mxu0 %v4601
  %5683 = vmatprep.mubr.f32.mxu0 %v4753
  %5684 = vmatmul.mubr.f32.gmra.mrb[0].mxu0 %v4752
  %v5685 = vpop.f32.mrb[0].mxu0
  %v5686 = vadd.f32 %v5611, %v5685
  %v5687 = vpop.f32.mrb[0].mxu0
  %5688 = vmatprep.mubr.f32.mxu0 %v4785
  %5689 = vmatmul.mubr.f32.gmra.mrb[0].mxu0 %v4784
  %v5690 = vpop.f32.mrb[0].mxu0
  %v5691 = vadd.f32 %v5616, %v5690
  %v5692 = vpop.f32.mrb[0].mxu0
  %5693 = vdwg.mxu0
  %5694 = vmatprep.subr.mxu0 0.0
  %5695 = vmatpush1.msra.mxu0 %v4602
  %5696 = vmatprep.subr.mxu0 0.0
  %5697 = vmatpush1.msra.mxu0 %v4603
  %5698 = vmatprep.subr.mxu0 0.0
  %5699 = vmatpush1.msra.mxu0 %v4604
  %5700 = vmatprep.subr.mxu0 0.0
  %5701 = vmatpush1.msra.mxu0 %v4605
  %5702 = vmatprep.subr.mxu0 0.0
  %5703 = vmatpush1.msra.mxu0 %v4606
  %5704 = vmatprep.subr.mxu0 0.0
  %5705 = vmatpush1.msra.mxu0 %v4607
  %5706 = vmatprep.subr.mxu0 0.0
  %5707 = vmatpush1.msra.mxu0 %v4608
  %5708 = vmatprep.subr.mxu0 0.0
  %5709 = vmatpush1.msra.mxu0 %v4609
  %5710 = vmatprep.subr.mxu0 0.0
  %5711 = vmatpush1.msra.mxu0 %v4610
  %5712 = vmatprep.subr.mxu0 0.0
  %5713 = vmatpush1.msra.mxu0 %v4611
  %5714 = vmatprep.subr.mxu0 0.0
  %5715 = vmatpush1.msra.mxu0 %v4612
  %5716 = vmatprep.subr.mxu0 0.0
  %5717 = vmatpush1.msra.mxu0 %v4613
  %5718 = vmatprep.subr.mxu0 0.0
  %5719 = vmatpush1.msra.mxu0 %v4614
  %5720 = vmatprep.subr.mxu0 0.0
  %5721 = vmatpush1.msra.mxu0 %v4615
  %5722 = vmatprep.subr.mxu0 0.0
  %5723 = vmatpush1.msra.mxu0 %v4616
  %5724 = vmatprep.subr.mxu0 0.0
  %5725 = vmatpush1.msra.mxu0 %v4617
  %5726 = vmatprep.subr.mxu0 0.0
  %5727 = vmatpush1.msra.mxu0 %v4618
  %5728 = vmatprep.subr.mxu0 0.0
  %5729 = vmatpush1.msra.mxu0 %v4619
  %5730 = vmatprep.subr.mxu0 0.0
  %5731 = vmatpush1.msra.mxu0 %v4620
  %5732 = vmatprep.subr.mxu0 0.0
  %5733 = vmatpush1.msra.mxu0 %v4621
  %5734 = vmatprep.subr.mxu0 0.0
  %5735 = vmatpush1.msra.mxu0 %v4622
  %5736 = vmatprep.subr.mxu0 0.0
  %5737 = vmatpush1.msra.mxu0 %v4623
  %5738 = vmatprep.subr.mxu0 0.0
  %5739 = vmatpush1.msra.mxu0 %v4624
  %5740 = vmatprep.subr.mxu0 0.0
  %5741 = vmatpush1.msra.mxu0 %v4625
  %5742 = vmatprep.subr.mxu0 0.0
  %5743 = vmatpush1.msra.mxu0 %v4626
  %5744 = vmatprep.subr.mxu0 0.0
  %5745 = vmatpush1.msra.mxu0 %v4627
  %5746 = vmatprep.subr.mxu0 0.0
  %5747 = vmatpush1.msra.mxu0 %v4628
  %5748 = vmatprep.subr.mxu0 0.0
  %5749 = vmatpush1.msra.mxu0 %v4629
  %5750 = vmatprep.subr.mxu0 0.0
  %5751 = vmatpush1.msra.mxu0 %v4630
  %5752 = vmatprep.subr.mxu0 0.0
  %5753 = vmatpush1.msra.mxu0 %v4631
  %5754 = vmatprep.subr.mxu0 0.0
  %5755 = vmatpush1.msra.mxu0 %v4632
  %5756 = vmatprep.subr.mxu0 0.0
  %5757 = vmatpush1.msra.mxu0 %v4633
  %5758 = vmatprep.mubr.f32.mxu0 %v4755
  %5759 = vmatmul.mubr.f32.gmra.mrb[0].mxu0 %v4754
  %v5760 = vpop.f32.mrb[0].mxu0
  %v5761 = vadd.f32 %v5686, %v5760
  %v5762 = vpop.f32.mrb[0].mxu0
  %5763 = vmatprep.mubr.f32.mxu0 %v4787
  %5764 = vmatmul.mubr.f32.gmra.mrb[0].mxu0 %v4786
  %v5765 = vpop.f32.mrb[0].mxu0
  %v5766 = vadd.f32 %v5691, %v5765
  %v5767 = vpop.f32.mrb[0].mxu0
  %5768 = vdwg.mxu0
  %5769 = vmatprep.subr.mxu0 0.0
  %5770 = vmatpush1.msra.mxu0 %v4634
  %5771 = vmatprep.subr.mxu0 0.0
  %5772 = vmatpush1.msra.mxu0 %v4635
  %5773 = vmatprep.subr.mxu0 0.0
  %5774 = vmatpush1.msra.mxu0 %v4636
  %5775 = vmatprep.subr.mxu0 0.0
  %5776 = vmatpush1.msra.mxu0 %v4637
  %5777 = vmatprep.subr.mxu0 0.0
  %5778 = vmatpush1.msra.mxu0 %v4638
  %5779 = vmatprep.subr.mxu0 0.0
  %5780 = vmatpush1.msra.mxu0 %v4639
  %5781 = vmatprep.subr.mxu0 0.0
  %5782 = vmatpush1.msra.mxu0 %v4640
  %5783 = vmatprep.subr.mxu0 0.0
  %5784 = vmatpush1.msra.mxu0 %v4641
  %5785 = vmatprep.subr.mxu0 0.0
  %5786 = vmatpush1.msra.mxu0 %v4642
  %5787 = vmatprep.subr.mxu0 0.0
  %5788 = vmatpush1.msra.mxu0 %v4643
  %5789 = vmatprep.subr.mxu0 0.0
  %5790 = vmatpush1.msra.mxu0 %v4644
  %5791 = vmatprep.subr.mxu0 0.0
  %5792 = vmatpush1.msra.mxu0 %v4645
  %5793 = vmatprep.subr.mxu0 0.0
  %5794 = vmatpush1.msra.mxu0 %v4646
  %5795 = vmatprep.subr.mxu0 0.0
  %5796 = vmatpush1.msra.mxu0 %v4647
  %5797 = vmatprep.subr.mxu0 0.0
  %5798 = vmatpush1.msra.mxu0 %v4648
  %5799 = vmatprep.subr.mxu0 0.0
  %5800 = vmatpush1.msra.mxu0 %v4649
  %5801 = vmatprep.subr.mxu0 0.0
  %5802 = vmatpush1.msra.mxu0 %v4650
  %5803 = vmatprep.subr.mxu0 0.0
  %5804 = vmatpush1.msra.mxu0 %v4651
  %5805 = vmatprep.subr.mxu0 0.0
  %5806 = vmatpush1.msra.mxu0 %v4652
  %5807 = vmatprep.subr.mxu0 0.0
  %5808 = vmatpush1.msra.mxu0 %v4653
  %5809 = vmatprep.subr.mxu0 0.0
  %5810 = vmatpush1.msra.mxu0 %v4654
  %5811 = vmatprep.subr.mxu0 0.0
  %5812 = vmatpush1.msra.mxu0 %v4655
  %5813 = vmatprep.subr.mxu0 0.0
  %5814 = vmatpush1.msra.mxu0 %v4656
  %5815 = vmatprep.subr.mxu0 0.0
  %5816 = vmatpush1.msra.mxu0 %v4657
  %5817 = vmatprep.subr.mxu0 0.0
  %5818 = vmatpush1.msra.mxu0 %v4658
  %5819 = vmatprep.subr.mxu0 0.0
  %5820 = vmatpush1.msra.mxu0 %v4659
  %5821 = vmatprep.subr.mxu0 0.0
  %5822 = vmatpush1.msra.mxu0 %v4660
  %5823 = vmatprep.subr.mxu0 0.0
  %5824 = vmatpush1.msra.mxu0 %v4661
  %5825 = vmatprep.subr.mxu0 0.0
  %5826 = vmatpush1.msra.mxu0 %v4662
  %5827 = vmatprep.subr.mxu0 0.0
  %5828 = vmatpush1.msra.mxu0 %v4663
  %5829 = vmatprep.subr.mxu0 0.0
  %5830 = vmatpush1.msra.mxu0 %v4664
  %5831 = vmatprep.subr.mxu0 0.0
  %5832 = vmatpush1.msra.mxu0 %v4665
  %5833 = vmatprep.mubr.f32.mxu0 %v4757
  %5834 = vmatmul.mubr.f32.gmra.mrb[0].mxu0 %v4756
  %v5835 = vpop.f32.mrb[0].mxu0
  %v5836 = vadd.f32 %v5761, %v5835
  %v5837 = vpop.f32.mrb[0].mxu0
  %5838 = vmatprep.mubr.f32.mxu0 %v4789
  %5839 = vmatmul.mubr.f32.gmra.mrb[0].mxu0 %v4788
  %v5840 = vpop.f32.mrb[0].mxu0
  %v5841 = vadd.f32 %v5766, %v5840
  %v5842 = vpop.f32.mrb[0].mxu0
  %5843 = vdwg.mxu0
  %5844 = vmatprep.subr.mxu0 0.0
  %5845 = vmatpush1.msra.mxu0 %v4666
  %5846 = vmatprep.subr.mxu0 0.0
  %5847 = vmatpush1.msra.mxu0 %v4667
  %5848 = vmatprep.subr.mxu0 0.0
  %5849 = vmatpush1.msra.mxu0 %v4668
  %5850 = vmatprep.subr.mxu0 0.0
  %5851 = vmatpush1.msra.mxu0 %v4669
  %5852 = vmatprep.subr.mxu0 0.0
  %5853 = vmatpush1.msra.mxu0 %v4670
  %5854 = vmatprep.subr.mxu0 0.0
  %5855 = vmatpush1.msra.mxu0 %v4671
  %5856 = vmatprep.subr.mxu0 0.0
  %5857 = vmatpush1.msra.mxu0 %v4672
  %5858 = vmatprep.subr.mxu0 0.0
  %5859 = vmatpush1.msra.mxu0 %v4673
  %5860 = vmatprep.subr.mxu0 0.0
  %5861 = vmatpush1.msra.mxu0 %v4674
  %5862 = vmatprep.subr.mxu0 0.0
  %5863 = vmatpush1.msra.mxu0 %v4675
  %5864 = vmatprep.subr.mxu0 0.0
  %5865 = vmatpush1.msra.mxu0 %v4676
  %5866 = vmatprep.subr.mxu0 0.0
  %5867 = vmatpush1.msra.mxu0 %v4677
  %5868 = vmatprep.subr.mxu0 0.0
  %5869 = vmatpush1.msra.mxu0 %v4678
  %5870 = vmatprep.subr.mxu0 0.0
  %5871 = vmatpush1.msra.mxu0 %v4679
  %5872 = vmatprep.subr.mxu0 0.0
  %5873 = vmatpush1.msra.mxu0 %v4680
  %5874 = vmatprep.subr.mxu0 0.0
  %5875 = vmatpush1.msra.mxu0 %v4681
  %5876 = vmatprep.subr.mxu0 0.0
  %5877 = vmatpush1.msra.mxu0 %v4682
  %5878 = vmatprep.subr.mxu0 0.0
  %5879 = vmatpush1.msra.mxu0 %v4683
  %5880 = vmatprep.subr.mxu0 0.0
  %5881 = vmatpush1.msra.mxu0 %v4684
  %5882 = vmatprep.subr.mxu0 0.0
  %5883 = vmatpush1.msra.mxu0 %v4685
  %5884 = vmatprep.subr.mxu0 0.0
  %5885 = vmatpush1.msra.mxu0 %v4686
  %5886 = vmatprep.subr.mxu0 0.0
  %5887 = vmatpush1.msra.mxu0 %v4687
  %5888 = vmatprep.subr.mxu0 0.0
  %5889 = vmatpush1.msra.mxu0 %v4688
  %5890 = vmatprep.subr.mxu0 0.0
  %5891 = vmatpush1.msra.mxu0 %v4689
  %5892 = vmatprep.subr.mxu0 0.0
  %5893 = vmatpush1.msra.mxu0 %v4690
  %5894 = vmatprep.subr.mxu0 0.0
  %5895 = vmatpush1.msra.mxu0 %v4691
  %5896 = vmatprep.subr.mxu0 0.0
  %5897 = vmatpush1.msra.mxu0 %v4692
  %5898 = vmatprep.subr.mxu0 0.0
  %5899 = vmatpush1.msra.mxu0 %v4693
  %5900 = vmatprep.subr.mxu0 0.0
  %5901 = vmatpush1.msra.mxu0 %v4694
  %5902 = vmatprep.subr.mxu0 0.0
  %5903 = vmatpush1.msra.mxu0 %v4695
  %5904 = vmatprep.subr.mxu0 0.0
  %5905 = vmatpush1.msra.mxu0 %v4696
  %5906 = vmatprep.subr.mxu0 0.0
  %5907 = vmatpush1.msra.mxu0 %v4697
  %5908 = vmatprep.mubr.f32.mxu0 %v4759
  %5909 = vmatmul.mubr.f32.gmra.mrb[0].mxu0 %v4758
  %v5910 = vpop.f32.mrb[0].mxu0
  %v5911 = vadd.f32 %v5836, %v5910
  %v5912 = vpop.f32.mrb[0].mxu0
  %5913 = vmatprep.mubr.f32.mxu0 %v4791
  %5914 = vmatmul.mubr.f32.gmra.mrb[0].mxu0 %v4790
  %v5915 = vpop.f32.mrb[0].mxu0
  %v5916 = vadd.f32 %v5841, %v5915
  %v5917 = vpop.f32.mrb[0].mxu0
  %5918 = vdwg.mxu0
  %5919 = vmatprep.subr.mxu0 0.0
  %5920 = vmatpush1.msra.mxu0 %v4698
  %5921 = vmatprep.subr.mxu0 0.0
  %5922 = vmatpush1.msra.mxu0 %v4699
  %5923 = vmatprep.subr.mxu0 0.0
  %5924 = vmatpush1.msra.mxu0 %v4700
  %5925 = vmatprep.subr.mxu0 0.0
  %5926 = vmatpush1.msra.mxu0 %v4701
  %5927 = vmatprep.subr.mxu0 0.0
  %5928 = vmatpush1.msra.mxu0 %v4702
  %5929 = vmatprep.subr.mxu0 0.0
  %5930 = vmatpush1.msra.mxu0 %v4703
  %5931 = vmatprep.subr.mxu0 0.0
  %5932 = vmatpush1.msra.mxu0 %v4704
  %5933 = vmatprep.subr.mxu0 0.0
  %5934 = vmatpush1.msra.mxu0 %v4705
  %5935 = vmatprep.subr.mxu0 0.0
  %5936 = vmatpush1.msra.mxu0 %v4706
  %5937 = vmatprep.subr.mxu0 0.0
  %5938 = vmatpush1.msra.mxu0 %v4707
  %5939 = vmatprep.subr.mxu0 0.0
  %5940 = vmatpush1.msra.mxu0 %v4708
  %5941 = vmatprep.subr.mxu0 0.0
  %5942 = vmatpush1.msra.mxu0 %v4709
  %5943 = vmatprep.subr.mxu0 0.0
  %5944 = vmatpush1.msra.mxu0 %v4710
  %5945 = vmatprep.subr.mxu0 0.0
  %5946 = vmatpush1.msra.mxu0 %v4711
  %5947 = vmatprep.subr.mxu0 0.0
  %5948 = vmatpush1.msra.mxu0 %v4712
  %5949 = vmatprep.subr.mxu0 0.0
  %5950 = vmatpush1.msra.mxu0 %v4713
  %5951 = vmatprep.subr.mxu0 0.0
  %5952 = vmatpush1.msra.mxu0 %v4714
  %5953 = vmatprep.subr.mxu0 0.0
  %5954 = vmatpush1.msra.mxu0 %v4715
  %5955 = vmatprep.subr.mxu0 0.0
  %5956 = vmatpush1.msra.mxu0 %v4716
  %5957 = vmatprep.subr.mxu0 0.0
  %5958 = vmatpush1.msra.mxu0 %v4717
  %5959 = vmatprep.subr.mxu0 0.0
  %5960 = vmatpush1.msra.mxu0 %v4718
  %5961 = vmatprep.subr.mxu0 0.0
  %5962 = vmatpush1.msra.mxu0 %v4719
  %5963 = vmatprep.subr.mxu0 0.0
  %5964 = vmatpush1.msra.mxu0 %v4720
  %5965 = vmatprep.subr.mxu0 0.0
  %5966 = vmatpush1.msra.mxu0 %v4721
  %5967 = vmatprep.subr.mxu0 0.0
  %5968 = vmatpush1.msra.mxu0 %v4722
  %5969 = vmatprep.subr.mxu0 0.0
  %5970 = vmatpush1.msra.mxu0 %v4723
  %5971 = vmatprep.subr.mxu0 0.0
  %5972 = vmatpush1.msra.mxu0 %v4724
  %5973 = vmatprep.subr.mxu0 0.0
  %5974 = vmatpush1.msra.mxu0 %v4725
  %5975 = vmatprep.subr.mxu0 0.0
  %5976 = vmatpush1.msra.mxu0 %v4726
  %5977 = vmatprep.subr.mxu0 0.0
  %5978 = vmatpush1.msra.mxu0 %v4727
  %5979 = vmatprep.subr.mxu0 0.0
  %5980 = vmatpush1.msra.mxu0 %v4728
  %5981 = vmatprep.subr.mxu0 0.0
  %5982 = vmatpush1.msra.mxu0 %v4729
  %5983 = vmatprep.mubr.f32.mxu0 %v4761
  %5984 = vmatmul.mubr.f32.gmra.mrb[0].mxu0 %v4760
  %v5985 = vpop.f32.mrb[0].mxu0
  %v5986 = vadd.f32 %v5911, %v5985
  %v5987 = vpop.f32.mrb[0].mxu0
  %5988 = vmatprep.mubr.f32.mxu0 %v4793
  %5989 = vmatmul.mubr.f32.gmra.mrb[0].mxu0 %v4792
  %v5990 = vpop.f32.mrb[0].mxu0
  %v5991 = vadd.f32 %v5916, %v5990
  %v5992 = vpop.f32.mrb[0].mxu0
  %5993 = vdwg.mxu0
  %5994 = vst [vmem:[%s4] sm:$0xff] %v5986
  %5995 = vst [vmem:[%s4 + $0x8] sm:$0xff] %v5991
  // Predicated region
  $region18: #{visual_odometry_forward.2} parent=0 // pred_check
    _
  $region19: #{visual_odometry_forward.2} parent=0 // pred_check_branch
    %5997 = sbr.rel (0) target = $region21
  $region20: #{visual_odometry_forward.2} parent=0 // pred_region
    _
  $region21: #{visual_odometry_forward.2} parent=0 // pred_fallthru
    _
  // Predicated region
  $region22: #{visual_odometry_forward.2} parent=0 // pred_check
    _
  $region23: #{visual_odometry_forward.2} parent=0 // pred_check_branch
    %5999 = sbr.rel (0) target = $region25
  $region24: #{visual_odometry_forward.2} parent=0 // pred_region
    _
  $region25: #{visual_odometry_forward.2} parent=0 // pred_fallthru
    _

</llo_original>
